<compile_context>
chip_gen: v5e
topology: v5e:2x2
jax: 0.10.0
libtpu: 0.0.40
codegen_flags: <defaults>
</compile_context>

<pallas_src>
import jax
import jax.numpy as jnp
from jax.experimental import pallas as pl
from jax.experimental.pallas import tpu as pltpu


def _model_local_kernel(bias_ref, x_ref, w_ref, o_ref):
    # bias_ref : SMEM (1,)                folded bias  b' = beta*sum(w) + b
    # x_ref    : VMEM (tile_rows, 128*T)  128 samples per row (lane-dense)
    # w_ref    : VMEM (128*T, 128)        block-expanded folded weights (resident)
    # o_ref    : VMEM (tile_rows, 128)    o[k, j] = result of sample 128*k + j
    #
    # One MXU matmul performs the length-T dots and the lane compaction.
    # HIGHEST precision keeps the f32 accumulation exact; drop to HIGH if a
    # v7x profile shows the MXU exposed above DMA (accuracy stays ~1e-6 rel).
    o_ref[...] = (
        jnp.dot(
            x_ref[...],
            w_ref[...],
            preferred_element_type=jnp.float32,
            precision=jax.lax.Precision.HIGHEST,
        )
        + bias_ref[0]
    )


def model_local_forward(x, w_local, b_local, gamma_local, beta_local, *,
                        tile_rows=None):
    """f = (gamma*x + beta) @ w_local + b_local, shape (N, 1), float32.

    x: (N, T); w_local: (T, 1); b/gamma/beta: scalars (or shape-(1,)).
    tile_rows = packed rows (of 128 samples) per grid step; default targets
    ~4 MiB of x per step.
    """
    x = jnp.asarray(x, jnp.float32)
    N, T = x.shape
    lanes = 128
    K = lanes * T

    gamma = jnp.asarray(gamma_local, jnp.float32).reshape(())
    beta = jnp.asarray(beta_local, jnp.float32).reshape(())
    b0 = jnp.asarray(b_local, jnp.float32).reshape(())
    w = jnp.asarray(w_local, jnp.float32).reshape(T)

    # Fold the scalar affine into the weights / bias (O(T) one-time work):
    #   (gamma*x + beta) @ w + b  ==  x @ (gamma*w) + (beta*sum(w) + b)
    w_fold = gamma * w                                   # (T,)
    bias = (beta * jnp.sum(w) + b0).reshape(1)           # (1,)  -> SMEM scalar

    # Block-expanded weight matrix: column j carries w_fold in rows [j*T,(j+1)*T).
    c = jnp.arange(K)
    W = jnp.where(
        (c // T)[:, None] == jnp.arange(lanes)[None, :],
        w_fold[c % T][:, None],
        0.0,
    ).astype(jnp.float32)                                # (128*T, 128)

    # Pad N only to the next 128-row boundary (no full-tile padding; no copy
    # at all when N is already 128-aligned).
    n_pad = pl.cdiv(N, lanes) * lanes
    if n_pad != N:
        x = jnp.pad(x, ((0, n_pad - N), (0, 0)))
    rows = n_pad // lanes
    x_r = x.reshape(rows, K)                             # free row-major reinterpret

    # Tile the packed-row axis: ~4 MiB of x per step, rounded to a sublane
    # multiple of 8; a single full-extent block when everything fits.
    if tile_rows is None:
        tile_rows = max(8, (4 * 1024 * 1024) // (K * 4))
    tile_rows = max(8, (int(tile_rows) + 7) // 8 * 8)
    if tile_rows >= rows:
        tile_rows = rows                                 # full-dim block is allowed
    grid = (pl.cdiv(rows, tile_rows),)                   # ragged last block OK

    # Explicit VMEM budget with headroom (double-buffered x tile + resident W
    # + double-buffered lane-dense output); capped well under v7x's 64 MiB.
    est = (2 * tile_rows * K * 4            # x tile, double-buffered
           + 2 * K * lanes * 4              # W (conservatively x2)
           + 2 * tile_rows * lanes * 4      # output tile
           + 4 * 1024 * 1024)               # slack for internal scratch
    vmem_bytes = int(min(max(est, 32 * 1024 * 1024), 48 * 1024 * 1024))

    out_packed = pl.pallas_call(
        _model_local_kernel,
        out_shape=jax.ShapeDtypeStruct((rows, lanes), jnp.float32),
        grid=grid,
        in_specs=[
            pl.BlockSpec(memory_space=pltpu.MemorySpace.SMEM),   # bias (1,)
            pl.BlockSpec((tile_rows, K), lambda i: (i, 0)),      # x tile
            pl.BlockSpec((K, lanes), lambda i: (0, 0)),          # W, resident
        ],
        out_specs=pl.BlockSpec((tile_rows, lanes), lambda i: (i, 0)),
        compiler_params=pltpu.CompilerParams(
            dimension_semantics=("parallel",),   # v7x: shard N-tiles across 2 TCs
            vmem_limit_bytes=vmem_bytes,
        ),
    )(bias, x_r, W)

    return out_packed.reshape(n_pad, 1)[:N]


def init_params(T_local, key):
    """Deterministic replication of model_local.__init__ parameter shapes."""
    kw, = jax.random.split(key, 1)
    w_local = 0.01 + 0.01 * jax.random.normal(kw, (T_local, 1), jnp.float32)
    b_local = jnp.zeros((1,), jnp.float32)
    gamma_local = jnp.ones((1,), jnp.float32)
    beta_local = jnp.zeros((1,), jnp.float32)
    return w_local, b_local, gamma_local, beta_local


def _reference(x, w_local, b_local, gamma_local, beta_local):
    return (
        jnp.dot(gamma_local * x + beta_local, w_local,
                precision=jax.lax.Precision.HIGHEST)
        + b_local
    )


if __name__ == "__main__":
    key = jax.random.PRNGKey(0)
    k_x, k_p, k_g, k_b, k_x2, k_x3 = jax.random.split(key, 6)

    N, T_local = 8, 32
    x = jax.random.normal(k_x, (N, T_local), jnp.float32)
    w_local, b_local, gamma_local, beta_local = init_params(T_local, k_p)
    # non-trivial affine params so the fold is actually exercised
    gamma_local = gamma_local + 0.3 * jax.random.normal(k_g, (1,), jnp.float32)
    beta_local = beta_local + 0.2 * jax.random.normal(k_b, (1,), jnp.float32)

    f = jax.block_until_ready(
        model_local_forward(x, w_local, b_local, gamma_local, beta_local))
    ref = _reference(x, w_local, b_local, gamma_local, beta_local)
    assert f.shape == (N, 1)
    assert jnp.allclose(f, ref, atol=1e-5, rtol=1e-5), \
        float(jnp.max(jnp.abs(f - ref)))

    # Unaligned N: pads only to the next 128-row boundary.
    N2 = 50
    x2 = jax.random.normal(k_x2, (N2, T_local), jnp.float32)
    f2 = jax.block_until_ready(
        model_local_forward(x2, w_local, b_local, gamma_local, beta_local))
    ref2 = _reference(x2, w_local, b_local, gamma_local, beta_local)
    assert f2.shape == (N2, 1)
    assert jnp.allclose(f2, ref2, atol=1e-5, rtol=1e-5), \
        float(jnp.max(jnp.abs(f2 - ref2)))

    # Multi-step grid with a ragged last block (tiny tile_rows to keep it small).
    N3 = 1300
    x3 = jax.random.normal(k_x3, (N3, T_local), jnp.float32)
    f3 = jax.block_until_ready(
        model_local_forward(x3, w_local, b_local, gamma_local, beta_local,
                            tile_rows=8))
    ref3 = _reference(x3, w_local, b_local, gamma_local, beta_local)
    assert f3.shape == (N3, 1)
    assert jnp.allclose(f3, ref3, atol=1e-5, rtol=1e-5), \
        float(jnp.max(jnp.abs(f3 - ref3)))

    print("KERNEL_OK")
</pallas_src>

<mosaic_0001>
module attributes {stable_mosaic.version = 11 : i64} {
  func.func @_model_local_kernel(%arg0: i32, %arg1: memref<1xf32, #tpu.memory_space<smem>>, %arg2: memref<1x4096xf32, #tpu.memory_space<vmem>>, %arg3: memref<4096x128xf32, #tpu.memory_space<vmem>>, %arg4: memref<1x128xf32, #tpu.memory_space<vmem>>) attributes {dimension_semantics = [#tpu.dimension_semantics<parallel>], iteration_bounds = array<i64: 1>, scalar_prefetch = 0 : i64, scratch_operands = 0 : i64, tpu.core_type = #tpu.core_type<tc>, window_params = [{transform_indices = @transform_0, window_bounds = array<i64: 1>}, {transform_indices = @transform_1, window_bounds = array<i64: 1, 4096>}, {pipeline_mode = #tpu.pipeline_mode<synchronous>, transform_indices = @transform_2, window_bounds = array<i64: 4096, 128>}, {transform_indices = @transform_3, window_bounds = array<i64: 1, 128>}]} {
    %c0 = arith.constant 0 : index
    %c0_0 = arith.constant 0 : index
    %0 = vector.load %arg2[%c0, %c0_0] : memref<1x4096xf32, #tpu.memory_space<vmem>>, vector<1x4096xf32>
    %c0_1 = arith.constant 0 : index
    %c0_2 = arith.constant 0 : index
    %1 = vector.load %arg3[%c0_1, %c0_2] : memref<4096x128xf32, #tpu.memory_space<vmem>>, vector<4096x128xf32>
    %cst = arith.constant dense<0.000000e+00> : vector<1x128xf32>
    %2 = tpu.matmul %0, %1, %cst {dimension_numbers = #tpu.dot_dimension_numbers<[1], [0], [0], [1], [0, 0, 1, 1], [], []>, precision = #tpu.contract_precision<fp32>} : vector<1x4096xf32>, vector<4096x128xf32>, vector<1x128xf32> -> vector<1x128xf32>
    %c0_3 = arith.constant 0 : index
    %3 = memref.load %arg1[%c0_3] : memref<1xf32, #tpu.memory_space<smem>>
    %4 = vector.broadcast %3 : f32 to vector<1x128xf32>
    %5 = arith.addf %2, %4 : vector<1x128xf32>
    %c0_4 = arith.constant 0 : index
    %c0_5 = arith.constant 0 : index
    %6 = vector.load %arg4[%c0_4, %c0_5] : memref<1x128xf32, #tpu.memory_space<vmem>>, vector<1x128xf32>
    tpu.vector_store %arg4[%c0_4, %c0_5], %5 {strides = array<i32>} : memref<1x128xf32, #tpu.memory_space<vmem>>, vector<1x128xf32>,
    return
  }
  func.func @transform_0(%arg0: i32) -> i32 {
    %c0_i32 = arith.constant 0 : i32
    %c0_i32_0 = arith.constant 0 : i32
    return %c0_i32 : i32
  }
  func.func @transform_1(%arg0: i32) -> (i32, i32) {
    %c0_i32 = arith.constant 0 : i32
    %c0_i32_0 = arith.constant 0 : i32
    return %arg0, %c0_i32 : i32, i32
  }
  func.func @transform_2(%arg0: i32) -> (i32, i32) {
    %c0_i32 = arith.constant 0 : i32
    %c0_i32_0 = arith.constant 0 : i32
    %c0_i32_1 = arith.constant 0 : i32
    return %c0_i32, %c0_i32_0 : i32, i32
  }
  func.func @transform_3(%arg0: i32) -> (i32, i32) {
    %c0_i32 = arith.constant 0 : i32
    %c0_i32_0 = arith.constant 0 : i32
    return %arg0, %c0_i32 : i32, i32
  }
}

</mosaic_0001>

<llo_original>
// kernel: tpu_custom_call.1
$region0: #{tpu_custom_call.1}
  #allocation0 [shape = 'u32[]', space=smem, size = 0x4, offset = 0x4, fixed_abs, tag = 'smem constant byte address 0x4 - core index']
  #allocation1 [shape = 'u32[72,128]{1,0:T(1,128)}', space=vmem, size = 0x9000, scoped, tag = 'internal scratch']
  #allocation2 [shape = 'f32[1]{0:T(128)S(6)}', space=smem, size = 0x200, scoped, tag = 'scoped memory for tpu_custom_call.1']
  %s0 = inlined_call_operand.<no memory space> [shape: f32[1], index: 0, kind: input, shape index: {}]
  %s1 = inlined_call_operand.hbm [shape: f32[1,4096], index: 1, kind: input, shape index: {}]
  %s2 = inlined_call_operand.hbm [shape: f32[4096,128], index: 2, kind: input, shape index: {}]
  %s3 = inlined_call_operand.hbm [shape: f32[1,128], index: 3, kind: output, shape index: {}]
  %s4 = sld [smem:[#allocation0]]
  $region30: #{tpu_custom_call.1} parent=0
    _
  %s6 = ssub.s32 1, %s4
  %s7 = scalar_select 0, %s6, %s4
  %8 = sst [smem:[#allocation2]] %s0
  $region1: #{tpu_custom_call.1} parent=0
    #allocation3 [shape = 'u8[16384]{0}', space=vmem, size = 0x4000, scoped, tag = 'input window, operand 1, single buffered']
    #allocation4 [shape = 's32[1]{0}', space=sflag, size = 0x4, scoped, tag = 'scoped memory for tpu_custom_call.1']
    #allocation5 [shape = 's32[1]{0}', space=sflag, size = 0x4, scoped, tag = 'scoped memory for tpu_custom_call.1']
    #allocation6 [shape = 'u8[2097152]{0}', space=vmem, size = 0x200000, scoped, tag = 'input window, operand 2, single buffered']
    #allocation7 [shape = 's32[1]{0}', space=sflag, size = 0x4, scoped, tag = 'scoped memory for tpu_custom_call.1']
    #allocation8 [shape = 'u8[512]{0}', space=vmem, size = 0x400, scoped, tag = 'output window, operand 0, single buffered']
    %9 = vsyncpa [#allocation4], 0
    %10 = vsyncpa [#allocation7], 0
    %11 = vsyncpa [#allocation5], 0
    // Predicated region
    $region2: #{tpu_custom_call.1} parent=1 // pred_check
      _
    $region3: #{tpu_custom_call.1} parent=1 // pred_check_branch
      %13 = sbr.rel (0) target = $region5
    $region4: #{tpu_custom_call.1} parent=1 // pred_region
      _
    $region5: #{tpu_custom_call.1} parent=1 // pred_fallthru
      _
    // Predicated region
    $region6: #{tpu_custom_call.1} parent=1 // pred_check
      _
    $region7: #{tpu_custom_call.1} parent=1 // pred_check_branch
      %15 = sbr.rel (0) target = $region9
    $region8: #{tpu_custom_call.1} parent=1 // pred_region
      %17 = vsyncadd [#allocation4], 0
      %s19 = sshll.u32 %s1, 4
      %s20 = int_to_ptr.hbm [resolvable:$true] %s19
      %s21 = sshll.u32 [#allocation3], 4
      %s22 = int_to_ptr.vmem [resolvable:$true] %s21
      %24 = dma.hbm_to_vmem [thread:$0]  %s20, 512, %s22, [#allocation4]
    $region9: #{tpu_custom_call.1} parent=1 // pred_fallthru
      _
    // Predicated region
    $region10: #{tpu_custom_call.1} parent=1 // pred_check
      _
    $region11: #{tpu_custom_call.1} parent=1 // pred_check_branch
      %26 = sbr.rel (0) target = $region13
    $region12: #{tpu_custom_call.1} parent=1 // pred_region
      %28 = vsyncadd [#allocation7], 0
      %s29 = sshll.u32 %s2, 4
      %s30 = int_to_ptr.hbm [resolvable:$true] %s29
      %s31 = sshll.u32 [#allocation6], 4
      %s32 = int_to_ptr.vmem [resolvable:$true] %s31
      %37 = dma.hbm_to_vmem [thread:$0]  %s30, 65536, %s32, [#allocation7], 128, 128, 8
    $region13: #{tpu_custom_call.1} parent=1 // pred_fallthru
      _
    // Predicated region
    $region14: #{tpu_custom_call.1} parent=1 // pred_check
      _
    $region15: #{tpu_custom_call.1} parent=1 // pred_check_branch
      %39 = sbr.rel (0) target = $region17
    $region16: #{tpu_custom_call.1} parent=1 // pred_region
      %41 = dma.done [#allocation4], 512
    $region17: #{tpu_custom_call.1} parent=1 // pred_fallthru
      _
    // Predicated region
    $region18: #{tpu_custom_call.1} parent=1 // pred_check
      _
    $region19: #{tpu_custom_call.1} parent=1 // pred_check_branch
      %43 = sbr.rel (0) target = $region21
    $region20: #{tpu_custom_call.1} parent=1 // pred_region
      %45 = dma.done [#allocation7], 65536
    $region21: #{tpu_custom_call.1} parent=1 // pred_fallthru
      _
    %v46 = vld [vmem:[#allocation3] sm:$0xff]
    %v47 = vld [vmem:[#allocation3 + $0x8] sm:$0xff]
    %v48 = vld [vmem:[#allocation3 + $0x10] sm:$0xff]
    %v49 = vld [vmem:[#allocation3 + $0x18] sm:$0xff]
    %v50 = vld [vmem:[#allocation6] sm:$0xff]
    %v51 = vld [vmem:[#allocation6 + $0x8] sm:$0xff]
    %v52 = vld [vmem:[#allocation6 + $0x10] sm:$0xff]
    %v53 = vld [vmem:[#allocation6 + $0x18] sm:$0xff]
    %v54 = vld [vmem:[#allocation6 + $0x20] sm:$0xff]
    %v55 = vld [vmem:[#allocation6 + $0x28] sm:$0xff]
    %v56 = vld [vmem:[#allocation6 + $0x30] sm:$0xff]
    %v57 = vld [vmem:[#allocation6 + $0x38] sm:$0xff]
    %v58 = vld [vmem:[#allocation6 + $0x40] sm:$0xff]
    %v59 = vld [vmem:[#allocation6 + $0x48] sm:$0xff]
    %v60 = vld [vmem:[#allocation6 + $0x50] sm:$0xff]
    %v61 = vld [vmem:[#allocation6 + $0x58] sm:$0xff]
    %v62 = vld [vmem:[#allocation6 + $0x60] sm:$0xff]
    %v63 = vld [vmem:[#allocation6 + $0x68] sm:$0xff]
    %v64 = vld [vmem:[#allocation6 + $0x70] sm:$0xff]
    %v65 = vld [vmem:[#allocation6 + $0x78] sm:$0xff]
    %v66 = vld [vmem:[#allocation6 + $0x80] sm:$0xff]
    %v67 = vld [vmem:[#allocation6 + $0x88] sm:$0xff]
    %v68 = vld [vmem:[#allocation6 + $0x90] sm:$0xff]
    %v69 = vld [vmem:[#allocation6 + $0x98] sm:$0xff]
    %v70 = vld [vmem:[#allocation6 + $0xa0] sm:$0xff]
    %v71 = vld [vmem:[#allocation6 + $0xa8] sm:$0xff]
    %v72 = vld [vmem:[#allocation6 + $0xb0] sm:$0xff]
    %v73 = vld [vmem:[#allocation6 + $0xb8] sm:$0xff]
    %v74 = vld [vmem:[#allocation6 + $0xc0] sm:$0xff]
    %v75 = vld [vmem:[#allocation6 + $0xc8] sm:$0xff]
    %v76 = vld [vmem:[#allocation6 + $0xd0] sm:$0xff]
    %v77 = vld [vmem:[#allocation6 + $0xd8] sm:$0xff]
    %v78 = vld [vmem:[#allocation6 + $0xe0] sm:$0xff]
    %v79 = vld [vmem:[#allocation6 + $0xe8] sm:$0xff]
    %v80 = vld [vmem:[#allocation6 + $0xf0] sm:$0xff]
    %v81 = vld [vmem:[#allocation6 + $0xf8] sm:$0xff]
    %v82 = vld [vmem:[#allocation6 + $0x100] sm:$0xff]
    %v83 = vld [vmem:[#allocation6 + $0x108] sm:$0xff]
    %v84 = vld [vmem:[#allocation6 + $0x110] sm:$0xff]
    %v85 = vld [vmem:[#allocation6 + $0x118] sm:$0xff]
    %v86 = vld [vmem:[#allocation6 + $0x120] sm:$0xff]
    %v87 = vld [vmem:[#allocation6 + $0x128] sm:$0xff]
    %v88 = vld [vmem:[#allocation6 + $0x130] sm:$0xff]
    %v89 = vld [vmem:[#allocation6 + $0x138] sm:$0xff]
    %v90 = vld [vmem:[#allocation6 + $0x140] sm:$0xff]
    %v91 = vld [vmem:[#allocation6 + $0x148] sm:$0xff]
    %v92 = vld [vmem:[#allocation6 + $0x150] sm:$0xff]
    %v93 = vld [vmem:[#allocation6 + $0x158] sm:$0xff]
    %v94 = vld [vmem:[#allocation6 + $0x160] sm:$0xff]
    %v95 = vld [vmem:[#allocation6 + $0x168] sm:$0xff]
    %v96 = vld [vmem:[#allocation6 + $0x170] sm:$0xff]
    %v97 = vld [vmem:[#allocation6 + $0x178] sm:$0xff]
    %v98 = vld [vmem:[#allocation6 + $0x180] sm:$0xff]
    %v99 = vld [vmem:[#allocation6 + $0x188] sm:$0xff]
    %v100 = vld [vmem:[#allocation6 + $0x190] sm:$0xff]
    %v101 = vld [vmem:[#allocation6 + $0x198] sm:$0xff]
    %v102 = vld [vmem:[#allocation6 + $0x1a0] sm:$0xff]
    %v103 = vld [vmem:[#allocation6 + $0x1a8] sm:$0xff]
    %v104 = vld [vmem:[#allocation6 + $0x1b0] sm:$0xff]
    %v105 = vld [vmem:[#allocation6 + $0x1b8] sm:$0xff]
    %v106 = vld [vmem:[#allocation6 + $0x1c0] sm:$0xff]
    %v107 = vld [vmem:[#allocation6 + $0x1c8] sm:$0xff]
    %v108 = vld [vmem:[#allocation6 + $0x1d0] sm:$0xff]
    %v109 = vld [vmem:[#allocation6 + $0x1d8] sm:$0xff]
    %v110 = vld [vmem:[#allocation6 + $0x1e0] sm:$0xff]
    %v111 = vld [vmem:[#allocation6 + $0x1e8] sm:$0xff]
    %v112 = vld [vmem:[#allocation6 + $0x1f0] sm:$0xff]
    %v113 = vld [vmem:[#allocation6 + $0x1f8] sm:$0xff]
    %v114 = vld [vmem:[#allocation6 + $0x200] sm:$0xff]
    %v115 = vld [vmem:[#allocation6 + $0x208] sm:$0xff]
    %v116 = vld [vmem:[#allocation6 + $0x210] sm:$0xff]
    %v117 = vld [vmem:[#allocation6 + $0x218] sm:$0xff]
    %v118 = vld [vmem:[#allocation6 + $0x220] sm:$0xff]
    %v119 = vld [vmem:[#allocation6 + $0x228] sm:$0xff]
    %v120 = vld [vmem:[#allocation6 + $0x230] sm:$0xff]
    %v121 = vld [vmem:[#allocation6 + $0x238] sm:$0xff]
    %v122 = vld [vmem:[#allocation6 + $0x240] sm:$0xff]
    %v123 = vld [vmem:[#allocation6 + $0x248] sm:$0xff]
    %v124 = vld [vmem:[#allocation6 + $0x250] sm:$0xff]
    %v125 = vld [vmem:[#allocation6 + $0x258] sm:$0xff]
    %v126 = vld [vmem:[#allocation6 + $0x260] sm:$0xff]
    %v127 = vld [vmem:[#allocation6 + $0x268] sm:$0xff]
    %v128 = vld [vmem:[#allocation6 + $0x270] sm:$0xff]
    %v129 = vld [vmem:[#allocation6 + $0x278] sm:$0xff]
    %v130 = vld [vmem:[#allocation6 + $0x280] sm:$0xff]
    %v131 = vld [vmem:[#allocation6 + $0x288] sm:$0xff]
    %v132 = vld [vmem:[#allocation6 + $0x290] sm:$0xff]
    %v133 = vld [vmem:[#allocation6 + $0x298] sm:$0xff]
    %v134 = vld [vmem:[#allocation6 + $0x2a0] sm:$0xff]
    %v135 = vld [vmem:[#allocation6 + $0x2a8] sm:$0xff]
    %v136 = vld [vmem:[#allocation6 + $0x2b0] sm:$0xff]
    %v137 = vld [vmem:[#allocation6 + $0x2b8] sm:$0xff]
    %v138 = vld [vmem:[#allocation6 + $0x2c0] sm:$0xff]
    %v139 = vld [vmem:[#allocation6 + $0x2c8] sm:$0xff]
    %v140 = vld [vmem:[#allocation6 + $0x2d0] sm:$0xff]
    %v141 = vld [vmem:[#allocation6 + $0x2d8] sm:$0xff]
    %v142 = vld [vmem:[#allocation6 + $0x2e0] sm:$0xff]
    %v143 = vld [vmem:[#allocation6 + $0x2e8] sm:$0xff]
    %v144 = vld [vmem:[#allocation6 + $0x2f0] sm:$0xff]
    %v145 = vld [vmem:[#allocation6 + $0x2f8] sm:$0xff]
    %v146 = vld [vmem:[#allocation6 + $0x300] sm:$0xff]
    %v147 = vld [vmem:[#allocation6 + $0x308] sm:$0xff]
    %v148 = vld [vmem:[#allocation6 + $0x310] sm:$0xff]
    %v149 = vld [vmem:[#allocation6 + $0x318] sm:$0xff]
    %v150 = vld [vmem:[#allocation6 + $0x320] sm:$0xff]
    %v151 = vld [vmem:[#allocation6 + $0x328] sm:$0xff]
    %v152 = vld [vmem:[#allocation6 + $0x330] sm:$0xff]
    %v153 = vld [vmem:[#allocation6 + $0x338] sm:$0xff]
    %v154 = vld [vmem:[#allocation6 + $0x340] sm:$0xff]
    %v155 = vld [vmem:[#allocation6 + $0x348] sm:$0xff]
    %v156 = vld [vmem:[#allocation6 + $0x350] sm:$0xff]
    %v157 = vld [vmem:[#allocation6 + $0x358] sm:$0xff]
    %v158 = vld [vmem:[#allocation6 + $0x360] sm:$0xff]
    %v159 = vld [vmem:[#allocation6 + $0x368] sm:$0xff]
    %v160 = vld [vmem:[#allocation6 + $0x370] sm:$0xff]
    %v161 = vld [vmem:[#allocation6 + $0x378] sm:$0xff]
    %v162 = vld [vmem:[#allocation6 + $0x380] sm:$0xff]
    %v163 = vld [vmem:[#allocation6 + $0x388] sm:$0xff]
    %v164 = vld [vmem:[#allocation6 + $0x390] sm:$0xff]
    %v165 = vld [vmem:[#allocation6 + $0x398] sm:$0xff]
    %v166 = vld [vmem:[#allocation6 + $0x3a0] sm:$0xff]
    %v167 = vld [vmem:[#allocation6 + $0x3a8] sm:$0xff]
    %v168 = vld [vmem:[#allocation6 + $0x3b0] sm:$0xff]
    %v169 = vld [vmem:[#allocation6 + $0x3b8] sm:$0xff]
    %v170 = vld [vmem:[#allocation6 + $0x3c0] sm:$0xff]
    %v171 = vld [vmem:[#allocation6 + $0x3c8] sm:$0xff]
    %v172 = vld [vmem:[#allocation6 + $0x3d0] sm:$0xff]
    %v173 = vld [vmem:[#allocation6 + $0x3d8] sm:$0xff]
    %v174 = vld [vmem:[#allocation6 + $0x3e0] sm:$0xff]
    %v175 = vld [vmem:[#allocation6 + $0x3e8] sm:$0xff]
    %v176 = vld [vmem:[#allocation6 + $0x3f0] sm:$0xff]
    %v177 = vld [vmem:[#allocation6 + $0x3f8] sm:$0xff]
    %v178 = vld [vmem:[#allocation6 + $0x400] sm:$0xff]
    %v179 = vld [vmem:[#allocation6 + $0x408] sm:$0xff]
    %v180 = vld [vmem:[#allocation6 + $0x410] sm:$0xff]
    %v181 = vld [vmem:[#allocation6 + $0x418] sm:$0xff]
    %v182 = vld [vmem:[#allocation6 + $0x420] sm:$0xff]
    %v183 = vld [vmem:[#allocation6 + $0x428] sm:$0xff]
    %v184 = vld [vmem:[#allocation6 + $0x430] sm:$0xff]
    %v185 = vld [vmem:[#allocation6 + $0x438] sm:$0xff]
    %v186 = vld [vmem:[#allocation6 + $0x440] sm:$0xff]
    %v187 = vld [vmem:[#allocation6 + $0x448] sm:$0xff]
    %v188 = vld [vmem:[#allocation6 + $0x450] sm:$0xff]
    %v189 = vld [vmem:[#allocation6 + $0x458] sm:$0xff]
    %v190 = vld [vmem:[#allocation6 + $0x460] sm:$0xff]
    %v191 = vld [vmem:[#allocation6 + $0x468] sm:$0xff]
    %v192 = vld [vmem:[#allocation6 + $0x470] sm:$0xff]
    %v193 = vld [vmem:[#allocation6 + $0x478] sm:$0xff]
    %v194 = vld [vmem:[#allocation6 + $0x480] sm:$0xff]
    %v195 = vld [vmem:[#allocation6 + $0x488] sm:$0xff]
    %v196 = vld [vmem:[#allocation6 + $0x490] sm:$0xff]
    %v197 = vld [vmem:[#allocation6 + $0x498] sm:$0xff]
    %v198 = vld [vmem:[#allocation6 + $0x4a0] sm:$0xff]
    %v199 = vld [vmem:[#allocation6 + $0x4a8] sm:$0xff]
    %v200 = vld [vmem:[#allocation6 + $0x4b0] sm:$0xff]
    %v201 = vld [vmem:[#allocation6 + $0x4b8] sm:$0xff]
    %v202 = vld [vmem:[#allocation6 + $0x4c0] sm:$0xff]
    %v203 = vld [vmem:[#allocation6 + $0x4c8] sm:$0xff]
    %v204 = vld [vmem:[#allocation6 + $0x4d0] sm:$0xff]
    %v205 = vld [vmem:[#allocation6 + $0x4d8] sm:$0xff]
    %v206 = vld [vmem:[#allocation6 + $0x4e0] sm:$0xff]
    %v207 = vld [vmem:[#allocation6 + $0x4e8] sm:$0xff]
    %v208 = vld [vmem:[#allocation6 + $0x4f0] sm:$0xff]
    %v209 = vld [vmem:[#allocation6 + $0x4f8] sm:$0xff]
    %v210 = vld [vmem:[#allocation6 + $0x500] sm:$0xff]
    %v211 = vld [vmem:[#allocation6 + $0x508] sm:$0xff]
    %v212 = vld [vmem:[#allocation6 + $0x510] sm:$0xff]
    %v213 = vld [vmem:[#allocation6 + $0x518] sm:$0xff]
    %v214 = vld [vmem:[#allocation6 + $0x520] sm:$0xff]
    %v215 = vld [vmem:[#allocation6 + $0x528] sm:$0xff]
    %v216 = vld [vmem:[#allocation6 + $0x530] sm:$0xff]
    %v217 = vld [vmem:[#allocation6 + $0x538] sm:$0xff]
    %v218 = vld [vmem:[#allocation6 + $0x540] sm:$0xff]
    %v219 = vld [vmem:[#allocation6 + $0x548] sm:$0xff]
    %v220 = vld [vmem:[#allocation6 + $0x550] sm:$0xff]
    %v221 = vld [vmem:[#allocation6 + $0x558] sm:$0xff]
    %v222 = vld [vmem:[#allocation6 + $0x560] sm:$0xff]
    %v223 = vld [vmem:[#allocation6 + $0x568] sm:$0xff]
    %v224 = vld [vmem:[#allocation6 + $0x570] sm:$0xff]
    %v225 = vld [vmem:[#allocation6 + $0x578] sm:$0xff]
    %v226 = vld [vmem:[#allocation6 + $0x580] sm:$0xff]
    %v227 = vld [vmem:[#allocation6 + $0x588] sm:$0xff]
    %v228 = vld [vmem:[#allocation6 + $0x590] sm:$0xff]
    %v229 = vld [vmem:[#allocation6 + $0x598] sm:$0xff]
    %v230 = vld [vmem:[#allocation6 + $0x5a0] sm:$0xff]
    %v231 = vld [vmem:[#allocation6 + $0x5a8] sm:$0xff]
    %v232 = vld [vmem:[#allocation6 + $0x5b0] sm:$0xff]
    %v233 = vld [vmem:[#allocation6 + $0x5b8] sm:$0xff]
    %v234 = vld [vmem:[#allocation6 + $0x5c0] sm:$0xff]
    %v235 = vld [vmem:[#allocation6 + $0x5c8] sm:$0xff]
    %v236 = vld [vmem:[#allocation6 + $0x5d0] sm:$0xff]
    %v237 = vld [vmem:[#allocation6 + $0x5d8] sm:$0xff]
    %v238 = vld [vmem:[#allocation6 + $0x5e0] sm:$0xff]
    %v239 = vld [vmem:[#allocation6 + $0x5e8] sm:$0xff]
    %v240 = vld [vmem:[#allocation6 + $0x5f0] sm:$0xff]
    %v241 = vld [vmem:[#allocation6 + $0x5f8] sm:$0xff]
    %v242 = vld [vmem:[#allocation6 + $0x600] sm:$0xff]
    %v243 = vld [vmem:[#allocation6 + $0x608] sm:$0xff]
    %v244 = vld [vmem:[#allocation6 + $0x610] sm:$0xff]
    %v245 = vld [vmem:[#allocation6 + $0x618] sm:$0xff]
    %v246 = vld [vmem:[#allocation6 + $0x620] sm:$0xff]
    %v247 = vld [vmem:[#allocation6 + $0x628] sm:$0xff]
    %v248 = vld [vmem:[#allocation6 + $0x630] sm:$0xff]
    %v249 = vld [vmem:[#allocation6 + $0x638] sm:$0xff]
    %v250 = vld [vmem:[#allocation6 + $0x640] sm:$0xff]
    %v251 = vld [vmem:[#allocation6 + $0x648] sm:$0xff]
    %v252 = vld [vmem:[#allocation6 + $0x650] sm:$0xff]
    %v253 = vld [vmem:[#allocation6 + $0x658] sm:$0xff]
    %v254 = vld [vmem:[#allocation6 + $0x660] sm:$0xff]
    %v255 = vld [vmem:[#allocation6 + $0x668] sm:$0xff]
    %v256 = vld [vmem:[#allocation6 + $0x670] sm:$0xff]
    %v257 = vld [vmem:[#allocation6 + $0x678] sm:$0xff]
    %v258 = vld [vmem:[#allocation6 + $0x680] sm:$0xff]
    %v259 = vld [vmem:[#allocation6 + $0x688] sm:$0xff]
    %v260 = vld [vmem:[#allocation6 + $0x690] sm:$0xff]
    %v261 = vld [vmem:[#allocation6 + $0x698] sm:$0xff]
    %v262 = vld [vmem:[#allocation6 + $0x6a0] sm:$0xff]
    %v263 = vld [vmem:[#allocation6 + $0x6a8] sm:$0xff]
    %v264 = vld [vmem:[#allocation6 + $0x6b0] sm:$0xff]
    %v265 = vld [vmem:[#allocation6 + $0x6b8] sm:$0xff]
    %v266 = vld [vmem:[#allocation6 + $0x6c0] sm:$0xff]
    %v267 = vld [vmem:[#allocation6 + $0x6c8] sm:$0xff]
    %v268 = vld [vmem:[#allocation6 + $0x6d0] sm:$0xff]
    %v269 = vld [vmem:[#allocation6 + $0x6d8] sm:$0xff]
    %v270 = vld [vmem:[#allocation6 + $0x6e0] sm:$0xff]
    %v271 = vld [vmem:[#allocation6 + $0x6e8] sm:$0xff]
    %v272 = vld [vmem:[#allocation6 + $0x6f0] sm:$0xff]
    %v273 = vld [vmem:[#allocation6 + $0x6f8] sm:$0xff]
    %v274 = vld [vmem:[#allocation6 + $0x700] sm:$0xff]
    %v275 = vld [vmem:[#allocation6 + $0x708] sm:$0xff]
    %v276 = vld [vmem:[#allocation6 + $0x710] sm:$0xff]
    %v277 = vld [vmem:[#allocation6 + $0x718] sm:$0xff]
    %v278 = vld [vmem:[#allocation6 + $0x720] sm:$0xff]
    %v279 = vld [vmem:[#allocation6 + $0x728] sm:$0xff]
    %v280 = vld [vmem:[#allocation6 + $0x730] sm:$0xff]
    %v281 = vld [vmem:[#allocation6 + $0x738] sm:$0xff]
    %v282 = vld [vmem:[#allocation6 + $0x740] sm:$0xff]
    %v283 = vld [vmem:[#allocation6 + $0x748] sm:$0xff]
    %v284 = vld [vmem:[#allocation6 + $0x750] sm:$0xff]
    %v285 = vld [vmem:[#allocation6 + $0x758] sm:$0xff]
    %v286 = vld [vmem:[#allocation6 + $0x760] sm:$0xff]
    %v287 = vld [vmem:[#allocation6 + $0x768] sm:$0xff]
    %v288 = vld [vmem:[#allocation6 + $0x770] sm:$0xff]
    %v289 = vld [vmem:[#allocation6 + $0x778] sm:$0xff]
    %v290 = vld [vmem:[#allocation6 + $0x780] sm:$0xff]
    %v291 = vld [vmem:[#allocation6 + $0x788] sm:$0xff]
    %v292 = vld [vmem:[#allocation6 + $0x790] sm:$0xff]
    %v293 = vld [vmem:[#allocation6 + $0x798] sm:$0xff]
    %v294 = vld [vmem:[#allocation6 + $0x7a0] sm:$0xff]
    %v295 = vld [vmem:[#allocation6 + $0x7a8] sm:$0xff]
    %v296 = vld [vmem:[#allocation6 + $0x7b0] sm:$0xff]
    %v297 = vld [vmem:[#allocation6 + $0x7b8] sm:$0xff]
    %v298 = vld [vmem:[#allocation6 + $0x7c0] sm:$0xff]
    %v299 = vld [vmem:[#allocation6 + $0x7c8] sm:$0xff]
    %v300 = vld [vmem:[#allocation6 + $0x7d0] sm:$0xff]
    %v301 = vld [vmem:[#allocation6 + $0x7d8] sm:$0xff]
    %v302 = vld [vmem:[#allocation6 + $0x7e0] sm:$0xff]
    %v303 = vld [vmem:[#allocation6 + $0x7e8] sm:$0xff]
    %v304 = vld [vmem:[#allocation6 + $0x7f0] sm:$0xff]
    %v305 = vld [vmem:[#allocation6 + $0x7f8] sm:$0xff]
    %v306 = vld [vmem:[#allocation6 + $0x800] sm:$0xff]
    %v307 = vld [vmem:[#allocation6 + $0x808] sm:$0xff]
    %v308 = vld [vmem:[#allocation6 + $0x810] sm:$0xff]
    %v309 = vld [vmem:[#allocation6 + $0x818] sm:$0xff]
    %v310 = vld [vmem:[#allocation6 + $0x820] sm:$0xff]
    %v311 = vld [vmem:[#allocation6 + $0x828] sm:$0xff]
    %v312 = vld [vmem:[#allocation6 + $0x830] sm:$0xff]
    %v313 = vld [vmem:[#allocation6 + $0x838] sm:$0xff]
    %v314 = vld [vmem:[#allocation6 + $0x840] sm:$0xff]
    %v315 = vld [vmem:[#allocation6 + $0x848] sm:$0xff]
    %v316 = vld [vmem:[#allocation6 + $0x850] sm:$0xff]
    %v317 = vld [vmem:[#allocation6 + $0x858] sm:$0xff]
    %v318 = vld [vmem:[#allocation6 + $0x860] sm:$0xff]
    %v319 = vld [vmem:[#allocation6 + $0x868] sm:$0xff]
    %v320 = vld [vmem:[#allocation6 + $0x870] sm:$0xff]
    %v321 = vld [vmem:[#allocation6 + $0x878] sm:$0xff]
    %v322 = vld [vmem:[#allocation6 + $0x880] sm:$0xff]
    %v323 = vld [vmem:[#allocation6 + $0x888] sm:$0xff]
    %v324 = vld [vmem:[#allocation6 + $0x890] sm:$0xff]
    %v325 = vld [vmem:[#allocation6 + $0x898] sm:$0xff]
    %v326 = vld [vmem:[#allocation6 + $0x8a0] sm:$0xff]
    %v327 = vld [vmem:[#allocation6 + $0x8a8] sm:$0xff]
    %v328 = vld [vmem:[#allocation6 + $0x8b0] sm:$0xff]
    %v329 = vld [vmem:[#allocation6 + $0x8b8] sm:$0xff]
    %v330 = vld [vmem:[#allocation6 + $0x8c0] sm:$0xff]
    %v331 = vld [vmem:[#allocation6 + $0x8c8] sm:$0xff]
    %v332 = vld [vmem:[#allocation6 + $0x8d0] sm:$0xff]
    %v333 = vld [vmem:[#allocation6 + $0x8d8] sm:$0xff]
    %v334 = vld [vmem:[#allocation6 + $0x8e0] sm:$0xff]
    %v335 = vld [vmem:[#allocation6 + $0x8e8] sm:$0xff]
    %v336 = vld [vmem:[#allocation6 + $0x8f0] sm:$0xff]
    %v337 = vld [vmem:[#allocation6 + $0x8f8] sm:$0xff]
    %v338 = vld [vmem:[#allocation6 + $0x900] sm:$0xff]
    %v339 = vld [vmem:[#allocation6 + $0x908] sm:$0xff]
    %v340 = vld [vmem:[#allocation6 + $0x910] sm:$0xff]
    %v341 = vld [vmem:[#allocation6 + $0x918] sm:$0xff]
    %v342 = vld [vmem:[#allocation6 + $0x920] sm:$0xff]
    %v343 = vld [vmem:[#allocation6 + $0x928] sm:$0xff]
    %v344 = vld [vmem:[#allocation6 + $0x930] sm:$0xff]
    %v345 = vld [vmem:[#allocation6 + $0x938] sm:$0xff]
    %v346 = vld [vmem:[#allocation6 + $0x940] sm:$0xff]
    %v347 = vld [vmem:[#allocation6 + $0x948] sm:$0xff]
    %v348 = vld [vmem:[#allocation6 + $0x950] sm:$0xff]
    %v349 = vld [vmem:[#allocation6 + $0x958] sm:$0xff]
    %v350 = vld [vmem:[#allocation6 + $0x960] sm:$0xff]
    %v351 = vld [vmem:[#allocation6 + $0x968] sm:$0xff]
    %v352 = vld [vmem:[#allocation6 + $0x970] sm:$0xff]
    %v353 = vld [vmem:[#allocation6 + $0x978] sm:$0xff]
    %v354 = vld [vmem:[#allocation6 + $0x980] sm:$0xff]
    %v355 = vld [vmem:[#allocation6 + $0x988] sm:$0xff]
    %v356 = vld [vmem:[#allocation6 + $0x990] sm:$0xff]
    %v357 = vld [vmem:[#allocation6 + $0x998] sm:$0xff]
    %v358 = vld [vmem:[#allocation6 + $0x9a0] sm:$0xff]
    %v359 = vld [vmem:[#allocation6 + $0x9a8] sm:$0xff]
    %v360 = vld [vmem:[#allocation6 + $0x9b0] sm:$0xff]
    %v361 = vld [vmem:[#allocation6 + $0x9b8] sm:$0xff]
    %v362 = vld [vmem:[#allocation6 + $0x9c0] sm:$0xff]
    %v363 = vld [vmem:[#allocation6 + $0x9c8] sm:$0xff]
    %v364 = vld [vmem:[#allocation6 + $0x9d0] sm:$0xff]
    %v365 = vld [vmem:[#allocation6 + $0x9d8] sm:$0xff]
    %v366 = vld [vmem:[#allocation6 + $0x9e0] sm:$0xff]
    %v367 = vld [vmem:[#allocation6 + $0x9e8] sm:$0xff]
    %v368 = vld [vmem:[#allocation6 + $0x9f0] sm:$0xff]
    %v369 = vld [vmem:[#allocation6 + $0x9f8] sm:$0xff]
    %v370 = vld [vmem:[#allocation6 + $0xa00] sm:$0xff]
    %v371 = vld [vmem:[#allocation6 + $0xa08] sm:$0xff]
    %v372 = vld [vmem:[#allocation6 + $0xa10] sm:$0xff]
    %v373 = vld [vmem:[#allocation6 + $0xa18] sm:$0xff]
    %v374 = vld [vmem:[#allocation6 + $0xa20] sm:$0xff]
    %v375 = vld [vmem:[#allocation6 + $0xa28] sm:$0xff]
    %v376 = vld [vmem:[#allocation6 + $0xa30] sm:$0xff]
    %v377 = vld [vmem:[#allocation6 + $0xa38] sm:$0xff]
    %v378 = vld [vmem:[#allocation6 + $0xa40] sm:$0xff]
    %v379 = vld [vmem:[#allocation6 + $0xa48] sm:$0xff]
    %v380 = vld [vmem:[#allocation6 + $0xa50] sm:$0xff]
    %v381 = vld [vmem:[#allocation6 + $0xa58] sm:$0xff]
    %v382 = vld [vmem:[#allocation6 + $0xa60] sm:$0xff]
    %v383 = vld [vmem:[#allocation6 + $0xa68] sm:$0xff]
    %v384 = vld [vmem:[#allocation6 + $0xa70] sm:$0xff]
    %v385 = vld [vmem:[#allocation6 + $0xa78] sm:$0xff]
    %v386 = vld [vmem:[#allocation6 + $0xa80] sm:$0xff]
    %v387 = vld [vmem:[#allocation6 + $0xa88] sm:$0xff]
    %v388 = vld [vmem:[#allocation6 + $0xa90] sm:$0xff]
    %v389 = vld [vmem:[#allocation6 + $0xa98] sm:$0xff]
    %v390 = vld [vmem:[#allocation6 + $0xaa0] sm:$0xff]
    %v391 = vld [vmem:[#allocation6 + $0xaa8] sm:$0xff]
    %v392 = vld [vmem:[#allocation6 + $0xab0] sm:$0xff]
    %v393 = vld [vmem:[#allocation6 + $0xab8] sm:$0xff]
    %v394 = vld [vmem:[#allocation6 + $0xac0] sm:$0xff]
    %v395 = vld [vmem:[#allocation6 + $0xac8] sm:$0xff]
    %v396 = vld [vmem:[#allocation6 + $0xad0] sm:$0xff]
    %v397 = vld [vmem:[#allocation6 + $0xad8] sm:$0xff]
    %v398 = vld [vmem:[#allocation6 + $0xae0] sm:$0xff]
    %v399 = vld [vmem:[#allocation6 + $0xae8] sm:$0xff]
    %v400 = vld [vmem:[#allocation6 + $0xaf0] sm:$0xff]
    %v401 = vld [vmem:[#allocation6 + $0xaf8] sm:$0xff]
    %v402 = vld [vmem:[#allocation6 + $0xb00] sm:$0xff]
    %v403 = vld [vmem:[#allocation6 + $0xb08] sm:$0xff]
    %v404 = vld [vmem:[#allocation6 + $0xb10] sm:$0xff]
    %v405 = vld [vmem:[#allocation6 + $0xb18] sm:$0xff]
    %v406 = vld [vmem:[#allocation6 + $0xb20] sm:$0xff]
    %v407 = vld [vmem:[#allocation6 + $0xb28] sm:$0xff]
    %v408 = vld [vmem:[#allocation6 + $0xb30] sm:$0xff]
    %v409 = vld [vmem:[#allocation6 + $0xb38] sm:$0xff]
    %v410 = vld [vmem:[#allocation6 + $0xb40] sm:$0xff]
    %v411 = vld [vmem:[#allocation6 + $0xb48] sm:$0xff]
    %v412 = vld [vmem:[#allocation6 + $0xb50] sm:$0xff]
    %v413 = vld [vmem:[#allocation6 + $0xb58] sm:$0xff]
    %v414 = vld [vmem:[#allocation6 + $0xb60] sm:$0xff]
    %v415 = vld [vmem:[#allocation6 + $0xb68] sm:$0xff]
    %v416 = vld [vmem:[#allocation6 + $0xb70] sm:$0xff]
    %v417 = vld [vmem:[#allocation6 + $0xb78] sm:$0xff]
    %v418 = vld [vmem:[#allocation6 + $0xb80] sm:$0xff]
    %v419 = vld [vmem:[#allocation6 + $0xb88] sm:$0xff]
    %v420 = vld [vmem:[#allocation6 + $0xb90] sm:$0xff]
    %v421 = vld [vmem:[#allocation6 + $0xb98] sm:$0xff]
    %v422 = vld [vmem:[#allocation6 + $0xba0] sm:$0xff]
    %v423 = vld [vmem:[#allocation6 + $0xba8] sm:$0xff]
    %v424 = vld [vmem:[#allocation6 + $0xbb0] sm:$0xff]
    %v425 = vld [vmem:[#allocation6 + $0xbb8] sm:$0xff]
    %v426 = vld [vmem:[#allocation6 + $0xbc0] sm:$0xff]
    %v427 = vld [vmem:[#allocation6 + $0xbc8] sm:$0xff]
    %v428 = vld [vmem:[#allocation6 + $0xbd0] sm:$0xff]
    %v429 = vld [vmem:[#allocation6 + $0xbd8] sm:$0xff]
    %v430 = vld [vmem:[#allocation6 + $0xbe0] sm:$0xff]
    %v431 = vld [vmem:[#allocation6 + $0xbe8] sm:$0xff]
    %v432 = vld [vmem:[#allocation6 + $0xbf0] sm:$0xff]
    %v433 = vld [vmem:[#allocation6 + $0xbf8] sm:$0xff]
    %v434 = vld [vmem:[#allocation6 + $0xc00] sm:$0xff]
    %v435 = vld [vmem:[#allocation6 + $0xc08] sm:$0xff]
    %v436 = vld [vmem:[#allocation6 + $0xc10] sm:$0xff]
    %v437 = vld [vmem:[#allocation6 + $0xc18] sm:$0xff]
    %v438 = vld [vmem:[#allocation6 + $0xc20] sm:$0xff]
    %v439 = vld [vmem:[#allocation6 + $0xc28] sm:$0xff]
    %v440 = vld [vmem:[#allocation6 + $0xc30] sm:$0xff]
    %v441 = vld [vmem:[#allocation6 + $0xc38] sm:$0xff]
    %v442 = vld [vmem:[#allocation6 + $0xc40] sm:$0xff]
    %v443 = vld [vmem:[#allocation6 + $0xc48] sm:$0xff]
    %v444 = vld [vmem:[#allocation6 + $0xc50] sm:$0xff]
    %v445 = vld [vmem:[#allocation6 + $0xc58] sm:$0xff]
    %v446 = vld [vmem:[#allocation6 + $0xc60] sm:$0xff]
    %v447 = vld [vmem:[#allocation6 + $0xc68] sm:$0xff]
    %v448 = vld [vmem:[#allocation6 + $0xc70] sm:$0xff]
    %v449 = vld [vmem:[#allocation6 + $0xc78] sm:$0xff]
    %v450 = vld [vmem:[#allocation6 + $0xc80] sm:$0xff]
    %v451 = vld [vmem:[#allocation6 + $0xc88] sm:$0xff]
    %v452 = vld [vmem:[#allocation6 + $0xc90] sm:$0xff]
    %v453 = vld [vmem:[#allocation6 + $0xc98] sm:$0xff]
    %v454 = vld [vmem:[#allocation6 + $0xca0] sm:$0xff]
    %v455 = vld [vmem:[#allocation6 + $0xca8] sm:$0xff]
    %v456 = vld [vmem:[#allocation6 + $0xcb0] sm:$0xff]
    %v457 = vld [vmem:[#allocation6 + $0xcb8] sm:$0xff]
    %v458 = vld [vmem:[#allocation6 + $0xcc0] sm:$0xff]
    %v459 = vld [vmem:[#allocation6 + $0xcc8] sm:$0xff]
    %v460 = vld [vmem:[#allocation6 + $0xcd0] sm:$0xff]
    %v461 = vld [vmem:[#allocation6 + $0xcd8] sm:$0xff]
    %v462 = vld [vmem:[#allocation6 + $0xce0] sm:$0xff]
    %v463 = vld [vmem:[#allocation6 + $0xce8] sm:$0xff]
    %v464 = vld [vmem:[#allocation6 + $0xcf0] sm:$0xff]
    %v465 = vld [vmem:[#allocation6 + $0xcf8] sm:$0xff]
    %v466 = vld [vmem:[#allocation6 + $0xd00] sm:$0xff]
    %v467 = vld [vmem:[#allocation6 + $0xd08] sm:$0xff]
    %v468 = vld [vmem:[#allocation6 + $0xd10] sm:$0xff]
    %v469 = vld [vmem:[#allocation6 + $0xd18] sm:$0xff]
    %v470 = vld [vmem:[#allocation6 + $0xd20] sm:$0xff]
    %v471 = vld [vmem:[#allocation6 + $0xd28] sm:$0xff]
    %v472 = vld [vmem:[#allocation6 + $0xd30] sm:$0xff]
    %v473 = vld [vmem:[#allocation6 + $0xd38] sm:$0xff]
    %v474 = vld [vmem:[#allocation6 + $0xd40] sm:$0xff]
    %v475 = vld [vmem:[#allocation6 + $0xd48] sm:$0xff]
    %v476 = vld [vmem:[#allocation6 + $0xd50] sm:$0xff]
    %v477 = vld [vmem:[#allocation6 + $0xd58] sm:$0xff]
    %v478 = vld [vmem:[#allocation6 + $0xd60] sm:$0xff]
    %v479 = vld [vmem:[#allocation6 + $0xd68] sm:$0xff]
    %v480 = vld [vmem:[#allocation6 + $0xd70] sm:$0xff]
    %v481 = vld [vmem:[#allocation6 + $0xd78] sm:$0xff]
    %v482 = vld [vmem:[#allocation6 + $0xd80] sm:$0xff]
    %v483 = vld [vmem:[#allocation6 + $0xd88] sm:$0xff]
    %v484 = vld [vmem:[#allocation6 + $0xd90] sm:$0xff]
    %v485 = vld [vmem:[#allocation6 + $0xd98] sm:$0xff]
    %v486 = vld [vmem:[#allocation6 + $0xda0] sm:$0xff]
    %v487 = vld [vmem:[#allocation6 + $0xda8] sm:$0xff]
    %v488 = vld [vmem:[#allocation6 + $0xdb0] sm:$0xff]
    %v489 = vld [vmem:[#allocation6 + $0xdb8] sm:$0xff]
    %v490 = vld [vmem:[#allocation6 + $0xdc0] sm:$0xff]
    %v491 = vld [vmem:[#allocation6 + $0xdc8] sm:$0xff]
    %v492 = vld [vmem:[#allocation6 + $0xdd0] sm:$0xff]
    %v493 = vld [vmem:[#allocation6 + $0xdd8] sm:$0xff]
    %v494 = vld [vmem:[#allocation6 + $0xde0] sm:$0xff]
    %v495 = vld [vmem:[#allocation6 + $0xde8] sm:$0xff]
    %v496 = vld [vmem:[#allocation6 + $0xdf0] sm:$0xff]
    %v497 = vld [vmem:[#allocation6 + $0xdf8] sm:$0xff]
    %v498 = vld [vmem:[#allocation6 + $0xe00] sm:$0xff]
    %v499 = vld [vmem:[#allocation6 + $0xe08] sm:$0xff]
    %v500 = vld [vmem:[#allocation6 + $0xe10] sm:$0xff]
    %v501 = vld [vmem:[#allocation6 + $0xe18] sm:$0xff]
    %v502 = vld [vmem:[#allocation6 + $0xe20] sm:$0xff]
    %v503 = vld [vmem:[#allocation6 + $0xe28] sm:$0xff]
    %v504 = vld [vmem:[#allocation6 + $0xe30] sm:$0xff]
    %v505 = vld [vmem:[#allocation6 + $0xe38] sm:$0xff]
    %v506 = vld [vmem:[#allocation6 + $0xe40] sm:$0xff]
    %v507 = vld [vmem:[#allocation6 + $0xe48] sm:$0xff]
    %v508 = vld [vmem:[#allocation6 + $0xe50] sm:$0xff]
    %v509 = vld [vmem:[#allocation6 + $0xe58] sm:$0xff]
    %v510 = vld [vmem:[#allocation6 + $0xe60] sm:$0xff]
    %v511 = vld [vmem:[#allocation6 + $0xe68] sm:$0xff]
    %v512 = vld [vmem:[#allocation6 + $0xe70] sm:$0xff]
    %v513 = vld [vmem:[#allocation6 + $0xe78] sm:$0xff]
    %v514 = vld [vmem:[#allocation6 + $0xe80] sm:$0xff]
    %v515 = vld [vmem:[#allocation6 + $0xe88] sm:$0xff]
    %v516 = vld [vmem:[#allocation6 + $0xe90] sm:$0xff]
    %v517 = vld [vmem:[#allocation6 + $0xe98] sm:$0xff]
    %v518 = vld [vmem:[#allocation6 + $0xea0] sm:$0xff]
    %v519 = vld [vmem:[#allocation6 + $0xea8] sm:$0xff]
    %v520 = vld [vmem:[#allocation6 + $0xeb0] sm:$0xff]
    %v521 = vld [vmem:[#allocation6 + $0xeb8] sm:$0xff]
    %v522 = vld [vmem:[#allocation6 + $0xec0] sm:$0xff]
    %v523 = vld [vmem:[#allocation6 + $0xec8] sm:$0xff]
    %v524 = vld [vmem:[#allocation6 + $0xed0] sm:$0xff]
    %v525 = vld [vmem:[#allocation6 + $0xed8] sm:$0xff]
    %v526 = vld [vmem:[#allocation6 + $0xee0] sm:$0xff]
    %v527 = vld [vmem:[#allocation6 + $0xee8] sm:$0xff]
    %v528 = vld [vmem:[#allocation6 + $0xef0] sm:$0xff]
    %v529 = vld [vmem:[#allocation6 + $0xef8] sm:$0xff]
    %v530 = vld [vmem:[#allocation6 + $0xf00] sm:$0xff]
    %v531 = vld [vmem:[#allocation6 + $0xf08] sm:$0xff]
    %v532 = vld [vmem:[#allocation6 + $0xf10] sm:$0xff]
    %v533 = vld [vmem:[#allocation6 + $0xf18] sm:$0xff]
    %v534 = vld [vmem:[#allocation6 + $0xf20] sm:$0xff]
    %v535 = vld [vmem:[#allocation6 + $0xf28] sm:$0xff]
    %v536 = vld [vmem:[#allocation6 + $0xf30] sm:$0xff]
    %v537 = vld [vmem:[#allocation6 + $0xf38] sm:$0xff]
    %v538 = vld [vmem:[#allocation6 + $0xf40] sm:$0xff]
    %v539 = vld [vmem:[#allocation6 + $0xf48] sm:$0xff]
    %v540 = vld [vmem:[#allocation6 + $0xf50] sm:$0xff]
    %v541 = vld [vmem:[#allocation6 + $0xf58] sm:$0xff]
    %v542 = vld [vmem:[#allocation6 + $0xf60] sm:$0xff]
    %v543 = vld [vmem:[#allocation6 + $0xf68] sm:$0xff]
    %v544 = vld [vmem:[#allocation6 + $0xf70] sm:$0xff]
    %v545 = vld [vmem:[#allocation6 + $0xf78] sm:$0xff]
    %v546 = vld [vmem:[#allocation6 + $0xf80] sm:$0xff]
    %v547 = vld [vmem:[#allocation6 + $0xf88] sm:$0xff]
    %v548 = vld [vmem:[#allocation6 + $0xf90] sm:$0xff]
    %v549 = vld [vmem:[#allocation6 + $0xf98] sm:$0xff]
    %v550 = vld [vmem:[#allocation6 + $0xfa0] sm:$0xff]
    %v551 = vld [vmem:[#allocation6 + $0xfa8] sm:$0xff]
    %v552 = vld [vmem:[#allocation6 + $0xfb0] sm:$0xff]
    %v553 = vld [vmem:[#allocation6 + $0xfb8] sm:$0xff]
    %v554 = vld [vmem:[#allocation6 + $0xfc0] sm:$0xff]
    %v555 = vld [vmem:[#allocation6 + $0xfc8] sm:$0xff]
    %v556 = vld [vmem:[#allocation6 + $0xfd0] sm:$0xff]
    %v557 = vld [vmem:[#allocation6 + $0xfd8] sm:$0xff]
    %v558 = vld [vmem:[#allocation6 + $0xfe0] sm:$0xff]
    %v559 = vld [vmem:[#allocation6 + $0xfe8] sm:$0xff]
    %v560 = vld [vmem:[#allocation6 + $0xff0] sm:$0xff]
    %v561 = vld [vmem:[#allocation6 + $0xff8] sm:$0xff]
    %s562 = sld [smem:[#allocation2]]
    %v563 = vstv %s562
    %v568 = vperm.slane %v46, 0
    %v569 = vperm.slane %v46, 1
    %v570 = vperm.slane %v46, 2
    %v571 = vperm.slane %v46, 3
    %v572 = vperm.slane %v46, 4
    %v573 = vperm.slane %v46, 5
    %v574 = vperm.slane %v46, 6
    %v575 = vperm.slane %v46, 7
    %v576 = vperm.slane %v47, 0
    %v577 = vperm.slane %v47, 1
    %v578 = vperm.slane %v47, 2
    %v579 = vperm.slane %v47, 3
    %v580 = vperm.slane %v47, 4
    %v581 = vperm.slane %v47, 5
    %v582 = vperm.slane %v47, 6
    %v583 = vperm.slane %v47, 7
    %v584 = vperm.slane %v48, 0
    %v585 = vperm.slane %v48, 1
    %v586 = vperm.slane %v48, 2
    %v587 = vperm.slane %v48, 3
    %v588 = vperm.slane %v48, 4
    %v589 = vperm.slane %v48, 5
    %v590 = vperm.slane %v48, 6
    %v591 = vperm.slane %v48, 7
    %v592 = vperm.slane %v49, 0
    %v593 = vperm.slane %v49, 1
    %v594 = vperm.slane %v49, 2
    %v595 = vperm.slane %v49, 3
    %v596 = vperm.slane %v49, 4
    %v597 = vperm.slane %v49, 5
    %v598 = vperm.slane %v49, 6
    %v599 = vperm.slane %v49, 7
    %v632 = vand.u32 %v65, 4294901760
    %633 = vmatpush.msra.mxu0 %v632
    %v634 = vand.u32 %v64, 4294901760
    %635 = vmatpush.msra.mxu0 %v634
    %v636 = vand.u32 %v63, 4294901760
    %637 = vmatpush.msra.mxu0 %v636
    %v638 = vand.u32 %v62, 4294901760
    %639 = vmatpush.msra.mxu0 %v638
    %v640 = vand.u32 %v61, 4294901760
    %641 = vmatpush.msra.mxu0 %v640
    %v642 = vand.u32 %v60, 4294901760
    %643 = vmatpush.msra.mxu0 %v642
    %v644 = vand.u32 %v59, 4294901760
    %645 = vmatpush.msra.mxu0 %v644
    %v646 = vand.u32 %v58, 4294901760
    %647 = vmatpush.msra.mxu0 %v646
    %v648 = vand.u32 %v57, 4294901760
    %649 = vmatpush.msra.mxu0 %v648
    %v650 = vand.u32 %v56, 4294901760
    %651 = vmatpush.msra.mxu0 %v650
    %v652 = vand.u32 %v55, 4294901760
    %653 = vmatpush.msra.mxu0 %v652
    %v654 = vand.u32 %v54, 4294901760
    %655 = vmatpush.msra.mxu0 %v654
    %v656 = vand.u32 %v53, 4294901760
    %657 = vmatpush.msra.mxu0 %v656
    %v658 = vand.u32 %v52, 4294901760
    %659 = vmatpush.msra.mxu0 %v658
    %v660 = vand.u32 %v51, 4294901760
    %661 = vmatpush.msra.mxu0 %v660
    %v662 = vand.u32 %v50, 4294901760
    %663 = vmatpush.msra.mxu0 %v662
    %v664 = vand.u32 %v568, 4294901760
    %v665 = vsub.f32 %v568, %v664
    %v666 = vand.u32 %v665, 4294901760
    %v667 = vsub.f32 %v665, %v666
    %v668 = vand.u32 %v667, 4294901760
    %669 = vmatmul.f32.gmra.mxu0 %v668
    %v670 = vpop.f32.mrf.mxu0
    %v671 = vadd.f32 %v563, %v670
    %672 = vdwg.mxu0
    %v673 = vand.u32 %v65, 4294901760
    %v674 = vsub.f32 %v65, %v673
    %v675 = vand.u32 %v674, 4294901760
    %v676 = vsub.f32 %v674, %v675
    %v677 = vand.u32 %v676, 4294901760
    %678 = vmatpush.msra.mxu0 %v677
    %v679 = vand.u32 %v64, 4294901760
    %v680 = vsub.f32 %v64, %v679
    %v681 = vand.u32 %v680, 4294901760
    %v682 = vsub.f32 %v680, %v681
    %v683 = vand.u32 %v682, 4294901760
    %684 = vmatpush.msra.mxu0 %v683
    %v685 = vand.u32 %v63, 4294901760
    %v686 = vsub.f32 %v63, %v685
    %v687 = vand.u32 %v686, 4294901760
    %v688 = vsub.f32 %v686, %v687
    %v689 = vand.u32 %v688, 4294901760
    %690 = vmatpush.msra.mxu0 %v689
    %v691 = vand.u32 %v62, 4294901760
    %v692 = vsub.f32 %v62, %v691
    %v693 = vand.u32 %v692, 4294901760
    %v694 = vsub.f32 %v692, %v693
    %v695 = vand.u32 %v694, 4294901760
    %696 = vmatpush.msra.mxu0 %v695
    %v697 = vand.u32 %v61, 4294901760
    %v698 = vsub.f32 %v61, %v697
    %v699 = vand.u32 %v698, 4294901760
    %v700 = vsub.f32 %v698, %v699
    %v701 = vand.u32 %v700, 4294901760
    %702 = vmatpush.msra.mxu0 %v701
    %v703 = vand.u32 %v60, 4294901760
    %v704 = vsub.f32 %v60, %v703
    %v705 = vand.u32 %v704, 4294901760
    %v706 = vsub.f32 %v704, %v705
    %v707 = vand.u32 %v706, 4294901760
    %708 = vmatpush.msra.mxu0 %v707
    %v709 = vand.u32 %v59, 4294901760
    %v710 = vsub.f32 %v59, %v709
    %v711 = vand.u32 %v710, 4294901760
    %v712 = vsub.f32 %v710, %v711
    %v713 = vand.u32 %v712, 4294901760
    %714 = vmatpush.msra.mxu0 %v713
    %v715 = vand.u32 %v58, 4294901760
    %v716 = vsub.f32 %v58, %v715
    %v717 = vand.u32 %v716, 4294901760
    %v718 = vsub.f32 %v716, %v717
    %v719 = vand.u32 %v718, 4294901760
    %720 = vmatpush.msra.mxu0 %v719
    %v721 = vand.u32 %v57, 4294901760
    %v722 = vsub.f32 %v57, %v721
    %v723 = vand.u32 %v722, 4294901760
    %v724 = vsub.f32 %v722, %v723
    %v725 = vand.u32 %v724, 4294901760
    %726 = vmatpush.msra.mxu0 %v725
    %v727 = vand.u32 %v56, 4294901760
    %v728 = vsub.f32 %v56, %v727
    %v729 = vand.u32 %v728, 4294901760
    %v730 = vsub.f32 %v728, %v729
    %v731 = vand.u32 %v730, 4294901760
    %732 = vmatpush.msra.mxu0 %v731
    %v733 = vand.u32 %v55, 4294901760
    %v734 = vsub.f32 %v55, %v733
    %v735 = vand.u32 %v734, 4294901760
    %v736 = vsub.f32 %v734, %v735
    %v737 = vand.u32 %v736, 4294901760
    %738 = vmatpush.msra.mxu0 %v737
    %v739 = vand.u32 %v54, 4294901760
    %v740 = vsub.f32 %v54, %v739
    %v741 = vand.u32 %v740, 4294901760
    %v742 = vsub.f32 %v740, %v741
    %v743 = vand.u32 %v742, 4294901760
    %744 = vmatpush.msra.mxu0 %v743
    %v745 = vand.u32 %v53, 4294901760
    %v746 = vsub.f32 %v53, %v745
    %v747 = vand.u32 %v746, 4294901760
    %v748 = vsub.f32 %v746, %v747
    %v749 = vand.u32 %v748, 4294901760
    %750 = vmatpush.msra.mxu0 %v749
    %v751 = vand.u32 %v52, 4294901760
    %v752 = vsub.f32 %v52, %v751
    %v753 = vand.u32 %v752, 4294901760
    %v754 = vsub.f32 %v752, %v753
    %v755 = vand.u32 %v754, 4294901760
    %756 = vmatpush.msra.mxu0 %v755
    %v757 = vand.u32 %v51, 4294901760
    %v758 = vsub.f32 %v51, %v757
    %v759 = vand.u32 %v758, 4294901760
    %v760 = vsub.f32 %v758, %v759
    %v761 = vand.u32 %v760, 4294901760
    %762 = vmatpush.msra.mxu0 %v761
    %v763 = vand.u32 %v50, 4294901760
    %v764 = vsub.f32 %v50, %v763
    %v765 = vand.u32 %v764, 4294901760
    %v766 = vsub.f32 %v764, %v765
    %v767 = vand.u32 %v766, 4294901760
    %768 = vmatpush.msra.mxu0 %v767
    %v769 = vand.u32 %v568, 4294901760
    %770 = vmatmul.f32.gmra.mxu0 %v769
    %v771 = vpop.f32.mrf.mxu0
    %v772 = vadd.f32 %v671, %v771
    %773 = vdwg.mxu0
    %v774 = vand.u32 %v65, 4294901760
    %v775 = vsub.f32 %v65, %v774
    %776 = vmatpush.msra.mxu0 %v775
    %v777 = vand.u32 %v64, 4294901760
    %v778 = vsub.f32 %v64, %v777
    %779 = vmatpush.msra.mxu0 %v778
    %v780 = vand.u32 %v63, 4294901760
    %v781 = vsub.f32 %v63, %v780
    %782 = vmatpush.msra.mxu0 %v781
    %v783 = vand.u32 %v62, 4294901760
    %v784 = vsub.f32 %v62, %v783
    %785 = vmatpush.msra.mxu0 %v784
    %v786 = vand.u32 %v61, 4294901760
    %v787 = vsub.f32 %v61, %v786
    %788 = vmatpush.msra.mxu0 %v787
    %v789 = vand.u32 %v60, 4294901760
    %v790 = vsub.f32 %v60, %v789
    %791 = vmatpush.msra.mxu0 %v790
    %v792 = vand.u32 %v59, 4294901760
    %v793 = vsub.f32 %v59, %v792
    %794 = vmatpush.msra.mxu0 %v793
    %v795 = vand.u32 %v58, 4294901760
    %v796 = vsub.f32 %v58, %v795
    %797 = vmatpush.msra.mxu0 %v796
    %v798 = vand.u32 %v57, 4294901760
    %v799 = vsub.f32 %v57, %v798
    %800 = vmatpush.msra.mxu0 %v799
    %v801 = vand.u32 %v56, 4294901760
    %v802 = vsub.f32 %v56, %v801
    %803 = vmatpush.msra.mxu0 %v802
    %v804 = vand.u32 %v55, 4294901760
    %v805 = vsub.f32 %v55, %v804
    %806 = vmatpush.msra.mxu0 %v805
    %v807 = vand.u32 %v54, 4294901760
    %v808 = vsub.f32 %v54, %v807
    %809 = vmatpush.msra.mxu0 %v808
    %v810 = vand.u32 %v53, 4294901760
    %v811 = vsub.f32 %v53, %v810
    %812 = vmatpush.msra.mxu0 %v811
    %v813 = vand.u32 %v52, 4294901760
    %v814 = vsub.f32 %v52, %v813
    %815 = vmatpush.msra.mxu0 %v814
    %v816 = vand.u32 %v51, 4294901760
    %v817 = vsub.f32 %v51, %v816
    %818 = vmatpush.msra.mxu0 %v817
    %v819 = vand.u32 %v50, 4294901760
    %v820 = vsub.f32 %v50, %v819
    %821 = vmatpush.msra.mxu0 %v820
    %v822 = vand.u32 %v568, 4294901760
    %v823 = vsub.f32 %v568, %v822
    %824 = vmatmul.f32.gmra.mxu0 %v823
    %v825 = vpop.f32.mrf.mxu0
    %v826 = vadd.f32 %v772, %v825
    %827 = vdwg.mxu0
    %v828 = vand.u32 %v65, 4294901760
    %829 = vmatpush.msra.mxu0 %v828
    %v830 = vand.u32 %v64, 4294901760
    %831 = vmatpush.msra.mxu0 %v830
    %v832 = vand.u32 %v63, 4294901760
    %833 = vmatpush.msra.mxu0 %v832
    %v834 = vand.u32 %v62, 4294901760
    %835 = vmatpush.msra.mxu0 %v834
    %v836 = vand.u32 %v61, 4294901760
    %837 = vmatpush.msra.mxu0 %v836
    %v838 = vand.u32 %v60, 4294901760
    %839 = vmatpush.msra.mxu0 %v838
    %v840 = vand.u32 %v59, 4294901760
    %841 = vmatpush.msra.mxu0 %v840
    %v842 = vand.u32 %v58, 4294901760
    %843 = vmatpush.msra.mxu0 %v842
    %v844 = vand.u32 %v57, 4294901760
    %845 = vmatpush.msra.mxu0 %v844
    %v846 = vand.u32 %v56, 4294901760
    %847 = vmatpush.msra.mxu0 %v846
    %v848 = vand.u32 %v55, 4294901760
    %849 = vmatpush.msra.mxu0 %v848
    %v850 = vand.u32 %v54, 4294901760
    %851 = vmatpush.msra.mxu0 %v850
    %v852 = vand.u32 %v53, 4294901760
    %853 = vmatpush.msra.mxu0 %v852
    %v854 = vand.u32 %v52, 4294901760
    %855 = vmatpush.msra.mxu0 %v854
    %v856 = vand.u32 %v51, 4294901760
    %857 = vmatpush.msra.mxu0 %v856
    %v858 = vand.u32 %v50, 4294901760
    %859 = vmatpush.msra.mxu0 %v858
    %v860 = vand.u32 %v568, 4294901760
    %v861 = vsub.f32 %v568, %v860
    %v862 = vand.u32 %v861, 4294901760
    %863 = vmatmul.f32.gmra.mxu0 %v862
    %v864 = vpop.f32.mrf.mxu0
    %v865 = vadd.f32 %v826, %v864
    %866 = vdwg.mxu0
    %v867 = vand.u32 %v65, 4294901760
    %v868 = vsub.f32 %v65, %v867
    %v869 = vand.u32 %v868, 4294901760
    %870 = vmatpush.msra.mxu0 %v869
    %v871 = vand.u32 %v64, 4294901760
    %v872 = vsub.f32 %v64, %v871
    %v873 = vand.u32 %v872, 4294901760
    %874 = vmatpush.msra.mxu0 %v873
    %v875 = vand.u32 %v63, 4294901760
    %v876 = vsub.f32 %v63, %v875
    %v877 = vand.u32 %v876, 4294901760
    %878 = vmatpush.msra.mxu0 %v877
    %v879 = vand.u32 %v62, 4294901760
    %v880 = vsub.f32 %v62, %v879
    %v881 = vand.u32 %v880, 4294901760
    %882 = vmatpush.msra.mxu0 %v881
    %v883 = vand.u32 %v61, 4294901760
    %v884 = vsub.f32 %v61, %v883
    %v885 = vand.u32 %v884, 4294901760
    %886 = vmatpush.msra.mxu0 %v885
    %v887 = vand.u32 %v60, 4294901760
    %v888 = vsub.f32 %v60, %v887
    %v889 = vand.u32 %v888, 4294901760
    %890 = vmatpush.msra.mxu0 %v889
    %v891 = vand.u32 %v59, 4294901760
    %v892 = vsub.f32 %v59, %v891
    %v893 = vand.u32 %v892, 4294901760
    %894 = vmatpush.msra.mxu0 %v893
    %v895 = vand.u32 %v58, 4294901760
    %v896 = vsub.f32 %v58, %v895
    %v897 = vand.u32 %v896, 4294901760
    %898 = vmatpush.msra.mxu0 %v897
    %v899 = vand.u32 %v57, 4294901760
    %v900 = vsub.f32 %v57, %v899
    %v901 = vand.u32 %v900, 4294901760
    %902 = vmatpush.msra.mxu0 %v901
    %v903 = vand.u32 %v56, 4294901760
    %v904 = vsub.f32 %v56, %v903
    %v905 = vand.u32 %v904, 4294901760
    %906 = vmatpush.msra.mxu0 %v905
    %v907 = vand.u32 %v55, 4294901760
    %v908 = vsub.f32 %v55, %v907
    %v909 = vand.u32 %v908, 4294901760
    %910 = vmatpush.msra.mxu0 %v909
    %v911 = vand.u32 %v54, 4294901760
    %v912 = vsub.f32 %v54, %v911
    %v913 = vand.u32 %v912, 4294901760
    %914 = vmatpush.msra.mxu0 %v913
    %v915 = vand.u32 %v53, 4294901760
    %v916 = vsub.f32 %v53, %v915
    %v917 = vand.u32 %v916, 4294901760
    %918 = vmatpush.msra.mxu0 %v917
    %v919 = vand.u32 %v52, 4294901760
    %v920 = vsub.f32 %v52, %v919
    %v921 = vand.u32 %v920, 4294901760
    %922 = vmatpush.msra.mxu0 %v921
    %v923 = vand.u32 %v51, 4294901760
    %v924 = vsub.f32 %v51, %v923
    %v925 = vand.u32 %v924, 4294901760
    %926 = vmatpush.msra.mxu0 %v925
    %v927 = vand.u32 %v50, 4294901760
    %v928 = vsub.f32 %v50, %v927
    %v929 = vand.u32 %v928, 4294901760
    %930 = vmatpush.msra.mxu0 %v929
    %v931 = vand.u32 %v568, 4294901760
    %932 = vmatmul.f32.gmra.mxu0 %v931
    %v933 = vpop.f32.mrf.mxu0
    %v934 = vadd.f32 %v865, %v933
    %935 = vdwg.mxu0
    %v936 = vand.u32 %v65, 4294901760
    %937 = vmatpush.msra.mxu0 %v936
    %v938 = vand.u32 %v64, 4294901760
    %939 = vmatpush.msra.mxu0 %v938
    %v940 = vand.u32 %v63, 4294901760
    %941 = vmatpush.msra.mxu0 %v940
    %v942 = vand.u32 %v62, 4294901760
    %943 = vmatpush.msra.mxu0 %v942
    %v944 = vand.u32 %v61, 4294901760
    %945 = vmatpush.msra.mxu0 %v944
    %v946 = vand.u32 %v60, 4294901760
    %947 = vmatpush.msra.mxu0 %v946
    %v948 = vand.u32 %v59, 4294901760
    %949 = vmatpush.msra.mxu0 %v948
    %v950 = vand.u32 %v58, 4294901760
    %951 = vmatpush.msra.mxu0 %v950
    %v952 = vand.u32 %v57, 4294901760
    %953 = vmatpush.msra.mxu0 %v952
    %v954 = vand.u32 %v56, 4294901760
    %955 = vmatpush.msra.mxu0 %v954
    %v956 = vand.u32 %v55, 4294901760
    %957 = vmatpush.msra.mxu0 %v956
    %v958 = vand.u32 %v54, 4294901760
    %959 = vmatpush.msra.mxu0 %v958
    %v960 = vand.u32 %v53, 4294901760
    %961 = vmatpush.msra.mxu0 %v960
    %v962 = vand.u32 %v52, 4294901760
    %963 = vmatpush.msra.mxu0 %v962
    %v964 = vand.u32 %v51, 4294901760
    %965 = vmatpush.msra.mxu0 %v964
    %v966 = vand.u32 %v50, 4294901760
    %967 = vmatpush.msra.mxu0 %v966
    %v968 = vand.u32 %v568, 4294901760
    %969 = vmatmul.f32.gmra.mxu0 %v968
    %v970 = vpop.f32.mrf.mxu0
    %v971 = vadd.f32 %v934, %v970
    %972 = vdwg.mxu0
    %v973 = vand.u32 %v81, 4294901760
    %974 = vmatpush.msra.mxu0 %v973
    %v975 = vand.u32 %v80, 4294901760
    %976 = vmatpush.msra.mxu0 %v975
    %v977 = vand.u32 %v79, 4294901760
    %978 = vmatpush.msra.mxu0 %v977
    %v979 = vand.u32 %v78, 4294901760
    %980 = vmatpush.msra.mxu0 %v979
    %v981 = vand.u32 %v77, 4294901760
    %982 = vmatpush.msra.mxu0 %v981
    %v983 = vand.u32 %v76, 4294901760
    %984 = vmatpush.msra.mxu0 %v983
    %v985 = vand.u32 %v75, 4294901760
    %986 = vmatpush.msra.mxu0 %v985
    %v987 = vand.u32 %v74, 4294901760
    %988 = vmatpush.msra.mxu0 %v987
    %v989 = vand.u32 %v73, 4294901760
    %990 = vmatpush.msra.mxu0 %v989
    %v991 = vand.u32 %v72, 4294901760
    %992 = vmatpush.msra.mxu0 %v991
    %v993 = vand.u32 %v71, 4294901760
    %994 = vmatpush.msra.mxu0 %v993
    %v995 = vand.u32 %v70, 4294901760
    %996 = vmatpush.msra.mxu0 %v995
    %v997 = vand.u32 %v69, 4294901760
    %998 = vmatpush.msra.mxu0 %v997
    %v999 = vand.u32 %v68, 4294901760
    %1000 = vmatpush.msra.mxu0 %v999
    %v1001 = vand.u32 %v67, 4294901760
    %1002 = vmatpush.msra.mxu0 %v1001
    %v1003 = vand.u32 %v66, 4294901760
    %1004 = vmatpush.msra.mxu0 %v1003
    %v1005 = vand.u32 %v569, 4294901760
    %v1006 = vsub.f32 %v569, %v1005
    %v1007 = vand.u32 %v1006, 4294901760
    %v1008 = vsub.f32 %v1006, %v1007
    %v1009 = vand.u32 %v1008, 4294901760
    %1010 = vmatmul.f32.gmra.mxu0 %v1009
    %v1011 = vpop.f32.mrf.mxu0
    %v1012 = vadd.f32 %v971, %v1011
    %1013 = vdwg.mxu0
    %v1014 = vand.u32 %v81, 4294901760
    %v1015 = vsub.f32 %v81, %v1014
    %v1016 = vand.u32 %v1015, 4294901760
    %v1017 = vsub.f32 %v1015, %v1016
    %v1018 = vand.u32 %v1017, 4294901760
    %1019 = vmatpush.msra.mxu0 %v1018
    %v1020 = vand.u32 %v80, 4294901760
    %v1021 = vsub.f32 %v80, %v1020
    %v1022 = vand.u32 %v1021, 4294901760
    %v1023 = vsub.f32 %v1021, %v1022
    %v1024 = vand.u32 %v1023, 4294901760
    %1025 = vmatpush.msra.mxu0 %v1024
    %v1026 = vand.u32 %v79, 4294901760
    %v1027 = vsub.f32 %v79, %v1026
    %v1028 = vand.u32 %v1027, 4294901760
    %v1029 = vsub.f32 %v1027, %v1028
    %v1030 = vand.u32 %v1029, 4294901760
    %1031 = vmatpush.msra.mxu0 %v1030
    %v1032 = vand.u32 %v78, 4294901760
    %v1033 = vsub.f32 %v78, %v1032
    %v1034 = vand.u32 %v1033, 4294901760
    %v1035 = vsub.f32 %v1033, %v1034
    %v1036 = vand.u32 %v1035, 4294901760
    %1037 = vmatpush.msra.mxu0 %v1036
    %v1038 = vand.u32 %v77, 4294901760
    %v1039 = vsub.f32 %v77, %v1038
    %v1040 = vand.u32 %v1039, 4294901760
    %v1041 = vsub.f32 %v1039, %v1040
    %v1042 = vand.u32 %v1041, 4294901760
    %1043 = vmatpush.msra.mxu0 %v1042
    %v1044 = vand.u32 %v76, 4294901760
    %v1045 = vsub.f32 %v76, %v1044
    %v1046 = vand.u32 %v1045, 4294901760
    %v1047 = vsub.f32 %v1045, %v1046
    %v1048 = vand.u32 %v1047, 4294901760
    %1049 = vmatpush.msra.mxu0 %v1048
    %v1050 = vand.u32 %v75, 4294901760
    %v1051 = vsub.f32 %v75, %v1050
    %v1052 = vand.u32 %v1051, 4294901760
    %v1053 = vsub.f32 %v1051, %v1052
    %v1054 = vand.u32 %v1053, 4294901760
    %1055 = vmatpush.msra.mxu0 %v1054
    %v1056 = vand.u32 %v74, 4294901760
    %v1057 = vsub.f32 %v74, %v1056
    %v1058 = vand.u32 %v1057, 4294901760
    %v1059 = vsub.f32 %v1057, %v1058
    %v1060 = vand.u32 %v1059, 4294901760
    %1061 = vmatpush.msra.mxu0 %v1060
    %v1062 = vand.u32 %v73, 4294901760
    %v1063 = vsub.f32 %v73, %v1062
    %v1064 = vand.u32 %v1063, 4294901760
    %v1065 = vsub.f32 %v1063, %v1064
    %v1066 = vand.u32 %v1065, 4294901760
    %1067 = vmatpush.msra.mxu0 %v1066
    %v1068 = vand.u32 %v72, 4294901760
    %v1069 = vsub.f32 %v72, %v1068
    %v1070 = vand.u32 %v1069, 4294901760
    %v1071 = vsub.f32 %v1069, %v1070
    %v1072 = vand.u32 %v1071, 4294901760
    %1073 = vmatpush.msra.mxu0 %v1072
    %v1074 = vand.u32 %v71, 4294901760
    %v1075 = vsub.f32 %v71, %v1074
    %v1076 = vand.u32 %v1075, 4294901760
    %v1077 = vsub.f32 %v1075, %v1076
    %v1078 = vand.u32 %v1077, 4294901760
    %1079 = vmatpush.msra.mxu0 %v1078
    %v1080 = vand.u32 %v70, 4294901760
    %v1081 = vsub.f32 %v70, %v1080
    %v1082 = vand.u32 %v1081, 4294901760
    %v1083 = vsub.f32 %v1081, %v1082
    %v1084 = vand.u32 %v1083, 4294901760
    %1085 = vmatpush.msra.mxu0 %v1084
    %v1086 = vand.u32 %v69, 4294901760
    %v1087 = vsub.f32 %v69, %v1086
    %v1088 = vand.u32 %v1087, 4294901760
    %v1089 = vsub.f32 %v1087, %v1088
    %v1090 = vand.u32 %v1089, 4294901760
    %1091 = vmatpush.msra.mxu0 %v1090
    %v1092 = vand.u32 %v68, 4294901760
    %v1093 = vsub.f32 %v68, %v1092
    %v1094 = vand.u32 %v1093, 4294901760
    %v1095 = vsub.f32 %v1093, %v1094
    %v1096 = vand.u32 %v1095, 4294901760
    %1097 = vmatpush.msra.mxu0 %v1096
    %v1098 = vand.u32 %v67, 4294901760
    %v1099 = vsub.f32 %v67, %v1098
    %v1100 = vand.u32 %v1099, 4294901760
    %v1101 = vsub.f32 %v1099, %v1100
    %v1102 = vand.u32 %v1101, 4294901760
    %1103 = vmatpush.msra.mxu0 %v1102
    %v1104 = vand.u32 %v66, 4294901760
    %v1105 = vsub.f32 %v66, %v1104
    %v1106 = vand.u32 %v1105, 4294901760
    %v1107 = vsub.f32 %v1105, %v1106
    %v1108 = vand.u32 %v1107, 4294901760
    %1109 = vmatpush.msra.mxu0 %v1108
    %v1110 = vand.u32 %v569, 4294901760
    %1111 = vmatmul.f32.gmra.mxu0 %v1110
    %v1112 = vpop.f32.mrf.mxu0
    %v1113 = vadd.f32 %v1012, %v1112
    %1114 = vdwg.mxu0
    %v1115 = vand.u32 %v81, 4294901760
    %v1116 = vsub.f32 %v81, %v1115
    %1117 = vmatpush.msra.mxu0 %v1116
    %v1118 = vand.u32 %v80, 4294901760
    %v1119 = vsub.f32 %v80, %v1118
    %1120 = vmatpush.msra.mxu0 %v1119
    %v1121 = vand.u32 %v79, 4294901760
    %v1122 = vsub.f32 %v79, %v1121
    %1123 = vmatpush.msra.mxu0 %v1122
    %v1124 = vand.u32 %v78, 4294901760
    %v1125 = vsub.f32 %v78, %v1124
    %1126 = vmatpush.msra.mxu0 %v1125
    %v1127 = vand.u32 %v77, 4294901760
    %v1128 = vsub.f32 %v77, %v1127
    %1129 = vmatpush.msra.mxu0 %v1128
    %v1130 = vand.u32 %v76, 4294901760
    %v1131 = vsub.f32 %v76, %v1130
    %1132 = vmatpush.msra.mxu0 %v1131
    %v1133 = vand.u32 %v75, 4294901760
    %v1134 = vsub.f32 %v75, %v1133
    %1135 = vmatpush.msra.mxu0 %v1134
    %v1136 = vand.u32 %v74, 4294901760
    %v1137 = vsub.f32 %v74, %v1136
    %1138 = vmatpush.msra.mxu0 %v1137
    %v1139 = vand.u32 %v73, 4294901760
    %v1140 = vsub.f32 %v73, %v1139
    %1141 = vmatpush.msra.mxu0 %v1140
    %v1142 = vand.u32 %v72, 4294901760
    %v1143 = vsub.f32 %v72, %v1142
    %1144 = vmatpush.msra.mxu0 %v1143
    %v1145 = vand.u32 %v71, 4294901760
    %v1146 = vsub.f32 %v71, %v1145
    %1147 = vmatpush.msra.mxu0 %v1146
    %v1148 = vand.u32 %v70, 4294901760
    %v1149 = vsub.f32 %v70, %v1148
    %1150 = vmatpush.msra.mxu0 %v1149
    %v1151 = vand.u32 %v69, 4294901760
    %v1152 = vsub.f32 %v69, %v1151
    %1153 = vmatpush.msra.mxu0 %v1152
    %v1154 = vand.u32 %v68, 4294901760
    %v1155 = vsub.f32 %v68, %v1154
    %1156 = vmatpush.msra.mxu0 %v1155
    %v1157 = vand.u32 %v67, 4294901760
    %v1158 = vsub.f32 %v67, %v1157
    %1159 = vmatpush.msra.mxu0 %v1158
    %v1160 = vand.u32 %v66, 4294901760
    %v1161 = vsub.f32 %v66, %v1160
    %1162 = vmatpush.msra.mxu0 %v1161
    %v1163 = vand.u32 %v569, 4294901760
    %v1164 = vsub.f32 %v569, %v1163
    %1165 = vmatmul.f32.gmra.mxu0 %v1164
    %v1166 = vpop.f32.mrf.mxu0
    %v1167 = vadd.f32 %v1113, %v1166
    %1168 = vdwg.mxu0
    %v1169 = vand.u32 %v81, 4294901760
    %1170 = vmatpush.msra.mxu0 %v1169
    %v1171 = vand.u32 %v80, 4294901760
    %1172 = vmatpush.msra.mxu0 %v1171
    %v1173 = vand.u32 %v79, 4294901760
    %1174 = vmatpush.msra.mxu0 %v1173
    %v1175 = vand.u32 %v78, 4294901760
    %1176 = vmatpush.msra.mxu0 %v1175
    %v1177 = vand.u32 %v77, 4294901760
    %1178 = vmatpush.msra.mxu0 %v1177
    %v1179 = vand.u32 %v76, 4294901760
    %1180 = vmatpush.msra.mxu0 %v1179
    %v1181 = vand.u32 %v75, 4294901760
    %1182 = vmatpush.msra.mxu0 %v1181
    %v1183 = vand.u32 %v74, 4294901760
    %1184 = vmatpush.msra.mxu0 %v1183
    %v1185 = vand.u32 %v73, 4294901760
    %1186 = vmatpush.msra.mxu0 %v1185
    %v1187 = vand.u32 %v72, 4294901760
    %1188 = vmatpush.msra.mxu0 %v1187
    %v1189 = vand.u32 %v71, 4294901760
    %1190 = vmatpush.msra.mxu0 %v1189
    %v1191 = vand.u32 %v70, 4294901760
    %1192 = vmatpush.msra.mxu0 %v1191
    %v1193 = vand.u32 %v69, 4294901760
    %1194 = vmatpush.msra.mxu0 %v1193
    %v1195 = vand.u32 %v68, 4294901760
    %1196 = vmatpush.msra.mxu0 %v1195
    %v1197 = vand.u32 %v67, 4294901760
    %1198 = vmatpush.msra.mxu0 %v1197
    %v1199 = vand.u32 %v66, 4294901760
    %1200 = vmatpush.msra.mxu0 %v1199
    %v1201 = vand.u32 %v569, 4294901760
    %v1202 = vsub.f32 %v569, %v1201
    %v1203 = vand.u32 %v1202, 4294901760
    %1204 = vmatmul.f32.gmra.mxu0 %v1203
    %v1205 = vpop.f32.mrf.mxu0
    %v1206 = vadd.f32 %v1167, %v1205
    %1207 = vdwg.mxu0
    %v1208 = vand.u32 %v81, 4294901760
    %v1209 = vsub.f32 %v81, %v1208
    %v1210 = vand.u32 %v1209, 4294901760
    %1211 = vmatpush.msra.mxu0 %v1210
    %v1212 = vand.u32 %v80, 4294901760
    %v1213 = vsub.f32 %v80, %v1212
    %v1214 = vand.u32 %v1213, 4294901760
    %1215 = vmatpush.msra.mxu0 %v1214
    %v1216 = vand.u32 %v79, 4294901760
    %v1217 = vsub.f32 %v79, %v1216
    %v1218 = vand.u32 %v1217, 4294901760
    %1219 = vmatpush.msra.mxu0 %v1218
    %v1220 = vand.u32 %v78, 4294901760
    %v1221 = vsub.f32 %v78, %v1220
    %v1222 = vand.u32 %v1221, 4294901760
    %1223 = vmatpush.msra.mxu0 %v1222
    %v1224 = vand.u32 %v77, 4294901760
    %v1225 = vsub.f32 %v77, %v1224
    %v1226 = vand.u32 %v1225, 4294901760
    %1227 = vmatpush.msra.mxu0 %v1226
    %v1228 = vand.u32 %v76, 4294901760
    %v1229 = vsub.f32 %v76, %v1228
    %v1230 = vand.u32 %v1229, 4294901760
    %1231 = vmatpush.msra.mxu0 %v1230
    %v1232 = vand.u32 %v75, 4294901760
    %v1233 = vsub.f32 %v75, %v1232
    %v1234 = vand.u32 %v1233, 4294901760
    %1235 = vmatpush.msra.mxu0 %v1234
    %v1236 = vand.u32 %v74, 4294901760
    %v1237 = vsub.f32 %v74, %v1236
    %v1238 = vand.u32 %v1237, 4294901760
    %1239 = vmatpush.msra.mxu0 %v1238
    %v1240 = vand.u32 %v73, 4294901760
    %v1241 = vsub.f32 %v73, %v1240
    %v1242 = vand.u32 %v1241, 4294901760
    %1243 = vmatpush.msra.mxu0 %v1242
    %v1244 = vand.u32 %v72, 4294901760
    %v1245 = vsub.f32 %v72, %v1244
    %v1246 = vand.u32 %v1245, 4294901760
    %1247 = vmatpush.msra.mxu0 %v1246
    %v1248 = vand.u32 %v71, 4294901760
    %v1249 = vsub.f32 %v71, %v1248
    %v1250 = vand.u32 %v1249, 4294901760
    %1251 = vmatpush.msra.mxu0 %v1250
    %v1252 = vand.u32 %v70, 4294901760
    %v1253 = vsub.f32 %v70, %v1252
    %v1254 = vand.u32 %v1253, 4294901760
    %1255 = vmatpush.msra.mxu0 %v1254
    %v1256 = vand.u32 %v69, 4294901760
    %v1257 = vsub.f32 %v69, %v1256
    %v1258 = vand.u32 %v1257, 4294901760
    %1259 = vmatpush.msra.mxu0 %v1258
    %v1260 = vand.u32 %v68, 4294901760
    %v1261 = vsub.f32 %v68, %v1260
    %v1262 = vand.u32 %v1261, 4294901760
    %1263 = vmatpush.msra.mxu0 %v1262
    %v1264 = vand.u32 %v67, 4294901760
    %v1265 = vsub.f32 %v67, %v1264
    %v1266 = vand.u32 %v1265, 4294901760
    %1267 = vmatpush.msra.mxu0 %v1266
    %v1268 = vand.u32 %v66, 4294901760
    %v1269 = vsub.f32 %v66, %v1268
    %v1270 = vand.u32 %v1269, 4294901760
    %1271 = vmatpush.msra.mxu0 %v1270
    %v1272 = vand.u32 %v569, 4294901760
    %1273 = vmatmul.f32.gmra.mxu0 %v1272
    %v1274 = vpop.f32.mrf.mxu0
    %v1275 = vadd.f32 %v1206, %v1274
    %1276 = vdwg.mxu0
    %v1277 = vand.u32 %v81, 4294901760
    %1278 = vmatpush.msra.mxu0 %v1277
    %v1279 = vand.u32 %v80, 4294901760
    %1280 = vmatpush.msra.mxu0 %v1279
    %v1281 = vand.u32 %v79, 4294901760
    %1282 = vmatpush.msra.mxu0 %v1281
    %v1283 = vand.u32 %v78, 4294901760
    %1284 = vmatpush.msra.mxu0 %v1283
    %v1285 = vand.u32 %v77, 4294901760
    %1286 = vmatpush.msra.mxu0 %v1285
    %v1287 = vand.u32 %v76, 4294901760
    %1288 = vmatpush.msra.mxu0 %v1287
    %v1289 = vand.u32 %v75, 4294901760
    %1290 = vmatpush.msra.mxu0 %v1289
    %v1291 = vand.u32 %v74, 4294901760
    %1292 = vmatpush.msra.mxu0 %v1291
    %v1293 = vand.u32 %v73, 4294901760
    %1294 = vmatpush.msra.mxu0 %v1293
    %v1295 = vand.u32 %v72, 4294901760
    %1296 = vmatpush.msra.mxu0 %v1295
    %v1297 = vand.u32 %v71, 4294901760
    %1298 = vmatpush.msra.mxu0 %v1297
    %v1299 = vand.u32 %v70, 4294901760
    %1300 = vmatpush.msra.mxu0 %v1299
    %v1301 = vand.u32 %v69, 4294901760
    %1302 = vmatpush.msra.mxu0 %v1301
    %v1303 = vand.u32 %v68, 4294901760
    %1304 = vmatpush.msra.mxu0 %v1303
    %v1305 = vand.u32 %v67, 4294901760
    %1306 = vmatpush.msra.mxu0 %v1305
    %v1307 = vand.u32 %v66, 4294901760
    %1308 = vmatpush.msra.mxu0 %v1307
    %v1309 = vand.u32 %v569, 4294901760
    %1310 = vmatmul.f32.gmra.mxu0 %v1309
    %v1311 = vpop.f32.mrf.mxu0
    %v1312 = vadd.f32 %v1275, %v1311
    %1313 = vdwg.mxu0
    %v1314 = vand.u32 %v97, 4294901760
    %1315 = vmatpush.msra.mxu0 %v1314
    %v1316 = vand.u32 %v96, 4294901760
    %1317 = vmatpush.msra.mxu0 %v1316
    %v1318 = vand.u32 %v95, 4294901760
    %1319 = vmatpush.msra.mxu0 %v1318
    %v1320 = vand.u32 %v94, 4294901760
    %1321 = vmatpush.msra.mxu0 %v1320
    %v1322 = vand.u32 %v93, 4294901760
    %1323 = vmatpush.msra.mxu0 %v1322
    %v1324 = vand.u32 %v92, 4294901760
    %1325 = vmatpush.msra.mxu0 %v1324
    %v1326 = vand.u32 %v91, 4294901760
    %1327 = vmatpush.msra.mxu0 %v1326
    %v1328 = vand.u32 %v90, 4294901760
    %1329 = vmatpush.msra.mxu0 %v1328
    %v1330 = vand.u32 %v89, 4294901760
    %1331 = vmatpush.msra.mxu0 %v1330
    %v1332 = vand.u32 %v88, 4294901760
    %1333 = vmatpush.msra.mxu0 %v1332
    %v1334 = vand.u32 %v87, 4294901760
    %1335 = vmatpush.msra.mxu0 %v1334
    %v1336 = vand.u32 %v86, 4294901760
    %1337 = vmatpush.msra.mxu0 %v1336
    %v1338 = vand.u32 %v85, 4294901760
    %1339 = vmatpush.msra.mxu0 %v1338
    %v1340 = vand.u32 %v84, 4294901760
    %1341 = vmatpush.msra.mxu0 %v1340
    %v1342 = vand.u32 %v83, 4294901760
    %1343 = vmatpush.msra.mxu0 %v1342
    %v1344 = vand.u32 %v82, 4294901760
    %1345 = vmatpush.msra.mxu0 %v1344
    %v1346 = vand.u32 %v570, 4294901760
    %v1347 = vsub.f32 %v570, %v1346
    %v1348 = vand.u32 %v1347, 4294901760
    %v1349 = vsub.f32 %v1347, %v1348
    %v1350 = vand.u32 %v1349, 4294901760
    %1351 = vmatmul.f32.gmra.mxu0 %v1350
    %v1352 = vpop.f32.mrf.mxu0
    %v1353 = vadd.f32 %v1312, %v1352
    %1354 = vdwg.mxu0
    %v1355 = vand.u32 %v97, 4294901760
    %v1356 = vsub.f32 %v97, %v1355
    %v1357 = vand.u32 %v1356, 4294901760
    %v1358 = vsub.f32 %v1356, %v1357
    %v1359 = vand.u32 %v1358, 4294901760
    %1360 = vmatpush.msra.mxu0 %v1359
    %v1361 = vand.u32 %v96, 4294901760
    %v1362 = vsub.f32 %v96, %v1361
    %v1363 = vand.u32 %v1362, 4294901760
    %v1364 = vsub.f32 %v1362, %v1363
    %v1365 = vand.u32 %v1364, 4294901760
    %1366 = vmatpush.msra.mxu0 %v1365
    %v1367 = vand.u32 %v95, 4294901760
    %v1368 = vsub.f32 %v95, %v1367
    %v1369 = vand.u32 %v1368, 4294901760
    %v1370 = vsub.f32 %v1368, %v1369
    %v1371 = vand.u32 %v1370, 4294901760
    %1372 = vmatpush.msra.mxu0 %v1371
    %v1373 = vand.u32 %v94, 4294901760
    %v1374 = vsub.f32 %v94, %v1373
    %v1375 = vand.u32 %v1374, 4294901760
    %v1376 = vsub.f32 %v1374, %v1375
    %v1377 = vand.u32 %v1376, 4294901760
    %1378 = vmatpush.msra.mxu0 %v1377
    %v1379 = vand.u32 %v93, 4294901760
    %v1380 = vsub.f32 %v93, %v1379
    %v1381 = vand.u32 %v1380, 4294901760
    %v1382 = vsub.f32 %v1380, %v1381
    %v1383 = vand.u32 %v1382, 4294901760
    %1384 = vmatpush.msra.mxu0 %v1383
    %v1385 = vand.u32 %v92, 4294901760
    %v1386 = vsub.f32 %v92, %v1385
    %v1387 = vand.u32 %v1386, 4294901760
    %v1388 = vsub.f32 %v1386, %v1387
    %v1389 = vand.u32 %v1388, 4294901760
    %1390 = vmatpush.msra.mxu0 %v1389
    %v1391 = vand.u32 %v91, 4294901760
    %v1392 = vsub.f32 %v91, %v1391
    %v1393 = vand.u32 %v1392, 4294901760
    %v1394 = vsub.f32 %v1392, %v1393
    %v1395 = vand.u32 %v1394, 4294901760
    %1396 = vmatpush.msra.mxu0 %v1395
    %v1397 = vand.u32 %v90, 4294901760
    %v1398 = vsub.f32 %v90, %v1397
    %v1399 = vand.u32 %v1398, 4294901760
    %v1400 = vsub.f32 %v1398, %v1399
    %v1401 = vand.u32 %v1400, 4294901760
    %1402 = vmatpush.msra.mxu0 %v1401
    %v1403 = vand.u32 %v89, 4294901760
    %v1404 = vsub.f32 %v89, %v1403
    %v1405 = vand.u32 %v1404, 4294901760
    %v1406 = vsub.f32 %v1404, %v1405
    %v1407 = vand.u32 %v1406, 4294901760
    %1408 = vmatpush.msra.mxu0 %v1407
    %v1409 = vand.u32 %v88, 4294901760
    %v1410 = vsub.f32 %v88, %v1409
    %v1411 = vand.u32 %v1410, 4294901760
    %v1412 = vsub.f32 %v1410, %v1411
    %v1413 = vand.u32 %v1412, 4294901760
    %1414 = vmatpush.msra.mxu0 %v1413
    %v1415 = vand.u32 %v87, 4294901760
    %v1416 = vsub.f32 %v87, %v1415
    %v1417 = vand.u32 %v1416, 4294901760
    %v1418 = vsub.f32 %v1416, %v1417
    %v1419 = vand.u32 %v1418, 4294901760
    %1420 = vmatpush.msra.mxu0 %v1419
    %v1421 = vand.u32 %v86, 4294901760
    %v1422 = vsub.f32 %v86, %v1421
    %v1423 = vand.u32 %v1422, 4294901760
    %v1424 = vsub.f32 %v1422, %v1423
    %v1425 = vand.u32 %v1424, 4294901760
    %1426 = vmatpush.msra.mxu0 %v1425
    %v1427 = vand.u32 %v85, 4294901760
    %v1428 = vsub.f32 %v85, %v1427
    %v1429 = vand.u32 %v1428, 4294901760
    %v1430 = vsub.f32 %v1428, %v1429
    %v1431 = vand.u32 %v1430, 4294901760
    %1432 = vmatpush.msra.mxu0 %v1431
    %v1433 = vand.u32 %v84, 4294901760
    %v1434 = vsub.f32 %v84, %v1433
    %v1435 = vand.u32 %v1434, 4294901760
    %v1436 = vsub.f32 %v1434, %v1435
    %v1437 = vand.u32 %v1436, 4294901760
    %1438 = vmatpush.msra.mxu0 %v1437
    %v1439 = vand.u32 %v83, 4294901760
    %v1440 = vsub.f32 %v83, %v1439
    %v1441 = vand.u32 %v1440, 4294901760
    %v1442 = vsub.f32 %v1440, %v1441
    %v1443 = vand.u32 %v1442, 4294901760
    %1444 = vmatpush.msra.mxu0 %v1443
    %v1445 = vand.u32 %v82, 4294901760
    %v1446 = vsub.f32 %v82, %v1445
    %v1447 = vand.u32 %v1446, 4294901760
    %v1448 = vsub.f32 %v1446, %v1447
    %v1449 = vand.u32 %v1448, 4294901760
    %1450 = vmatpush.msra.mxu0 %v1449
    %v1451 = vand.u32 %v570, 4294901760
    %1452 = vmatmul.f32.gmra.mxu0 %v1451
    %v1453 = vpop.f32.mrf.mxu0
    %v1454 = vadd.f32 %v1353, %v1453
    %1455 = vdwg.mxu0
    %v1456 = vand.u32 %v97, 4294901760
    %v1457 = vsub.f32 %v97, %v1456
    %1458 = vmatpush.msra.mxu0 %v1457
    %v1459 = vand.u32 %v96, 4294901760
    %v1460 = vsub.f32 %v96, %v1459
    %1461 = vmatpush.msra.mxu0 %v1460
    %v1462 = vand.u32 %v95, 4294901760
    %v1463 = vsub.f32 %v95, %v1462
    %1464 = vmatpush.msra.mxu0 %v1463
    %v1465 = vand.u32 %v94, 4294901760
    %v1466 = vsub.f32 %v94, %v1465
    %1467 = vmatpush.msra.mxu0 %v1466
    %v1468 = vand.u32 %v93, 4294901760
    %v1469 = vsub.f32 %v93, %v1468
    %1470 = vmatpush.msra.mxu0 %v1469
    %v1471 = vand.u32 %v92, 4294901760
    %v1472 = vsub.f32 %v92, %v1471
    %1473 = vmatpush.msra.mxu0 %v1472
    %v1474 = vand.u32 %v91, 4294901760
    %v1475 = vsub.f32 %v91, %v1474
    %1476 = vmatpush.msra.mxu0 %v1475
    %v1477 = vand.u32 %v90, 4294901760
    %v1478 = vsub.f32 %v90, %v1477
    %1479 = vmatpush.msra.mxu0 %v1478
    %v1480 = vand.u32 %v89, 4294901760
    %v1481 = vsub.f32 %v89, %v1480
    %1482 = vmatpush.msra.mxu0 %v1481
    %v1483 = vand.u32 %v88, 4294901760
    %v1484 = vsub.f32 %v88, %v1483
    %1485 = vmatpush.msra.mxu0 %v1484
    %v1486 = vand.u32 %v87, 4294901760
    %v1487 = vsub.f32 %v87, %v1486
    %1488 = vmatpush.msra.mxu0 %v1487
    %v1489 = vand.u32 %v86, 4294901760
    %v1490 = vsub.f32 %v86, %v1489
    %1491 = vmatpush.msra.mxu0 %v1490
    %v1492 = vand.u32 %v85, 4294901760
    %v1493 = vsub.f32 %v85, %v1492
    %1494 = vmatpush.msra.mxu0 %v1493
    %v1495 = vand.u32 %v84, 4294901760
    %v1496 = vsub.f32 %v84, %v1495
    %1497 = vmatpush.msra.mxu0 %v1496
    %v1498 = vand.u32 %v83, 4294901760
    %v1499 = vsub.f32 %v83, %v1498
    %1500 = vmatpush.msra.mxu0 %v1499
    %v1501 = vand.u32 %v82, 4294901760
    %v1502 = vsub.f32 %v82, %v1501
    %1503 = vmatpush.msra.mxu0 %v1502
    %v1504 = vand.u32 %v570, 4294901760
    %v1505 = vsub.f32 %v570, %v1504
    %1506 = vmatmul.f32.gmra.mxu0 %v1505
    %v1507 = vpop.f32.mrf.mxu0
    %v1508 = vadd.f32 %v1454, %v1507
    %1509 = vdwg.mxu0
    %v1510 = vand.u32 %v97, 4294901760
    %1511 = vmatpush.msra.mxu0 %v1510
    %v1512 = vand.u32 %v96, 4294901760
    %1513 = vmatpush.msra.mxu0 %v1512
    %v1514 = vand.u32 %v95, 4294901760
    %1515 = vmatpush.msra.mxu0 %v1514
    %v1516 = vand.u32 %v94, 4294901760
    %1517 = vmatpush.msra.mxu0 %v1516
    %v1518 = vand.u32 %v93, 4294901760
    %1519 = vmatpush.msra.mxu0 %v1518
    %v1520 = vand.u32 %v92, 4294901760
    %1521 = vmatpush.msra.mxu0 %v1520
    %v1522 = vand.u32 %v91, 4294901760
    %1523 = vmatpush.msra.mxu0 %v1522
    %v1524 = vand.u32 %v90, 4294901760
    %1525 = vmatpush.msra.mxu0 %v1524
    %v1526 = vand.u32 %v89, 4294901760
    %1527 = vmatpush.msra.mxu0 %v1526
    %v1528 = vand.u32 %v88, 4294901760
    %1529 = vmatpush.msra.mxu0 %v1528
    %v1530 = vand.u32 %v87, 4294901760
    %1531 = vmatpush.msra.mxu0 %v1530
    %v1532 = vand.u32 %v86, 4294901760
    %1533 = vmatpush.msra.mxu0 %v1532
    %v1534 = vand.u32 %v85, 4294901760
    %1535 = vmatpush.msra.mxu0 %v1534
    %v1536 = vand.u32 %v84, 4294901760
    %1537 = vmatpush.msra.mxu0 %v1536
    %v1538 = vand.u32 %v83, 4294901760
    %1539 = vmatpush.msra.mxu0 %v1538
    %v1540 = vand.u32 %v82, 4294901760
    %1541 = vmatpush.msra.mxu0 %v1540
    %v1542 = vand.u32 %v570, 4294901760
    %v1543 = vsub.f32 %v570, %v1542
    %v1544 = vand.u32 %v1543, 4294901760
    %1545 = vmatmul.f32.gmra.mxu0 %v1544
    %v1546 = vpop.f32.mrf.mxu0
    %v1547 = vadd.f32 %v1508, %v1546
    %1548 = vdwg.mxu0
    %v1549 = vand.u32 %v97, 4294901760
    %v1550 = vsub.f32 %v97, %v1549
    %v1551 = vand.u32 %v1550, 4294901760
    %1552 = vmatpush.msra.mxu0 %v1551
    %v1553 = vand.u32 %v96, 4294901760
    %v1554 = vsub.f32 %v96, %v1553
    %v1555 = vand.u32 %v1554, 4294901760
    %1556 = vmatpush.msra.mxu0 %v1555
    %v1557 = vand.u32 %v95, 4294901760
    %v1558 = vsub.f32 %v95, %v1557
    %v1559 = vand.u32 %v1558, 4294901760
    %1560 = vmatpush.msra.mxu0 %v1559
    %v1561 = vand.u32 %v94, 4294901760
    %v1562 = vsub.f32 %v94, %v1561
    %v1563 = vand.u32 %v1562, 4294901760
    %1564 = vmatpush.msra.mxu0 %v1563
    %v1565 = vand.u32 %v93, 4294901760
    %v1566 = vsub.f32 %v93, %v1565
    %v1567 = vand.u32 %v1566, 4294901760
    %1568 = vmatpush.msra.mxu0 %v1567
    %v1569 = vand.u32 %v92, 4294901760
    %v1570 = vsub.f32 %v92, %v1569
    %v1571 = vand.u32 %v1570, 4294901760
    %1572 = vmatpush.msra.mxu0 %v1571
    %v1573 = vand.u32 %v91, 4294901760
    %v1574 = vsub.f32 %v91, %v1573
    %v1575 = vand.u32 %v1574, 4294901760
    %1576 = vmatpush.msra.mxu0 %v1575
    %v1577 = vand.u32 %v90, 4294901760
    %v1578 = vsub.f32 %v90, %v1577
    %v1579 = vand.u32 %v1578, 4294901760
    %1580 = vmatpush.msra.mxu0 %v1579
    %v1581 = vand.u32 %v89, 4294901760
    %v1582 = vsub.f32 %v89, %v1581
    %v1583 = vand.u32 %v1582, 4294901760
    %1584 = vmatpush.msra.mxu0 %v1583
    %v1585 = vand.u32 %v88, 4294901760
    %v1586 = vsub.f32 %v88, %v1585
    %v1587 = vand.u32 %v1586, 4294901760
    %1588 = vmatpush.msra.mxu0 %v1587
    %v1589 = vand.u32 %v87, 4294901760
    %v1590 = vsub.f32 %v87, %v1589
    %v1591 = vand.u32 %v1590, 4294901760
    %1592 = vmatpush.msra.mxu0 %v1591
    %v1593 = vand.u32 %v86, 4294901760
    %v1594 = vsub.f32 %v86, %v1593
    %v1595 = vand.u32 %v1594, 4294901760
    %1596 = vmatpush.msra.mxu0 %v1595
    %v1597 = vand.u32 %v85, 4294901760
    %v1598 = vsub.f32 %v85, %v1597
    %v1599 = vand.u32 %v1598, 4294901760
    %1600 = vmatpush.msra.mxu0 %v1599
    %v1601 = vand.u32 %v84, 4294901760
    %v1602 = vsub.f32 %v84, %v1601
    %v1603 = vand.u32 %v1602, 4294901760
    %1604 = vmatpush.msra.mxu0 %v1603
    %v1605 = vand.u32 %v83, 4294901760
    %v1606 = vsub.f32 %v83, %v1605
    %v1607 = vand.u32 %v1606, 4294901760
    %1608 = vmatpush.msra.mxu0 %v1607
    %v1609 = vand.u32 %v82, 4294901760
    %v1610 = vsub.f32 %v82, %v1609
    %v1611 = vand.u32 %v1610, 4294901760
    %1612 = vmatpush.msra.mxu0 %v1611
    %v1613 = vand.u32 %v570, 4294901760
    %1614 = vmatmul.f32.gmra.mxu0 %v1613
    %v1615 = vpop.f32.mrf.mxu0
    %v1616 = vadd.f32 %v1547, %v1615
    %1617 = vdwg.mxu0
    %v1618 = vand.u32 %v97, 4294901760
    %1619 = vmatpush.msra.mxu0 %v1618
    %v1620 = vand.u32 %v96, 4294901760
    %1621 = vmatpush.msra.mxu0 %v1620
    %v1622 = vand.u32 %v95, 4294901760
    %1623 = vmatpush.msra.mxu0 %v1622
    %v1624 = vand.u32 %v94, 4294901760
    %1625 = vmatpush.msra.mxu0 %v1624
    %v1626 = vand.u32 %v93, 4294901760
    %1627 = vmatpush.msra.mxu0 %v1626
    %v1628 = vand.u32 %v92, 4294901760
    %1629 = vmatpush.msra.mxu0 %v1628
    %v1630 = vand.u32 %v91, 4294901760
    %1631 = vmatpush.msra.mxu0 %v1630
    %v1632 = vand.u32 %v90, 4294901760
    %1633 = vmatpush.msra.mxu0 %v1632
    %v1634 = vand.u32 %v89, 4294901760
    %1635 = vmatpush.msra.mxu0 %v1634
    %v1636 = vand.u32 %v88, 4294901760
    %1637 = vmatpush.msra.mxu0 %v1636
    %v1638 = vand.u32 %v87, 4294901760
    %1639 = vmatpush.msra.mxu0 %v1638
    %v1640 = vand.u32 %v86, 4294901760
    %1641 = vmatpush.msra.mxu0 %v1640
    %v1642 = vand.u32 %v85, 4294901760
    %1643 = vmatpush.msra.mxu0 %v1642
    %v1644 = vand.u32 %v84, 4294901760
    %1645 = vmatpush.msra.mxu0 %v1644
    %v1646 = vand.u32 %v83, 4294901760
    %1647 = vmatpush.msra.mxu0 %v1646
    %v1648 = vand.u32 %v82, 4294901760
    %1649 = vmatpush.msra.mxu0 %v1648
    %v1650 = vand.u32 %v570, 4294901760
    %1651 = vmatmul.f32.gmra.mxu0 %v1650
    %v1652 = vpop.f32.mrf.mxu0
    %v1653 = vadd.f32 %v1616, %v1652
    %1654 = vdwg.mxu0
    %v1655 = vand.u32 %v113, 4294901760
    %1656 = vmatpush.msra.mxu0 %v1655
    %v1657 = vand.u32 %v112, 4294901760
    %1658 = vmatpush.msra.mxu0 %v1657
    %v1659 = vand.u32 %v111, 4294901760
    %1660 = vmatpush.msra.mxu0 %v1659
    %v1661 = vand.u32 %v110, 4294901760
    %1662 = vmatpush.msra.mxu0 %v1661
    %v1663 = vand.u32 %v109, 4294901760
    %1664 = vmatpush.msra.mxu0 %v1663
    %v1665 = vand.u32 %v108, 4294901760
    %1666 = vmatpush.msra.mxu0 %v1665
    %v1667 = vand.u32 %v107, 4294901760
    %1668 = vmatpush.msra.mxu0 %v1667
    %v1669 = vand.u32 %v106, 4294901760
    %1670 = vmatpush.msra.mxu0 %v1669
    %v1671 = vand.u32 %v105, 4294901760
    %1672 = vmatpush.msra.mxu0 %v1671
    %v1673 = vand.u32 %v104, 4294901760
    %1674 = vmatpush.msra.mxu0 %v1673
    %v1675 = vand.u32 %v103, 4294901760
    %1676 = vmatpush.msra.mxu0 %v1675
    %v1677 = vand.u32 %v102, 4294901760
    %1678 = vmatpush.msra.mxu0 %v1677
    %v1679 = vand.u32 %v101, 4294901760
    %1680 = vmatpush.msra.mxu0 %v1679
    %v1681 = vand.u32 %v100, 4294901760
    %1682 = vmatpush.msra.mxu0 %v1681
    %v1683 = vand.u32 %v99, 4294901760
    %1684 = vmatpush.msra.mxu0 %v1683
    %v1685 = vand.u32 %v98, 4294901760
    %1686 = vmatpush.msra.mxu0 %v1685
    %v1687 = vand.u32 %v571, 4294901760
    %v1688 = vsub.f32 %v571, %v1687
    %v1689 = vand.u32 %v1688, 4294901760
    %v1690 = vsub.f32 %v1688, %v1689
    %v1691 = vand.u32 %v1690, 4294901760
    %1692 = vmatmul.f32.gmra.mxu0 %v1691
    %v1693 = vpop.f32.mrf.mxu0
    %v1694 = vadd.f32 %v1653, %v1693
    %1695 = vdwg.mxu0
    %v1696 = vand.u32 %v113, 4294901760
    %v1697 = vsub.f32 %v113, %v1696
    %v1698 = vand.u32 %v1697, 4294901760
    %v1699 = vsub.f32 %v1697, %v1698
    %v1700 = vand.u32 %v1699, 4294901760
    %1701 = vmatpush.msra.mxu0 %v1700
    %v1702 = vand.u32 %v112, 4294901760
    %v1703 = vsub.f32 %v112, %v1702
    %v1704 = vand.u32 %v1703, 4294901760
    %v1705 = vsub.f32 %v1703, %v1704
    %v1706 = vand.u32 %v1705, 4294901760
    %1707 = vmatpush.msra.mxu0 %v1706
    %v1708 = vand.u32 %v111, 4294901760
    %v1709 = vsub.f32 %v111, %v1708
    %v1710 = vand.u32 %v1709, 4294901760
    %v1711 = vsub.f32 %v1709, %v1710
    %v1712 = vand.u32 %v1711, 4294901760
    %1713 = vmatpush.msra.mxu0 %v1712
    %v1714 = vand.u32 %v110, 4294901760
    %v1715 = vsub.f32 %v110, %v1714
    %v1716 = vand.u32 %v1715, 4294901760
    %v1717 = vsub.f32 %v1715, %v1716
    %v1718 = vand.u32 %v1717, 4294901760
    %1719 = vmatpush.msra.mxu0 %v1718
    %v1720 = vand.u32 %v109, 4294901760
    %v1721 = vsub.f32 %v109, %v1720
    %v1722 = vand.u32 %v1721, 4294901760
    %v1723 = vsub.f32 %v1721, %v1722
    %v1724 = vand.u32 %v1723, 4294901760
    %1725 = vmatpush.msra.mxu0 %v1724
    %v1726 = vand.u32 %v108, 4294901760
    %v1727 = vsub.f32 %v108, %v1726
    %v1728 = vand.u32 %v1727, 4294901760
    %v1729 = vsub.f32 %v1727, %v1728
    %v1730 = vand.u32 %v1729, 4294901760
    %1731 = vmatpush.msra.mxu0 %v1730
    %v1732 = vand.u32 %v107, 4294901760
    %v1733 = vsub.f32 %v107, %v1732
    %v1734 = vand.u32 %v1733, 4294901760
    %v1735 = vsub.f32 %v1733, %v1734
    %v1736 = vand.u32 %v1735, 4294901760
    %1737 = vmatpush.msra.mxu0 %v1736
    %v1738 = vand.u32 %v106, 4294901760
    %v1739 = vsub.f32 %v106, %v1738
    %v1740 = vand.u32 %v1739, 4294901760
    %v1741 = vsub.f32 %v1739, %v1740
    %v1742 = vand.u32 %v1741, 4294901760
    %1743 = vmatpush.msra.mxu0 %v1742
    %v1744 = vand.u32 %v105, 4294901760
    %v1745 = vsub.f32 %v105, %v1744
    %v1746 = vand.u32 %v1745, 4294901760
    %v1747 = vsub.f32 %v1745, %v1746
    %v1748 = vand.u32 %v1747, 4294901760
    %1749 = vmatpush.msra.mxu0 %v1748
    %v1750 = vand.u32 %v104, 4294901760
    %v1751 = vsub.f32 %v104, %v1750
    %v1752 = vand.u32 %v1751, 4294901760
    %v1753 = vsub.f32 %v1751, %v1752
    %v1754 = vand.u32 %v1753, 4294901760
    %1755 = vmatpush.msra.mxu0 %v1754
    %v1756 = vand.u32 %v103, 4294901760
    %v1757 = vsub.f32 %v103, %v1756
    %v1758 = vand.u32 %v1757, 4294901760
    %v1759 = vsub.f32 %v1757, %v1758
    %v1760 = vand.u32 %v1759, 4294901760
    %1761 = vmatpush.msra.mxu0 %v1760
    %v1762 = vand.u32 %v102, 4294901760
    %v1763 = vsub.f32 %v102, %v1762
    %v1764 = vand.u32 %v1763, 4294901760
    %v1765 = vsub.f32 %v1763, %v1764
    %v1766 = vand.u32 %v1765, 4294901760
    %1767 = vmatpush.msra.mxu0 %v1766
    %v1768 = vand.u32 %v101, 4294901760
    %v1769 = vsub.f32 %v101, %v1768
    %v1770 = vand.u32 %v1769, 4294901760
    %v1771 = vsub.f32 %v1769, %v1770
    %v1772 = vand.u32 %v1771, 4294901760
    %1773 = vmatpush.msra.mxu0 %v1772
    %v1774 = vand.u32 %v100, 4294901760
    %v1775 = vsub.f32 %v100, %v1774
    %v1776 = vand.u32 %v1775, 4294901760
    %v1777 = vsub.f32 %v1775, %v1776
    %v1778 = vand.u32 %v1777, 4294901760
    %1779 = vmatpush.msra.mxu0 %v1778
    %v1780 = vand.u32 %v99, 4294901760
    %v1781 = vsub.f32 %v99, %v1780
    %v1782 = vand.u32 %v1781, 4294901760
    %v1783 = vsub.f32 %v1781, %v1782
    %v1784 = vand.u32 %v1783, 4294901760
    %1785 = vmatpush.msra.mxu0 %v1784
    %v1786 = vand.u32 %v98, 4294901760
    %v1787 = vsub.f32 %v98, %v1786
    %v1788 = vand.u32 %v1787, 4294901760
    %v1789 = vsub.f32 %v1787, %v1788
    %v1790 = vand.u32 %v1789, 4294901760
    %1791 = vmatpush.msra.mxu0 %v1790
    %v1792 = vand.u32 %v571, 4294901760
    %1793 = vmatmul.f32.gmra.mxu0 %v1792
    %v1794 = vpop.f32.mrf.mxu0
    %v1795 = vadd.f32 %v1694, %v1794
    %1796 = vdwg.mxu0
    %v1797 = vand.u32 %v113, 4294901760
    %v1798 = vsub.f32 %v113, %v1797
    %1799 = vmatpush.msra.mxu0 %v1798
    %v1800 = vand.u32 %v112, 4294901760
    %v1801 = vsub.f32 %v112, %v1800
    %1802 = vmatpush.msra.mxu0 %v1801
    %v1803 = vand.u32 %v111, 4294901760
    %v1804 = vsub.f32 %v111, %v1803
    %1805 = vmatpush.msra.mxu0 %v1804
    %v1806 = vand.u32 %v110, 4294901760
    %v1807 = vsub.f32 %v110, %v1806
    %1808 = vmatpush.msra.mxu0 %v1807
    %v1809 = vand.u32 %v109, 4294901760
    %v1810 = vsub.f32 %v109, %v1809
    %1811 = vmatpush.msra.mxu0 %v1810
    %v1812 = vand.u32 %v108, 4294901760
    %v1813 = vsub.f32 %v108, %v1812
    %1814 = vmatpush.msra.mxu0 %v1813
    %v1815 = vand.u32 %v107, 4294901760
    %v1816 = vsub.f32 %v107, %v1815
    %1817 = vmatpush.msra.mxu0 %v1816
    %v1818 = vand.u32 %v106, 4294901760
    %v1819 = vsub.f32 %v106, %v1818
    %1820 = vmatpush.msra.mxu0 %v1819
    %v1821 = vand.u32 %v105, 4294901760
    %v1822 = vsub.f32 %v105, %v1821
    %1823 = vmatpush.msra.mxu0 %v1822
    %v1824 = vand.u32 %v104, 4294901760
    %v1825 = vsub.f32 %v104, %v1824
    %1826 = vmatpush.msra.mxu0 %v1825
    %v1827 = vand.u32 %v103, 4294901760
    %v1828 = vsub.f32 %v103, %v1827
    %1829 = vmatpush.msra.mxu0 %v1828
    %v1830 = vand.u32 %v102, 4294901760
    %v1831 = vsub.f32 %v102, %v1830
    %1832 = vmatpush.msra.mxu0 %v1831
    %v1833 = vand.u32 %v101, 4294901760
    %v1834 = vsub.f32 %v101, %v1833
    %1835 = vmatpush.msra.mxu0 %v1834
    %v1836 = vand.u32 %v100, 4294901760
    %v1837 = vsub.f32 %v100, %v1836
    %1838 = vmatpush.msra.mxu0 %v1837
    %v1839 = vand.u32 %v99, 4294901760
    %v1840 = vsub.f32 %v99, %v1839
    %1841 = vmatpush.msra.mxu0 %v1840
    %v1842 = vand.u32 %v98, 4294901760
    %v1843 = vsub.f32 %v98, %v1842
    %1844 = vmatpush.msra.mxu0 %v1843
    %v1845 = vand.u32 %v571, 4294901760
    %v1846 = vsub.f32 %v571, %v1845
    %1847 = vmatmul.f32.gmra.mxu0 %v1846
    %v1848 = vpop.f32.mrf.mxu0
    %v1849 = vadd.f32 %v1795, %v1848
    %1850 = vdwg.mxu0
    %v1851 = vand.u32 %v113, 4294901760
    %1852 = vmatpush.msra.mxu0 %v1851
    %v1853 = vand.u32 %v112, 4294901760
    %1854 = vmatpush.msra.mxu0 %v1853
    %v1855 = vand.u32 %v111, 4294901760
    %1856 = vmatpush.msra.mxu0 %v1855
    %v1857 = vand.u32 %v110, 4294901760
    %1858 = vmatpush.msra.mxu0 %v1857
    %v1859 = vand.u32 %v109, 4294901760
    %1860 = vmatpush.msra.mxu0 %v1859
    %v1861 = vand.u32 %v108, 4294901760
    %1862 = vmatpush.msra.mxu0 %v1861
    %v1863 = vand.u32 %v107, 4294901760
    %1864 = vmatpush.msra.mxu0 %v1863
    %v1865 = vand.u32 %v106, 4294901760
    %1866 = vmatpush.msra.mxu0 %v1865
    %v1867 = vand.u32 %v105, 4294901760
    %1868 = vmatpush.msra.mxu0 %v1867
    %v1869 = vand.u32 %v104, 4294901760
    %1870 = vmatpush.msra.mxu0 %v1869
    %v1871 = vand.u32 %v103, 4294901760
    %1872 = vmatpush.msra.mxu0 %v1871
    %v1873 = vand.u32 %v102, 4294901760
    %1874 = vmatpush.msra.mxu0 %v1873
    %v1875 = vand.u32 %v101, 4294901760
    %1876 = vmatpush.msra.mxu0 %v1875
    %v1877 = vand.u32 %v100, 4294901760
    %1878 = vmatpush.msra.mxu0 %v1877
    %v1879 = vand.u32 %v99, 4294901760
    %1880 = vmatpush.msra.mxu0 %v1879
    %v1881 = vand.u32 %v98, 4294901760
    %1882 = vmatpush.msra.mxu0 %v1881
    %v1883 = vand.u32 %v571, 4294901760
    %v1884 = vsub.f32 %v571, %v1883
    %v1885 = vand.u32 %v1884, 4294901760
    %1886 = vmatmul.f32.gmra.mxu0 %v1885
    %v1887 = vpop.f32.mrf.mxu0
    %v1888 = vadd.f32 %v1849, %v1887
    %1889 = vdwg.mxu0
    %v1890 = vand.u32 %v113, 4294901760
    %v1891 = vsub.f32 %v113, %v1890
    %v1892 = vand.u32 %v1891, 4294901760
    %1893 = vmatpush.msra.mxu0 %v1892
    %v1894 = vand.u32 %v112, 4294901760
    %v1895 = vsub.f32 %v112, %v1894
    %v1896 = vand.u32 %v1895, 4294901760
    %1897 = vmatpush.msra.mxu0 %v1896
    %v1898 = vand.u32 %v111, 4294901760
    %v1899 = vsub.f32 %v111, %v1898
    %v1900 = vand.u32 %v1899, 4294901760
    %1901 = vmatpush.msra.mxu0 %v1900
    %v1902 = vand.u32 %v110, 4294901760
    %v1903 = vsub.f32 %v110, %v1902
    %v1904 = vand.u32 %v1903, 4294901760
    %1905 = vmatpush.msra.mxu0 %v1904
    %v1906 = vand.u32 %v109, 4294901760
    %v1907 = vsub.f32 %v109, %v1906
    %v1908 = vand.u32 %v1907, 4294901760
    %1909 = vmatpush.msra.mxu0 %v1908
    %v1910 = vand.u32 %v108, 4294901760
    %v1911 = vsub.f32 %v108, %v1910
    %v1912 = vand.u32 %v1911, 4294901760
    %1913 = vmatpush.msra.mxu0 %v1912
    %v1914 = vand.u32 %v107, 4294901760
    %v1915 = vsub.f32 %v107, %v1914
    %v1916 = vand.u32 %v1915, 4294901760
    %1917 = vmatpush.msra.mxu0 %v1916
    %v1918 = vand.u32 %v106, 4294901760
    %v1919 = vsub.f32 %v106, %v1918
    %v1920 = vand.u32 %v1919, 4294901760
    %1921 = vmatpush.msra.mxu0 %v1920
    %v1922 = vand.u32 %v105, 4294901760
    %v1923 = vsub.f32 %v105, %v1922
    %v1924 = vand.u32 %v1923, 4294901760
    %1925 = vmatpush.msra.mxu0 %v1924
    %v1926 = vand.u32 %v104, 4294901760
    %v1927 = vsub.f32 %v104, %v1926
    %v1928 = vand.u32 %v1927, 4294901760
    %1929 = vmatpush.msra.mxu0 %v1928
    %v1930 = vand.u32 %v103, 4294901760
    %v1931 = vsub.f32 %v103, %v1930
    %v1932 = vand.u32 %v1931, 4294901760
    %1933 = vmatpush.msra.mxu0 %v1932
    %v1934 = vand.u32 %v102, 4294901760
    %v1935 = vsub.f32 %v102, %v1934
    %v1936 = vand.u32 %v1935, 4294901760
    %1937 = vmatpush.msra.mxu0 %v1936
    %v1938 = vand.u32 %v101, 4294901760
    %v1939 = vsub.f32 %v101, %v1938
    %v1940 = vand.u32 %v1939, 4294901760
    %1941 = vmatpush.msra.mxu0 %v1940
    %v1942 = vand.u32 %v100, 4294901760
    %v1943 = vsub.f32 %v100, %v1942
    %v1944 = vand.u32 %v1943, 4294901760
    %1945 = vmatpush.msra.mxu0 %v1944
    %v1946 = vand.u32 %v99, 4294901760
    %v1947 = vsub.f32 %v99, %v1946
    %v1948 = vand.u32 %v1947, 4294901760
    %1949 = vmatpush.msra.mxu0 %v1948
    %v1950 = vand.u32 %v98, 4294901760
    %v1951 = vsub.f32 %v98, %v1950
    %v1952 = vand.u32 %v1951, 4294901760
    %1953 = vmatpush.msra.mxu0 %v1952
    %v1954 = vand.u32 %v571, 4294901760
    %1955 = vmatmul.f32.gmra.mxu0 %v1954
    %v1956 = vpop.f32.mrf.mxu0
    %v1957 = vadd.f32 %v1888, %v1956
    %1958 = vdwg.mxu0
    %v1959 = vand.u32 %v113, 4294901760
    %1960 = vmatpush.msra.mxu0 %v1959
    %v1961 = vand.u32 %v112, 4294901760
    %1962 = vmatpush.msra.mxu0 %v1961
    %v1963 = vand.u32 %v111, 4294901760
    %1964 = vmatpush.msra.mxu0 %v1963
    %v1965 = vand.u32 %v110, 4294901760
    %1966 = vmatpush.msra.mxu0 %v1965
    %v1967 = vand.u32 %v109, 4294901760
    %1968 = vmatpush.msra.mxu0 %v1967
    %v1969 = vand.u32 %v108, 4294901760
    %1970 = vmatpush.msra.mxu0 %v1969
    %v1971 = vand.u32 %v107, 4294901760
    %1972 = vmatpush.msra.mxu0 %v1971
    %v1973 = vand.u32 %v106, 4294901760
    %1974 = vmatpush.msra.mxu0 %v1973
    %v1975 = vand.u32 %v105, 4294901760
    %1976 = vmatpush.msra.mxu0 %v1975
    %v1977 = vand.u32 %v104, 4294901760
    %1978 = vmatpush.msra.mxu0 %v1977
    %v1979 = vand.u32 %v103, 4294901760
    %1980 = vmatpush.msra.mxu0 %v1979
    %v1981 = vand.u32 %v102, 4294901760
    %1982 = vmatpush.msra.mxu0 %v1981
    %v1983 = vand.u32 %v101, 4294901760
    %1984 = vmatpush.msra.mxu0 %v1983
    %v1985 = vand.u32 %v100, 4294901760
    %1986 = vmatpush.msra.mxu0 %v1985
    %v1987 = vand.u32 %v99, 4294901760
    %1988 = vmatpush.msra.mxu0 %v1987
    %v1989 = vand.u32 %v98, 4294901760
    %1990 = vmatpush.msra.mxu0 %v1989
    %v1991 = vand.u32 %v571, 4294901760
    %1992 = vmatmul.f32.gmra.mxu0 %v1991
    %v1993 = vpop.f32.mrf.mxu0
    %v1994 = vadd.f32 %v1957, %v1993
    %1995 = vdwg.mxu0
    %v1996 = vand.u32 %v129, 4294901760
    %1997 = vmatpush.msra.mxu0 %v1996
    %v1998 = vand.u32 %v128, 4294901760
    %1999 = vmatpush.msra.mxu0 %v1998
    %v2000 = vand.u32 %v127, 4294901760
    %2001 = vmatpush.msra.mxu0 %v2000
    %v2002 = vand.u32 %v126, 4294901760
    %2003 = vmatpush.msra.mxu0 %v2002
    %v2004 = vand.u32 %v125, 4294901760
    %2005 = vmatpush.msra.mxu0 %v2004
    %v2006 = vand.u32 %v124, 4294901760
    %2007 = vmatpush.msra.mxu0 %v2006
    %v2008 = vand.u32 %v123, 4294901760
    %2009 = vmatpush.msra.mxu0 %v2008
    %v2010 = vand.u32 %v122, 4294901760
    %2011 = vmatpush.msra.mxu0 %v2010
    %v2012 = vand.u32 %v121, 4294901760
    %2013 = vmatpush.msra.mxu0 %v2012
    %v2014 = vand.u32 %v120, 4294901760
    %2015 = vmatpush.msra.mxu0 %v2014
    %v2016 = vand.u32 %v119, 4294901760
    %2017 = vmatpush.msra.mxu0 %v2016
    %v2018 = vand.u32 %v118, 4294901760
    %2019 = vmatpush.msra.mxu0 %v2018
    %v2020 = vand.u32 %v117, 4294901760
    %2021 = vmatpush.msra.mxu0 %v2020
    %v2022 = vand.u32 %v116, 4294901760
    %2023 = vmatpush.msra.mxu0 %v2022
    %v2024 = vand.u32 %v115, 4294901760
    %2025 = vmatpush.msra.mxu0 %v2024
    %v2026 = vand.u32 %v114, 4294901760
    %2027 = vmatpush.msra.mxu0 %v2026
    %v2028 = vand.u32 %v572, 4294901760
    %v2029 = vsub.f32 %v572, %v2028
    %v2030 = vand.u32 %v2029, 4294901760
    %v2031 = vsub.f32 %v2029, %v2030
    %v2032 = vand.u32 %v2031, 4294901760
    %2033 = vmatmul.f32.gmra.mxu0 %v2032
    %v2034 = vpop.f32.mrf.mxu0
    %v2035 = vadd.f32 %v1994, %v2034
    %2036 = vdwg.mxu0
    %v2037 = vand.u32 %v129, 4294901760
    %v2038 = vsub.f32 %v129, %v2037
    %v2039 = vand.u32 %v2038, 4294901760
    %v2040 = vsub.f32 %v2038, %v2039
    %v2041 = vand.u32 %v2040, 4294901760
    %2042 = vmatpush.msra.mxu0 %v2041
    %v2043 = vand.u32 %v128, 4294901760
    %v2044 = vsub.f32 %v128, %v2043
    %v2045 = vand.u32 %v2044, 4294901760
    %v2046 = vsub.f32 %v2044, %v2045
    %v2047 = vand.u32 %v2046, 4294901760
    %2048 = vmatpush.msra.mxu0 %v2047
    %v2049 = vand.u32 %v127, 4294901760
    %v2050 = vsub.f32 %v127, %v2049
    %v2051 = vand.u32 %v2050, 4294901760
    %v2052 = vsub.f32 %v2050, %v2051
    %v2053 = vand.u32 %v2052, 4294901760
    %2054 = vmatpush.msra.mxu0 %v2053
    %v2055 = vand.u32 %v126, 4294901760
    %v2056 = vsub.f32 %v126, %v2055
    %v2057 = vand.u32 %v2056, 4294901760
    %v2058 = vsub.f32 %v2056, %v2057
    %v2059 = vand.u32 %v2058, 4294901760
    %2060 = vmatpush.msra.mxu0 %v2059
    %v2061 = vand.u32 %v125, 4294901760
    %v2062 = vsub.f32 %v125, %v2061
    %v2063 = vand.u32 %v2062, 4294901760
    %v2064 = vsub.f32 %v2062, %v2063
    %v2065 = vand.u32 %v2064, 4294901760
    %2066 = vmatpush.msra.mxu0 %v2065
    %v2067 = vand.u32 %v124, 4294901760
    %v2068 = vsub.f32 %v124, %v2067
    %v2069 = vand.u32 %v2068, 4294901760
    %v2070 = vsub.f32 %v2068, %v2069
    %v2071 = vand.u32 %v2070, 4294901760
    %2072 = vmatpush.msra.mxu0 %v2071
    %v2073 = vand.u32 %v123, 4294901760
    %v2074 = vsub.f32 %v123, %v2073
    %v2075 = vand.u32 %v2074, 4294901760
    %v2076 = vsub.f32 %v2074, %v2075
    %v2077 = vand.u32 %v2076, 4294901760
    %2078 = vmatpush.msra.mxu0 %v2077
    %v2079 = vand.u32 %v122, 4294901760
    %v2080 = vsub.f32 %v122, %v2079
    %v2081 = vand.u32 %v2080, 4294901760
    %v2082 = vsub.f32 %v2080, %v2081
    %v2083 = vand.u32 %v2082, 4294901760
    %2084 = vmatpush.msra.mxu0 %v2083
    %v2085 = vand.u32 %v121, 4294901760
    %v2086 = vsub.f32 %v121, %v2085
    %v2087 = vand.u32 %v2086, 4294901760
    %v2088 = vsub.f32 %v2086, %v2087
    %v2089 = vand.u32 %v2088, 4294901760
    %2090 = vmatpush.msra.mxu0 %v2089
    %v2091 = vand.u32 %v120, 4294901760
    %v2092 = vsub.f32 %v120, %v2091
    %v2093 = vand.u32 %v2092, 4294901760
    %v2094 = vsub.f32 %v2092, %v2093
    %v2095 = vand.u32 %v2094, 4294901760
    %2096 = vmatpush.msra.mxu0 %v2095
    %v2097 = vand.u32 %v119, 4294901760
    %v2098 = vsub.f32 %v119, %v2097
    %v2099 = vand.u32 %v2098, 4294901760
    %v2100 = vsub.f32 %v2098, %v2099
    %v2101 = vand.u32 %v2100, 4294901760
    %2102 = vmatpush.msra.mxu0 %v2101
    %v2103 = vand.u32 %v118, 4294901760
    %v2104 = vsub.f32 %v118, %v2103
    %v2105 = vand.u32 %v2104, 4294901760
    %v2106 = vsub.f32 %v2104, %v2105
    %v2107 = vand.u32 %v2106, 4294901760
    %2108 = vmatpush.msra.mxu0 %v2107
    %v2109 = vand.u32 %v117, 4294901760
    %v2110 = vsub.f32 %v117, %v2109
    %v2111 = vand.u32 %v2110, 4294901760
    %v2112 = vsub.f32 %v2110, %v2111
    %v2113 = vand.u32 %v2112, 4294901760
    %2114 = vmatpush.msra.mxu0 %v2113
    %v2115 = vand.u32 %v116, 4294901760
    %v2116 = vsub.f32 %v116, %v2115
    %v2117 = vand.u32 %v2116, 4294901760
    %v2118 = vsub.f32 %v2116, %v2117
    %v2119 = vand.u32 %v2118, 4294901760
    %2120 = vmatpush.msra.mxu0 %v2119
    %v2121 = vand.u32 %v115, 4294901760
    %v2122 = vsub.f32 %v115, %v2121
    %v2123 = vand.u32 %v2122, 4294901760
    %v2124 = vsub.f32 %v2122, %v2123
    %v2125 = vand.u32 %v2124, 4294901760
    %2126 = vmatpush.msra.mxu0 %v2125
    %v2127 = vand.u32 %v114, 4294901760
    %v2128 = vsub.f32 %v114, %v2127
    %v2129 = vand.u32 %v2128, 4294901760
    %v2130 = vsub.f32 %v2128, %v2129
    %v2131 = vand.u32 %v2130, 4294901760
    %2132 = vmatpush.msra.mxu0 %v2131
    %v2133 = vand.u32 %v572, 4294901760
    %2134 = vmatmul.f32.gmra.mxu0 %v2133
    %v2135 = vpop.f32.mrf.mxu0
    %v2136 = vadd.f32 %v2035, %v2135
    %2137 = vdwg.mxu0
    %v2138 = vand.u32 %v129, 4294901760
    %v2139 = vsub.f32 %v129, %v2138
    %2140 = vmatpush.msra.mxu0 %v2139
    %v2141 = vand.u32 %v128, 4294901760
    %v2142 = vsub.f32 %v128, %v2141
    %2143 = vmatpush.msra.mxu0 %v2142
    %v2144 = vand.u32 %v127, 4294901760
    %v2145 = vsub.f32 %v127, %v2144
    %2146 = vmatpush.msra.mxu0 %v2145
    %v2147 = vand.u32 %v126, 4294901760
    %v2148 = vsub.f32 %v126, %v2147
    %2149 = vmatpush.msra.mxu0 %v2148
    %v2150 = vand.u32 %v125, 4294901760
    %v2151 = vsub.f32 %v125, %v2150
    %2152 = vmatpush.msra.mxu0 %v2151
    %v2153 = vand.u32 %v124, 4294901760
    %v2154 = vsub.f32 %v124, %v2153
    %2155 = vmatpush.msra.mxu0 %v2154
    %v2156 = vand.u32 %v123, 4294901760
    %v2157 = vsub.f32 %v123, %v2156
    %2158 = vmatpush.msra.mxu0 %v2157
    %v2159 = vand.u32 %v122, 4294901760
    %v2160 = vsub.f32 %v122, %v2159
    %2161 = vmatpush.msra.mxu0 %v2160
    %v2162 = vand.u32 %v121, 4294901760
    %v2163 = vsub.f32 %v121, %v2162
    %2164 = vmatpush.msra.mxu0 %v2163
    %v2165 = vand.u32 %v120, 4294901760
    %v2166 = vsub.f32 %v120, %v2165
    %2167 = vmatpush.msra.mxu0 %v2166
    %v2168 = vand.u32 %v119, 4294901760
    %v2169 = vsub.f32 %v119, %v2168
    %2170 = vmatpush.msra.mxu0 %v2169
    %v2171 = vand.u32 %v118, 4294901760
    %v2172 = vsub.f32 %v118, %v2171
    %2173 = vmatpush.msra.mxu0 %v2172
    %v2174 = vand.u32 %v117, 4294901760
    %v2175 = vsub.f32 %v117, %v2174
    %2176 = vmatpush.msra.mxu0 %v2175
    %v2177 = vand.u32 %v116, 4294901760
    %v2178 = vsub.f32 %v116, %v2177
    %2179 = vmatpush.msra.mxu0 %v2178
    %v2180 = vand.u32 %v115, 4294901760
    %v2181 = vsub.f32 %v115, %v2180
    %2182 = vmatpush.msra.mxu0 %v2181
    %v2183 = vand.u32 %v114, 4294901760
    %v2184 = vsub.f32 %v114, %v2183
    %2185 = vmatpush.msra.mxu0 %v2184
    %v2186 = vand.u32 %v572, 4294901760
    %v2187 = vsub.f32 %v572, %v2186
    %2188 = vmatmul.f32.gmra.mxu0 %v2187
    %v2189 = vpop.f32.mrf.mxu0
    %v2190 = vadd.f32 %v2136, %v2189
    %2191 = vdwg.mxu0
    %v2192 = vand.u32 %v129, 4294901760
    %2193 = vmatpush.msra.mxu0 %v2192
    %v2194 = vand.u32 %v128, 4294901760
    %2195 = vmatpush.msra.mxu0 %v2194
    %v2196 = vand.u32 %v127, 4294901760
    %2197 = vmatpush.msra.mxu0 %v2196
    %v2198 = vand.u32 %v126, 4294901760
    %2199 = vmatpush.msra.mxu0 %v2198
    %v2200 = vand.u32 %v125, 4294901760
    %2201 = vmatpush.msra.mxu0 %v2200
    %v2202 = vand.u32 %v124, 4294901760
    %2203 = vmatpush.msra.mxu0 %v2202
    %v2204 = vand.u32 %v123, 4294901760
    %2205 = vmatpush.msra.mxu0 %v2204
    %v2206 = vand.u32 %v122, 4294901760
    %2207 = vmatpush.msra.mxu0 %v2206
    %v2208 = vand.u32 %v121, 4294901760
    %2209 = vmatpush.msra.mxu0 %v2208
    %v2210 = vand.u32 %v120, 4294901760
    %2211 = vmatpush.msra.mxu0 %v2210
    %v2212 = vand.u32 %v119, 4294901760
    %2213 = vmatpush.msra.mxu0 %v2212
    %v2214 = vand.u32 %v118, 4294901760
    %2215 = vmatpush.msra.mxu0 %v2214
    %v2216 = vand.u32 %v117, 4294901760
    %2217 = vmatpush.msra.mxu0 %v2216
    %v2218 = vand.u32 %v116, 4294901760
    %2219 = vmatpush.msra.mxu0 %v2218
    %v2220 = vand.u32 %v115, 4294901760
    %2221 = vmatpush.msra.mxu0 %v2220
    %v2222 = vand.u32 %v114, 4294901760
    %2223 = vmatpush.msra.mxu0 %v2222
    %v2224 = vand.u32 %v572, 4294901760
    %v2225 = vsub.f32 %v572, %v2224
    %v2226 = vand.u32 %v2225, 4294901760
    %2227 = vmatmul.f32.gmra.mxu0 %v2226
    %v2228 = vpop.f32.mrf.mxu0
    %v2229 = vadd.f32 %v2190, %v2228
    %2230 = vdwg.mxu0
    %v2231 = vand.u32 %v129, 4294901760
    %v2232 = vsub.f32 %v129, %v2231
    %v2233 = vand.u32 %v2232, 4294901760
    %2234 = vmatpush.msra.mxu0 %v2233
    %v2235 = vand.u32 %v128, 4294901760
    %v2236 = vsub.f32 %v128, %v2235
    %v2237 = vand.u32 %v2236, 4294901760
    %2238 = vmatpush.msra.mxu0 %v2237
    %v2239 = vand.u32 %v127, 4294901760
    %v2240 = vsub.f32 %v127, %v2239
    %v2241 = vand.u32 %v2240, 4294901760
    %2242 = vmatpush.msra.mxu0 %v2241
    %v2243 = vand.u32 %v126, 4294901760
    %v2244 = vsub.f32 %v126, %v2243
    %v2245 = vand.u32 %v2244, 4294901760
    %2246 = vmatpush.msra.mxu0 %v2245
    %v2247 = vand.u32 %v125, 4294901760
    %v2248 = vsub.f32 %v125, %v2247
    %v2249 = vand.u32 %v2248, 4294901760
    %2250 = vmatpush.msra.mxu0 %v2249
    %v2251 = vand.u32 %v124, 4294901760
    %v2252 = vsub.f32 %v124, %v2251
    %v2253 = vand.u32 %v2252, 4294901760
    %2254 = vmatpush.msra.mxu0 %v2253
    %v2255 = vand.u32 %v123, 4294901760
    %v2256 = vsub.f32 %v123, %v2255
    %v2257 = vand.u32 %v2256, 4294901760
    %2258 = vmatpush.msra.mxu0 %v2257
    %v2259 = vand.u32 %v122, 4294901760
    %v2260 = vsub.f32 %v122, %v2259
    %v2261 = vand.u32 %v2260, 4294901760
    %2262 = vmatpush.msra.mxu0 %v2261
    %v2263 = vand.u32 %v121, 4294901760
    %v2264 = vsub.f32 %v121, %v2263
    %v2265 = vand.u32 %v2264, 4294901760
    %2266 = vmatpush.msra.mxu0 %v2265
    %v2267 = vand.u32 %v120, 4294901760
    %v2268 = vsub.f32 %v120, %v2267
    %v2269 = vand.u32 %v2268, 4294901760
    %2270 = vmatpush.msra.mxu0 %v2269
    %v2271 = vand.u32 %v119, 4294901760
    %v2272 = vsub.f32 %v119, %v2271
    %v2273 = vand.u32 %v2272, 4294901760
    %2274 = vmatpush.msra.mxu0 %v2273
    %v2275 = vand.u32 %v118, 4294901760
    %v2276 = vsub.f32 %v118, %v2275
    %v2277 = vand.u32 %v2276, 4294901760
    %2278 = vmatpush.msra.mxu0 %v2277
    %v2279 = vand.u32 %v117, 4294901760
    %v2280 = vsub.f32 %v117, %v2279
    %v2281 = vand.u32 %v2280, 4294901760
    %2282 = vmatpush.msra.mxu0 %v2281
    %v2283 = vand.u32 %v116, 4294901760
    %v2284 = vsub.f32 %v116, %v2283
    %v2285 = vand.u32 %v2284, 4294901760
    %2286 = vmatpush.msra.mxu0 %v2285
    %v2287 = vand.u32 %v115, 4294901760
    %v2288 = vsub.f32 %v115, %v2287
    %v2289 = vand.u32 %v2288, 4294901760
    %2290 = vmatpush.msra.mxu0 %v2289
    %v2291 = vand.u32 %v114, 4294901760
    %v2292 = vsub.f32 %v114, %v2291
    %v2293 = vand.u32 %v2292, 4294901760
    %2294 = vmatpush.msra.mxu0 %v2293
    %v2295 = vand.u32 %v572, 4294901760
    %2296 = vmatmul.f32.gmra.mxu0 %v2295
    %v2297 = vpop.f32.mrf.mxu0
    %v2298 = vadd.f32 %v2229, %v2297
    %2299 = vdwg.mxu0
    %v2300 = vand.u32 %v129, 4294901760
    %2301 = vmatpush.msra.mxu0 %v2300
    %v2302 = vand.u32 %v128, 4294901760
    %2303 = vmatpush.msra.mxu0 %v2302
    %v2304 = vand.u32 %v127, 4294901760
    %2305 = vmatpush.msra.mxu0 %v2304
    %v2306 = vand.u32 %v126, 4294901760
    %2307 = vmatpush.msra.mxu0 %v2306
    %v2308 = vand.u32 %v125, 4294901760
    %2309 = vmatpush.msra.mxu0 %v2308
    %v2310 = vand.u32 %v124, 4294901760
    %2311 = vmatpush.msra.mxu0 %v2310
    %v2312 = vand.u32 %v123, 4294901760
    %2313 = vmatpush.msra.mxu0 %v2312
    %v2314 = vand.u32 %v122, 4294901760
    %2315 = vmatpush.msra.mxu0 %v2314
    %v2316 = vand.u32 %v121, 4294901760
    %2317 = vmatpush.msra.mxu0 %v2316
    %v2318 = vand.u32 %v120, 4294901760
    %2319 = vmatpush.msra.mxu0 %v2318
    %v2320 = vand.u32 %v119, 4294901760
    %2321 = vmatpush.msra.mxu0 %v2320
    %v2322 = vand.u32 %v118, 4294901760
    %2323 = vmatpush.msra.mxu0 %v2322
    %v2324 = vand.u32 %v117, 4294901760
    %2325 = vmatpush.msra.mxu0 %v2324
    %v2326 = vand.u32 %v116, 4294901760
    %2327 = vmatpush.msra.mxu0 %v2326
    %v2328 = vand.u32 %v115, 4294901760
    %2329 = vmatpush.msra.mxu0 %v2328
    %v2330 = vand.u32 %v114, 4294901760
    %2331 = vmatpush.msra.mxu0 %v2330
    %v2332 = vand.u32 %v572, 4294901760
    %2333 = vmatmul.f32.gmra.mxu0 %v2332
    %v2334 = vpop.f32.mrf.mxu0
    %v2335 = vadd.f32 %v2298, %v2334
    %2336 = vdwg.mxu0
    %v2337 = vand.u32 %v145, 4294901760
    %2338 = vmatpush.msra.mxu0 %v2337
    %v2339 = vand.u32 %v144, 4294901760
    %2340 = vmatpush.msra.mxu0 %v2339
    %v2341 = vand.u32 %v143, 4294901760
    %2342 = vmatpush.msra.mxu0 %v2341
    %v2343 = vand.u32 %v142, 4294901760
    %2344 = vmatpush.msra.mxu0 %v2343
    %v2345 = vand.u32 %v141, 4294901760
    %2346 = vmatpush.msra.mxu0 %v2345
    %v2347 = vand.u32 %v140, 4294901760
    %2348 = vmatpush.msra.mxu0 %v2347
    %v2349 = vand.u32 %v139, 4294901760
    %2350 = vmatpush.msra.mxu0 %v2349
    %v2351 = vand.u32 %v138, 4294901760
    %2352 = vmatpush.msra.mxu0 %v2351
    %v2353 = vand.u32 %v137, 4294901760
    %2354 = vmatpush.msra.mxu0 %v2353
    %v2355 = vand.u32 %v136, 4294901760
    %2356 = vmatpush.msra.mxu0 %v2355
    %v2357 = vand.u32 %v135, 4294901760
    %2358 = vmatpush.msra.mxu0 %v2357
    %v2359 = vand.u32 %v134, 4294901760
    %2360 = vmatpush.msra.mxu0 %v2359
    %v2361 = vand.u32 %v133, 4294901760
    %2362 = vmatpush.msra.mxu0 %v2361
    %v2363 = vand.u32 %v132, 4294901760
    %2364 = vmatpush.msra.mxu0 %v2363
    %v2365 = vand.u32 %v131, 4294901760
    %2366 = vmatpush.msra.mxu0 %v2365
    %v2367 = vand.u32 %v130, 4294901760
    %2368 = vmatpush.msra.mxu0 %v2367
    %v2369 = vand.u32 %v573, 4294901760
    %v2370 = vsub.f32 %v573, %v2369
    %v2371 = vand.u32 %v2370, 4294901760
    %v2372 = vsub.f32 %v2370, %v2371
    %v2373 = vand.u32 %v2372, 4294901760
    %2374 = vmatmul.f32.gmra.mxu0 %v2373
    %v2375 = vpop.f32.mrf.mxu0
    %v2376 = vadd.f32 %v2335, %v2375
    %2377 = vdwg.mxu0
    %v2378 = vand.u32 %v145, 4294901760
    %v2379 = vsub.f32 %v145, %v2378
    %v2380 = vand.u32 %v2379, 4294901760
    %v2381 = vsub.f32 %v2379, %v2380
    %v2382 = vand.u32 %v2381, 4294901760
    %2383 = vmatpush.msra.mxu0 %v2382
    %v2384 = vand.u32 %v144, 4294901760
    %v2385 = vsub.f32 %v144, %v2384
    %v2386 = vand.u32 %v2385, 4294901760
    %v2387 = vsub.f32 %v2385, %v2386
    %v2388 = vand.u32 %v2387, 4294901760
    %2389 = vmatpush.msra.mxu0 %v2388
    %v2390 = vand.u32 %v143, 4294901760
    %v2391 = vsub.f32 %v143, %v2390
    %v2392 = vand.u32 %v2391, 4294901760
    %v2393 = vsub.f32 %v2391, %v2392
    %v2394 = vand.u32 %v2393, 4294901760
    %2395 = vmatpush.msra.mxu0 %v2394
    %v2396 = vand.u32 %v142, 4294901760
    %v2397 = vsub.f32 %v142, %v2396
    %v2398 = vand.u32 %v2397, 4294901760
    %v2399 = vsub.f32 %v2397, %v2398
    %v2400 = vand.u32 %v2399, 4294901760
    %2401 = vmatpush.msra.mxu0 %v2400
    %v2402 = vand.u32 %v141, 4294901760
    %v2403 = vsub.f32 %v141, %v2402
    %v2404 = vand.u32 %v2403, 4294901760
    %v2405 = vsub.f32 %v2403, %v2404
    %v2406 = vand.u32 %v2405, 4294901760
    %2407 = vmatpush.msra.mxu0 %v2406
    %v2408 = vand.u32 %v140, 4294901760
    %v2409 = vsub.f32 %v140, %v2408
    %v2410 = vand.u32 %v2409, 4294901760
    %v2411 = vsub.f32 %v2409, %v2410
    %v2412 = vand.u32 %v2411, 4294901760
    %2413 = vmatpush.msra.mxu0 %v2412
    %v2414 = vand.u32 %v139, 4294901760
    %v2415 = vsub.f32 %v139, %v2414
    %v2416 = vand.u32 %v2415, 4294901760
    %v2417 = vsub.f32 %v2415, %v2416
    %v2418 = vand.u32 %v2417, 4294901760
    %2419 = vmatpush.msra.mxu0 %v2418
    %v2420 = vand.u32 %v138, 4294901760
    %v2421 = vsub.f32 %v138, %v2420
    %v2422 = vand.u32 %v2421, 4294901760
    %v2423 = vsub.f32 %v2421, %v2422
    %v2424 = vand.u32 %v2423, 4294901760
    %2425 = vmatpush.msra.mxu0 %v2424
    %v2426 = vand.u32 %v137, 4294901760
    %v2427 = vsub.f32 %v137, %v2426
    %v2428 = vand.u32 %v2427, 4294901760
    %v2429 = vsub.f32 %v2427, %v2428
    %v2430 = vand.u32 %v2429, 4294901760
    %2431 = vmatpush.msra.mxu0 %v2430
    %v2432 = vand.u32 %v136, 4294901760
    %v2433 = vsub.f32 %v136, %v2432
    %v2434 = vand.u32 %v2433, 4294901760
    %v2435 = vsub.f32 %v2433, %v2434
    %v2436 = vand.u32 %v2435, 4294901760
    %2437 = vmatpush.msra.mxu0 %v2436
    %v2438 = vand.u32 %v135, 4294901760
    %v2439 = vsub.f32 %v135, %v2438
    %v2440 = vand.u32 %v2439, 4294901760
    %v2441 = vsub.f32 %v2439, %v2440
    %v2442 = vand.u32 %v2441, 4294901760
    %2443 = vmatpush.msra.mxu0 %v2442
    %v2444 = vand.u32 %v134, 4294901760
    %v2445 = vsub.f32 %v134, %v2444
    %v2446 = vand.u32 %v2445, 4294901760
    %v2447 = vsub.f32 %v2445, %v2446
    %v2448 = vand.u32 %v2447, 4294901760
    %2449 = vmatpush.msra.mxu0 %v2448
    %v2450 = vand.u32 %v133, 4294901760
    %v2451 = vsub.f32 %v133, %v2450
    %v2452 = vand.u32 %v2451, 4294901760
    %v2453 = vsub.f32 %v2451, %v2452
    %v2454 = vand.u32 %v2453, 4294901760
    %2455 = vmatpush.msra.mxu0 %v2454
    %v2456 = vand.u32 %v132, 4294901760
    %v2457 = vsub.f32 %v132, %v2456
    %v2458 = vand.u32 %v2457, 4294901760
    %v2459 = vsub.f32 %v2457, %v2458
    %v2460 = vand.u32 %v2459, 4294901760
    %2461 = vmatpush.msra.mxu0 %v2460
    %v2462 = vand.u32 %v131, 4294901760
    %v2463 = vsub.f32 %v131, %v2462
    %v2464 = vand.u32 %v2463, 4294901760
    %v2465 = vsub.f32 %v2463, %v2464
    %v2466 = vand.u32 %v2465, 4294901760
    %2467 = vmatpush.msra.mxu0 %v2466
    %v2468 = vand.u32 %v130, 4294901760
    %v2469 = vsub.f32 %v130, %v2468
    %v2470 = vand.u32 %v2469, 4294901760
    %v2471 = vsub.f32 %v2469, %v2470
    %v2472 = vand.u32 %v2471, 4294901760
    %2473 = vmatpush.msra.mxu0 %v2472
    %v2474 = vand.u32 %v573, 4294901760
    %2475 = vmatmul.f32.gmra.mxu0 %v2474
    %v2476 = vpop.f32.mrf.mxu0
    %v2477 = vadd.f32 %v2376, %v2476
    %2478 = vdwg.mxu0
    %v2479 = vand.u32 %v145, 4294901760
    %v2480 = vsub.f32 %v145, %v2479
    %2481 = vmatpush.msra.mxu0 %v2480
    %v2482 = vand.u32 %v144, 4294901760
    %v2483 = vsub.f32 %v144, %v2482
    %2484 = vmatpush.msra.mxu0 %v2483
    %v2485 = vand.u32 %v143, 4294901760
    %v2486 = vsub.f32 %v143, %v2485
    %2487 = vmatpush.msra.mxu0 %v2486
    %v2488 = vand.u32 %v142, 4294901760
    %v2489 = vsub.f32 %v142, %v2488
    %2490 = vmatpush.msra.mxu0 %v2489
    %v2491 = vand.u32 %v141, 4294901760
    %v2492 = vsub.f32 %v141, %v2491
    %2493 = vmatpush.msra.mxu0 %v2492
    %v2494 = vand.u32 %v140, 4294901760
    %v2495 = vsub.f32 %v140, %v2494
    %2496 = vmatpush.msra.mxu0 %v2495
    %v2497 = vand.u32 %v139, 4294901760
    %v2498 = vsub.f32 %v139, %v2497
    %2499 = vmatpush.msra.mxu0 %v2498
    %v2500 = vand.u32 %v138, 4294901760
    %v2501 = vsub.f32 %v138, %v2500
    %2502 = vmatpush.msra.mxu0 %v2501
    %v2503 = vand.u32 %v137, 4294901760
    %v2504 = vsub.f32 %v137, %v2503
    %2505 = vmatpush.msra.mxu0 %v2504
    %v2506 = vand.u32 %v136, 4294901760
    %v2507 = vsub.f32 %v136, %v2506
    %2508 = vmatpush.msra.mxu0 %v2507
    %v2509 = vand.u32 %v135, 4294901760
    %v2510 = vsub.f32 %v135, %v2509
    %2511 = vmatpush.msra.mxu0 %v2510
    %v2512 = vand.u32 %v134, 4294901760
    %v2513 = vsub.f32 %v134, %v2512
    %2514 = vmatpush.msra.mxu0 %v2513
    %v2515 = vand.u32 %v133, 4294901760
    %v2516 = vsub.f32 %v133, %v2515
    %2517 = vmatpush.msra.mxu0 %v2516
    %v2518 = vand.u32 %v132, 4294901760
    %v2519 = vsub.f32 %v132, %v2518
    %2520 = vmatpush.msra.mxu0 %v2519
    %v2521 = vand.u32 %v131, 4294901760
    %v2522 = vsub.f32 %v131, %v2521
    %2523 = vmatpush.msra.mxu0 %v2522
    %v2524 = vand.u32 %v130, 4294901760
    %v2525 = vsub.f32 %v130, %v2524
    %2526 = vmatpush.msra.mxu0 %v2525
    %v2527 = vand.u32 %v573, 4294901760
    %v2528 = vsub.f32 %v573, %v2527
    %2529 = vmatmul.f32.gmra.mxu0 %v2528
    %v2530 = vpop.f32.mrf.mxu0
    %v2531 = vadd.f32 %v2477, %v2530
    %2532 = vdwg.mxu0
    %v2533 = vand.u32 %v145, 4294901760
    %2534 = vmatpush.msra.mxu0 %v2533
    %v2535 = vand.u32 %v144, 4294901760
    %2536 = vmatpush.msra.mxu0 %v2535
    %v2537 = vand.u32 %v143, 4294901760
    %2538 = vmatpush.msra.mxu0 %v2537
    %v2539 = vand.u32 %v142, 4294901760
    %2540 = vmatpush.msra.mxu0 %v2539
    %v2541 = vand.u32 %v141, 4294901760
    %2542 = vmatpush.msra.mxu0 %v2541
    %v2543 = vand.u32 %v140, 4294901760
    %2544 = vmatpush.msra.mxu0 %v2543
    %v2545 = vand.u32 %v139, 4294901760
    %2546 = vmatpush.msra.mxu0 %v2545
    %v2547 = vand.u32 %v138, 4294901760
    %2548 = vmatpush.msra.mxu0 %v2547
    %v2549 = vand.u32 %v137, 4294901760
    %2550 = vmatpush.msra.mxu0 %v2549
    %v2551 = vand.u32 %v136, 4294901760
    %2552 = vmatpush.msra.mxu0 %v2551
    %v2553 = vand.u32 %v135, 4294901760
    %2554 = vmatpush.msra.mxu0 %v2553
    %v2555 = vand.u32 %v134, 4294901760
    %2556 = vmatpush.msra.mxu0 %v2555
    %v2557 = vand.u32 %v133, 4294901760
    %2558 = vmatpush.msra.mxu0 %v2557
    %v2559 = vand.u32 %v132, 4294901760
    %2560 = vmatpush.msra.mxu0 %v2559
    %v2561 = vand.u32 %v131, 4294901760
    %2562 = vmatpush.msra.mxu0 %v2561
    %v2563 = vand.u32 %v130, 4294901760
    %2564 = vmatpush.msra.mxu0 %v2563
    %v2565 = vand.u32 %v573, 4294901760
    %v2566 = vsub.f32 %v573, %v2565
    %v2567 = vand.u32 %v2566, 4294901760
    %2568 = vmatmul.f32.gmra.mxu0 %v2567
    %v2569 = vpop.f32.mrf.mxu0
    %v2570 = vadd.f32 %v2531, %v2569
    %2571 = vdwg.mxu0
    %v2572 = vand.u32 %v145, 4294901760
    %v2573 = vsub.f32 %v145, %v2572
    %v2574 = vand.u32 %v2573, 4294901760
    %2575 = vmatpush.msra.mxu0 %v2574
    %v2576 = vand.u32 %v144, 4294901760
    %v2577 = vsub.f32 %v144, %v2576
    %v2578 = vand.u32 %v2577, 4294901760
    %2579 = vmatpush.msra.mxu0 %v2578
    %v2580 = vand.u32 %v143, 4294901760
    %v2581 = vsub.f32 %v143, %v2580
    %v2582 = vand.u32 %v2581, 4294901760
    %2583 = vmatpush.msra.mxu0 %v2582
    %v2584 = vand.u32 %v142, 4294901760
    %v2585 = vsub.f32 %v142, %v2584
    %v2586 = vand.u32 %v2585, 4294901760
    %2587 = vmatpush.msra.mxu0 %v2586
    %v2588 = vand.u32 %v141, 4294901760
    %v2589 = vsub.f32 %v141, %v2588
    %v2590 = vand.u32 %v2589, 4294901760
    %2591 = vmatpush.msra.mxu0 %v2590
    %v2592 = vand.u32 %v140, 4294901760
    %v2593 = vsub.f32 %v140, %v2592
    %v2594 = vand.u32 %v2593, 4294901760
    %2595 = vmatpush.msra.mxu0 %v2594
    %v2596 = vand.u32 %v139, 4294901760
    %v2597 = vsub.f32 %v139, %v2596
    %v2598 = vand.u32 %v2597, 4294901760
    %2599 = vmatpush.msra.mxu0 %v2598
    %v2600 = vand.u32 %v138, 4294901760
    %v2601 = vsub.f32 %v138, %v2600
    %v2602 = vand.u32 %v2601, 4294901760
    %2603 = vmatpush.msra.mxu0 %v2602
    %v2604 = vand.u32 %v137, 4294901760
    %v2605 = vsub.f32 %v137, %v2604
    %v2606 = vand.u32 %v2605, 4294901760
    %2607 = vmatpush.msra.mxu0 %v2606
    %v2608 = vand.u32 %v136, 4294901760
    %v2609 = vsub.f32 %v136, %v2608
    %v2610 = vand.u32 %v2609, 4294901760
    %2611 = vmatpush.msra.mxu0 %v2610
    %v2612 = vand.u32 %v135, 4294901760
    %v2613 = vsub.f32 %v135, %v2612
    %v2614 = vand.u32 %v2613, 4294901760
    %2615 = vmatpush.msra.mxu0 %v2614
    %v2616 = vand.u32 %v134, 4294901760
    %v2617 = vsub.f32 %v134, %v2616
    %v2618 = vand.u32 %v2617, 4294901760
    %2619 = vmatpush.msra.mxu0 %v2618
    %v2620 = vand.u32 %v133, 4294901760
    %v2621 = vsub.f32 %v133, %v2620
    %v2622 = vand.u32 %v2621, 4294901760
    %2623 = vmatpush.msra.mxu0 %v2622
    %v2624 = vand.u32 %v132, 4294901760
    %v2625 = vsub.f32 %v132, %v2624
    %v2626 = vand.u32 %v2625, 4294901760
    %2627 = vmatpush.msra.mxu0 %v2626
    %v2628 = vand.u32 %v131, 4294901760
    %v2629 = vsub.f32 %v131, %v2628
    %v2630 = vand.u32 %v2629, 4294901760
    %2631 = vmatpush.msra.mxu0 %v2630
    %v2632 = vand.u32 %v130, 4294901760
    %v2633 = vsub.f32 %v130, %v2632
    %v2634 = vand.u32 %v2633, 4294901760
    %2635 = vmatpush.msra.mxu0 %v2634
    %v2636 = vand.u32 %v573, 4294901760
    %2637 = vmatmul.f32.gmra.mxu0 %v2636
    %v2638 = vpop.f32.mrf.mxu0
    %v2639 = vadd.f32 %v2570, %v2638
    %2640 = vdwg.mxu0
    %v2641 = vand.u32 %v145, 4294901760
    %2642 = vmatpush.msra.mxu0 %v2641
    %v2643 = vand.u32 %v144, 4294901760
    %2644 = vmatpush.msra.mxu0 %v2643
    %v2645 = vand.u32 %v143, 4294901760
    %2646 = vmatpush.msra.mxu0 %v2645
    %v2647 = vand.u32 %v142, 4294901760
    %2648 = vmatpush.msra.mxu0 %v2647
    %v2649 = vand.u32 %v141, 4294901760
    %2650 = vmatpush.msra.mxu0 %v2649
    %v2651 = vand.u32 %v140, 4294901760
    %2652 = vmatpush.msra.mxu0 %v2651
    %v2653 = vand.u32 %v139, 4294901760
    %2654 = vmatpush.msra.mxu0 %v2653
    %v2655 = vand.u32 %v138, 4294901760
    %2656 = vmatpush.msra.mxu0 %v2655
    %v2657 = vand.u32 %v137, 4294901760
    %2658 = vmatpush.msra.mxu0 %v2657
    %v2659 = vand.u32 %v136, 4294901760
    %2660 = vmatpush.msra.mxu0 %v2659
    %v2661 = vand.u32 %v135, 4294901760
    %2662 = vmatpush.msra.mxu0 %v2661
    %v2663 = vand.u32 %v134, 4294901760
    %2664 = vmatpush.msra.mxu0 %v2663
    %v2665 = vand.u32 %v133, 4294901760
    %2666 = vmatpush.msra.mxu0 %v2665
    %v2667 = vand.u32 %v132, 4294901760
    %2668 = vmatpush.msra.mxu0 %v2667
    %v2669 = vand.u32 %v131, 4294901760
    %2670 = vmatpush.msra.mxu0 %v2669
    %v2671 = vand.u32 %v130, 4294901760
    %2672 = vmatpush.msra.mxu0 %v2671
    %v2673 = vand.u32 %v573, 4294901760
    %2674 = vmatmul.f32.gmra.mxu0 %v2673
    %v2675 = vpop.f32.mrf.mxu0
    %v2676 = vadd.f32 %v2639, %v2675
    %2677 = vdwg.mxu0
    %v2678 = vand.u32 %v161, 4294901760
    %2679 = vmatpush.msra.mxu0 %v2678
    %v2680 = vand.u32 %v160, 4294901760
    %2681 = vmatpush.msra.mxu0 %v2680
    %v2682 = vand.u32 %v159, 4294901760
    %2683 = vmatpush.msra.mxu0 %v2682
    %v2684 = vand.u32 %v158, 4294901760
    %2685 = vmatpush.msra.mxu0 %v2684
    %v2686 = vand.u32 %v157, 4294901760
    %2687 = vmatpush.msra.mxu0 %v2686
    %v2688 = vand.u32 %v156, 4294901760
    %2689 = vmatpush.msra.mxu0 %v2688
    %v2690 = vand.u32 %v155, 4294901760
    %2691 = vmatpush.msra.mxu0 %v2690
    %v2692 = vand.u32 %v154, 4294901760
    %2693 = vmatpush.msra.mxu0 %v2692
    %v2694 = vand.u32 %v153, 4294901760
    %2695 = vmatpush.msra.mxu0 %v2694
    %v2696 = vand.u32 %v152, 4294901760
    %2697 = vmatpush.msra.mxu0 %v2696
    %v2698 = vand.u32 %v151, 4294901760
    %2699 = vmatpush.msra.mxu0 %v2698
    %v2700 = vand.u32 %v150, 4294901760
    %2701 = vmatpush.msra.mxu0 %v2700
    %v2702 = vand.u32 %v149, 4294901760
    %2703 = vmatpush.msra.mxu0 %v2702
    %v2704 = vand.u32 %v148, 4294901760
    %2705 = vmatpush.msra.mxu0 %v2704
    %v2706 = vand.u32 %v147, 4294901760
    %2707 = vmatpush.msra.mxu0 %v2706
    %v2708 = vand.u32 %v146, 4294901760
    %2709 = vmatpush.msra.mxu0 %v2708
    %v2710 = vand.u32 %v574, 4294901760
    %v2711 = vsub.f32 %v574, %v2710
    %v2712 = vand.u32 %v2711, 4294901760
    %v2713 = vsub.f32 %v2711, %v2712
    %v2714 = vand.u32 %v2713, 4294901760
    %2715 = vmatmul.f32.gmra.mxu0 %v2714
    %v2716 = vpop.f32.mrf.mxu0
    %v2717 = vadd.f32 %v2676, %v2716
    %2718 = vdwg.mxu0
    %v2719 = vand.u32 %v161, 4294901760
    %v2720 = vsub.f32 %v161, %v2719
    %v2721 = vand.u32 %v2720, 4294901760
    %v2722 = vsub.f32 %v2720, %v2721
    %v2723 = vand.u32 %v2722, 4294901760
    %2724 = vmatpush.msra.mxu0 %v2723
    %v2725 = vand.u32 %v160, 4294901760
    %v2726 = vsub.f32 %v160, %v2725
    %v2727 = vand.u32 %v2726, 4294901760
    %v2728 = vsub.f32 %v2726, %v2727
    %v2729 = vand.u32 %v2728, 4294901760
    %2730 = vmatpush.msra.mxu0 %v2729
    %v2731 = vand.u32 %v159, 4294901760
    %v2732 = vsub.f32 %v159, %v2731
    %v2733 = vand.u32 %v2732, 4294901760
    %v2734 = vsub.f32 %v2732, %v2733
    %v2735 = vand.u32 %v2734, 4294901760
    %2736 = vmatpush.msra.mxu0 %v2735
    %v2737 = vand.u32 %v158, 4294901760
    %v2738 = vsub.f32 %v158, %v2737
    %v2739 = vand.u32 %v2738, 4294901760
    %v2740 = vsub.f32 %v2738, %v2739
    %v2741 = vand.u32 %v2740, 4294901760
    %2742 = vmatpush.msra.mxu0 %v2741
    %v2743 = vand.u32 %v157, 4294901760
    %v2744 = vsub.f32 %v157, %v2743
    %v2745 = vand.u32 %v2744, 4294901760
    %v2746 = vsub.f32 %v2744, %v2745
    %v2747 = vand.u32 %v2746, 4294901760
    %2748 = vmatpush.msra.mxu0 %v2747
    %v2749 = vand.u32 %v156, 4294901760
    %v2750 = vsub.f32 %v156, %v2749
    %v2751 = vand.u32 %v2750, 4294901760
    %v2752 = vsub.f32 %v2750, %v2751
    %v2753 = vand.u32 %v2752, 4294901760
    %2754 = vmatpush.msra.mxu0 %v2753
    %v2755 = vand.u32 %v155, 4294901760
    %v2756 = vsub.f32 %v155, %v2755
    %v2757 = vand.u32 %v2756, 4294901760
    %v2758 = vsub.f32 %v2756, %v2757
    %v2759 = vand.u32 %v2758, 4294901760
    %2760 = vmatpush.msra.mxu0 %v2759
    %v2761 = vand.u32 %v154, 4294901760
    %v2762 = vsub.f32 %v154, %v2761
    %v2763 = vand.u32 %v2762, 4294901760
    %v2764 = vsub.f32 %v2762, %v2763
    %v2765 = vand.u32 %v2764, 4294901760
    %2766 = vmatpush.msra.mxu0 %v2765
    %v2767 = vand.u32 %v153, 4294901760
    %v2768 = vsub.f32 %v153, %v2767
    %v2769 = vand.u32 %v2768, 4294901760
    %v2770 = vsub.f32 %v2768, %v2769
    %v2771 = vand.u32 %v2770, 4294901760
    %2772 = vmatpush.msra.mxu0 %v2771
    %v2773 = vand.u32 %v152, 4294901760
    %v2774 = vsub.f32 %v152, %v2773
    %v2775 = vand.u32 %v2774, 4294901760
    %v2776 = vsub.f32 %v2774, %v2775
    %v2777 = vand.u32 %v2776, 4294901760
    %2778 = vmatpush.msra.mxu0 %v2777
    %v2779 = vand.u32 %v151, 4294901760
    %v2780 = vsub.f32 %v151, %v2779
    %v2781 = vand.u32 %v2780, 4294901760
    %v2782 = vsub.f32 %v2780, %v2781
    %v2783 = vand.u32 %v2782, 4294901760
    %2784 = vmatpush.msra.mxu0 %v2783
    %v2785 = vand.u32 %v150, 4294901760
    %v2786 = vsub.f32 %v150, %v2785
    %v2787 = vand.u32 %v2786, 4294901760
    %v2788 = vsub.f32 %v2786, %v2787
    %v2789 = vand.u32 %v2788, 4294901760
    %2790 = vmatpush.msra.mxu0 %v2789
    %v2791 = vand.u32 %v149, 4294901760
    %v2792 = vsub.f32 %v149, %v2791
    %v2793 = vand.u32 %v2792, 4294901760
    %v2794 = vsub.f32 %v2792, %v2793
    %v2795 = vand.u32 %v2794, 4294901760
    %2796 = vmatpush.msra.mxu0 %v2795
    %v2797 = vand.u32 %v148, 4294901760
    %v2798 = vsub.f32 %v148, %v2797
    %v2799 = vand.u32 %v2798, 4294901760
    %v2800 = vsub.f32 %v2798, %v2799
    %v2801 = vand.u32 %v2800, 4294901760
    %2802 = vmatpush.msra.mxu0 %v2801
    %v2803 = vand.u32 %v147, 4294901760
    %v2804 = vsub.f32 %v147, %v2803
    %v2805 = vand.u32 %v2804, 4294901760
    %v2806 = vsub.f32 %v2804, %v2805
    %v2807 = vand.u32 %v2806, 4294901760
    %2808 = vmatpush.msra.mxu0 %v2807
    %v2809 = vand.u32 %v146, 4294901760
    %v2810 = vsub.f32 %v146, %v2809
    %v2811 = vand.u32 %v2810, 4294901760
    %v2812 = vsub.f32 %v2810, %v2811
    %v2813 = vand.u32 %v2812, 4294901760
    %2814 = vmatpush.msra.mxu0 %v2813
    %v2815 = vand.u32 %v574, 4294901760
    %2816 = vmatmul.f32.gmra.mxu0 %v2815
    %v2817 = vpop.f32.mrf.mxu0
    %v2818 = vadd.f32 %v2717, %v2817
    %2819 = vdwg.mxu0
    %v2820 = vand.u32 %v161, 4294901760
    %v2821 = vsub.f32 %v161, %v2820
    %2822 = vmatpush.msra.mxu0 %v2821
    %v2823 = vand.u32 %v160, 4294901760
    %v2824 = vsub.f32 %v160, %v2823
    %2825 = vmatpush.msra.mxu0 %v2824
    %v2826 = vand.u32 %v159, 4294901760
    %v2827 = vsub.f32 %v159, %v2826
    %2828 = vmatpush.msra.mxu0 %v2827
    %v2829 = vand.u32 %v158, 4294901760
    %v2830 = vsub.f32 %v158, %v2829
    %2831 = vmatpush.msra.mxu0 %v2830
    %v2832 = vand.u32 %v157, 4294901760
    %v2833 = vsub.f32 %v157, %v2832
    %2834 = vmatpush.msra.mxu0 %v2833
    %v2835 = vand.u32 %v156, 4294901760
    %v2836 = vsub.f32 %v156, %v2835
    %2837 = vmatpush.msra.mxu0 %v2836
    %v2838 = vand.u32 %v155, 4294901760
    %v2839 = vsub.f32 %v155, %v2838
    %2840 = vmatpush.msra.mxu0 %v2839
    %v2841 = vand.u32 %v154, 4294901760
    %v2842 = vsub.f32 %v154, %v2841
    %2843 = vmatpush.msra.mxu0 %v2842
    %v2844 = vand.u32 %v153, 4294901760
    %v2845 = vsub.f32 %v153, %v2844
    %2846 = vmatpush.msra.mxu0 %v2845
    %v2847 = vand.u32 %v152, 4294901760
    %v2848 = vsub.f32 %v152, %v2847
    %2849 = vmatpush.msra.mxu0 %v2848
    %v2850 = vand.u32 %v151, 4294901760
    %v2851 = vsub.f32 %v151, %v2850
    %2852 = vmatpush.msra.mxu0 %v2851
    %v2853 = vand.u32 %v150, 4294901760
    %v2854 = vsub.f32 %v150, %v2853
    %2855 = vmatpush.msra.mxu0 %v2854
    %v2856 = vand.u32 %v149, 4294901760
    %v2857 = vsub.f32 %v149, %v2856
    %2858 = vmatpush.msra.mxu0 %v2857
    %v2859 = vand.u32 %v148, 4294901760
    %v2860 = vsub.f32 %v148, %v2859
    %2861 = vmatpush.msra.mxu0 %v2860
    %v2862 = vand.u32 %v147, 4294901760
    %v2863 = vsub.f32 %v147, %v2862
    %2864 = vmatpush.msra.mxu0 %v2863
    %v2865 = vand.u32 %v146, 4294901760
    %v2866 = vsub.f32 %v146, %v2865
    %2867 = vmatpush.msra.mxu0 %v2866
    %v2868 = vand.u32 %v574, 4294901760
    %v2869 = vsub.f32 %v574, %v2868
    %2870 = vmatmul.f32.gmra.mxu0 %v2869
    %v2871 = vpop.f32.mrf.mxu0
    %v2872 = vadd.f32 %v2818, %v2871
    %2873 = vdwg.mxu0
    %v2874 = vand.u32 %v161, 4294901760
    %2875 = vmatpush.msra.mxu0 %v2874
    %v2876 = vand.u32 %v160, 4294901760
    %2877 = vmatpush.msra.mxu0 %v2876
    %v2878 = vand.u32 %v159, 4294901760
    %2879 = vmatpush.msra.mxu0 %v2878
    %v2880 = vand.u32 %v158, 4294901760
    %2881 = vmatpush.msra.mxu0 %v2880
    %v2882 = vand.u32 %v157, 4294901760
    %2883 = vmatpush.msra.mxu0 %v2882
    %v2884 = vand.u32 %v156, 4294901760
    %2885 = vmatpush.msra.mxu0 %v2884
    %v2886 = vand.u32 %v155, 4294901760
    %2887 = vmatpush.msra.mxu0 %v2886
    %v2888 = vand.u32 %v154, 4294901760
    %2889 = vmatpush.msra.mxu0 %v2888
    %v2890 = vand.u32 %v153, 4294901760
    %2891 = vmatpush.msra.mxu0 %v2890
    %v2892 = vand.u32 %v152, 4294901760
    %2893 = vmatpush.msra.mxu0 %v2892
    %v2894 = vand.u32 %v151, 4294901760
    %2895 = vmatpush.msra.mxu0 %v2894
    %v2896 = vand.u32 %v150, 4294901760
    %2897 = vmatpush.msra.mxu0 %v2896
    %v2898 = vand.u32 %v149, 4294901760
    %2899 = vmatpush.msra.mxu0 %v2898
    %v2900 = vand.u32 %v148, 4294901760
    %2901 = vmatpush.msra.mxu0 %v2900
    %v2902 = vand.u32 %v147, 4294901760
    %2903 = vmatpush.msra.mxu0 %v2902
    %v2904 = vand.u32 %v146, 4294901760
    %2905 = vmatpush.msra.mxu0 %v2904
    %v2906 = vand.u32 %v574, 4294901760
    %v2907 = vsub.f32 %v574, %v2906
    %v2908 = vand.u32 %v2907, 4294901760
    %2909 = vmatmul.f32.gmra.mxu0 %v2908
    %v2910 = vpop.f32.mrf.mxu0
    %v2911 = vadd.f32 %v2872, %v2910
    %2912 = vdwg.mxu0
    %v2913 = vand.u32 %v161, 4294901760
    %v2914 = vsub.f32 %v161, %v2913
    %v2915 = vand.u32 %v2914, 4294901760
    %2916 = vmatpush.msra.mxu0 %v2915
    %v2917 = vand.u32 %v160, 4294901760
    %v2918 = vsub.f32 %v160, %v2917
    %v2919 = vand.u32 %v2918, 4294901760
    %2920 = vmatpush.msra.mxu0 %v2919
    %v2921 = vand.u32 %v159, 4294901760
    %v2922 = vsub.f32 %v159, %v2921
    %v2923 = vand.u32 %v2922, 4294901760
    %2924 = vmatpush.msra.mxu0 %v2923
    %v2925 = vand.u32 %v158, 4294901760
    %v2926 = vsub.f32 %v158, %v2925
    %v2927 = vand.u32 %v2926, 4294901760
    %2928 = vmatpush.msra.mxu0 %v2927
    %v2929 = vand.u32 %v157, 4294901760
    %v2930 = vsub.f32 %v157, %v2929
    %v2931 = vand.u32 %v2930, 4294901760
    %2932 = vmatpush.msra.mxu0 %v2931
    %v2933 = vand.u32 %v156, 4294901760
    %v2934 = vsub.f32 %v156, %v2933
    %v2935 = vand.u32 %v2934, 4294901760
    %2936 = vmatpush.msra.mxu0 %v2935
    %v2937 = vand.u32 %v155, 4294901760
    %v2938 = vsub.f32 %v155, %v2937
    %v2939 = vand.u32 %v2938, 4294901760
    %2940 = vmatpush.msra.mxu0 %v2939
    %v2941 = vand.u32 %v154, 4294901760
    %v2942 = vsub.f32 %v154, %v2941
    %v2943 = vand.u32 %v2942, 4294901760
    %2944 = vmatpush.msra.mxu0 %v2943
    %v2945 = vand.u32 %v153, 4294901760
    %v2946 = vsub.f32 %v153, %v2945
    %v2947 = vand.u32 %v2946, 4294901760
    %2948 = vmatpush.msra.mxu0 %v2947
    %v2949 = vand.u32 %v152, 4294901760
    %v2950 = vsub.f32 %v152, %v2949
    %v2951 = vand.u32 %v2950, 4294901760
    %2952 = vmatpush.msra.mxu0 %v2951
    %v2953 = vand.u32 %v151, 4294901760
    %v2954 = vsub.f32 %v151, %v2953
    %v2955 = vand.u32 %v2954, 4294901760
    %2956 = vmatpush.msra.mxu0 %v2955
    %v2957 = vand.u32 %v150, 4294901760
    %v2958 = vsub.f32 %v150, %v2957
    %v2959 = vand.u32 %v2958, 4294901760
    %2960 = vmatpush.msra.mxu0 %v2959
    %v2961 = vand.u32 %v149, 4294901760
    %v2962 = vsub.f32 %v149, %v2961
    %v2963 = vand.u32 %v2962, 4294901760
    %2964 = vmatpush.msra.mxu0 %v2963
    %v2965 = vand.u32 %v148, 4294901760
    %v2966 = vsub.f32 %v148, %v2965
    %v2967 = vand.u32 %v2966, 4294901760
    %2968 = vmatpush.msra.mxu0 %v2967
    %v2969 = vand.u32 %v147, 4294901760
    %v2970 = vsub.f32 %v147, %v2969
    %v2971 = vand.u32 %v2970, 4294901760
    %2972 = vmatpush.msra.mxu0 %v2971
    %v2973 = vand.u32 %v146, 4294901760
    %v2974 = vsub.f32 %v146, %v2973
    %v2975 = vand.u32 %v2974, 4294901760
    %2976 = vmatpush.msra.mxu0 %v2975
    %v2977 = vand.u32 %v574, 4294901760
    %2978 = vmatmul.f32.gmra.mxu0 %v2977
    %v2979 = vpop.f32.mrf.mxu0
    %v2980 = vadd.f32 %v2911, %v2979
    %2981 = vdwg.mxu0
    %v2982 = vand.u32 %v161, 4294901760
    %2983 = vmatpush.msra.mxu0 %v2982
    %v2984 = vand.u32 %v160, 4294901760
    %2985 = vmatpush.msra.mxu0 %v2984
    %v2986 = vand.u32 %v159, 4294901760
    %2987 = vmatpush.msra.mxu0 %v2986
    %v2988 = vand.u32 %v158, 4294901760
    %2989 = vmatpush.msra.mxu0 %v2988
    %v2990 = vand.u32 %v157, 4294901760
    %2991 = vmatpush.msra.mxu0 %v2990
    %v2992 = vand.u32 %v156, 4294901760
    %2993 = vmatpush.msra.mxu0 %v2992
    %v2994 = vand.u32 %v155, 4294901760
    %2995 = vmatpush.msra.mxu0 %v2994
    %v2996 = vand.u32 %v154, 4294901760
    %2997 = vmatpush.msra.mxu0 %v2996
    %v2998 = vand.u32 %v153, 4294901760
    %2999 = vmatpush.msra.mxu0 %v2998
    %v3000 = vand.u32 %v152, 4294901760
    %3001 = vmatpush.msra.mxu0 %v3000
    %v3002 = vand.u32 %v151, 4294901760
    %3003 = vmatpush.msra.mxu0 %v3002
    %v3004 = vand.u32 %v150, 4294901760
    %3005 = vmatpush.msra.mxu0 %v3004
    %v3006 = vand.u32 %v149, 4294901760
    %3007 = vmatpush.msra.mxu0 %v3006
    %v3008 = vand.u32 %v148, 4294901760
    %3009 = vmatpush.msra.mxu0 %v3008
    %v3010 = vand.u32 %v147, 4294901760
    %3011 = vmatpush.msra.mxu0 %v3010
    %v3012 = vand.u32 %v146, 4294901760
    %3013 = vmatpush.msra.mxu0 %v3012
    %v3014 = vand.u32 %v574, 4294901760
    %3015 = vmatmul.f32.gmra.mxu0 %v3014
    %v3016 = vpop.f32.mrf.mxu0
    %v3017 = vadd.f32 %v2980, %v3016
    %3018 = vdwg.mxu0
    %v3019 = vand.u32 %v177, 4294901760
    %3020 = vmatpush.msra.mxu0 %v3019
    %v3021 = vand.u32 %v176, 4294901760
    %3022 = vmatpush.msra.mxu0 %v3021
    %v3023 = vand.u32 %v175, 4294901760
    %3024 = vmatpush.msra.mxu0 %v3023
    %v3025 = vand.u32 %v174, 4294901760
    %3026 = vmatpush.msra.mxu0 %v3025
    %v3027 = vand.u32 %v173, 4294901760
    %3028 = vmatpush.msra.mxu0 %v3027
    %v3029 = vand.u32 %v172, 4294901760
    %3030 = vmatpush.msra.mxu0 %v3029
    %v3031 = vand.u32 %v171, 4294901760
    %3032 = vmatpush.msra.mxu0 %v3031
    %v3033 = vand.u32 %v170, 4294901760
    %3034 = vmatpush.msra.mxu0 %v3033
    %v3035 = vand.u32 %v169, 4294901760
    %3036 = vmatpush.msra.mxu0 %v3035
    %v3037 = vand.u32 %v168, 4294901760
    %3038 = vmatpush.msra.mxu0 %v3037
    %v3039 = vand.u32 %v167, 4294901760
    %3040 = vmatpush.msra.mxu0 %v3039
    %v3041 = vand.u32 %v166, 4294901760
    %3042 = vmatpush.msra.mxu0 %v3041
    %v3043 = vand.u32 %v165, 4294901760
    %3044 = vmatpush.msra.mxu0 %v3043
    %v3045 = vand.u32 %v164, 4294901760
    %3046 = vmatpush.msra.mxu0 %v3045
    %v3047 = vand.u32 %v163, 4294901760
    %3048 = vmatpush.msra.mxu0 %v3047
    %v3049 = vand.u32 %v162, 4294901760
    %3050 = vmatpush.msra.mxu0 %v3049
    %v3051 = vand.u32 %v575, 4294901760
    %v3052 = vsub.f32 %v575, %v3051
    %v3053 = vand.u32 %v3052, 4294901760
    %v3054 = vsub.f32 %v3052, %v3053
    %v3055 = vand.u32 %v3054, 4294901760
    %3056 = vmatmul.f32.gmra.mxu0 %v3055
    %v3057 = vpop.f32.mrf.mxu0
    %v3058 = vadd.f32 %v3017, %v3057
    %3059 = vdwg.mxu0
    %v3060 = vand.u32 %v177, 4294901760
    %v3061 = vsub.f32 %v177, %v3060
    %v3062 = vand.u32 %v3061, 4294901760
    %v3063 = vsub.f32 %v3061, %v3062
    %v3064 = vand.u32 %v3063, 4294901760
    %3065 = vmatpush.msra.mxu0 %v3064
    %v3066 = vand.u32 %v176, 4294901760
    %v3067 = vsub.f32 %v176, %v3066
    %v3068 = vand.u32 %v3067, 4294901760
    %v3069 = vsub.f32 %v3067, %v3068
    %v3070 = vand.u32 %v3069, 4294901760
    %3071 = vmatpush.msra.mxu0 %v3070
    %v3072 = vand.u32 %v175, 4294901760
    %v3073 = vsub.f32 %v175, %v3072
    %v3074 = vand.u32 %v3073, 4294901760
    %v3075 = vsub.f32 %v3073, %v3074
    %v3076 = vand.u32 %v3075, 4294901760
    %3077 = vmatpush.msra.mxu0 %v3076
    %v3078 = vand.u32 %v174, 4294901760
    %v3079 = vsub.f32 %v174, %v3078
    %v3080 = vand.u32 %v3079, 4294901760
    %v3081 = vsub.f32 %v3079, %v3080
    %v3082 = vand.u32 %v3081, 4294901760
    %3083 = vmatpush.msra.mxu0 %v3082
    %v3084 = vand.u32 %v173, 4294901760
    %v3085 = vsub.f32 %v173, %v3084
    %v3086 = vand.u32 %v3085, 4294901760
    %v3087 = vsub.f32 %v3085, %v3086
    %v3088 = vand.u32 %v3087, 4294901760
    %3089 = vmatpush.msra.mxu0 %v3088
    %v3090 = vand.u32 %v172, 4294901760
    %v3091 = vsub.f32 %v172, %v3090
    %v3092 = vand.u32 %v3091, 4294901760
    %v3093 = vsub.f32 %v3091, %v3092
    %v3094 = vand.u32 %v3093, 4294901760
    %3095 = vmatpush.msra.mxu0 %v3094
    %v3096 = vand.u32 %v171, 4294901760
    %v3097 = vsub.f32 %v171, %v3096
    %v3098 = vand.u32 %v3097, 4294901760
    %v3099 = vsub.f32 %v3097, %v3098
    %v3100 = vand.u32 %v3099, 4294901760
    %3101 = vmatpush.msra.mxu0 %v3100
    %v3102 = vand.u32 %v170, 4294901760
    %v3103 = vsub.f32 %v170, %v3102
    %v3104 = vand.u32 %v3103, 4294901760
    %v3105 = vsub.f32 %v3103, %v3104
    %v3106 = vand.u32 %v3105, 4294901760
    %3107 = vmatpush.msra.mxu0 %v3106
    %v3108 = vand.u32 %v169, 4294901760
    %v3109 = vsub.f32 %v169, %v3108
    %v3110 = vand.u32 %v3109, 4294901760
    %v3111 = vsub.f32 %v3109, %v3110
    %v3112 = vand.u32 %v3111, 4294901760
    %3113 = vmatpush.msra.mxu0 %v3112
    %v3114 = vand.u32 %v168, 4294901760
    %v3115 = vsub.f32 %v168, %v3114
    %v3116 = vand.u32 %v3115, 4294901760
    %v3117 = vsub.f32 %v3115, %v3116
    %v3118 = vand.u32 %v3117, 4294901760
    %3119 = vmatpush.msra.mxu0 %v3118
    %v3120 = vand.u32 %v167, 4294901760
    %v3121 = vsub.f32 %v167, %v3120
    %v3122 = vand.u32 %v3121, 4294901760
    %v3123 = vsub.f32 %v3121, %v3122
    %v3124 = vand.u32 %v3123, 4294901760
    %3125 = vmatpush.msra.mxu0 %v3124
    %v3126 = vand.u32 %v166, 4294901760
    %v3127 = vsub.f32 %v166, %v3126
    %v3128 = vand.u32 %v3127, 4294901760
    %v3129 = vsub.f32 %v3127, %v3128
    %v3130 = vand.u32 %v3129, 4294901760
    %3131 = vmatpush.msra.mxu0 %v3130
    %v3132 = vand.u32 %v165, 4294901760
    %v3133 = vsub.f32 %v165, %v3132
    %v3134 = vand.u32 %v3133, 4294901760
    %v3135 = vsub.f32 %v3133, %v3134
    %v3136 = vand.u32 %v3135, 4294901760
    %3137 = vmatpush.msra.mxu0 %v3136
    %v3138 = vand.u32 %v164, 4294901760
    %v3139 = vsub.f32 %v164, %v3138
    %v3140 = vand.u32 %v3139, 4294901760
    %v3141 = vsub.f32 %v3139, %v3140
    %v3142 = vand.u32 %v3141, 4294901760
    %3143 = vmatpush.msra.mxu0 %v3142
    %v3144 = vand.u32 %v163, 4294901760
    %v3145 = vsub.f32 %v163, %v3144
    %v3146 = vand.u32 %v3145, 4294901760
    %v3147 = vsub.f32 %v3145, %v3146
    %v3148 = vand.u32 %v3147, 4294901760
    %3149 = vmatpush.msra.mxu0 %v3148
    %v3150 = vand.u32 %v162, 4294901760
    %v3151 = vsub.f32 %v162, %v3150
    %v3152 = vand.u32 %v3151, 4294901760
    %v3153 = vsub.f32 %v3151, %v3152
    %v3154 = vand.u32 %v3153, 4294901760
    %3155 = vmatpush.msra.mxu0 %v3154
    %v3156 = vand.u32 %v575, 4294901760
    %3157 = vmatmul.f32.gmra.mxu0 %v3156
    %v3158 = vpop.f32.mrf.mxu0
    %v3159 = vadd.f32 %v3058, %v3158
    %3160 = vdwg.mxu0
    %v3161 = vand.u32 %v177, 4294901760
    %v3162 = vsub.f32 %v177, %v3161
    %3163 = vmatpush.msra.mxu0 %v3162
    %v3164 = vand.u32 %v176, 4294901760
    %v3165 = vsub.f32 %v176, %v3164
    %3166 = vmatpush.msra.mxu0 %v3165
    %v3167 = vand.u32 %v175, 4294901760
    %v3168 = vsub.f32 %v175, %v3167
    %3169 = vmatpush.msra.mxu0 %v3168
    %v3170 = vand.u32 %v174, 4294901760
    %v3171 = vsub.f32 %v174, %v3170
    %3172 = vmatpush.msra.mxu0 %v3171
    %v3173 = vand.u32 %v173, 4294901760
    %v3174 = vsub.f32 %v173, %v3173
    %3175 = vmatpush.msra.mxu0 %v3174
    %v3176 = vand.u32 %v172, 4294901760
    %v3177 = vsub.f32 %v172, %v3176
    %3178 = vmatpush.msra.mxu0 %v3177
    %v3179 = vand.u32 %v171, 4294901760
    %v3180 = vsub.f32 %v171, %v3179
    %3181 = vmatpush.msra.mxu0 %v3180
    %v3182 = vand.u32 %v170, 4294901760
    %v3183 = vsub.f32 %v170, %v3182
    %3184 = vmatpush.msra.mxu0 %v3183
    %v3185 = vand.u32 %v169, 4294901760
    %v3186 = vsub.f32 %v169, %v3185
    %3187 = vmatpush.msra.mxu0 %v3186
    %v3188 = vand.u32 %v168, 4294901760
    %v3189 = vsub.f32 %v168, %v3188
    %3190 = vmatpush.msra.mxu0 %v3189
    %v3191 = vand.u32 %v167, 4294901760
    %v3192 = vsub.f32 %v167, %v3191
    %3193 = vmatpush.msra.mxu0 %v3192
    %v3194 = vand.u32 %v166, 4294901760
    %v3195 = vsub.f32 %v166, %v3194
    %3196 = vmatpush.msra.mxu0 %v3195
    %v3197 = vand.u32 %v165, 4294901760
    %v3198 = vsub.f32 %v165, %v3197
    %3199 = vmatpush.msra.mxu0 %v3198
    %v3200 = vand.u32 %v164, 4294901760
    %v3201 = vsub.f32 %v164, %v3200
    %3202 = vmatpush.msra.mxu0 %v3201
    %v3203 = vand.u32 %v163, 4294901760
    %v3204 = vsub.f32 %v163, %v3203
    %3205 = vmatpush.msra.mxu0 %v3204
    %v3206 = vand.u32 %v162, 4294901760
    %v3207 = vsub.f32 %v162, %v3206
    %3208 = vmatpush.msra.mxu0 %v3207
    %v3209 = vand.u32 %v575, 4294901760
    %v3210 = vsub.f32 %v575, %v3209
    %3211 = vmatmul.f32.gmra.mxu0 %v3210
    %v3212 = vpop.f32.mrf.mxu0
    %v3213 = vadd.f32 %v3159, %v3212
    %3214 = vdwg.mxu0
    %v3215 = vand.u32 %v177, 4294901760
    %3216 = vmatpush.msra.mxu0 %v3215
    %v3217 = vand.u32 %v176, 4294901760
    %3218 = vmatpush.msra.mxu0 %v3217
    %v3219 = vand.u32 %v175, 4294901760
    %3220 = vmatpush.msra.mxu0 %v3219
    %v3221 = vand.u32 %v174, 4294901760
    %3222 = vmatpush.msra.mxu0 %v3221
    %v3223 = vand.u32 %v173, 4294901760
    %3224 = vmatpush.msra.mxu0 %v3223
    %v3225 = vand.u32 %v172, 4294901760
    %3226 = vmatpush.msra.mxu0 %v3225
    %v3227 = vand.u32 %v171, 4294901760
    %3228 = vmatpush.msra.mxu0 %v3227
    %v3229 = vand.u32 %v170, 4294901760
    %3230 = vmatpush.msra.mxu0 %v3229
    %v3231 = vand.u32 %v169, 4294901760
    %3232 = vmatpush.msra.mxu0 %v3231
    %v3233 = vand.u32 %v168, 4294901760
    %3234 = vmatpush.msra.mxu0 %v3233
    %v3235 = vand.u32 %v167, 4294901760
    %3236 = vmatpush.msra.mxu0 %v3235
    %v3237 = vand.u32 %v166, 4294901760
    %3238 = vmatpush.msra.mxu0 %v3237
    %v3239 = vand.u32 %v165, 4294901760
    %3240 = vmatpush.msra.mxu0 %v3239
    %v3241 = vand.u32 %v164, 4294901760
    %3242 = vmatpush.msra.mxu0 %v3241
    %v3243 = vand.u32 %v163, 4294901760
    %3244 = vmatpush.msra.mxu0 %v3243
    %v3245 = vand.u32 %v162, 4294901760
    %3246 = vmatpush.msra.mxu0 %v3245
    %v3247 = vand.u32 %v575, 4294901760
    %v3248 = vsub.f32 %v575, %v3247
    %v3249 = vand.u32 %v3248, 4294901760
    %3250 = vmatmul.f32.gmra.mxu0 %v3249
    %v3251 = vpop.f32.mrf.mxu0
    %v3252 = vadd.f32 %v3213, %v3251
    %3253 = vdwg.mxu0
    %v3254 = vand.u32 %v177, 4294901760
    %v3255 = vsub.f32 %v177, %v3254
    %v3256 = vand.u32 %v3255, 4294901760
    %3257 = vmatpush.msra.mxu0 %v3256
    %v3258 = vand.u32 %v176, 4294901760
    %v3259 = vsub.f32 %v176, %v3258
    %v3260 = vand.u32 %v3259, 4294901760
    %3261 = vmatpush.msra.mxu0 %v3260
    %v3262 = vand.u32 %v175, 4294901760
    %v3263 = vsub.f32 %v175, %v3262
    %v3264 = vand.u32 %v3263, 4294901760
    %3265 = vmatpush.msra.mxu0 %v3264
    %v3266 = vand.u32 %v174, 4294901760
    %v3267 = vsub.f32 %v174, %v3266
    %v3268 = vand.u32 %v3267, 4294901760
    %3269 = vmatpush.msra.mxu0 %v3268
    %v3270 = vand.u32 %v173, 4294901760
    %v3271 = vsub.f32 %v173, %v3270
    %v3272 = vand.u32 %v3271, 4294901760
    %3273 = vmatpush.msra.mxu0 %v3272
    %v3274 = vand.u32 %v172, 4294901760
    %v3275 = vsub.f32 %v172, %v3274
    %v3276 = vand.u32 %v3275, 4294901760
    %3277 = vmatpush.msra.mxu0 %v3276
    %v3278 = vand.u32 %v171, 4294901760
    %v3279 = vsub.f32 %v171, %v3278
    %v3280 = vand.u32 %v3279, 4294901760
    %3281 = vmatpush.msra.mxu0 %v3280
    %v3282 = vand.u32 %v170, 4294901760
    %v3283 = vsub.f32 %v170, %v3282
    %v3284 = vand.u32 %v3283, 4294901760
    %3285 = vmatpush.msra.mxu0 %v3284
    %v3286 = vand.u32 %v169, 4294901760
    %v3287 = vsub.f32 %v169, %v3286
    %v3288 = vand.u32 %v3287, 4294901760
    %3289 = vmatpush.msra.mxu0 %v3288
    %v3290 = vand.u32 %v168, 4294901760
    %v3291 = vsub.f32 %v168, %v3290
    %v3292 = vand.u32 %v3291, 4294901760
    %3293 = vmatpush.msra.mxu0 %v3292
    %v3294 = vand.u32 %v167, 4294901760
    %v3295 = vsub.f32 %v167, %v3294
    %v3296 = vand.u32 %v3295, 4294901760
    %3297 = vmatpush.msra.mxu0 %v3296
    %v3298 = vand.u32 %v166, 4294901760
    %v3299 = vsub.f32 %v166, %v3298
    %v3300 = vand.u32 %v3299, 4294901760
    %3301 = vmatpush.msra.mxu0 %v3300
    %v3302 = vand.u32 %v165, 4294901760
    %v3303 = vsub.f32 %v165, %v3302
    %v3304 = vand.u32 %v3303, 4294901760
    %3305 = vmatpush.msra.mxu0 %v3304
    %v3306 = vand.u32 %v164, 4294901760
    %v3307 = vsub.f32 %v164, %v3306
    %v3308 = vand.u32 %v3307, 4294901760
    %3309 = vmatpush.msra.mxu0 %v3308
    %v3310 = vand.u32 %v163, 4294901760
    %v3311 = vsub.f32 %v163, %v3310
    %v3312 = vand.u32 %v3311, 4294901760
    %3313 = vmatpush.msra.mxu0 %v3312
    %v3314 = vand.u32 %v162, 4294901760
    %v3315 = vsub.f32 %v162, %v3314
    %v3316 = vand.u32 %v3315, 4294901760
    %3317 = vmatpush.msra.mxu0 %v3316
    %v3318 = vand.u32 %v575, 4294901760
    %3319 = vmatmul.f32.gmra.mxu0 %v3318
    %v3320 = vpop.f32.mrf.mxu0
    %v3321 = vadd.f32 %v3252, %v3320
    %3322 = vdwg.mxu0
    %v3323 = vand.u32 %v177, 4294901760
    %3324 = vmatpush.msra.mxu0 %v3323
    %v3325 = vand.u32 %v176, 4294901760
    %3326 = vmatpush.msra.mxu0 %v3325
    %v3327 = vand.u32 %v175, 4294901760
    %3328 = vmatpush.msra.mxu0 %v3327
    %v3329 = vand.u32 %v174, 4294901760
    %3330 = vmatpush.msra.mxu0 %v3329
    %v3331 = vand.u32 %v173, 4294901760
    %3332 = vmatpush.msra.mxu0 %v3331
    %v3333 = vand.u32 %v172, 4294901760
    %3334 = vmatpush.msra.mxu0 %v3333
    %v3335 = vand.u32 %v171, 4294901760
    %3336 = vmatpush.msra.mxu0 %v3335
    %v3337 = vand.u32 %v170, 4294901760
    %3338 = vmatpush.msra.mxu0 %v3337
    %v3339 = vand.u32 %v169, 4294901760
    %3340 = vmatpush.msra.mxu0 %v3339
    %v3341 = vand.u32 %v168, 4294901760
    %3342 = vmatpush.msra.mxu0 %v3341
    %v3343 = vand.u32 %v167, 4294901760
    %3344 = vmatpush.msra.mxu0 %v3343
    %v3345 = vand.u32 %v166, 4294901760
    %3346 = vmatpush.msra.mxu0 %v3345
    %v3347 = vand.u32 %v165, 4294901760
    %3348 = vmatpush.msra.mxu0 %v3347
    %v3349 = vand.u32 %v164, 4294901760
    %3350 = vmatpush.msra.mxu0 %v3349
    %v3351 = vand.u32 %v163, 4294901760
    %3352 = vmatpush.msra.mxu0 %v3351
    %v3353 = vand.u32 %v162, 4294901760
    %3354 = vmatpush.msra.mxu0 %v3353
    %v3355 = vand.u32 %v575, 4294901760
    %3356 = vmatmul.f32.gmra.mxu0 %v3355
    %v3357 = vpop.f32.mrf.mxu0
    %v3358 = vadd.f32 %v3321, %v3357
    %3359 = vdwg.mxu0
    %v3360 = vand.u32 %v193, 4294901760
    %3361 = vmatpush.msra.mxu0 %v3360
    %v3362 = vand.u32 %v192, 4294901760
    %3363 = vmatpush.msra.mxu0 %v3362
    %v3364 = vand.u32 %v191, 4294901760
    %3365 = vmatpush.msra.mxu0 %v3364
    %v3366 = vand.u32 %v190, 4294901760
    %3367 = vmatpush.msra.mxu0 %v3366
    %v3368 = vand.u32 %v189, 4294901760
    %3369 = vmatpush.msra.mxu0 %v3368
    %v3370 = vand.u32 %v188, 4294901760
    %3371 = vmatpush.msra.mxu0 %v3370
    %v3372 = vand.u32 %v187, 4294901760
    %3373 = vmatpush.msra.mxu0 %v3372
    %v3374 = vand.u32 %v186, 4294901760
    %3375 = vmatpush.msra.mxu0 %v3374
    %v3376 = vand.u32 %v185, 4294901760
    %3377 = vmatpush.msra.mxu0 %v3376
    %v3378 = vand.u32 %v184, 4294901760
    %3379 = vmatpush.msra.mxu0 %v3378
    %v3380 = vand.u32 %v183, 4294901760
    %3381 = vmatpush.msra.mxu0 %v3380
    %v3382 = vand.u32 %v182, 4294901760
    %3383 = vmatpush.msra.mxu0 %v3382
    %v3384 = vand.u32 %v181, 4294901760
    %3385 = vmatpush.msra.mxu0 %v3384
    %v3386 = vand.u32 %v180, 4294901760
    %3387 = vmatpush.msra.mxu0 %v3386
    %v3388 = vand.u32 %v179, 4294901760
    %3389 = vmatpush.msra.mxu0 %v3388
    %v3390 = vand.u32 %v178, 4294901760
    %3391 = vmatpush.msra.mxu0 %v3390
    %v3392 = vand.u32 %v576, 4294901760
    %v3393 = vsub.f32 %v576, %v3392
    %v3394 = vand.u32 %v3393, 4294901760
    %v3395 = vsub.f32 %v3393, %v3394
    %v3396 = vand.u32 %v3395, 4294901760
    %3397 = vmatmul.f32.gmra.mxu0 %v3396
    %v3398 = vpop.f32.mrf.mxu0
    %v3399 = vadd.f32 %v3358, %v3398
    %3400 = vdwg.mxu0
    %v3401 = vand.u32 %v193, 4294901760
    %v3402 = vsub.f32 %v193, %v3401
    %v3403 = vand.u32 %v3402, 4294901760
    %v3404 = vsub.f32 %v3402, %v3403
    %v3405 = vand.u32 %v3404, 4294901760
    %3406 = vmatpush.msra.mxu0 %v3405
    %v3407 = vand.u32 %v192, 4294901760
    %v3408 = vsub.f32 %v192, %v3407
    %v3409 = vand.u32 %v3408, 4294901760
    %v3410 = vsub.f32 %v3408, %v3409
    %v3411 = vand.u32 %v3410, 4294901760
    %3412 = vmatpush.msra.mxu0 %v3411
    %v3413 = vand.u32 %v191, 4294901760
    %v3414 = vsub.f32 %v191, %v3413
    %v3415 = vand.u32 %v3414, 4294901760
    %v3416 = vsub.f32 %v3414, %v3415
    %v3417 = vand.u32 %v3416, 4294901760
    %3418 = vmatpush.msra.mxu0 %v3417
    %v3419 = vand.u32 %v190, 4294901760
    %v3420 = vsub.f32 %v190, %v3419
    %v3421 = vand.u32 %v3420, 4294901760
    %v3422 = vsub.f32 %v3420, %v3421
    %v3423 = vand.u32 %v3422, 4294901760
    %3424 = vmatpush.msra.mxu0 %v3423
    %v3425 = vand.u32 %v189, 4294901760
    %v3426 = vsub.f32 %v189, %v3425
    %v3427 = vand.u32 %v3426, 4294901760
    %v3428 = vsub.f32 %v3426, %v3427
    %v3429 = vand.u32 %v3428, 4294901760
    %3430 = vmatpush.msra.mxu0 %v3429
    %v3431 = vand.u32 %v188, 4294901760
    %v3432 = vsub.f32 %v188, %v3431
    %v3433 = vand.u32 %v3432, 4294901760
    %v3434 = vsub.f32 %v3432, %v3433
    %v3435 = vand.u32 %v3434, 4294901760
    %3436 = vmatpush.msra.mxu0 %v3435
    %v3437 = vand.u32 %v187, 4294901760
    %v3438 = vsub.f32 %v187, %v3437
    %v3439 = vand.u32 %v3438, 4294901760
    %v3440 = vsub.f32 %v3438, %v3439
    %v3441 = vand.u32 %v3440, 4294901760
    %3442 = vmatpush.msra.mxu0 %v3441
    %v3443 = vand.u32 %v186, 4294901760
    %v3444 = vsub.f32 %v186, %v3443
    %v3445 = vand.u32 %v3444, 4294901760
    %v3446 = vsub.f32 %v3444, %v3445
    %v3447 = vand.u32 %v3446, 4294901760
    %3448 = vmatpush.msra.mxu0 %v3447
    %v3449 = vand.u32 %v185, 4294901760
    %v3450 = vsub.f32 %v185, %v3449
    %v3451 = vand.u32 %v3450, 4294901760
    %v3452 = vsub.f32 %v3450, %v3451
    %v3453 = vand.u32 %v3452, 4294901760
    %3454 = vmatpush.msra.mxu0 %v3453
    %v3455 = vand.u32 %v184, 4294901760
    %v3456 = vsub.f32 %v184, %v3455
    %v3457 = vand.u32 %v3456, 4294901760
    %v3458 = vsub.f32 %v3456, %v3457
    %v3459 = vand.u32 %v3458, 4294901760
    %3460 = vmatpush.msra.mxu0 %v3459
    %v3461 = vand.u32 %v183, 4294901760
    %v3462 = vsub.f32 %v183, %v3461
    %v3463 = vand.u32 %v3462, 4294901760
    %v3464 = vsub.f32 %v3462, %v3463
    %v3465 = vand.u32 %v3464, 4294901760
    %3466 = vmatpush.msra.mxu0 %v3465
    %v3467 = vand.u32 %v182, 4294901760
    %v3468 = vsub.f32 %v182, %v3467
    %v3469 = vand.u32 %v3468, 4294901760
    %v3470 = vsub.f32 %v3468, %v3469
    %v3471 = vand.u32 %v3470, 4294901760
    %3472 = vmatpush.msra.mxu0 %v3471
    %v3473 = vand.u32 %v181, 4294901760
    %v3474 = vsub.f32 %v181, %v3473
    %v3475 = vand.u32 %v3474, 4294901760
    %v3476 = vsub.f32 %v3474, %v3475
    %v3477 = vand.u32 %v3476, 4294901760
    %3478 = vmatpush.msra.mxu0 %v3477
    %v3479 = vand.u32 %v180, 4294901760
    %v3480 = vsub.f32 %v180, %v3479
    %v3481 = vand.u32 %v3480, 4294901760
    %v3482 = vsub.f32 %v3480, %v3481
    %v3483 = vand.u32 %v3482, 4294901760
    %3484 = vmatpush.msra.mxu0 %v3483
    %v3485 = vand.u32 %v179, 4294901760
    %v3486 = vsub.f32 %v179, %v3485
    %v3487 = vand.u32 %v3486, 4294901760
    %v3488 = vsub.f32 %v3486, %v3487
    %v3489 = vand.u32 %v3488, 4294901760
    %3490 = vmatpush.msra.mxu0 %v3489
    %v3491 = vand.u32 %v178, 4294901760
    %v3492 = vsub.f32 %v178, %v3491
    %v3493 = vand.u32 %v3492, 4294901760
    %v3494 = vsub.f32 %v3492, %v3493
    %v3495 = vand.u32 %v3494, 4294901760
    %3496 = vmatpush.msra.mxu0 %v3495
    %v3497 = vand.u32 %v576, 4294901760
    %3498 = vmatmul.f32.gmra.mxu0 %v3497
    %v3499 = vpop.f32.mrf.mxu0
    %v3500 = vadd.f32 %v3399, %v3499
    %3501 = vdwg.mxu0
    %v3502 = vand.u32 %v193, 4294901760
    %v3503 = vsub.f32 %v193, %v3502
    %3504 = vmatpush.msra.mxu0 %v3503
    %v3505 = vand.u32 %v192, 4294901760
    %v3506 = vsub.f32 %v192, %v3505
    %3507 = vmatpush.msra.mxu0 %v3506
    %v3508 = vand.u32 %v191, 4294901760
    %v3509 = vsub.f32 %v191, %v3508
    %3510 = vmatpush.msra.mxu0 %v3509
    %v3511 = vand.u32 %v190, 4294901760
    %v3512 = vsub.f32 %v190, %v3511
    %3513 = vmatpush.msra.mxu0 %v3512
    %v3514 = vand.u32 %v189, 4294901760
    %v3515 = vsub.f32 %v189, %v3514
    %3516 = vmatpush.msra.mxu0 %v3515
    %v3517 = vand.u32 %v188, 4294901760
    %v3518 = vsub.f32 %v188, %v3517
    %3519 = vmatpush.msra.mxu0 %v3518
    %v3520 = vand.u32 %v187, 4294901760
    %v3521 = vsub.f32 %v187, %v3520
    %3522 = vmatpush.msra.mxu0 %v3521
    %v3523 = vand.u32 %v186, 4294901760
    %v3524 = vsub.f32 %v186, %v3523
    %3525 = vmatpush.msra.mxu0 %v3524
    %v3526 = vand.u32 %v185, 4294901760
    %v3527 = vsub.f32 %v185, %v3526
    %3528 = vmatpush.msra.mxu0 %v3527
    %v3529 = vand.u32 %v184, 4294901760
    %v3530 = vsub.f32 %v184, %v3529
    %3531 = vmatpush.msra.mxu0 %v3530
    %v3532 = vand.u32 %v183, 4294901760
    %v3533 = vsub.f32 %v183, %v3532
    %3534 = vmatpush.msra.mxu0 %v3533
    %v3535 = vand.u32 %v182, 4294901760
    %v3536 = vsub.f32 %v182, %v3535
    %3537 = vmatpush.msra.mxu0 %v3536
    %v3538 = vand.u32 %v181, 4294901760
    %v3539 = vsub.f32 %v181, %v3538
    %3540 = vmatpush.msra.mxu0 %v3539
    %v3541 = vand.u32 %v180, 4294901760
    %v3542 = vsub.f32 %v180, %v3541
    %3543 = vmatpush.msra.mxu0 %v3542
    %v3544 = vand.u32 %v179, 4294901760
    %v3545 = vsub.f32 %v179, %v3544
    %3546 = vmatpush.msra.mxu0 %v3545
    %v3547 = vand.u32 %v178, 4294901760
    %v3548 = vsub.f32 %v178, %v3547
    %3549 = vmatpush.msra.mxu0 %v3548
    %v3550 = vand.u32 %v576, 4294901760
    %v3551 = vsub.f32 %v576, %v3550
    %3552 = vmatmul.f32.gmra.mxu0 %v3551
    %v3553 = vpop.f32.mrf.mxu0
    %v3554 = vadd.f32 %v3500, %v3553
    %3555 = vdwg.mxu0
    %v3556 = vand.u32 %v193, 4294901760
    %3557 = vmatpush.msra.mxu0 %v3556
    %v3558 = vand.u32 %v192, 4294901760
    %3559 = vmatpush.msra.mxu0 %v3558
    %v3560 = vand.u32 %v191, 4294901760
    %3561 = vmatpush.msra.mxu0 %v3560
    %v3562 = vand.u32 %v190, 4294901760
    %3563 = vmatpush.msra.mxu0 %v3562
    %v3564 = vand.u32 %v189, 4294901760
    %3565 = vmatpush.msra.mxu0 %v3564
    %v3566 = vand.u32 %v188, 4294901760
    %3567 = vmatpush.msra.mxu0 %v3566
    %v3568 = vand.u32 %v187, 4294901760
    %3569 = vmatpush.msra.mxu0 %v3568
    %v3570 = vand.u32 %v186, 4294901760
    %3571 = vmatpush.msra.mxu0 %v3570
    %v3572 = vand.u32 %v185, 4294901760
    %3573 = vmatpush.msra.mxu0 %v3572
    %v3574 = vand.u32 %v184, 4294901760
    %3575 = vmatpush.msra.mxu0 %v3574
    %v3576 = vand.u32 %v183, 4294901760
    %3577 = vmatpush.msra.mxu0 %v3576
    %v3578 = vand.u32 %v182, 4294901760
    %3579 = vmatpush.msra.mxu0 %v3578
    %v3580 = vand.u32 %v181, 4294901760
    %3581 = vmatpush.msra.mxu0 %v3580
    %v3582 = vand.u32 %v180, 4294901760
    %3583 = vmatpush.msra.mxu0 %v3582
    %v3584 = vand.u32 %v179, 4294901760
    %3585 = vmatpush.msra.mxu0 %v3584
    %v3586 = vand.u32 %v178, 4294901760
    %3587 = vmatpush.msra.mxu0 %v3586
    %v3588 = vand.u32 %v576, 4294901760
    %v3589 = vsub.f32 %v576, %v3588
    %v3590 = vand.u32 %v3589, 4294901760
    %3591 = vmatmul.f32.gmra.mxu0 %v3590
    %v3592 = vpop.f32.mrf.mxu0
    %v3593 = vadd.f32 %v3554, %v3592
    %3594 = vdwg.mxu0
    %v3595 = vand.u32 %v193, 4294901760
    %v3596 = vsub.f32 %v193, %v3595
    %v3597 = vand.u32 %v3596, 4294901760
    %3598 = vmatpush.msra.mxu0 %v3597
    %v3599 = vand.u32 %v192, 4294901760
    %v3600 = vsub.f32 %v192, %v3599
    %v3601 = vand.u32 %v3600, 4294901760
    %3602 = vmatpush.msra.mxu0 %v3601
    %v3603 = vand.u32 %v191, 4294901760
    %v3604 = vsub.f32 %v191, %v3603
    %v3605 = vand.u32 %v3604, 4294901760
    %3606 = vmatpush.msra.mxu0 %v3605
    %v3607 = vand.u32 %v190, 4294901760
    %v3608 = vsub.f32 %v190, %v3607
    %v3609 = vand.u32 %v3608, 4294901760
    %3610 = vmatpush.msra.mxu0 %v3609
    %v3611 = vand.u32 %v189, 4294901760
    %v3612 = vsub.f32 %v189, %v3611
    %v3613 = vand.u32 %v3612, 4294901760
    %3614 = vmatpush.msra.mxu0 %v3613
    %v3615 = vand.u32 %v188, 4294901760
    %v3616 = vsub.f32 %v188, %v3615
    %v3617 = vand.u32 %v3616, 4294901760
    %3618 = vmatpush.msra.mxu0 %v3617
    %v3619 = vand.u32 %v187, 4294901760
    %v3620 = vsub.f32 %v187, %v3619
    %v3621 = vand.u32 %v3620, 4294901760
    %3622 = vmatpush.msra.mxu0 %v3621
    %v3623 = vand.u32 %v186, 4294901760
    %v3624 = vsub.f32 %v186, %v3623
    %v3625 = vand.u32 %v3624, 4294901760
    %3626 = vmatpush.msra.mxu0 %v3625
    %v3627 = vand.u32 %v185, 4294901760
    %v3628 = vsub.f32 %v185, %v3627
    %v3629 = vand.u32 %v3628, 4294901760
    %3630 = vmatpush.msra.mxu0 %v3629
    %v3631 = vand.u32 %v184, 4294901760
    %v3632 = vsub.f32 %v184, %v3631
    %v3633 = vand.u32 %v3632, 4294901760
    %3634 = vmatpush.msra.mxu0 %v3633
    %v3635 = vand.u32 %v183, 4294901760
    %v3636 = vsub.f32 %v183, %v3635
    %v3637 = vand.u32 %v3636, 4294901760
    %3638 = vmatpush.msra.mxu0 %v3637
    %v3639 = vand.u32 %v182, 4294901760
    %v3640 = vsub.f32 %v182, %v3639
    %v3641 = vand.u32 %v3640, 4294901760
    %3642 = vmatpush.msra.mxu0 %v3641
    %v3643 = vand.u32 %v181, 4294901760
    %v3644 = vsub.f32 %v181, %v3643
    %v3645 = vand.u32 %v3644, 4294901760
    %3646 = vmatpush.msra.mxu0 %v3645
    %v3647 = vand.u32 %v180, 4294901760
    %v3648 = vsub.f32 %v180, %v3647
    %v3649 = vand.u32 %v3648, 4294901760
    %3650 = vmatpush.msra.mxu0 %v3649
    %v3651 = vand.u32 %v179, 4294901760
    %v3652 = vsub.f32 %v179, %v3651
    %v3653 = vand.u32 %v3652, 4294901760
    %3654 = vmatpush.msra.mxu0 %v3653
    %v3655 = vand.u32 %v178, 4294901760
    %v3656 = vsub.f32 %v178, %v3655
    %v3657 = vand.u32 %v3656, 4294901760
    %3658 = vmatpush.msra.mxu0 %v3657
    %v3659 = vand.u32 %v576, 4294901760
    %3660 = vmatmul.f32.gmra.mxu0 %v3659
    %v3661 = vpop.f32.mrf.mxu0
    %v3662 = vadd.f32 %v3593, %v3661
    %3663 = vdwg.mxu0
    %v3664 = vand.u32 %v193, 4294901760
    %3665 = vmatpush.msra.mxu0 %v3664
    %v3666 = vand.u32 %v192, 4294901760
    %3667 = vmatpush.msra.mxu0 %v3666
    %v3668 = vand.u32 %v191, 4294901760
    %3669 = vmatpush.msra.mxu0 %v3668
    %v3670 = vand.u32 %v190, 4294901760
    %3671 = vmatpush.msra.mxu0 %v3670
    %v3672 = vand.u32 %v189, 4294901760
    %3673 = vmatpush.msra.mxu0 %v3672
    %v3674 = vand.u32 %v188, 4294901760
    %3675 = vmatpush.msra.mxu0 %v3674
    %v3676 = vand.u32 %v187, 4294901760
    %3677 = vmatpush.msra.mxu0 %v3676
    %v3678 = vand.u32 %v186, 4294901760
    %3679 = vmatpush.msra.mxu0 %v3678
    %v3680 = vand.u32 %v185, 4294901760
    %3681 = vmatpush.msra.mxu0 %v3680
    %v3682 = vand.u32 %v184, 4294901760
    %3683 = vmatpush.msra.mxu0 %v3682
    %v3684 = vand.u32 %v183, 4294901760
    %3685 = vmatpush.msra.mxu0 %v3684
    %v3686 = vand.u32 %v182, 4294901760
    %3687 = vmatpush.msra.mxu0 %v3686
    %v3688 = vand.u32 %v181, 4294901760
    %3689 = vmatpush.msra.mxu0 %v3688
    %v3690 = vand.u32 %v180, 4294901760
    %3691 = vmatpush.msra.mxu0 %v3690
    %v3692 = vand.u32 %v179, 4294901760
    %3693 = vmatpush.msra.mxu0 %v3692
    %v3694 = vand.u32 %v178, 4294901760
    %3695 = vmatpush.msra.mxu0 %v3694
    %v3696 = vand.u32 %v576, 4294901760
    %3697 = vmatmul.f32.gmra.mxu0 %v3696
    %v3698 = vpop.f32.mrf.mxu0
    %v3699 = vadd.f32 %v3662, %v3698
    %3700 = vdwg.mxu0
    %v3701 = vand.u32 %v209, 4294901760
    %3702 = vmatpush.msra.mxu0 %v3701
    %v3703 = vand.u32 %v208, 4294901760
    %3704 = vmatpush.msra.mxu0 %v3703
    %v3705 = vand.u32 %v207, 4294901760
    %3706 = vmatpush.msra.mxu0 %v3705
    %v3707 = vand.u32 %v206, 4294901760
    %3708 = vmatpush.msra.mxu0 %v3707
    %v3709 = vand.u32 %v205, 4294901760
    %3710 = vmatpush.msra.mxu0 %v3709
    %v3711 = vand.u32 %v204, 4294901760
    %3712 = vmatpush.msra.mxu0 %v3711
    %v3713 = vand.u32 %v203, 4294901760
    %3714 = vmatpush.msra.mxu0 %v3713
    %v3715 = vand.u32 %v202, 4294901760
    %3716 = vmatpush.msra.mxu0 %v3715
    %v3717 = vand.u32 %v201, 4294901760
    %3718 = vmatpush.msra.mxu0 %v3717
    %v3719 = vand.u32 %v200, 4294901760
    %3720 = vmatpush.msra.mxu0 %v3719
    %v3721 = vand.u32 %v199, 4294901760
    %3722 = vmatpush.msra.mxu0 %v3721
    %v3723 = vand.u32 %v198, 4294901760
    %3724 = vmatpush.msra.mxu0 %v3723
    %v3725 = vand.u32 %v197, 4294901760
    %3726 = vmatpush.msra.mxu0 %v3725
    %v3727 = vand.u32 %v196, 4294901760
    %3728 = vmatpush.msra.mxu0 %v3727
    %v3729 = vand.u32 %v195, 4294901760
    %3730 = vmatpush.msra.mxu0 %v3729
    %v3731 = vand.u32 %v194, 4294901760
    %3732 = vmatpush.msra.mxu0 %v3731
    %v3733 = vand.u32 %v577, 4294901760
    %v3734 = vsub.f32 %v577, %v3733
    %v3735 = vand.u32 %v3734, 4294901760
    %v3736 = vsub.f32 %v3734, %v3735
    %v3737 = vand.u32 %v3736, 4294901760
    %3738 = vmatmul.f32.gmra.mxu0 %v3737
    %v3739 = vpop.f32.mrf.mxu0
    %v3740 = vadd.f32 %v3699, %v3739
    %3741 = vdwg.mxu0
    %v3742 = vand.u32 %v209, 4294901760
    %v3743 = vsub.f32 %v209, %v3742
    %v3744 = vand.u32 %v3743, 4294901760
    %v3745 = vsub.f32 %v3743, %v3744
    %v3746 = vand.u32 %v3745, 4294901760
    %3747 = vmatpush.msra.mxu0 %v3746
    %v3748 = vand.u32 %v208, 4294901760
    %v3749 = vsub.f32 %v208, %v3748
    %v3750 = vand.u32 %v3749, 4294901760
    %v3751 = vsub.f32 %v3749, %v3750
    %v3752 = vand.u32 %v3751, 4294901760
    %3753 = vmatpush.msra.mxu0 %v3752
    %v3754 = vand.u32 %v207, 4294901760
    %v3755 = vsub.f32 %v207, %v3754
    %v3756 = vand.u32 %v3755, 4294901760
    %v3757 = vsub.f32 %v3755, %v3756
    %v3758 = vand.u32 %v3757, 4294901760
    %3759 = vmatpush.msra.mxu0 %v3758
    %v3760 = vand.u32 %v206, 4294901760
    %v3761 = vsub.f32 %v206, %v3760
    %v3762 = vand.u32 %v3761, 4294901760
    %v3763 = vsub.f32 %v3761, %v3762
    %v3764 = vand.u32 %v3763, 4294901760
    %3765 = vmatpush.msra.mxu0 %v3764
    %v3766 = vand.u32 %v205, 4294901760
    %v3767 = vsub.f32 %v205, %v3766
    %v3768 = vand.u32 %v3767, 4294901760
    %v3769 = vsub.f32 %v3767, %v3768
    %v3770 = vand.u32 %v3769, 4294901760
    %3771 = vmatpush.msra.mxu0 %v3770
    %v3772 = vand.u32 %v204, 4294901760
    %v3773 = vsub.f32 %v204, %v3772
    %v3774 = vand.u32 %v3773, 4294901760
    %v3775 = vsub.f32 %v3773, %v3774
    %v3776 = vand.u32 %v3775, 4294901760
    %3777 = vmatpush.msra.mxu0 %v3776
    %v3778 = vand.u32 %v203, 4294901760
    %v3779 = vsub.f32 %v203, %v3778
    %v3780 = vand.u32 %v3779, 4294901760
    %v3781 = vsub.f32 %v3779, %v3780
    %v3782 = vand.u32 %v3781, 4294901760
    %3783 = vmatpush.msra.mxu0 %v3782
    %v3784 = vand.u32 %v202, 4294901760
    %v3785 = vsub.f32 %v202, %v3784
    %v3786 = vand.u32 %v3785, 4294901760
    %v3787 = vsub.f32 %v3785, %v3786
    %v3788 = vand.u32 %v3787, 4294901760
    %3789 = vmatpush.msra.mxu0 %v3788
    %v3790 = vand.u32 %v201, 4294901760
    %v3791 = vsub.f32 %v201, %v3790
    %v3792 = vand.u32 %v3791, 4294901760
    %v3793 = vsub.f32 %v3791, %v3792
    %v3794 = vand.u32 %v3793, 4294901760
    %3795 = vmatpush.msra.mxu0 %v3794
    %v3796 = vand.u32 %v200, 4294901760
    %v3797 = vsub.f32 %v200, %v3796
    %v3798 = vand.u32 %v3797, 4294901760
    %v3799 = vsub.f32 %v3797, %v3798
    %v3800 = vand.u32 %v3799, 4294901760
    %3801 = vmatpush.msra.mxu0 %v3800
    %v3802 = vand.u32 %v199, 4294901760
    %v3803 = vsub.f32 %v199, %v3802
    %v3804 = vand.u32 %v3803, 4294901760
    %v3805 = vsub.f32 %v3803, %v3804
    %v3806 = vand.u32 %v3805, 4294901760
    %3807 = vmatpush.msra.mxu0 %v3806
    %v3808 = vand.u32 %v198, 4294901760
    %v3809 = vsub.f32 %v198, %v3808
    %v3810 = vand.u32 %v3809, 4294901760
    %v3811 = vsub.f32 %v3809, %v3810
    %v3812 = vand.u32 %v3811, 4294901760
    %3813 = vmatpush.msra.mxu0 %v3812
    %v3814 = vand.u32 %v197, 4294901760
    %v3815 = vsub.f32 %v197, %v3814
    %v3816 = vand.u32 %v3815, 4294901760
    %v3817 = vsub.f32 %v3815, %v3816
    %v3818 = vand.u32 %v3817, 4294901760
    %3819 = vmatpush.msra.mxu0 %v3818
    %v3820 = vand.u32 %v196, 4294901760
    %v3821 = vsub.f32 %v196, %v3820
    %v3822 = vand.u32 %v3821, 4294901760
    %v3823 = vsub.f32 %v3821, %v3822
    %v3824 = vand.u32 %v3823, 4294901760
    %3825 = vmatpush.msra.mxu0 %v3824
    %v3826 = vand.u32 %v195, 4294901760
    %v3827 = vsub.f32 %v195, %v3826
    %v3828 = vand.u32 %v3827, 4294901760
    %v3829 = vsub.f32 %v3827, %v3828
    %v3830 = vand.u32 %v3829, 4294901760
    %3831 = vmatpush.msra.mxu0 %v3830
    %v3832 = vand.u32 %v194, 4294901760
    %v3833 = vsub.f32 %v194, %v3832
    %v3834 = vand.u32 %v3833, 4294901760
    %v3835 = vsub.f32 %v3833, %v3834
    %v3836 = vand.u32 %v3835, 4294901760
    %3837 = vmatpush.msra.mxu0 %v3836
    %v3838 = vand.u32 %v577, 4294901760
    %3839 = vmatmul.f32.gmra.mxu0 %v3838
    %v3840 = vpop.f32.mrf.mxu0
    %v3841 = vadd.f32 %v3740, %v3840
    %3842 = vdwg.mxu0
    %v3843 = vand.u32 %v209, 4294901760
    %v3844 = vsub.f32 %v209, %v3843
    %3845 = vmatpush.msra.mxu0 %v3844
    %v3846 = vand.u32 %v208, 4294901760
    %v3847 = vsub.f32 %v208, %v3846
    %3848 = vmatpush.msra.mxu0 %v3847
    %v3849 = vand.u32 %v207, 4294901760
    %v3850 = vsub.f32 %v207, %v3849
    %3851 = vmatpush.msra.mxu0 %v3850
    %v3852 = vand.u32 %v206, 4294901760
    %v3853 = vsub.f32 %v206, %v3852
    %3854 = vmatpush.msra.mxu0 %v3853
    %v3855 = vand.u32 %v205, 4294901760
    %v3856 = vsub.f32 %v205, %v3855
    %3857 = vmatpush.msra.mxu0 %v3856
    %v3858 = vand.u32 %v204, 4294901760
    %v3859 = vsub.f32 %v204, %v3858
    %3860 = vmatpush.msra.mxu0 %v3859
    %v3861 = vand.u32 %v203, 4294901760
    %v3862 = vsub.f32 %v203, %v3861
    %3863 = vmatpush.msra.mxu0 %v3862
    %v3864 = vand.u32 %v202, 4294901760
    %v3865 = vsub.f32 %v202, %v3864
    %3866 = vmatpush.msra.mxu0 %v3865
    %v3867 = vand.u32 %v201, 4294901760
    %v3868 = vsub.f32 %v201, %v3867
    %3869 = vmatpush.msra.mxu0 %v3868
    %v3870 = vand.u32 %v200, 4294901760
    %v3871 = vsub.f32 %v200, %v3870
    %3872 = vmatpush.msra.mxu0 %v3871
    %v3873 = vand.u32 %v199, 4294901760
    %v3874 = vsub.f32 %v199, %v3873
    %3875 = vmatpush.msra.mxu0 %v3874
    %v3876 = vand.u32 %v198, 4294901760
    %v3877 = vsub.f32 %v198, %v3876
    %3878 = vmatpush.msra.mxu0 %v3877
    %v3879 = vand.u32 %v197, 4294901760
    %v3880 = vsub.f32 %v197, %v3879
    %3881 = vmatpush.msra.mxu0 %v3880
    %v3882 = vand.u32 %v196, 4294901760
    %v3883 = vsub.f32 %v196, %v3882
    %3884 = vmatpush.msra.mxu0 %v3883
    %v3885 = vand.u32 %v195, 4294901760
    %v3886 = vsub.f32 %v195, %v3885
    %3887 = vmatpush.msra.mxu0 %v3886
    %v3888 = vand.u32 %v194, 4294901760
    %v3889 = vsub.f32 %v194, %v3888
    %3890 = vmatpush.msra.mxu0 %v3889
    %v3891 = vand.u32 %v577, 4294901760
    %v3892 = vsub.f32 %v577, %v3891
    %3893 = vmatmul.f32.gmra.mxu0 %v3892
    %v3894 = vpop.f32.mrf.mxu0
    %v3895 = vadd.f32 %v3841, %v3894
    %3896 = vdwg.mxu0
    %v3897 = vand.u32 %v209, 4294901760
    %3898 = vmatpush.msra.mxu0 %v3897
    %v3899 = vand.u32 %v208, 4294901760
    %3900 = vmatpush.msra.mxu0 %v3899
    %v3901 = vand.u32 %v207, 4294901760
    %3902 = vmatpush.msra.mxu0 %v3901
    %v3903 = vand.u32 %v206, 4294901760
    %3904 = vmatpush.msra.mxu0 %v3903
    %v3905 = vand.u32 %v205, 4294901760
    %3906 = vmatpush.msra.mxu0 %v3905
    %v3907 = vand.u32 %v204, 4294901760
    %3908 = vmatpush.msra.mxu0 %v3907
    %v3909 = vand.u32 %v203, 4294901760
    %3910 = vmatpush.msra.mxu0 %v3909
    %v3911 = vand.u32 %v202, 4294901760
    %3912 = vmatpush.msra.mxu0 %v3911
    %v3913 = vand.u32 %v201, 4294901760
    %3914 = vmatpush.msra.mxu0 %v3913
    %v3915 = vand.u32 %v200, 4294901760
    %3916 = vmatpush.msra.mxu0 %v3915
    %v3917 = vand.u32 %v199, 4294901760
    %3918 = vmatpush.msra.mxu0 %v3917
    %v3919 = vand.u32 %v198, 4294901760
    %3920 = vmatpush.msra.mxu0 %v3919
    %v3921 = vand.u32 %v197, 4294901760
    %3922 = vmatpush.msra.mxu0 %v3921
    %v3923 = vand.u32 %v196, 4294901760
    %3924 = vmatpush.msra.mxu0 %v3923
    %v3925 = vand.u32 %v195, 4294901760
    %3926 = vmatpush.msra.mxu0 %v3925
    %v3927 = vand.u32 %v194, 4294901760
    %3928 = vmatpush.msra.mxu0 %v3927
    %v3929 = vand.u32 %v577, 4294901760
    %v3930 = vsub.f32 %v577, %v3929
    %v3931 = vand.u32 %v3930, 4294901760
    %3932 = vmatmul.f32.gmra.mxu0 %v3931
    %v3933 = vpop.f32.mrf.mxu0
    %v3934 = vadd.f32 %v3895, %v3933
    %3935 = vdwg.mxu0
    %v3936 = vand.u32 %v209, 4294901760
    %v3937 = vsub.f32 %v209, %v3936
    %v3938 = vand.u32 %v3937, 4294901760
    %3939 = vmatpush.msra.mxu0 %v3938
    %v3940 = vand.u32 %v208, 4294901760
    %v3941 = vsub.f32 %v208, %v3940
    %v3942 = vand.u32 %v3941, 4294901760
    %3943 = vmatpush.msra.mxu0 %v3942
    %v3944 = vand.u32 %v207, 4294901760
    %v3945 = vsub.f32 %v207, %v3944
    %v3946 = vand.u32 %v3945, 4294901760
    %3947 = vmatpush.msra.mxu0 %v3946
    %v3948 = vand.u32 %v206, 4294901760
    %v3949 = vsub.f32 %v206, %v3948
    %v3950 = vand.u32 %v3949, 4294901760
    %3951 = vmatpush.msra.mxu0 %v3950
    %v3952 = vand.u32 %v205, 4294901760
    %v3953 = vsub.f32 %v205, %v3952
    %v3954 = vand.u32 %v3953, 4294901760
    %3955 = vmatpush.msra.mxu0 %v3954
    %v3956 = vand.u32 %v204, 4294901760
    %v3957 = vsub.f32 %v204, %v3956
    %v3958 = vand.u32 %v3957, 4294901760
    %3959 = vmatpush.msra.mxu0 %v3958
    %v3960 = vand.u32 %v203, 4294901760
    %v3961 = vsub.f32 %v203, %v3960
    %v3962 = vand.u32 %v3961, 4294901760
    %3963 = vmatpush.msra.mxu0 %v3962
    %v3964 = vand.u32 %v202, 4294901760
    %v3965 = vsub.f32 %v202, %v3964
    %v3966 = vand.u32 %v3965, 4294901760
    %3967 = vmatpush.msra.mxu0 %v3966
    %v3968 = vand.u32 %v201, 4294901760
    %v3969 = vsub.f32 %v201, %v3968
    %v3970 = vand.u32 %v3969, 4294901760
    %3971 = vmatpush.msra.mxu0 %v3970
    %v3972 = vand.u32 %v200, 4294901760
    %v3973 = vsub.f32 %v200, %v3972
    %v3974 = vand.u32 %v3973, 4294901760
    %3975 = vmatpush.msra.mxu0 %v3974
    %v3976 = vand.u32 %v199, 4294901760
    %v3977 = vsub.f32 %v199, %v3976
    %v3978 = vand.u32 %v3977, 4294901760
    %3979 = vmatpush.msra.mxu0 %v3978
    %v3980 = vand.u32 %v198, 4294901760
    %v3981 = vsub.f32 %v198, %v3980
    %v3982 = vand.u32 %v3981, 4294901760
    %3983 = vmatpush.msra.mxu0 %v3982
    %v3984 = vand.u32 %v197, 4294901760
    %v3985 = vsub.f32 %v197, %v3984
    %v3986 = vand.u32 %v3985, 4294901760
    %3987 = vmatpush.msra.mxu0 %v3986
    %v3988 = vand.u32 %v196, 4294901760
    %v3989 = vsub.f32 %v196, %v3988
    %v3990 = vand.u32 %v3989, 4294901760
    %3991 = vmatpush.msra.mxu0 %v3990
    %v3992 = vand.u32 %v195, 4294901760
    %v3993 = vsub.f32 %v195, %v3992
    %v3994 = vand.u32 %v3993, 4294901760
    %3995 = vmatpush.msra.mxu0 %v3994
    %v3996 = vand.u32 %v194, 4294901760
    %v3997 = vsub.f32 %v194, %v3996
    %v3998 = vand.u32 %v3997, 4294901760
    %3999 = vmatpush.msra.mxu0 %v3998
    %v4000 = vand.u32 %v577, 4294901760
    %4001 = vmatmul.f32.gmra.mxu0 %v4000
    %v4002 = vpop.f32.mrf.mxu0
    %v4003 = vadd.f32 %v3934, %v4002
    %4004 = vdwg.mxu0
    %v4005 = vand.u32 %v209, 4294901760
    %4006 = vmatpush.msra.mxu0 %v4005
    %v4007 = vand.u32 %v208, 4294901760
    %4008 = vmatpush.msra.mxu0 %v4007
    %v4009 = vand.u32 %v207, 4294901760
    %4010 = vmatpush.msra.mxu0 %v4009
    %v4011 = vand.u32 %v206, 4294901760
    %4012 = vmatpush.msra.mxu0 %v4011
    %v4013 = vand.u32 %v205, 4294901760
    %4014 = vmatpush.msra.mxu0 %v4013
    %v4015 = vand.u32 %v204, 4294901760
    %4016 = vmatpush.msra.mxu0 %v4015
    %v4017 = vand.u32 %v203, 4294901760
    %4018 = vmatpush.msra.mxu0 %v4017
    %v4019 = vand.u32 %v202, 4294901760
    %4020 = vmatpush.msra.mxu0 %v4019
    %v4021 = vand.u32 %v201, 4294901760
    %4022 = vmatpush.msra.mxu0 %v4021
    %v4023 = vand.u32 %v200, 4294901760
    %4024 = vmatpush.msra.mxu0 %v4023
    %v4025 = vand.u32 %v199, 4294901760
    %4026 = vmatpush.msra.mxu0 %v4025
    %v4027 = vand.u32 %v198, 4294901760
    %4028 = vmatpush.msra.mxu0 %v4027
    %v4029 = vand.u32 %v197, 4294901760
    %4030 = vmatpush.msra.mxu0 %v4029
    %v4031 = vand.u32 %v196, 4294901760
    %4032 = vmatpush.msra.mxu0 %v4031
    %v4033 = vand.u32 %v195, 4294901760
    %4034 = vmatpush.msra.mxu0 %v4033
    %v4035 = vand.u32 %v194, 4294901760
    %4036 = vmatpush.msra.mxu0 %v4035
    %v4037 = vand.u32 %v577, 4294901760
    %4038 = vmatmul.f32.gmra.mxu0 %v4037
    %v4039 = vpop.f32.mrf.mxu0
    %v4040 = vadd.f32 %v4003, %v4039
    %4041 = vdwg.mxu0
    %v4042 = vand.u32 %v225, 4294901760
    %4043 = vmatpush.msra.mxu0 %v4042
    %v4044 = vand.u32 %v224, 4294901760
    %4045 = vmatpush.msra.mxu0 %v4044
    %v4046 = vand.u32 %v223, 4294901760
    %4047 = vmatpush.msra.mxu0 %v4046
    %v4048 = vand.u32 %v222, 4294901760
    %4049 = vmatpush.msra.mxu0 %v4048
    %v4050 = vand.u32 %v221, 4294901760
    %4051 = vmatpush.msra.mxu0 %v4050
    %v4052 = vand.u32 %v220, 4294901760
    %4053 = vmatpush.msra.mxu0 %v4052
    %v4054 = vand.u32 %v219, 4294901760
    %4055 = vmatpush.msra.mxu0 %v4054
    %v4056 = vand.u32 %v218, 4294901760
    %4057 = vmatpush.msra.mxu0 %v4056
    %v4058 = vand.u32 %v217, 4294901760
    %4059 = vmatpush.msra.mxu0 %v4058
    %v4060 = vand.u32 %v216, 4294901760
    %4061 = vmatpush.msra.mxu0 %v4060
    %v4062 = vand.u32 %v215, 4294901760
    %4063 = vmatpush.msra.mxu0 %v4062
    %v4064 = vand.u32 %v214, 4294901760
    %4065 = vmatpush.msra.mxu0 %v4064
    %v4066 = vand.u32 %v213, 4294901760
    %4067 = vmatpush.msra.mxu0 %v4066
    %v4068 = vand.u32 %v212, 4294901760
    %4069 = vmatpush.msra.mxu0 %v4068
    %v4070 = vand.u32 %v211, 4294901760
    %4071 = vmatpush.msra.mxu0 %v4070
    %v4072 = vand.u32 %v210, 4294901760
    %4073 = vmatpush.msra.mxu0 %v4072
    %v4074 = vand.u32 %v578, 4294901760
    %v4075 = vsub.f32 %v578, %v4074
    %v4076 = vand.u32 %v4075, 4294901760
    %v4077 = vsub.f32 %v4075, %v4076
    %v4078 = vand.u32 %v4077, 4294901760
    %4079 = vmatmul.f32.gmra.mxu0 %v4078
    %v4080 = vpop.f32.mrf.mxu0
    %v4081 = vadd.f32 %v4040, %v4080
    %4082 = vdwg.mxu0
    %v4083 = vand.u32 %v225, 4294901760
    %v4084 = vsub.f32 %v225, %v4083
    %v4085 = vand.u32 %v4084, 4294901760
    %v4086 = vsub.f32 %v4084, %v4085
    %v4087 = vand.u32 %v4086, 4294901760
    %4088 = vmatpush.msra.mxu0 %v4087
    %v4089 = vand.u32 %v224, 4294901760
    %v4090 = vsub.f32 %v224, %v4089
    %v4091 = vand.u32 %v4090, 4294901760
    %v4092 = vsub.f32 %v4090, %v4091
    %v4093 = vand.u32 %v4092, 4294901760
    %4094 = vmatpush.msra.mxu0 %v4093
    %v4095 = vand.u32 %v223, 4294901760
    %v4096 = vsub.f32 %v223, %v4095
    %v4097 = vand.u32 %v4096, 4294901760
    %v4098 = vsub.f32 %v4096, %v4097
    %v4099 = vand.u32 %v4098, 4294901760
    %4100 = vmatpush.msra.mxu0 %v4099
    %v4101 = vand.u32 %v222, 4294901760
    %v4102 = vsub.f32 %v222, %v4101
    %v4103 = vand.u32 %v4102, 4294901760
    %v4104 = vsub.f32 %v4102, %v4103
    %v4105 = vand.u32 %v4104, 4294901760
    %4106 = vmatpush.msra.mxu0 %v4105
    %v4107 = vand.u32 %v221, 4294901760
    %v4108 = vsub.f32 %v221, %v4107
    %v4109 = vand.u32 %v4108, 4294901760
    %v4110 = vsub.f32 %v4108, %v4109
    %v4111 = vand.u32 %v4110, 4294901760
    %4112 = vmatpush.msra.mxu0 %v4111
    %v4113 = vand.u32 %v220, 4294901760
    %v4114 = vsub.f32 %v220, %v4113
    %v4115 = vand.u32 %v4114, 4294901760
    %v4116 = vsub.f32 %v4114, %v4115
    %v4117 = vand.u32 %v4116, 4294901760
    %4118 = vmatpush.msra.mxu0 %v4117
    %v4119 = vand.u32 %v219, 4294901760
    %v4120 = vsub.f32 %v219, %v4119
    %v4121 = vand.u32 %v4120, 4294901760
    %v4122 = vsub.f32 %v4120, %v4121
    %v4123 = vand.u32 %v4122, 4294901760
    %4124 = vmatpush.msra.mxu0 %v4123
    %v4125 = vand.u32 %v218, 4294901760
    %v4126 = vsub.f32 %v218, %v4125
    %v4127 = vand.u32 %v4126, 4294901760
    %v4128 = vsub.f32 %v4126, %v4127
    %v4129 = vand.u32 %v4128, 4294901760
    %4130 = vmatpush.msra.mxu0 %v4129
    %v4131 = vand.u32 %v217, 4294901760
    %v4132 = vsub.f32 %v217, %v4131
    %v4133 = vand.u32 %v4132, 4294901760
    %v4134 = vsub.f32 %v4132, %v4133
    %v4135 = vand.u32 %v4134, 4294901760
    %4136 = vmatpush.msra.mxu0 %v4135
    %v4137 = vand.u32 %v216, 4294901760
    %v4138 = vsub.f32 %v216, %v4137
    %v4139 = vand.u32 %v4138, 4294901760
    %v4140 = vsub.f32 %v4138, %v4139
    %v4141 = vand.u32 %v4140, 4294901760
    %4142 = vmatpush.msra.mxu0 %v4141
    %v4143 = vand.u32 %v215, 4294901760
    %v4144 = vsub.f32 %v215, %v4143
    %v4145 = vand.u32 %v4144, 4294901760
    %v4146 = vsub.f32 %v4144, %v4145
    %v4147 = vand.u32 %v4146, 4294901760
    %4148 = vmatpush.msra.mxu0 %v4147
    %v4149 = vand.u32 %v214, 4294901760
    %v4150 = vsub.f32 %v214, %v4149
    %v4151 = vand.u32 %v4150, 4294901760
    %v4152 = vsub.f32 %v4150, %v4151
    %v4153 = vand.u32 %v4152, 4294901760
    %4154 = vmatpush.msra.mxu0 %v4153
    %v4155 = vand.u32 %v213, 4294901760
    %v4156 = vsub.f32 %v213, %v4155
    %v4157 = vand.u32 %v4156, 4294901760
    %v4158 = vsub.f32 %v4156, %v4157
    %v4159 = vand.u32 %v4158, 4294901760
    %4160 = vmatpush.msra.mxu0 %v4159
    %v4161 = vand.u32 %v212, 4294901760
    %v4162 = vsub.f32 %v212, %v4161
    %v4163 = vand.u32 %v4162, 4294901760
    %v4164 = vsub.f32 %v4162, %v4163
    %v4165 = vand.u32 %v4164, 4294901760
    %4166 = vmatpush.msra.mxu0 %v4165
    %v4167 = vand.u32 %v211, 4294901760
    %v4168 = vsub.f32 %v211, %v4167
    %v4169 = vand.u32 %v4168, 4294901760
    %v4170 = vsub.f32 %v4168, %v4169
    %v4171 = vand.u32 %v4170, 4294901760
    %4172 = vmatpush.msra.mxu0 %v4171
    %v4173 = vand.u32 %v210, 4294901760
    %v4174 = vsub.f32 %v210, %v4173
    %v4175 = vand.u32 %v4174, 4294901760
    %v4176 = vsub.f32 %v4174, %v4175
    %v4177 = vand.u32 %v4176, 4294901760
    %4178 = vmatpush.msra.mxu0 %v4177
    %v4179 = vand.u32 %v578, 4294901760
    %4180 = vmatmul.f32.gmra.mxu0 %v4179
    %v4181 = vpop.f32.mrf.mxu0
    %v4182 = vadd.f32 %v4081, %v4181
    %4183 = vdwg.mxu0
    %v4184 = vand.u32 %v225, 4294901760
    %v4185 = vsub.f32 %v225, %v4184
    %4186 = vmatpush.msra.mxu0 %v4185
    %v4187 = vand.u32 %v224, 4294901760
    %v4188 = vsub.f32 %v224, %v4187
    %4189 = vmatpush.msra.mxu0 %v4188
    %v4190 = vand.u32 %v223, 4294901760
    %v4191 = vsub.f32 %v223, %v4190
    %4192 = vmatpush.msra.mxu0 %v4191
    %v4193 = vand.u32 %v222, 4294901760
    %v4194 = vsub.f32 %v222, %v4193
    %4195 = vmatpush.msra.mxu0 %v4194
    %v4196 = vand.u32 %v221, 4294901760
    %v4197 = vsub.f32 %v221, %v4196
    %4198 = vmatpush.msra.mxu0 %v4197
    %v4199 = vand.u32 %v220, 4294901760
    %v4200 = vsub.f32 %v220, %v4199
    %4201 = vmatpush.msra.mxu0 %v4200
    %v4202 = vand.u32 %v219, 4294901760
    %v4203 = vsub.f32 %v219, %v4202
    %4204 = vmatpush.msra.mxu0 %v4203
    %v4205 = vand.u32 %v218, 4294901760
    %v4206 = vsub.f32 %v218, %v4205
    %4207 = vmatpush.msra.mxu0 %v4206
    %v4208 = vand.u32 %v217, 4294901760
    %v4209 = vsub.f32 %v217, %v4208
    %4210 = vmatpush.msra.mxu0 %v4209
    %v4211 = vand.u32 %v216, 4294901760
    %v4212 = vsub.f32 %v216, %v4211
    %4213 = vmatpush.msra.mxu0 %v4212
    %v4214 = vand.u32 %v215, 4294901760
    %v4215 = vsub.f32 %v215, %v4214
    %4216 = vmatpush.msra.mxu0 %v4215
    %v4217 = vand.u32 %v214, 4294901760
    %v4218 = vsub.f32 %v214, %v4217
    %4219 = vmatpush.msra.mxu0 %v4218
    %v4220 = vand.u32 %v213, 4294901760
    %v4221 = vsub.f32 %v213, %v4220
    %4222 = vmatpush.msra.mxu0 %v4221
    %v4223 = vand.u32 %v212, 4294901760
    %v4224 = vsub.f32 %v212, %v4223
    %4225 = vmatpush.msra.mxu0 %v4224
    %v4226 = vand.u32 %v211, 4294901760
    %v4227 = vsub.f32 %v211, %v4226
    %4228 = vmatpush.msra.mxu0 %v4227
    %v4229 = vand.u32 %v210, 4294901760
    %v4230 = vsub.f32 %v210, %v4229
    %4231 = vmatpush.msra.mxu0 %v4230
    %v4232 = vand.u32 %v578, 4294901760
    %v4233 = vsub.f32 %v578, %v4232
    %4234 = vmatmul.f32.gmra.mxu0 %v4233
    %v4235 = vpop.f32.mrf.mxu0
    %v4236 = vadd.f32 %v4182, %v4235
    %4237 = vdwg.mxu0
    %v4238 = vand.u32 %v225, 4294901760
    %4239 = vmatpush.msra.mxu0 %v4238
    %v4240 = vand.u32 %v224, 4294901760
    %4241 = vmatpush.msra.mxu0 %v4240
    %v4242 = vand.u32 %v223, 4294901760
    %4243 = vmatpush.msra.mxu0 %v4242
    %v4244 = vand.u32 %v222, 4294901760
    %4245 = vmatpush.msra.mxu0 %v4244
    %v4246 = vand.u32 %v221, 4294901760
    %4247 = vmatpush.msra.mxu0 %v4246
    %v4248 = vand.u32 %v220, 4294901760
    %4249 = vmatpush.msra.mxu0 %v4248
    %v4250 = vand.u32 %v219, 4294901760
    %4251 = vmatpush.msra.mxu0 %v4250
    %v4252 = vand.u32 %v218, 4294901760
    %4253 = vmatpush.msra.mxu0 %v4252
    %v4254 = vand.u32 %v217, 4294901760
    %4255 = vmatpush.msra.mxu0 %v4254
    %v4256 = vand.u32 %v216, 4294901760
    %4257 = vmatpush.msra.mxu0 %v4256
    %v4258 = vand.u32 %v215, 4294901760
    %4259 = vmatpush.msra.mxu0 %v4258
    %v4260 = vand.u32 %v214, 4294901760
    %4261 = vmatpush.msra.mxu0 %v4260
    %v4262 = vand.u32 %v213, 4294901760
    %4263 = vmatpush.msra.mxu0 %v4262
    %v4264 = vand.u32 %v212, 4294901760
    %4265 = vmatpush.msra.mxu0 %v4264
    %v4266 = vand.u32 %v211, 4294901760
    %4267 = vmatpush.msra.mxu0 %v4266
    %v4268 = vand.u32 %v210, 4294901760
    %4269 = vmatpush.msra.mxu0 %v4268
    %v4270 = vand.u32 %v578, 4294901760
    %v4271 = vsub.f32 %v578, %v4270
    %v4272 = vand.u32 %v4271, 4294901760
    %4273 = vmatmul.f32.gmra.mxu0 %v4272
    %v4274 = vpop.f32.mrf.mxu0
    %v4275 = vadd.f32 %v4236, %v4274
    %4276 = vdwg.mxu0
    %v4277 = vand.u32 %v225, 4294901760
    %v4278 = vsub.f32 %v225, %v4277
    %v4279 = vand.u32 %v4278, 4294901760
    %4280 = vmatpush.msra.mxu0 %v4279
    %v4281 = vand.u32 %v224, 4294901760
    %v4282 = vsub.f32 %v224, %v4281
    %v4283 = vand.u32 %v4282, 4294901760
    %4284 = vmatpush.msra.mxu0 %v4283
    %v4285 = vand.u32 %v223, 4294901760
    %v4286 = vsub.f32 %v223, %v4285
    %v4287 = vand.u32 %v4286, 4294901760
    %4288 = vmatpush.msra.mxu0 %v4287
    %v4289 = vand.u32 %v222, 4294901760
    %v4290 = vsub.f32 %v222, %v4289
    %v4291 = vand.u32 %v4290, 4294901760
    %4292 = vmatpush.msra.mxu0 %v4291
    %v4293 = vand.u32 %v221, 4294901760
    %v4294 = vsub.f32 %v221, %v4293
    %v4295 = vand.u32 %v4294, 4294901760
    %4296 = vmatpush.msra.mxu0 %v4295
    %v4297 = vand.u32 %v220, 4294901760
    %v4298 = vsub.f32 %v220, %v4297
    %v4299 = vand.u32 %v4298, 4294901760
    %4300 = vmatpush.msra.mxu0 %v4299
    %v4301 = vand.u32 %v219, 4294901760
    %v4302 = vsub.f32 %v219, %v4301
    %v4303 = vand.u32 %v4302, 4294901760
    %4304 = vmatpush.msra.mxu0 %v4303
    %v4305 = vand.u32 %v218, 4294901760
    %v4306 = vsub.f32 %v218, %v4305
    %v4307 = vand.u32 %v4306, 4294901760
    %4308 = vmatpush.msra.mxu0 %v4307
    %v4309 = vand.u32 %v217, 4294901760
    %v4310 = vsub.f32 %v217, %v4309
    %v4311 = vand.u32 %v4310, 4294901760
    %4312 = vmatpush.msra.mxu0 %v4311
    %v4313 = vand.u32 %v216, 4294901760
    %v4314 = vsub.f32 %v216, %v4313
    %v4315 = vand.u32 %v4314, 4294901760
    %4316 = vmatpush.msra.mxu0 %v4315
    %v4317 = vand.u32 %v215, 4294901760
    %v4318 = vsub.f32 %v215, %v4317
    %v4319 = vand.u32 %v4318, 4294901760
    %4320 = vmatpush.msra.mxu0 %v4319
    %v4321 = vand.u32 %v214, 4294901760
    %v4322 = vsub.f32 %v214, %v4321
    %v4323 = vand.u32 %v4322, 4294901760
    %4324 = vmatpush.msra.mxu0 %v4323
    %v4325 = vand.u32 %v213, 4294901760
    %v4326 = vsub.f32 %v213, %v4325
    %v4327 = vand.u32 %v4326, 4294901760
    %4328 = vmatpush.msra.mxu0 %v4327
    %v4329 = vand.u32 %v212, 4294901760
    %v4330 = vsub.f32 %v212, %v4329
    %v4331 = vand.u32 %v4330, 4294901760
    %4332 = vmatpush.msra.mxu0 %v4331
    %v4333 = vand.u32 %v211, 4294901760
    %v4334 = vsub.f32 %v211, %v4333
    %v4335 = vand.u32 %v4334, 4294901760
    %4336 = vmatpush.msra.mxu0 %v4335
    %v4337 = vand.u32 %v210, 4294901760
    %v4338 = vsub.f32 %v210, %v4337
    %v4339 = vand.u32 %v4338, 4294901760
    %4340 = vmatpush.msra.mxu0 %v4339
    %v4341 = vand.u32 %v578, 4294901760
    %4342 = vmatmul.f32.gmra.mxu0 %v4341
    %v4343 = vpop.f32.mrf.mxu0
    %v4344 = vadd.f32 %v4275, %v4343
    %4345 = vdwg.mxu0
    %v4346 = vand.u32 %v225, 4294901760
    %4347 = vmatpush.msra.mxu0 %v4346
    %v4348 = vand.u32 %v224, 4294901760
    %4349 = vmatpush.msra.mxu0 %v4348
    %v4350 = vand.u32 %v223, 4294901760
    %4351 = vmatpush.msra.mxu0 %v4350
    %v4352 = vand.u32 %v222, 4294901760
    %4353 = vmatpush.msra.mxu0 %v4352
    %v4354 = vand.u32 %v221, 4294901760
    %4355 = vmatpush.msra.mxu0 %v4354
    %v4356 = vand.u32 %v220, 4294901760
    %4357 = vmatpush.msra.mxu0 %v4356
    %v4358 = vand.u32 %v219, 4294901760
    %4359 = vmatpush.msra.mxu0 %v4358
    %v4360 = vand.u32 %v218, 4294901760
    %4361 = vmatpush.msra.mxu0 %v4360
    %v4362 = vand.u32 %v217, 4294901760
    %4363 = vmatpush.msra.mxu0 %v4362
    %v4364 = vand.u32 %v216, 4294901760
    %4365 = vmatpush.msra.mxu0 %v4364
    %v4366 = vand.u32 %v215, 4294901760
    %4367 = vmatpush.msra.mxu0 %v4366
    %v4368 = vand.u32 %v214, 4294901760
    %4369 = vmatpush.msra.mxu0 %v4368
    %v4370 = vand.u32 %v213, 4294901760
    %4371 = vmatpush.msra.mxu0 %v4370
    %v4372 = vand.u32 %v212, 4294901760
    %4373 = vmatpush.msra.mxu0 %v4372
    %v4374 = vand.u32 %v211, 4294901760
    %4375 = vmatpush.msra.mxu0 %v4374
    %v4376 = vand.u32 %v210, 4294901760
    %4377 = vmatpush.msra.mxu0 %v4376
    %v4378 = vand.u32 %v578, 4294901760
    %4379 = vmatmul.f32.gmra.mxu0 %v4378
    %v4380 = vpop.f32.mrf.mxu0
    %v4381 = vadd.f32 %v4344, %v4380
    %4382 = vdwg.mxu0
    %v4383 = vand.u32 %v241, 4294901760
    %4384 = vmatpush.msra.mxu0 %v4383
    %v4385 = vand.u32 %v240, 4294901760
    %4386 = vmatpush.msra.mxu0 %v4385
    %v4387 = vand.u32 %v239, 4294901760
    %4388 = vmatpush.msra.mxu0 %v4387
    %v4389 = vand.u32 %v238, 4294901760
    %4390 = vmatpush.msra.mxu0 %v4389
    %v4391 = vand.u32 %v237, 4294901760
    %4392 = vmatpush.msra.mxu0 %v4391
    %v4393 = vand.u32 %v236, 4294901760
    %4394 = vmatpush.msra.mxu0 %v4393
    %v4395 = vand.u32 %v235, 4294901760
    %4396 = vmatpush.msra.mxu0 %v4395
    %v4397 = vand.u32 %v234, 4294901760
    %4398 = vmatpush.msra.mxu0 %v4397
    %v4399 = vand.u32 %v233, 4294901760
    %4400 = vmatpush.msra.mxu0 %v4399
    %v4401 = vand.u32 %v232, 4294901760
    %4402 = vmatpush.msra.mxu0 %v4401
    %v4403 = vand.u32 %v231, 4294901760
    %4404 = vmatpush.msra.mxu0 %v4403
    %v4405 = vand.u32 %v230, 4294901760
    %4406 = vmatpush.msra.mxu0 %v4405
    %v4407 = vand.u32 %v229, 4294901760
    %4408 = vmatpush.msra.mxu0 %v4407
    %v4409 = vand.u32 %v228, 4294901760
    %4410 = vmatpush.msra.mxu0 %v4409
    %v4411 = vand.u32 %v227, 4294901760
    %4412 = vmatpush.msra.mxu0 %v4411
    %v4413 = vand.u32 %v226, 4294901760
    %4414 = vmatpush.msra.mxu0 %v4413
    %v4415 = vand.u32 %v579, 4294901760
    %v4416 = vsub.f32 %v579, %v4415
    %v4417 = vand.u32 %v4416, 4294901760
    %v4418 = vsub.f32 %v4416, %v4417
    %v4419 = vand.u32 %v4418, 4294901760
    %4420 = vmatmul.f32.gmra.mxu0 %v4419
    %v4421 = vpop.f32.mrf.mxu0
    %v4422 = vadd.f32 %v4381, %v4421
    %4423 = vdwg.mxu0
    %v4424 = vand.u32 %v241, 4294901760
    %v4425 = vsub.f32 %v241, %v4424
    %v4426 = vand.u32 %v4425, 4294901760
    %v4427 = vsub.f32 %v4425, %v4426
    %v4428 = vand.u32 %v4427, 4294901760
    %4429 = vmatpush.msra.mxu0 %v4428
    %v4430 = vand.u32 %v240, 4294901760
    %v4431 = vsub.f32 %v240, %v4430
    %v4432 = vand.u32 %v4431, 4294901760
    %v4433 = vsub.f32 %v4431, %v4432
    %v4434 = vand.u32 %v4433, 4294901760
    %4435 = vmatpush.msra.mxu0 %v4434
    %v4436 = vand.u32 %v239, 4294901760
    %v4437 = vsub.f32 %v239, %v4436
    %v4438 = vand.u32 %v4437, 4294901760
    %v4439 = vsub.f32 %v4437, %v4438
    %v4440 = vand.u32 %v4439, 4294901760
    %4441 = vmatpush.msra.mxu0 %v4440
    %v4442 = vand.u32 %v238, 4294901760
    %v4443 = vsub.f32 %v238, %v4442
    %v4444 = vand.u32 %v4443, 4294901760
    %v4445 = vsub.f32 %v4443, %v4444
    %v4446 = vand.u32 %v4445, 4294901760
    %4447 = vmatpush.msra.mxu0 %v4446
    %v4448 = vand.u32 %v237, 4294901760
    %v4449 = vsub.f32 %v237, %v4448
    %v4450 = vand.u32 %v4449, 4294901760
    %v4451 = vsub.f32 %v4449, %v4450
    %v4452 = vand.u32 %v4451, 4294901760
    %4453 = vmatpush.msra.mxu0 %v4452
    %v4454 = vand.u32 %v236, 4294901760
    %v4455 = vsub.f32 %v236, %v4454
    %v4456 = vand.u32 %v4455, 4294901760
    %v4457 = vsub.f32 %v4455, %v4456
    %v4458 = vand.u32 %v4457, 4294901760
    %4459 = vmatpush.msra.mxu0 %v4458
    %v4460 = vand.u32 %v235, 4294901760
    %v4461 = vsub.f32 %v235, %v4460
    %v4462 = vand.u32 %v4461, 4294901760
    %v4463 = vsub.f32 %v4461, %v4462
    %v4464 = vand.u32 %v4463, 4294901760
    %4465 = vmatpush.msra.mxu0 %v4464
    %v4466 = vand.u32 %v234, 4294901760
    %v4467 = vsub.f32 %v234, %v4466
    %v4468 = vand.u32 %v4467, 4294901760
    %v4469 = vsub.f32 %v4467, %v4468
    %v4470 = vand.u32 %v4469, 4294901760
    %4471 = vmatpush.msra.mxu0 %v4470
    %v4472 = vand.u32 %v233, 4294901760
    %v4473 = vsub.f32 %v233, %v4472
    %v4474 = vand.u32 %v4473, 4294901760
    %v4475 = vsub.f32 %v4473, %v4474
    %v4476 = vand.u32 %v4475, 4294901760
    %4477 = vmatpush.msra.mxu0 %v4476
    %v4478 = vand.u32 %v232, 4294901760
    %v4479 = vsub.f32 %v232, %v4478
    %v4480 = vand.u32 %v4479, 4294901760
    %v4481 = vsub.f32 %v4479, %v4480
    %v4482 = vand.u32 %v4481, 4294901760
    %4483 = vmatpush.msra.mxu0 %v4482
    %v4484 = vand.u32 %v231, 4294901760
    %v4485 = vsub.f32 %v231, %v4484
    %v4486 = vand.u32 %v4485, 4294901760
    %v4487 = vsub.f32 %v4485, %v4486
    %v4488 = vand.u32 %v4487, 4294901760
    %4489 = vmatpush.msra.mxu0 %v4488
    %v4490 = vand.u32 %v230, 4294901760
    %v4491 = vsub.f32 %v230, %v4490
    %v4492 = vand.u32 %v4491, 4294901760
    %v4493 = vsub.f32 %v4491, %v4492
    %v4494 = vand.u32 %v4493, 4294901760
    %4495 = vmatpush.msra.mxu0 %v4494
    %v4496 = vand.u32 %v229, 4294901760
    %v4497 = vsub.f32 %v229, %v4496
    %v4498 = vand.u32 %v4497, 4294901760
    %v4499 = vsub.f32 %v4497, %v4498
    %v4500 = vand.u32 %v4499, 4294901760
    %4501 = vmatpush.msra.mxu0 %v4500
    %v4502 = vand.u32 %v228, 4294901760
    %v4503 = vsub.f32 %v228, %v4502
    %v4504 = vand.u32 %v4503, 4294901760
    %v4505 = vsub.f32 %v4503, %v4504
    %v4506 = vand.u32 %v4505, 4294901760
    %4507 = vmatpush.msra.mxu0 %v4506
    %v4508 = vand.u32 %v227, 4294901760
    %v4509 = vsub.f32 %v227, %v4508
    %v4510 = vand.u32 %v4509, 4294901760
    %v4511 = vsub.f32 %v4509, %v4510
    %v4512 = vand.u32 %v4511, 4294901760
    %4513 = vmatpush.msra.mxu0 %v4512
    %v4514 = vand.u32 %v226, 4294901760
    %v4515 = vsub.f32 %v226, %v4514
    %v4516 = vand.u32 %v4515, 4294901760
    %v4517 = vsub.f32 %v4515, %v4516
    %v4518 = vand.u32 %v4517, 4294901760
    %4519 = vmatpush.msra.mxu0 %v4518
    %v4520 = vand.u32 %v579, 4294901760
    %4521 = vmatmul.f32.gmra.mxu0 %v4520
    %v4522 = vpop.f32.mrf.mxu0
    %v4523 = vadd.f32 %v4422, %v4522
    %4524 = vdwg.mxu0
    %v4525 = vand.u32 %v241, 4294901760
    %v4526 = vsub.f32 %v241, %v4525
    %4527 = vmatpush.msra.mxu0 %v4526
    %v4528 = vand.u32 %v240, 4294901760
    %v4529 = vsub.f32 %v240, %v4528
    %4530 = vmatpush.msra.mxu0 %v4529
    %v4531 = vand.u32 %v239, 4294901760
    %v4532 = vsub.f32 %v239, %v4531
    %4533 = vmatpush.msra.mxu0 %v4532
    %v4534 = vand.u32 %v238, 4294901760
    %v4535 = vsub.f32 %v238, %v4534
    %4536 = vmatpush.msra.mxu0 %v4535
    %v4537 = vand.u32 %v237, 4294901760
    %v4538 = vsub.f32 %v237, %v4537
    %4539 = vmatpush.msra.mxu0 %v4538
    %v4540 = vand.u32 %v236, 4294901760
    %v4541 = vsub.f32 %v236, %v4540
    %4542 = vmatpush.msra.mxu0 %v4541
    %v4543 = vand.u32 %v235, 4294901760
    %v4544 = vsub.f32 %v235, %v4543
    %4545 = vmatpush.msra.mxu0 %v4544
    %v4546 = vand.u32 %v234, 4294901760
    %v4547 = vsub.f32 %v234, %v4546
    %4548 = vmatpush.msra.mxu0 %v4547
    %v4549 = vand.u32 %v233, 4294901760
    %v4550 = vsub.f32 %v233, %v4549
    %4551 = vmatpush.msra.mxu0 %v4550
    %v4552 = vand.u32 %v232, 4294901760
    %v4553 = vsub.f32 %v232, %v4552
    %4554 = vmatpush.msra.mxu0 %v4553
    %v4555 = vand.u32 %v231, 4294901760
    %v4556 = vsub.f32 %v231, %v4555
    %4557 = vmatpush.msra.mxu0 %v4556
    %v4558 = vand.u32 %v230, 4294901760
    %v4559 = vsub.f32 %v230, %v4558
    %4560 = vmatpush.msra.mxu0 %v4559
    %v4561 = vand.u32 %v229, 4294901760
    %v4562 = vsub.f32 %v229, %v4561
    %4563 = vmatpush.msra.mxu0 %v4562
    %v4564 = vand.u32 %v228, 4294901760
    %v4565 = vsub.f32 %v228, %v4564
    %4566 = vmatpush.msra.mxu0 %v4565
    %v4567 = vand.u32 %v227, 4294901760
    %v4568 = vsub.f32 %v227, %v4567
    %4569 = vmatpush.msra.mxu0 %v4568
    %v4570 = vand.u32 %v226, 4294901760
    %v4571 = vsub.f32 %v226, %v4570
    %4572 = vmatpush.msra.mxu0 %v4571
    %v4573 = vand.u32 %v579, 4294901760
    %v4574 = vsub.f32 %v579, %v4573
    %4575 = vmatmul.f32.gmra.mxu0 %v4574
    %v4576 = vpop.f32.mrf.mxu0
    %v4577 = vadd.f32 %v4523, %v4576
    %4578 = vdwg.mxu0
    %v4579 = vand.u32 %v241, 4294901760
    %4580 = vmatpush.msra.mxu0 %v4579
    %v4581 = vand.u32 %v240, 4294901760
    %4582 = vmatpush.msra.mxu0 %v4581
    %v4583 = vand.u32 %v239, 4294901760
    %4584 = vmatpush.msra.mxu0 %v4583
    %v4585 = vand.u32 %v238, 4294901760
    %4586 = vmatpush.msra.mxu0 %v4585
    %v4587 = vand.u32 %v237, 4294901760
    %4588 = vmatpush.msra.mxu0 %v4587
    %v4589 = vand.u32 %v236, 4294901760
    %4590 = vmatpush.msra.mxu0 %v4589
    %v4591 = vand.u32 %v235, 4294901760
    %4592 = vmatpush.msra.mxu0 %v4591
    %v4593 = vand.u32 %v234, 4294901760
    %4594 = vmatpush.msra.mxu0 %v4593
    %v4595 = vand.u32 %v233, 4294901760
    %4596 = vmatpush.msra.mxu0 %v4595
    %v4597 = vand.u32 %v232, 4294901760
    %4598 = vmatpush.msra.mxu0 %v4597
    %v4599 = vand.u32 %v231, 4294901760
    %4600 = vmatpush.msra.mxu0 %v4599
    %v4601 = vand.u32 %v230, 4294901760
    %4602 = vmatpush.msra.mxu0 %v4601
    %v4603 = vand.u32 %v229, 4294901760
    %4604 = vmatpush.msra.mxu0 %v4603
    %v4605 = vand.u32 %v228, 4294901760
    %4606 = vmatpush.msra.mxu0 %v4605
    %v4607 = vand.u32 %v227, 4294901760
    %4608 = vmatpush.msra.mxu0 %v4607
    %v4609 = vand.u32 %v226, 4294901760
    %4610 = vmatpush.msra.mxu0 %v4609
    %v4611 = vand.u32 %v579, 4294901760
    %v4612 = vsub.f32 %v579, %v4611
    %v4613 = vand.u32 %v4612, 4294901760
    %4614 = vmatmul.f32.gmra.mxu0 %v4613
    %v4615 = vpop.f32.mrf.mxu0
    %v4616 = vadd.f32 %v4577, %v4615
    %4617 = vdwg.mxu0
    %v4618 = vand.u32 %v241, 4294901760
    %v4619 = vsub.f32 %v241, %v4618
    %v4620 = vand.u32 %v4619, 4294901760
    %4621 = vmatpush.msra.mxu0 %v4620
    %v4622 = vand.u32 %v240, 4294901760
    %v4623 = vsub.f32 %v240, %v4622
    %v4624 = vand.u32 %v4623, 4294901760
    %4625 = vmatpush.msra.mxu0 %v4624
    %v4626 = vand.u32 %v239, 4294901760
    %v4627 = vsub.f32 %v239, %v4626
    %v4628 = vand.u32 %v4627, 4294901760
    %4629 = vmatpush.msra.mxu0 %v4628
    %v4630 = vand.u32 %v238, 4294901760
    %v4631 = vsub.f32 %v238, %v4630
    %v4632 = vand.u32 %v4631, 4294901760
    %4633 = vmatpush.msra.mxu0 %v4632
    %v4634 = vand.u32 %v237, 4294901760
    %v4635 = vsub.f32 %v237, %v4634
    %v4636 = vand.u32 %v4635, 4294901760
    %4637 = vmatpush.msra.mxu0 %v4636
    %v4638 = vand.u32 %v236, 4294901760
    %v4639 = vsub.f32 %v236, %v4638
    %v4640 = vand.u32 %v4639, 4294901760
    %4641 = vmatpush.msra.mxu0 %v4640
    %v4642 = vand.u32 %v235, 4294901760
    %v4643 = vsub.f32 %v235, %v4642
    %v4644 = vand.u32 %v4643, 4294901760
    %4645 = vmatpush.msra.mxu0 %v4644
    %v4646 = vand.u32 %v234, 4294901760
    %v4647 = vsub.f32 %v234, %v4646
    %v4648 = vand.u32 %v4647, 4294901760
    %4649 = vmatpush.msra.mxu0 %v4648
    %v4650 = vand.u32 %v233, 4294901760
    %v4651 = vsub.f32 %v233, %v4650
    %v4652 = vand.u32 %v4651, 4294901760
    %4653 = vmatpush.msra.mxu0 %v4652
    %v4654 = vand.u32 %v232, 4294901760
    %v4655 = vsub.f32 %v232, %v4654
    %v4656 = vand.u32 %v4655, 4294901760
    %4657 = vmatpush.msra.mxu0 %v4656
    %v4658 = vand.u32 %v231, 4294901760
    %v4659 = vsub.f32 %v231, %v4658
    %v4660 = vand.u32 %v4659, 4294901760
    %4661 = vmatpush.msra.mxu0 %v4660
    %v4662 = vand.u32 %v230, 4294901760
    %v4663 = vsub.f32 %v230, %v4662
    %v4664 = vand.u32 %v4663, 4294901760
    %4665 = vmatpush.msra.mxu0 %v4664
    %v4666 = vand.u32 %v229, 4294901760
    %v4667 = vsub.f32 %v229, %v4666
    %v4668 = vand.u32 %v4667, 4294901760
    %4669 = vmatpush.msra.mxu0 %v4668
    %v4670 = vand.u32 %v228, 4294901760
    %v4671 = vsub.f32 %v228, %v4670
    %v4672 = vand.u32 %v4671, 4294901760
    %4673 = vmatpush.msra.mxu0 %v4672
    %v4674 = vand.u32 %v227, 4294901760
    %v4675 = vsub.f32 %v227, %v4674
    %v4676 = vand.u32 %v4675, 4294901760
    %4677 = vmatpush.msra.mxu0 %v4676
    %v4678 = vand.u32 %v226, 4294901760
    %v4679 = vsub.f32 %v226, %v4678
    %v4680 = vand.u32 %v4679, 4294901760
    %4681 = vmatpush.msra.mxu0 %v4680
    %v4682 = vand.u32 %v579, 4294901760
    %4683 = vmatmul.f32.gmra.mxu0 %v4682
    %v4684 = vpop.f32.mrf.mxu0
    %v4685 = vadd.f32 %v4616, %v4684
    %4686 = vdwg.mxu0
    %v4687 = vand.u32 %v241, 4294901760
    %4688 = vmatpush.msra.mxu0 %v4687
    %v4689 = vand.u32 %v240, 4294901760
    %4690 = vmatpush.msra.mxu0 %v4689
    %v4691 = vand.u32 %v239, 4294901760
    %4692 = vmatpush.msra.mxu0 %v4691
    %v4693 = vand.u32 %v238, 4294901760
    %4694 = vmatpush.msra.mxu0 %v4693
    %v4695 = vand.u32 %v237, 4294901760
    %4696 = vmatpush.msra.mxu0 %v4695
    %v4697 = vand.u32 %v236, 4294901760
    %4698 = vmatpush.msra.mxu0 %v4697
    %v4699 = vand.u32 %v235, 4294901760
    %4700 = vmatpush.msra.mxu0 %v4699
    %v4701 = vand.u32 %v234, 4294901760
    %4702 = vmatpush.msra.mxu0 %v4701
    %v4703 = vand.u32 %v233, 4294901760
    %4704 = vmatpush.msra.mxu0 %v4703
    %v4705 = vand.u32 %v232, 4294901760
    %4706 = vmatpush.msra.mxu0 %v4705
    %v4707 = vand.u32 %v231, 4294901760
    %4708 = vmatpush.msra.mxu0 %v4707
    %v4709 = vand.u32 %v230, 4294901760
    %4710 = vmatpush.msra.mxu0 %v4709
    %v4711 = vand.u32 %v229, 4294901760
    %4712 = vmatpush.msra.mxu0 %v4711
    %v4713 = vand.u32 %v228, 4294901760
    %4714 = vmatpush.msra.mxu0 %v4713
    %v4715 = vand.u32 %v227, 4294901760
    %4716 = vmatpush.msra.mxu0 %v4715
    %v4717 = vand.u32 %v226, 4294901760
    %4718 = vmatpush.msra.mxu0 %v4717
    %v4719 = vand.u32 %v579, 4294901760
    %4720 = vmatmul.f32.gmra.mxu0 %v4719
    %v4721 = vpop.f32.mrf.mxu0
    %v4722 = vadd.f32 %v4685, %v4721
    %4723 = vdwg.mxu0
    %v4724 = vand.u32 %v257, 4294901760
    %4725 = vmatpush.msra.mxu0 %v4724
    %v4726 = vand.u32 %v256, 4294901760
    %4727 = vmatpush.msra.mxu0 %v4726
    %v4728 = vand.u32 %v255, 4294901760
    %4729 = vmatpush.msra.mxu0 %v4728
    %v4730 = vand.u32 %v254, 4294901760
    %4731 = vmatpush.msra.mxu0 %v4730
    %v4732 = vand.u32 %v253, 4294901760
    %4733 = vmatpush.msra.mxu0 %v4732
    %v4734 = vand.u32 %v252, 4294901760
    %4735 = vmatpush.msra.mxu0 %v4734
    %v4736 = vand.u32 %v251, 4294901760
    %4737 = vmatpush.msra.mxu0 %v4736
    %v4738 = vand.u32 %v250, 4294901760
    %4739 = vmatpush.msra.mxu0 %v4738
    %v4740 = vand.u32 %v249, 4294901760
    %4741 = vmatpush.msra.mxu0 %v4740
    %v4742 = vand.u32 %v248, 4294901760
    %4743 = vmatpush.msra.mxu0 %v4742
    %v4744 = vand.u32 %v247, 4294901760
    %4745 = vmatpush.msra.mxu0 %v4744
    %v4746 = vand.u32 %v246, 4294901760
    %4747 = vmatpush.msra.mxu0 %v4746
    %v4748 = vand.u32 %v245, 4294901760
    %4749 = vmatpush.msra.mxu0 %v4748
    %v4750 = vand.u32 %v244, 4294901760
    %4751 = vmatpush.msra.mxu0 %v4750
    %v4752 = vand.u32 %v243, 4294901760
    %4753 = vmatpush.msra.mxu0 %v4752
    %v4754 = vand.u32 %v242, 4294901760
    %4755 = vmatpush.msra.mxu0 %v4754
    %v4756 = vand.u32 %v580, 4294901760
    %v4757 = vsub.f32 %v580, %v4756
    %v4758 = vand.u32 %v4757, 4294901760
    %v4759 = vsub.f32 %v4757, %v4758
    %v4760 = vand.u32 %v4759, 4294901760
    %4761 = vmatmul.f32.gmra.mxu0 %v4760
    %v4762 = vpop.f32.mrf.mxu0
    %v4763 = vadd.f32 %v4722, %v4762
    %4764 = vdwg.mxu0
    %v4765 = vand.u32 %v257, 4294901760
    %v4766 = vsub.f32 %v257, %v4765
    %v4767 = vand.u32 %v4766, 4294901760
    %v4768 = vsub.f32 %v4766, %v4767
    %v4769 = vand.u32 %v4768, 4294901760
    %4770 = vmatpush.msra.mxu0 %v4769
    %v4771 = vand.u32 %v256, 4294901760
    %v4772 = vsub.f32 %v256, %v4771
    %v4773 = vand.u32 %v4772, 4294901760
    %v4774 = vsub.f32 %v4772, %v4773
    %v4775 = vand.u32 %v4774, 4294901760
    %4776 = vmatpush.msra.mxu0 %v4775
    %v4777 = vand.u32 %v255, 4294901760
    %v4778 = vsub.f32 %v255, %v4777
    %v4779 = vand.u32 %v4778, 4294901760
    %v4780 = vsub.f32 %v4778, %v4779
    %v4781 = vand.u32 %v4780, 4294901760
    %4782 = vmatpush.msra.mxu0 %v4781
    %v4783 = vand.u32 %v254, 4294901760
    %v4784 = vsub.f32 %v254, %v4783
    %v4785 = vand.u32 %v4784, 4294901760
    %v4786 = vsub.f32 %v4784, %v4785
    %v4787 = vand.u32 %v4786, 4294901760
    %4788 = vmatpush.msra.mxu0 %v4787
    %v4789 = vand.u32 %v253, 4294901760
    %v4790 = vsub.f32 %v253, %v4789
    %v4791 = vand.u32 %v4790, 4294901760
    %v4792 = vsub.f32 %v4790, %v4791
    %v4793 = vand.u32 %v4792, 4294901760
    %4794 = vmatpush.msra.mxu0 %v4793
    %v4795 = vand.u32 %v252, 4294901760
    %v4796 = vsub.f32 %v252, %v4795
    %v4797 = vand.u32 %v4796, 4294901760
    %v4798 = vsub.f32 %v4796, %v4797
    %v4799 = vand.u32 %v4798, 4294901760
    %4800 = vmatpush.msra.mxu0 %v4799
    %v4801 = vand.u32 %v251, 4294901760
    %v4802 = vsub.f32 %v251, %v4801
    %v4803 = vand.u32 %v4802, 4294901760
    %v4804 = vsub.f32 %v4802, %v4803
    %v4805 = vand.u32 %v4804, 4294901760
    %4806 = vmatpush.msra.mxu0 %v4805
    %v4807 = vand.u32 %v250, 4294901760
    %v4808 = vsub.f32 %v250, %v4807
    %v4809 = vand.u32 %v4808, 4294901760
    %v4810 = vsub.f32 %v4808, %v4809
    %v4811 = vand.u32 %v4810, 4294901760
    %4812 = vmatpush.msra.mxu0 %v4811
    %v4813 = vand.u32 %v249, 4294901760
    %v4814 = vsub.f32 %v249, %v4813
    %v4815 = vand.u32 %v4814, 4294901760
    %v4816 = vsub.f32 %v4814, %v4815
    %v4817 = vand.u32 %v4816, 4294901760
    %4818 = vmatpush.msra.mxu0 %v4817
    %v4819 = vand.u32 %v248, 4294901760
    %v4820 = vsub.f32 %v248, %v4819
    %v4821 = vand.u32 %v4820, 4294901760
    %v4822 = vsub.f32 %v4820, %v4821
    %v4823 = vand.u32 %v4822, 4294901760
    %4824 = vmatpush.msra.mxu0 %v4823
    %v4825 = vand.u32 %v247, 4294901760
    %v4826 = vsub.f32 %v247, %v4825
    %v4827 = vand.u32 %v4826, 4294901760
    %v4828 = vsub.f32 %v4826, %v4827
    %v4829 = vand.u32 %v4828, 4294901760
    %4830 = vmatpush.msra.mxu0 %v4829
    %v4831 = vand.u32 %v246, 4294901760
    %v4832 = vsub.f32 %v246, %v4831
    %v4833 = vand.u32 %v4832, 4294901760
    %v4834 = vsub.f32 %v4832, %v4833
    %v4835 = vand.u32 %v4834, 4294901760
    %4836 = vmatpush.msra.mxu0 %v4835
    %v4837 = vand.u32 %v245, 4294901760
    %v4838 = vsub.f32 %v245, %v4837
    %v4839 = vand.u32 %v4838, 4294901760
    %v4840 = vsub.f32 %v4838, %v4839
    %v4841 = vand.u32 %v4840, 4294901760
    %4842 = vmatpush.msra.mxu0 %v4841
    %v4843 = vand.u32 %v244, 4294901760
    %v4844 = vsub.f32 %v244, %v4843
    %v4845 = vand.u32 %v4844, 4294901760
    %v4846 = vsub.f32 %v4844, %v4845
    %v4847 = vand.u32 %v4846, 4294901760
    %4848 = vmatpush.msra.mxu0 %v4847
    %v4849 = vand.u32 %v243, 4294901760
    %v4850 = vsub.f32 %v243, %v4849
    %v4851 = vand.u32 %v4850, 4294901760
    %v4852 = vsub.f32 %v4850, %v4851
    %v4853 = vand.u32 %v4852, 4294901760
    %4854 = vmatpush.msra.mxu0 %v4853
    %v4855 = vand.u32 %v242, 4294901760
    %v4856 = vsub.f32 %v242, %v4855
    %v4857 = vand.u32 %v4856, 4294901760
    %v4858 = vsub.f32 %v4856, %v4857
    %v4859 = vand.u32 %v4858, 4294901760
    %4860 = vmatpush.msra.mxu0 %v4859
    %v4861 = vand.u32 %v580, 4294901760
    %4862 = vmatmul.f32.gmra.mxu0 %v4861
    %v4863 = vpop.f32.mrf.mxu0
    %v4864 = vadd.f32 %v4763, %v4863
    %4865 = vdwg.mxu0
    %v4866 = vand.u32 %v257, 4294901760
    %v4867 = vsub.f32 %v257, %v4866
    %4868 = vmatpush.msra.mxu0 %v4867
    %v4869 = vand.u32 %v256, 4294901760
    %v4870 = vsub.f32 %v256, %v4869
    %4871 = vmatpush.msra.mxu0 %v4870
    %v4872 = vand.u32 %v255, 4294901760
    %v4873 = vsub.f32 %v255, %v4872
    %4874 = vmatpush.msra.mxu0 %v4873
    %v4875 = vand.u32 %v254, 4294901760
    %v4876 = vsub.f32 %v254, %v4875
    %4877 = vmatpush.msra.mxu0 %v4876
    %v4878 = vand.u32 %v253, 4294901760
    %v4879 = vsub.f32 %v253, %v4878
    %4880 = vmatpush.msra.mxu0 %v4879
    %v4881 = vand.u32 %v252, 4294901760
    %v4882 = vsub.f32 %v252, %v4881
    %4883 = vmatpush.msra.mxu0 %v4882
    %v4884 = vand.u32 %v251, 4294901760
    %v4885 = vsub.f32 %v251, %v4884
    %4886 = vmatpush.msra.mxu0 %v4885
    %v4887 = vand.u32 %v250, 4294901760
    %v4888 = vsub.f32 %v250, %v4887
    %4889 = vmatpush.msra.mxu0 %v4888
    %v4890 = vand.u32 %v249, 4294901760
    %v4891 = vsub.f32 %v249, %v4890
    %4892 = vmatpush.msra.mxu0 %v4891
    %v4893 = vand.u32 %v248, 4294901760
    %v4894 = vsub.f32 %v248, %v4893
    %4895 = vmatpush.msra.mxu0 %v4894
    %v4896 = vand.u32 %v247, 4294901760
    %v4897 = vsub.f32 %v247, %v4896
    %4898 = vmatpush.msra.mxu0 %v4897
    %v4899 = vand.u32 %v246, 4294901760
    %v4900 = vsub.f32 %v246, %v4899
    %4901 = vmatpush.msra.mxu0 %v4900
    %v4902 = vand.u32 %v245, 4294901760
    %v4903 = vsub.f32 %v245, %v4902
    %4904 = vmatpush.msra.mxu0 %v4903
    %v4905 = vand.u32 %v244, 4294901760
    %v4906 = vsub.f32 %v244, %v4905
    %4907 = vmatpush.msra.mxu0 %v4906
    %v4908 = vand.u32 %v243, 4294901760
    %v4909 = vsub.f32 %v243, %v4908
    %4910 = vmatpush.msra.mxu0 %v4909
    %v4911 = vand.u32 %v242, 4294901760
    %v4912 = vsub.f32 %v242, %v4911
    %4913 = vmatpush.msra.mxu0 %v4912
    %v4914 = vand.u32 %v580, 4294901760
    %v4915 = vsub.f32 %v580, %v4914
    %4916 = vmatmul.f32.gmra.mxu0 %v4915
    %v4917 = vpop.f32.mrf.mxu0
    %v4918 = vadd.f32 %v4864, %v4917
    %4919 = vdwg.mxu0
    %v4920 = vand.u32 %v257, 4294901760
    %4921 = vmatpush.msra.mxu0 %v4920
    %v4922 = vand.u32 %v256, 4294901760
    %4923 = vmatpush.msra.mxu0 %v4922
    %v4924 = vand.u32 %v255, 4294901760
    %4925 = vmatpush.msra.mxu0 %v4924
    %v4926 = vand.u32 %v254, 4294901760
    %4927 = vmatpush.msra.mxu0 %v4926
    %v4928 = vand.u32 %v253, 4294901760
    %4929 = vmatpush.msra.mxu0 %v4928
    %v4930 = vand.u32 %v252, 4294901760
    %4931 = vmatpush.msra.mxu0 %v4930
    %v4932 = vand.u32 %v251, 4294901760
    %4933 = vmatpush.msra.mxu0 %v4932
    %v4934 = vand.u32 %v250, 4294901760
    %4935 = vmatpush.msra.mxu0 %v4934
    %v4936 = vand.u32 %v249, 4294901760
    %4937 = vmatpush.msra.mxu0 %v4936
    %v4938 = vand.u32 %v248, 4294901760
    %4939 = vmatpush.msra.mxu0 %v4938
    %v4940 = vand.u32 %v247, 4294901760
    %4941 = vmatpush.msra.mxu0 %v4940
    %v4942 = vand.u32 %v246, 4294901760
    %4943 = vmatpush.msra.mxu0 %v4942
    %v4944 = vand.u32 %v245, 4294901760
    %4945 = vmatpush.msra.mxu0 %v4944
    %v4946 = vand.u32 %v244, 4294901760
    %4947 = vmatpush.msra.mxu0 %v4946
    %v4948 = vand.u32 %v243, 4294901760
    %4949 = vmatpush.msra.mxu0 %v4948
    %v4950 = vand.u32 %v242, 4294901760
    %4951 = vmatpush.msra.mxu0 %v4950
    %v4952 = vand.u32 %v580, 4294901760
    %v4953 = vsub.f32 %v580, %v4952
    %v4954 = vand.u32 %v4953, 4294901760
    %4955 = vmatmul.f32.gmra.mxu0 %v4954
    %v4956 = vpop.f32.mrf.mxu0
    %v4957 = vadd.f32 %v4918, %v4956
    %4958 = vdwg.mxu0
    %v4959 = vand.u32 %v257, 4294901760
    %v4960 = vsub.f32 %v257, %v4959
    %v4961 = vand.u32 %v4960, 4294901760
    %4962 = vmatpush.msra.mxu0 %v4961
    %v4963 = vand.u32 %v256, 4294901760
    %v4964 = vsub.f32 %v256, %v4963
    %v4965 = vand.u32 %v4964, 4294901760
    %4966 = vmatpush.msra.mxu0 %v4965
    %v4967 = vand.u32 %v255, 4294901760
    %v4968 = vsub.f32 %v255, %v4967
    %v4969 = vand.u32 %v4968, 4294901760
    %4970 = vmatpush.msra.mxu0 %v4969
    %v4971 = vand.u32 %v254, 4294901760
    %v4972 = vsub.f32 %v254, %v4971
    %v4973 = vand.u32 %v4972, 4294901760
    %4974 = vmatpush.msra.mxu0 %v4973
    %v4975 = vand.u32 %v253, 4294901760
    %v4976 = vsub.f32 %v253, %v4975
    %v4977 = vand.u32 %v4976, 4294901760
    %4978 = vmatpush.msra.mxu0 %v4977
    %v4979 = vand.u32 %v252, 4294901760
    %v4980 = vsub.f32 %v252, %v4979
    %v4981 = vand.u32 %v4980, 4294901760
    %4982 = vmatpush.msra.mxu0 %v4981
    %v4983 = vand.u32 %v251, 4294901760
    %v4984 = vsub.f32 %v251, %v4983
    %v4985 = vand.u32 %v4984, 4294901760
    %4986 = vmatpush.msra.mxu0 %v4985
    %v4987 = vand.u32 %v250, 4294901760
    %v4988 = vsub.f32 %v250, %v4987
    %v4989 = vand.u32 %v4988, 4294901760
    %4990 = vmatpush.msra.mxu0 %v4989
    %v4991 = vand.u32 %v249, 4294901760
    %v4992 = vsub.f32 %v249, %v4991
    %v4993 = vand.u32 %v4992, 4294901760
    %4994 = vmatpush.msra.mxu0 %v4993
    %v4995 = vand.u32 %v248, 4294901760
    %v4996 = vsub.f32 %v248, %v4995
    %v4997 = vand.u32 %v4996, 4294901760
    %4998 = vmatpush.msra.mxu0 %v4997
    %v4999 = vand.u32 %v247, 4294901760
    %v5000 = vsub.f32 %v247, %v4999
    %v5001 = vand.u32 %v5000, 4294901760
    %5002 = vmatpush.msra.mxu0 %v5001
    %v5003 = vand.u32 %v246, 4294901760
    %v5004 = vsub.f32 %v246, %v5003
    %v5005 = vand.u32 %v5004, 4294901760
    %5006 = vmatpush.msra.mxu0 %v5005
    %v5007 = vand.u32 %v245, 4294901760
    %v5008 = vsub.f32 %v245, %v5007
    %v5009 = vand.u32 %v5008, 4294901760
    %5010 = vmatpush.msra.mxu0 %v5009
    %v5011 = vand.u32 %v244, 4294901760
    %v5012 = vsub.f32 %v244, %v5011
    %v5013 = vand.u32 %v5012, 4294901760
    %5014 = vmatpush.msra.mxu0 %v5013
    %v5015 = vand.u32 %v243, 4294901760
    %v5016 = vsub.f32 %v243, %v5015
    %v5017 = vand.u32 %v5016, 4294901760
    %5018 = vmatpush.msra.mxu0 %v5017
    %v5019 = vand.u32 %v242, 4294901760
    %v5020 = vsub.f32 %v242, %v5019
    %v5021 = vand.u32 %v5020, 4294901760
    %5022 = vmatpush.msra.mxu0 %v5021
    %v5023 = vand.u32 %v580, 4294901760
    %5024 = vmatmul.f32.gmra.mxu0 %v5023
    %v5025 = vpop.f32.mrf.mxu0
    %v5026 = vadd.f32 %v4957, %v5025
    %5027 = vdwg.mxu0
    %v5028 = vand.u32 %v257, 4294901760
    %5029 = vmatpush.msra.mxu0 %v5028
    %v5030 = vand.u32 %v256, 4294901760
    %5031 = vmatpush.msra.mxu0 %v5030
    %v5032 = vand.u32 %v255, 4294901760
    %5033 = vmatpush.msra.mxu0 %v5032
    %v5034 = vand.u32 %v254, 4294901760
    %5035 = vmatpush.msra.mxu0 %v5034
    %v5036 = vand.u32 %v253, 4294901760
    %5037 = vmatpush.msra.mxu0 %v5036
    %v5038 = vand.u32 %v252, 4294901760
    %5039 = vmatpush.msra.mxu0 %v5038
    %v5040 = vand.u32 %v251, 4294901760
    %5041 = vmatpush.msra.mxu0 %v5040
    %v5042 = vand.u32 %v250, 4294901760
    %5043 = vmatpush.msra.mxu0 %v5042
    %v5044 = vand.u32 %v249, 4294901760
    %5045 = vmatpush.msra.mxu0 %v5044
    %v5046 = vand.u32 %v248, 4294901760
    %5047 = vmatpush.msra.mxu0 %v5046
    %v5048 = vand.u32 %v247, 4294901760
    %5049 = vmatpush.msra.mxu0 %v5048
    %v5050 = vand.u32 %v246, 4294901760
    %5051 = vmatpush.msra.mxu0 %v5050
    %v5052 = vand.u32 %v245, 4294901760
    %5053 = vmatpush.msra.mxu0 %v5052
    %v5054 = vand.u32 %v244, 4294901760
    %5055 = vmatpush.msra.mxu0 %v5054
    %v5056 = vand.u32 %v243, 4294901760
    %5057 = vmatpush.msra.mxu0 %v5056
    %v5058 = vand.u32 %v242, 4294901760
    %5059 = vmatpush.msra.mxu0 %v5058
    %v5060 = vand.u32 %v580, 4294901760
    %5061 = vmatmul.f32.gmra.mxu0 %v5060
    %v5062 = vpop.f32.mrf.mxu0
    %v5063 = vadd.f32 %v5026, %v5062
    %5064 = vdwg.mxu0
    %v5065 = vand.u32 %v273, 4294901760
    %5066 = vmatpush.msra.mxu0 %v5065
    %v5067 = vand.u32 %v272, 4294901760
    %5068 = vmatpush.msra.mxu0 %v5067
    %v5069 = vand.u32 %v271, 4294901760
    %5070 = vmatpush.msra.mxu0 %v5069
    %v5071 = vand.u32 %v270, 4294901760
    %5072 = vmatpush.msra.mxu0 %v5071
    %v5073 = vand.u32 %v269, 4294901760
    %5074 = vmatpush.msra.mxu0 %v5073
    %v5075 = vand.u32 %v268, 4294901760
    %5076 = vmatpush.msra.mxu0 %v5075
    %v5077 = vand.u32 %v267, 4294901760
    %5078 = vmatpush.msra.mxu0 %v5077
    %v5079 = vand.u32 %v266, 4294901760
    %5080 = vmatpush.msra.mxu0 %v5079
    %v5081 = vand.u32 %v265, 4294901760
    %5082 = vmatpush.msra.mxu0 %v5081
    %v5083 = vand.u32 %v264, 4294901760
    %5084 = vmatpush.msra.mxu0 %v5083
    %v5085 = vand.u32 %v263, 4294901760
    %5086 = vmatpush.msra.mxu0 %v5085
    %v5087 = vand.u32 %v262, 4294901760
    %5088 = vmatpush.msra.mxu0 %v5087
    %v5089 = vand.u32 %v261, 4294901760
    %5090 = vmatpush.msra.mxu0 %v5089
    %v5091 = vand.u32 %v260, 4294901760
    %5092 = vmatpush.msra.mxu0 %v5091
    %v5093 = vand.u32 %v259, 4294901760
    %5094 = vmatpush.msra.mxu0 %v5093
    %v5095 = vand.u32 %v258, 4294901760
    %5096 = vmatpush.msra.mxu0 %v5095
    %v5097 = vand.u32 %v581, 4294901760
    %v5098 = vsub.f32 %v581, %v5097
    %v5099 = vand.u32 %v5098, 4294901760
    %v5100 = vsub.f32 %v5098, %v5099
    %v5101 = vand.u32 %v5100, 4294901760
    %5102 = vmatmul.f32.gmra.mxu0 %v5101
    %v5103 = vpop.f32.mrf.mxu0
    %v5104 = vadd.f32 %v5063, %v5103
    %5105 = vdwg.mxu0
    %v5106 = vand.u32 %v273, 4294901760
    %v5107 = vsub.f32 %v273, %v5106
    %v5108 = vand.u32 %v5107, 4294901760
    %v5109 = vsub.f32 %v5107, %v5108
    %v5110 = vand.u32 %v5109, 4294901760
    %5111 = vmatpush.msra.mxu0 %v5110
    %v5112 = vand.u32 %v272, 4294901760
    %v5113 = vsub.f32 %v272, %v5112
    %v5114 = vand.u32 %v5113, 4294901760
    %v5115 = vsub.f32 %v5113, %v5114
    %v5116 = vand.u32 %v5115, 4294901760
    %5117 = vmatpush.msra.mxu0 %v5116
    %v5118 = vand.u32 %v271, 4294901760
    %v5119 = vsub.f32 %v271, %v5118
    %v5120 = vand.u32 %v5119, 4294901760
    %v5121 = vsub.f32 %v5119, %v5120
    %v5122 = vand.u32 %v5121, 4294901760
    %5123 = vmatpush.msra.mxu0 %v5122
    %v5124 = vand.u32 %v270, 4294901760
    %v5125 = vsub.f32 %v270, %v5124
    %v5126 = vand.u32 %v5125, 4294901760
    %v5127 = vsub.f32 %v5125, %v5126
    %v5128 = vand.u32 %v5127, 4294901760
    %5129 = vmatpush.msra.mxu0 %v5128
    %v5130 = vand.u32 %v269, 4294901760
    %v5131 = vsub.f32 %v269, %v5130
    %v5132 = vand.u32 %v5131, 4294901760
    %v5133 = vsub.f32 %v5131, %v5132
    %v5134 = vand.u32 %v5133, 4294901760
    %5135 = vmatpush.msra.mxu0 %v5134
    %v5136 = vand.u32 %v268, 4294901760
    %v5137 = vsub.f32 %v268, %v5136
    %v5138 = vand.u32 %v5137, 4294901760
    %v5139 = vsub.f32 %v5137, %v5138
    %v5140 = vand.u32 %v5139, 4294901760
    %5141 = vmatpush.msra.mxu0 %v5140
    %v5142 = vand.u32 %v267, 4294901760
    %v5143 = vsub.f32 %v267, %v5142
    %v5144 = vand.u32 %v5143, 4294901760
    %v5145 = vsub.f32 %v5143, %v5144
    %v5146 = vand.u32 %v5145, 4294901760
    %5147 = vmatpush.msra.mxu0 %v5146
    %v5148 = vand.u32 %v266, 4294901760
    %v5149 = vsub.f32 %v266, %v5148
    %v5150 = vand.u32 %v5149, 4294901760
    %v5151 = vsub.f32 %v5149, %v5150
    %v5152 = vand.u32 %v5151, 4294901760
    %5153 = vmatpush.msra.mxu0 %v5152
    %v5154 = vand.u32 %v265, 4294901760
    %v5155 = vsub.f32 %v265, %v5154
    %v5156 = vand.u32 %v5155, 4294901760
    %v5157 = vsub.f32 %v5155, %v5156
    %v5158 = vand.u32 %v5157, 4294901760
    %5159 = vmatpush.msra.mxu0 %v5158
    %v5160 = vand.u32 %v264, 4294901760
    %v5161 = vsub.f32 %v264, %v5160
    %v5162 = vand.u32 %v5161, 4294901760
    %v5163 = vsub.f32 %v5161, %v5162
    %v5164 = vand.u32 %v5163, 4294901760
    %5165 = vmatpush.msra.mxu0 %v5164
    %v5166 = vand.u32 %v263, 4294901760
    %v5167 = vsub.f32 %v263, %v5166
    %v5168 = vand.u32 %v5167, 4294901760
    %v5169 = vsub.f32 %v5167, %v5168
    %v5170 = vand.u32 %v5169, 4294901760
    %5171 = vmatpush.msra.mxu0 %v5170
    %v5172 = vand.u32 %v262, 4294901760
    %v5173 = vsub.f32 %v262, %v5172
    %v5174 = vand.u32 %v5173, 4294901760
    %v5175 = vsub.f32 %v5173, %v5174
    %v5176 = vand.u32 %v5175, 4294901760
    %5177 = vmatpush.msra.mxu0 %v5176
    %v5178 = vand.u32 %v261, 4294901760
    %v5179 = vsub.f32 %v261, %v5178
    %v5180 = vand.u32 %v5179, 4294901760
    %v5181 = vsub.f32 %v5179, %v5180
    %v5182 = vand.u32 %v5181, 4294901760
    %5183 = vmatpush.msra.mxu0 %v5182
    %v5184 = vand.u32 %v260, 4294901760
    %v5185 = vsub.f32 %v260, %v5184
    %v5186 = vand.u32 %v5185, 4294901760
    %v5187 = vsub.f32 %v5185, %v5186
    %v5188 = vand.u32 %v5187, 4294901760
    %5189 = vmatpush.msra.mxu0 %v5188
    %v5190 = vand.u32 %v259, 4294901760
    %v5191 = vsub.f32 %v259, %v5190
    %v5192 = vand.u32 %v5191, 4294901760
    %v5193 = vsub.f32 %v5191, %v5192
    %v5194 = vand.u32 %v5193, 4294901760
    %5195 = vmatpush.msra.mxu0 %v5194
    %v5196 = vand.u32 %v258, 4294901760
    %v5197 = vsub.f32 %v258, %v5196
    %v5198 = vand.u32 %v5197, 4294901760
    %v5199 = vsub.f32 %v5197, %v5198
    %v5200 = vand.u32 %v5199, 4294901760
    %5201 = vmatpush.msra.mxu0 %v5200
    %v5202 = vand.u32 %v581, 4294901760
    %5203 = vmatmul.f32.gmra.mxu0 %v5202
    %v5204 = vpop.f32.mrf.mxu0
    %v5205 = vadd.f32 %v5104, %v5204
    %5206 = vdwg.mxu0
    %v5207 = vand.u32 %v273, 4294901760
    %v5208 = vsub.f32 %v273, %v5207
    %5209 = vmatpush.msra.mxu0 %v5208
    %v5210 = vand.u32 %v272, 4294901760
    %v5211 = vsub.f32 %v272, %v5210
    %5212 = vmatpush.msra.mxu0 %v5211
    %v5213 = vand.u32 %v271, 4294901760
    %v5214 = vsub.f32 %v271, %v5213
    %5215 = vmatpush.msra.mxu0 %v5214
    %v5216 = vand.u32 %v270, 4294901760
    %v5217 = vsub.f32 %v270, %v5216
    %5218 = vmatpush.msra.mxu0 %v5217
    %v5219 = vand.u32 %v269, 4294901760
    %v5220 = vsub.f32 %v269, %v5219
    %5221 = vmatpush.msra.mxu0 %v5220
    %v5222 = vand.u32 %v268, 4294901760
    %v5223 = vsub.f32 %v268, %v5222
    %5224 = vmatpush.msra.mxu0 %v5223
    %v5225 = vand.u32 %v267, 4294901760
    %v5226 = vsub.f32 %v267, %v5225
    %5227 = vmatpush.msra.mxu0 %v5226
    %v5228 = vand.u32 %v266, 4294901760
    %v5229 = vsub.f32 %v266, %v5228
    %5230 = vmatpush.msra.mxu0 %v5229
    %v5231 = vand.u32 %v265, 4294901760
    %v5232 = vsub.f32 %v265, %v5231
    %5233 = vmatpush.msra.mxu0 %v5232
    %v5234 = vand.u32 %v264, 4294901760
    %v5235 = vsub.f32 %v264, %v5234
    %5236 = vmatpush.msra.mxu0 %v5235
    %v5237 = vand.u32 %v263, 4294901760
    %v5238 = vsub.f32 %v263, %v5237
    %5239 = vmatpush.msra.mxu0 %v5238
    %v5240 = vand.u32 %v262, 4294901760
    %v5241 = vsub.f32 %v262, %v5240
    %5242 = vmatpush.msra.mxu0 %v5241
    %v5243 = vand.u32 %v261, 4294901760
    %v5244 = vsub.f32 %v261, %v5243
    %5245 = vmatpush.msra.mxu0 %v5244
    %v5246 = vand.u32 %v260, 4294901760
    %v5247 = vsub.f32 %v260, %v5246
    %5248 = vmatpush.msra.mxu0 %v5247
    %v5249 = vand.u32 %v259, 4294901760
    %v5250 = vsub.f32 %v259, %v5249
    %5251 = vmatpush.msra.mxu0 %v5250
    %v5252 = vand.u32 %v258, 4294901760
    %v5253 = vsub.f32 %v258, %v5252
    %5254 = vmatpush.msra.mxu0 %v5253
    %v5255 = vand.u32 %v581, 4294901760
    %v5256 = vsub.f32 %v581, %v5255
    %5257 = vmatmul.f32.gmra.mxu0 %v5256
    %v5258 = vpop.f32.mrf.mxu0
    %v5259 = vadd.f32 %v5205, %v5258
    %5260 = vdwg.mxu0
    %v5261 = vand.u32 %v273, 4294901760
    %5262 = vmatpush.msra.mxu0 %v5261
    %v5263 = vand.u32 %v272, 4294901760
    %5264 = vmatpush.msra.mxu0 %v5263
    %v5265 = vand.u32 %v271, 4294901760
    %5266 = vmatpush.msra.mxu0 %v5265
    %v5267 = vand.u32 %v270, 4294901760
    %5268 = vmatpush.msra.mxu0 %v5267
    %v5269 = vand.u32 %v269, 4294901760
    %5270 = vmatpush.msra.mxu0 %v5269
    %v5271 = vand.u32 %v268, 4294901760
    %5272 = vmatpush.msra.mxu0 %v5271
    %v5273 = vand.u32 %v267, 4294901760
    %5274 = vmatpush.msra.mxu0 %v5273
    %v5275 = vand.u32 %v266, 4294901760
    %5276 = vmatpush.msra.mxu0 %v5275
    %v5277 = vand.u32 %v265, 4294901760
    %5278 = vmatpush.msra.mxu0 %v5277
    %v5279 = vand.u32 %v264, 4294901760
    %5280 = vmatpush.msra.mxu0 %v5279
    %v5281 = vand.u32 %v263, 4294901760
    %5282 = vmatpush.msra.mxu0 %v5281
    %v5283 = vand.u32 %v262, 4294901760
    %5284 = vmatpush.msra.mxu0 %v5283
    %v5285 = vand.u32 %v261, 4294901760
    %5286 = vmatpush.msra.mxu0 %v5285
    %v5287 = vand.u32 %v260, 4294901760
    %5288 = vmatpush.msra.mxu0 %v5287
    %v5289 = vand.u32 %v259, 4294901760
    %5290 = vmatpush.msra.mxu0 %v5289
    %v5291 = vand.u32 %v258, 4294901760
    %5292 = vmatpush.msra.mxu0 %v5291
    %v5293 = vand.u32 %v581, 4294901760
    %v5294 = vsub.f32 %v581, %v5293
    %v5295 = vand.u32 %v5294, 4294901760
    %5296 = vmatmul.f32.gmra.mxu0 %v5295
    %v5297 = vpop.f32.mrf.mxu0
    %v5298 = vadd.f32 %v5259, %v5297
    %5299 = vdwg.mxu0
    %v5300 = vand.u32 %v273, 4294901760
    %v5301 = vsub.f32 %v273, %v5300
    %v5302 = vand.u32 %v5301, 4294901760
    %5303 = vmatpush.msra.mxu0 %v5302
    %v5304 = vand.u32 %v272, 4294901760
    %v5305 = vsub.f32 %v272, %v5304
    %v5306 = vand.u32 %v5305, 4294901760
    %5307 = vmatpush.msra.mxu0 %v5306
    %v5308 = vand.u32 %v271, 4294901760
    %v5309 = vsub.f32 %v271, %v5308
    %v5310 = vand.u32 %v5309, 4294901760
    %5311 = vmatpush.msra.mxu0 %v5310
    %v5312 = vand.u32 %v270, 4294901760
    %v5313 = vsub.f32 %v270, %v5312
    %v5314 = vand.u32 %v5313, 4294901760
    %5315 = vmatpush.msra.mxu0 %v5314
    %v5316 = vand.u32 %v269, 4294901760
    %v5317 = vsub.f32 %v269, %v5316
    %v5318 = vand.u32 %v5317, 4294901760
    %5319 = vmatpush.msra.mxu0 %v5318
    %v5320 = vand.u32 %v268, 4294901760
    %v5321 = vsub.f32 %v268, %v5320
    %v5322 = vand.u32 %v5321, 4294901760
    %5323 = vmatpush.msra.mxu0 %v5322
    %v5324 = vand.u32 %v267, 4294901760
    %v5325 = vsub.f32 %v267, %v5324
    %v5326 = vand.u32 %v5325, 4294901760
    %5327 = vmatpush.msra.mxu0 %v5326
    %v5328 = vand.u32 %v266, 4294901760
    %v5329 = vsub.f32 %v266, %v5328
    %v5330 = vand.u32 %v5329, 4294901760
    %5331 = vmatpush.msra.mxu0 %v5330
    %v5332 = vand.u32 %v265, 4294901760
    %v5333 = vsub.f32 %v265, %v5332
    %v5334 = vand.u32 %v5333, 4294901760
    %5335 = vmatpush.msra.mxu0 %v5334
    %v5336 = vand.u32 %v264, 4294901760
    %v5337 = vsub.f32 %v264, %v5336
    %v5338 = vand.u32 %v5337, 4294901760
    %5339 = vmatpush.msra.mxu0 %v5338
    %v5340 = vand.u32 %v263, 4294901760
    %v5341 = vsub.f32 %v263, %v5340
    %v5342 = vand.u32 %v5341, 4294901760
    %5343 = vmatpush.msra.mxu0 %v5342
    %v5344 = vand.u32 %v262, 4294901760
    %v5345 = vsub.f32 %v262, %v5344
    %v5346 = vand.u32 %v5345, 4294901760
    %5347 = vmatpush.msra.mxu0 %v5346
    %v5348 = vand.u32 %v261, 4294901760
    %v5349 = vsub.f32 %v261, %v5348
    %v5350 = vand.u32 %v5349, 4294901760
    %5351 = vmatpush.msra.mxu0 %v5350
    %v5352 = vand.u32 %v260, 4294901760
    %v5353 = vsub.f32 %v260, %v5352
    %v5354 = vand.u32 %v5353, 4294901760
    %5355 = vmatpush.msra.mxu0 %v5354
    %v5356 = vand.u32 %v259, 4294901760
    %v5357 = vsub.f32 %v259, %v5356
    %v5358 = vand.u32 %v5357, 4294901760
    %5359 = vmatpush.msra.mxu0 %v5358
    %v5360 = vand.u32 %v258, 4294901760
    %v5361 = vsub.f32 %v258, %v5360
    %v5362 = vand.u32 %v5361, 4294901760
    %5363 = vmatpush.msra.mxu0 %v5362
    %v5364 = vand.u32 %v581, 4294901760
    %5365 = vmatmul.f32.gmra.mxu0 %v5364
    %v5366 = vpop.f32.mrf.mxu0
    %v5367 = vadd.f32 %v5298, %v5366
    %5368 = vdwg.mxu0
    %v5369 = vand.u32 %v273, 4294901760
    %5370 = vmatpush.msra.mxu0 %v5369
    %v5371 = vand.u32 %v272, 4294901760
    %5372 = vmatpush.msra.mxu0 %v5371
    %v5373 = vand.u32 %v271, 4294901760
    %5374 = vmatpush.msra.mxu0 %v5373
    %v5375 = vand.u32 %v270, 4294901760
    %5376 = vmatpush.msra.mxu0 %v5375
    %v5377 = vand.u32 %v269, 4294901760
    %5378 = vmatpush.msra.mxu0 %v5377
    %v5379 = vand.u32 %v268, 4294901760
    %5380 = vmatpush.msra.mxu0 %v5379
    %v5381 = vand.u32 %v267, 4294901760
    %5382 = vmatpush.msra.mxu0 %v5381
    %v5383 = vand.u32 %v266, 4294901760
    %5384 = vmatpush.msra.mxu0 %v5383
    %v5385 = vand.u32 %v265, 4294901760
    %5386 = vmatpush.msra.mxu0 %v5385
    %v5387 = vand.u32 %v264, 4294901760
    %5388 = vmatpush.msra.mxu0 %v5387
    %v5389 = vand.u32 %v263, 4294901760
    %5390 = vmatpush.msra.mxu0 %v5389
    %v5391 = vand.u32 %v262, 4294901760
    %5392 = vmatpush.msra.mxu0 %v5391
    %v5393 = vand.u32 %v261, 4294901760
    %5394 = vmatpush.msra.mxu0 %v5393
    %v5395 = vand.u32 %v260, 4294901760
    %5396 = vmatpush.msra.mxu0 %v5395
    %v5397 = vand.u32 %v259, 4294901760
    %5398 = vmatpush.msra.mxu0 %v5397
    %v5399 = vand.u32 %v258, 4294901760
    %5400 = vmatpush.msra.mxu0 %v5399
    %v5401 = vand.u32 %v581, 4294901760
    %5402 = vmatmul.f32.gmra.mxu0 %v5401
    %v5403 = vpop.f32.mrf.mxu0
    %v5404 = vadd.f32 %v5367, %v5403
    %5405 = vdwg.mxu0
    %v5406 = vand.u32 %v289, 4294901760
    %5407 = vmatpush.msra.mxu0 %v5406
    %v5408 = vand.u32 %v288, 4294901760
    %5409 = vmatpush.msra.mxu0 %v5408
    %v5410 = vand.u32 %v287, 4294901760
    %5411 = vmatpush.msra.mxu0 %v5410
    %v5412 = vand.u32 %v286, 4294901760
    %5413 = vmatpush.msra.mxu0 %v5412
    %v5414 = vand.u32 %v285, 4294901760
    %5415 = vmatpush.msra.mxu0 %v5414
    %v5416 = vand.u32 %v284, 4294901760
    %5417 = vmatpush.msra.mxu0 %v5416
    %v5418 = vand.u32 %v283, 4294901760
    %5419 = vmatpush.msra.mxu0 %v5418
    %v5420 = vand.u32 %v282, 4294901760
    %5421 = vmatpush.msra.mxu0 %v5420
    %v5422 = vand.u32 %v281, 4294901760
    %5423 = vmatpush.msra.mxu0 %v5422
    %v5424 = vand.u32 %v280, 4294901760
    %5425 = vmatpush.msra.mxu0 %v5424
    %v5426 = vand.u32 %v279, 4294901760
    %5427 = vmatpush.msra.mxu0 %v5426
    %v5428 = vand.u32 %v278, 4294901760
    %5429 = vmatpush.msra.mxu0 %v5428
    %v5430 = vand.u32 %v277, 4294901760
    %5431 = vmatpush.msra.mxu0 %v5430
    %v5432 = vand.u32 %v276, 4294901760
    %5433 = vmatpush.msra.mxu0 %v5432
    %v5434 = vand.u32 %v275, 4294901760
    %5435 = vmatpush.msra.mxu0 %v5434
    %v5436 = vand.u32 %v274, 4294901760
    %5437 = vmatpush.msra.mxu0 %v5436
    %v5438 = vand.u32 %v582, 4294901760
    %v5439 = vsub.f32 %v582, %v5438
    %v5440 = vand.u32 %v5439, 4294901760
    %v5441 = vsub.f32 %v5439, %v5440
    %v5442 = vand.u32 %v5441, 4294901760
    %5443 = vmatmul.f32.gmra.mxu0 %v5442
    %v5444 = vpop.f32.mrf.mxu0
    %v5445 = vadd.f32 %v5404, %v5444
    %5446 = vdwg.mxu0
    %v5447 = vand.u32 %v289, 4294901760
    %v5448 = vsub.f32 %v289, %v5447
    %v5449 = vand.u32 %v5448, 4294901760
    %v5450 = vsub.f32 %v5448, %v5449
    %v5451 = vand.u32 %v5450, 4294901760
    %5452 = vmatpush.msra.mxu0 %v5451
    %v5453 = vand.u32 %v288, 4294901760
    %v5454 = vsub.f32 %v288, %v5453
    %v5455 = vand.u32 %v5454, 4294901760
    %v5456 = vsub.f32 %v5454, %v5455
    %v5457 = vand.u32 %v5456, 4294901760
    %5458 = vmatpush.msra.mxu0 %v5457
    %v5459 = vand.u32 %v287, 4294901760
    %v5460 = vsub.f32 %v287, %v5459
    %v5461 = vand.u32 %v5460, 4294901760
    %v5462 = vsub.f32 %v5460, %v5461
    %v5463 = vand.u32 %v5462, 4294901760
    %5464 = vmatpush.msra.mxu0 %v5463
    %v5465 = vand.u32 %v286, 4294901760
    %v5466 = vsub.f32 %v286, %v5465
    %v5467 = vand.u32 %v5466, 4294901760
    %v5468 = vsub.f32 %v5466, %v5467
    %v5469 = vand.u32 %v5468, 4294901760
    %5470 = vmatpush.msra.mxu0 %v5469
    %v5471 = vand.u32 %v285, 4294901760
    %v5472 = vsub.f32 %v285, %v5471
    %v5473 = vand.u32 %v5472, 4294901760
    %v5474 = vsub.f32 %v5472, %v5473
    %v5475 = vand.u32 %v5474, 4294901760
    %5476 = vmatpush.msra.mxu0 %v5475
    %v5477 = vand.u32 %v284, 4294901760
    %v5478 = vsub.f32 %v284, %v5477
    %v5479 = vand.u32 %v5478, 4294901760
    %v5480 = vsub.f32 %v5478, %v5479
    %v5481 = vand.u32 %v5480, 4294901760
    %5482 = vmatpush.msra.mxu0 %v5481
    %v5483 = vand.u32 %v283, 4294901760
    %v5484 = vsub.f32 %v283, %v5483
    %v5485 = vand.u32 %v5484, 4294901760
    %v5486 = vsub.f32 %v5484, %v5485
    %v5487 = vand.u32 %v5486, 4294901760
    %5488 = vmatpush.msra.mxu0 %v5487
    %v5489 = vand.u32 %v282, 4294901760
    %v5490 = vsub.f32 %v282, %v5489
    %v5491 = vand.u32 %v5490, 4294901760
    %v5492 = vsub.f32 %v5490, %v5491
    %v5493 = vand.u32 %v5492, 4294901760
    %5494 = vmatpush.msra.mxu0 %v5493
    %v5495 = vand.u32 %v281, 4294901760
    %v5496 = vsub.f32 %v281, %v5495
    %v5497 = vand.u32 %v5496, 4294901760
    %v5498 = vsub.f32 %v5496, %v5497
    %v5499 = vand.u32 %v5498, 4294901760
    %5500 = vmatpush.msra.mxu0 %v5499
    %v5501 = vand.u32 %v280, 4294901760
    %v5502 = vsub.f32 %v280, %v5501
    %v5503 = vand.u32 %v5502, 4294901760
    %v5504 = vsub.f32 %v5502, %v5503
    %v5505 = vand.u32 %v5504, 4294901760
    %5506 = vmatpush.msra.mxu0 %v5505
    %v5507 = vand.u32 %v279, 4294901760
    %v5508 = vsub.f32 %v279, %v5507
    %v5509 = vand.u32 %v5508, 4294901760
    %v5510 = vsub.f32 %v5508, %v5509
    %v5511 = vand.u32 %v5510, 4294901760
    %5512 = vmatpush.msra.mxu0 %v5511
    %v5513 = vand.u32 %v278, 4294901760
    %v5514 = vsub.f32 %v278, %v5513
    %v5515 = vand.u32 %v5514, 4294901760
    %v5516 = vsub.f32 %v5514, %v5515
    %v5517 = vand.u32 %v5516, 4294901760
    %5518 = vmatpush.msra.mxu0 %v5517
    %v5519 = vand.u32 %v277, 4294901760
    %v5520 = vsub.f32 %v277, %v5519
    %v5521 = vand.u32 %v5520, 4294901760
    %v5522 = vsub.f32 %v5520, %v5521
    %v5523 = vand.u32 %v5522, 4294901760
    %5524 = vmatpush.msra.mxu0 %v5523
    %v5525 = vand.u32 %v276, 4294901760
    %v5526 = vsub.f32 %v276, %v5525
    %v5527 = vand.u32 %v5526, 4294901760
    %v5528 = vsub.f32 %v5526, %v5527
    %v5529 = vand.u32 %v5528, 4294901760
    %5530 = vmatpush.msra.mxu0 %v5529
    %v5531 = vand.u32 %v275, 4294901760
    %v5532 = vsub.f32 %v275, %v5531
    %v5533 = vand.u32 %v5532, 4294901760
    %v5534 = vsub.f32 %v5532, %v5533
    %v5535 = vand.u32 %v5534, 4294901760
    %5536 = vmatpush.msra.mxu0 %v5535
    %v5537 = vand.u32 %v274, 4294901760
    %v5538 = vsub.f32 %v274, %v5537
    %v5539 = vand.u32 %v5538, 4294901760
    %v5540 = vsub.f32 %v5538, %v5539
    %v5541 = vand.u32 %v5540, 4294901760
    %5542 = vmatpush.msra.mxu0 %v5541
    %v5543 = vand.u32 %v582, 4294901760
    %5544 = vmatmul.f32.gmra.mxu0 %v5543
    %v5545 = vpop.f32.mrf.mxu0
    %v5546 = vadd.f32 %v5445, %v5545
    %5547 = vdwg.mxu0
    %v5548 = vand.u32 %v289, 4294901760
    %v5549 = vsub.f32 %v289, %v5548
    %5550 = vmatpush.msra.mxu0 %v5549
    %v5551 = vand.u32 %v288, 4294901760
    %v5552 = vsub.f32 %v288, %v5551
    %5553 = vmatpush.msra.mxu0 %v5552
    %v5554 = vand.u32 %v287, 4294901760
    %v5555 = vsub.f32 %v287, %v5554
    %5556 = vmatpush.msra.mxu0 %v5555
    %v5557 = vand.u32 %v286, 4294901760
    %v5558 = vsub.f32 %v286, %v5557
    %5559 = vmatpush.msra.mxu0 %v5558
    %v5560 = vand.u32 %v285, 4294901760
    %v5561 = vsub.f32 %v285, %v5560
    %5562 = vmatpush.msra.mxu0 %v5561
    %v5563 = vand.u32 %v284, 4294901760
    %v5564 = vsub.f32 %v284, %v5563
    %5565 = vmatpush.msra.mxu0 %v5564
    %v5566 = vand.u32 %v283, 4294901760
    %v5567 = vsub.f32 %v283, %v5566
    %5568 = vmatpush.msra.mxu0 %v5567
    %v5569 = vand.u32 %v282, 4294901760
    %v5570 = vsub.f32 %v282, %v5569
    %5571 = vmatpush.msra.mxu0 %v5570
    %v5572 = vand.u32 %v281, 4294901760
    %v5573 = vsub.f32 %v281, %v5572
    %5574 = vmatpush.msra.mxu0 %v5573
    %v5575 = vand.u32 %v280, 4294901760
    %v5576 = vsub.f32 %v280, %v5575
    %5577 = vmatpush.msra.mxu0 %v5576
    %v5578 = vand.u32 %v279, 4294901760
    %v5579 = vsub.f32 %v279, %v5578
    %5580 = vmatpush.msra.mxu0 %v5579
    %v5581 = vand.u32 %v278, 4294901760
    %v5582 = vsub.f32 %v278, %v5581
    %5583 = vmatpush.msra.mxu0 %v5582
    %v5584 = vand.u32 %v277, 4294901760
    %v5585 = vsub.f32 %v277, %v5584
    %5586 = vmatpush.msra.mxu0 %v5585
    %v5587 = vand.u32 %v276, 4294901760
    %v5588 = vsub.f32 %v276, %v5587
    %5589 = vmatpush.msra.mxu0 %v5588
    %v5590 = vand.u32 %v275, 4294901760
    %v5591 = vsub.f32 %v275, %v5590
    %5592 = vmatpush.msra.mxu0 %v5591
    %v5593 = vand.u32 %v274, 4294901760
    %v5594 = vsub.f32 %v274, %v5593
    %5595 = vmatpush.msra.mxu0 %v5594
    %v5596 = vand.u32 %v582, 4294901760
    %v5597 = vsub.f32 %v582, %v5596
    %5598 = vmatmul.f32.gmra.mxu0 %v5597
    %v5599 = vpop.f32.mrf.mxu0
    %v5600 = vadd.f32 %v5546, %v5599
    %5601 = vdwg.mxu0
    %v5602 = vand.u32 %v289, 4294901760
    %5603 = vmatpush.msra.mxu0 %v5602
    %v5604 = vand.u32 %v288, 4294901760
    %5605 = vmatpush.msra.mxu0 %v5604
    %v5606 = vand.u32 %v287, 4294901760
    %5607 = vmatpush.msra.mxu0 %v5606
    %v5608 = vand.u32 %v286, 4294901760
    %5609 = vmatpush.msra.mxu0 %v5608
    %v5610 = vand.u32 %v285, 4294901760
    %5611 = vmatpush.msra.mxu0 %v5610
    %v5612 = vand.u32 %v284, 4294901760
    %5613 = vmatpush.msra.mxu0 %v5612
    %v5614 = vand.u32 %v283, 4294901760
    %5615 = vmatpush.msra.mxu0 %v5614
    %v5616 = vand.u32 %v282, 4294901760
    %5617 = vmatpush.msra.mxu0 %v5616
    %v5618 = vand.u32 %v281, 4294901760
    %5619 = vmatpush.msra.mxu0 %v5618
    %v5620 = vand.u32 %v280, 4294901760
    %5621 = vmatpush.msra.mxu0 %v5620
    %v5622 = vand.u32 %v279, 4294901760
    %5623 = vmatpush.msra.mxu0 %v5622
    %v5624 = vand.u32 %v278, 4294901760
    %5625 = vmatpush.msra.mxu0 %v5624
    %v5626 = vand.u32 %v277, 4294901760
    %5627 = vmatpush.msra.mxu0 %v5626
    %v5628 = vand.u32 %v276, 4294901760
    %5629 = vmatpush.msra.mxu0 %v5628
    %v5630 = vand.u32 %v275, 4294901760
    %5631 = vmatpush.msra.mxu0 %v5630
    %v5632 = vand.u32 %v274, 4294901760
    %5633 = vmatpush.msra.mxu0 %v5632
    %v5634 = vand.u32 %v582, 4294901760
    %v5635 = vsub.f32 %v582, %v5634
    %v5636 = vand.u32 %v5635, 4294901760
    %5637 = vmatmul.f32.gmra.mxu0 %v5636
    %v5638 = vpop.f32.mrf.mxu0
    %v5639 = vadd.f32 %v5600, %v5638
    %5640 = vdwg.mxu0
    %v5641 = vand.u32 %v289, 4294901760
    %v5642 = vsub.f32 %v289, %v5641
    %v5643 = vand.u32 %v5642, 4294901760
    %5644 = vmatpush.msra.mxu0 %v5643
    %v5645 = vand.u32 %v288, 4294901760
    %v5646 = vsub.f32 %v288, %v5645
    %v5647 = vand.u32 %v5646, 4294901760
    %5648 = vmatpush.msra.mxu0 %v5647
    %v5649 = vand.u32 %v287, 4294901760
    %v5650 = vsub.f32 %v287, %v5649
    %v5651 = vand.u32 %v5650, 4294901760
    %5652 = vmatpush.msra.mxu0 %v5651
    %v5653 = vand.u32 %v286, 4294901760
    %v5654 = vsub.f32 %v286, %v5653
    %v5655 = vand.u32 %v5654, 4294901760
    %5656 = vmatpush.msra.mxu0 %v5655
    %v5657 = vand.u32 %v285, 4294901760
    %v5658 = vsub.f32 %v285, %v5657
    %v5659 = vand.u32 %v5658, 4294901760
    %5660 = vmatpush.msra.mxu0 %v5659
    %v5661 = vand.u32 %v284, 4294901760
    %v5662 = vsub.f32 %v284, %v5661
    %v5663 = vand.u32 %v5662, 4294901760
    %5664 = vmatpush.msra.mxu0 %v5663
    %v5665 = vand.u32 %v283, 4294901760
    %v5666 = vsub.f32 %v283, %v5665
    %v5667 = vand.u32 %v5666, 4294901760
    %5668 = vmatpush.msra.mxu0 %v5667
    %v5669 = vand.u32 %v282, 4294901760
    %v5670 = vsub.f32 %v282, %v5669
    %v5671 = vand.u32 %v5670, 4294901760
    %5672 = vmatpush.msra.mxu0 %v5671
    %v5673 = vand.u32 %v281, 4294901760
    %v5674 = vsub.f32 %v281, %v5673
    %v5675 = vand.u32 %v5674, 4294901760
    %5676 = vmatpush.msra.mxu0 %v5675
    %v5677 = vand.u32 %v280, 4294901760
    %v5678 = vsub.f32 %v280, %v5677
    %v5679 = vand.u32 %v5678, 4294901760
    %5680 = vmatpush.msra.mxu0 %v5679
    %v5681 = vand.u32 %v279, 4294901760
    %v5682 = vsub.f32 %v279, %v5681
    %v5683 = vand.u32 %v5682, 4294901760
    %5684 = vmatpush.msra.mxu0 %v5683
    %v5685 = vand.u32 %v278, 4294901760
    %v5686 = vsub.f32 %v278, %v5685
    %v5687 = vand.u32 %v5686, 4294901760
    %5688 = vmatpush.msra.mxu0 %v5687
    %v5689 = vand.u32 %v277, 4294901760
    %v5690 = vsub.f32 %v277, %v5689
    %v5691 = vand.u32 %v5690, 4294901760
    %5692 = vmatpush.msra.mxu0 %v5691
    %v5693 = vand.u32 %v276, 4294901760
    %v5694 = vsub.f32 %v276, %v5693
    %v5695 = vand.u32 %v5694, 4294901760
    %5696 = vmatpush.msra.mxu0 %v5695
    %v5697 = vand.u32 %v275, 4294901760
    %v5698 = vsub.f32 %v275, %v5697
    %v5699 = vand.u32 %v5698, 4294901760
    %5700 = vmatpush.msra.mxu0 %v5699
    %v5701 = vand.u32 %v274, 4294901760
    %v5702 = vsub.f32 %v274, %v5701
    %v5703 = vand.u32 %v5702, 4294901760
    %5704 = vmatpush.msra.mxu0 %v5703
    %v5705 = vand.u32 %v582, 4294901760
    %5706 = vmatmul.f32.gmra.mxu0 %v5705
    %v5707 = vpop.f32.mrf.mxu0
    %v5708 = vadd.f32 %v5639, %v5707
    %5709 = vdwg.mxu0
    %v5710 = vand.u32 %v289, 4294901760
    %5711 = vmatpush.msra.mxu0 %v5710
    %v5712 = vand.u32 %v288, 4294901760
    %5713 = vmatpush.msra.mxu0 %v5712
    %v5714 = vand.u32 %v287, 4294901760
    %5715 = vmatpush.msra.mxu0 %v5714
    %v5716 = vand.u32 %v286, 4294901760
    %5717 = vmatpush.msra.mxu0 %v5716
    %v5718 = vand.u32 %v285, 4294901760
    %5719 = vmatpush.msra.mxu0 %v5718
    %v5720 = vand.u32 %v284, 4294901760
    %5721 = vmatpush.msra.mxu0 %v5720
    %v5722 = vand.u32 %v283, 4294901760
    %5723 = vmatpush.msra.mxu0 %v5722
    %v5724 = vand.u32 %v282, 4294901760
    %5725 = vmatpush.msra.mxu0 %v5724
    %v5726 = vand.u32 %v281, 4294901760
    %5727 = vmatpush.msra.mxu0 %v5726
    %v5728 = vand.u32 %v280, 4294901760
    %5729 = vmatpush.msra.mxu0 %v5728
    %v5730 = vand.u32 %v279, 4294901760
    %5731 = vmatpush.msra.mxu0 %v5730
    %v5732 = vand.u32 %v278, 4294901760
    %5733 = vmatpush.msra.mxu0 %v5732
    %v5734 = vand.u32 %v277, 4294901760
    %5735 = vmatpush.msra.mxu0 %v5734
    %v5736 = vand.u32 %v276, 4294901760
    %5737 = vmatpush.msra.mxu0 %v5736
    %v5738 = vand.u32 %v275, 4294901760
    %5739 = vmatpush.msra.mxu0 %v5738
    %v5740 = vand.u32 %v274, 4294901760
    %5741 = vmatpush.msra.mxu0 %v5740
    %v5742 = vand.u32 %v582, 4294901760
    %5743 = vmatmul.f32.gmra.mxu0 %v5742
    %v5744 = vpop.f32.mrf.mxu0
    %v5745 = vadd.f32 %v5708, %v5744
    %5746 = vdwg.mxu0
    %v5747 = vand.u32 %v305, 4294901760
    %5748 = vmatpush.msra.mxu0 %v5747
    %v5749 = vand.u32 %v304, 4294901760
    %5750 = vmatpush.msra.mxu0 %v5749
    %v5751 = vand.u32 %v303, 4294901760
    %5752 = vmatpush.msra.mxu0 %v5751
    %v5753 = vand.u32 %v302, 4294901760
    %5754 = vmatpush.msra.mxu0 %v5753
    %v5755 = vand.u32 %v301, 4294901760
    %5756 = vmatpush.msra.mxu0 %v5755
    %v5757 = vand.u32 %v300, 4294901760
    %5758 = vmatpush.msra.mxu0 %v5757
    %v5759 = vand.u32 %v299, 4294901760
    %5760 = vmatpush.msra.mxu0 %v5759
    %v5761 = vand.u32 %v298, 4294901760
    %5762 = vmatpush.msra.mxu0 %v5761
    %v5763 = vand.u32 %v297, 4294901760
    %5764 = vmatpush.msra.mxu0 %v5763
    %v5765 = vand.u32 %v296, 4294901760
    %5766 = vmatpush.msra.mxu0 %v5765
    %v5767 = vand.u32 %v295, 4294901760
    %5768 = vmatpush.msra.mxu0 %v5767
    %v5769 = vand.u32 %v294, 4294901760
    %5770 = vmatpush.msra.mxu0 %v5769
    %v5771 = vand.u32 %v293, 4294901760
    %5772 = vmatpush.msra.mxu0 %v5771
    %v5773 = vand.u32 %v292, 4294901760
    %5774 = vmatpush.msra.mxu0 %v5773
    %v5775 = vand.u32 %v291, 4294901760
    %5776 = vmatpush.msra.mxu0 %v5775
    %v5777 = vand.u32 %v290, 4294901760
    %5778 = vmatpush.msra.mxu0 %v5777
    %v5779 = vand.u32 %v583, 4294901760
    %v5780 = vsub.f32 %v583, %v5779
    %v5781 = vand.u32 %v5780, 4294901760
    %v5782 = vsub.f32 %v5780, %v5781
    %v5783 = vand.u32 %v5782, 4294901760
    %5784 = vmatmul.f32.gmra.mxu0 %v5783
    %v5785 = vpop.f32.mrf.mxu0
    %v5786 = vadd.f32 %v5745, %v5785
    %5787 = vdwg.mxu0
    %v5788 = vand.u32 %v305, 4294901760
    %v5789 = vsub.f32 %v305, %v5788
    %v5790 = vand.u32 %v5789, 4294901760
    %v5791 = vsub.f32 %v5789, %v5790
    %v5792 = vand.u32 %v5791, 4294901760
    %5793 = vmatpush.msra.mxu0 %v5792
    %v5794 = vand.u32 %v304, 4294901760
    %v5795 = vsub.f32 %v304, %v5794
    %v5796 = vand.u32 %v5795, 4294901760
    %v5797 = vsub.f32 %v5795, %v5796
    %v5798 = vand.u32 %v5797, 4294901760
    %5799 = vmatpush.msra.mxu0 %v5798
    %v5800 = vand.u32 %v303, 4294901760
    %v5801 = vsub.f32 %v303, %v5800
    %v5802 = vand.u32 %v5801, 4294901760
    %v5803 = vsub.f32 %v5801, %v5802
    %v5804 = vand.u32 %v5803, 4294901760
    %5805 = vmatpush.msra.mxu0 %v5804
    %v5806 = vand.u32 %v302, 4294901760
    %v5807 = vsub.f32 %v302, %v5806
    %v5808 = vand.u32 %v5807, 4294901760
    %v5809 = vsub.f32 %v5807, %v5808
    %v5810 = vand.u32 %v5809, 4294901760
    %5811 = vmatpush.msra.mxu0 %v5810
    %v5812 = vand.u32 %v301, 4294901760
    %v5813 = vsub.f32 %v301, %v5812
    %v5814 = vand.u32 %v5813, 4294901760
    %v5815 = vsub.f32 %v5813, %v5814
    %v5816 = vand.u32 %v5815, 4294901760
    %5817 = vmatpush.msra.mxu0 %v5816
    %v5818 = vand.u32 %v300, 4294901760
    %v5819 = vsub.f32 %v300, %v5818
    %v5820 = vand.u32 %v5819, 4294901760
    %v5821 = vsub.f32 %v5819, %v5820
    %v5822 = vand.u32 %v5821, 4294901760
    %5823 = vmatpush.msra.mxu0 %v5822
    %v5824 = vand.u32 %v299, 4294901760
    %v5825 = vsub.f32 %v299, %v5824
    %v5826 = vand.u32 %v5825, 4294901760
    %v5827 = vsub.f32 %v5825, %v5826
    %v5828 = vand.u32 %v5827, 4294901760
    %5829 = vmatpush.msra.mxu0 %v5828
    %v5830 = vand.u32 %v298, 4294901760
    %v5831 = vsub.f32 %v298, %v5830
    %v5832 = vand.u32 %v5831, 4294901760
    %v5833 = vsub.f32 %v5831, %v5832
    %v5834 = vand.u32 %v5833, 4294901760
    %5835 = vmatpush.msra.mxu0 %v5834
    %v5836 = vand.u32 %v297, 4294901760
    %v5837 = vsub.f32 %v297, %v5836
    %v5838 = vand.u32 %v5837, 4294901760
    %v5839 = vsub.f32 %v5837, %v5838
    %v5840 = vand.u32 %v5839, 4294901760
    %5841 = vmatpush.msra.mxu0 %v5840
    %v5842 = vand.u32 %v296, 4294901760
    %v5843 = vsub.f32 %v296, %v5842
    %v5844 = vand.u32 %v5843, 4294901760
    %v5845 = vsub.f32 %v5843, %v5844
    %v5846 = vand.u32 %v5845, 4294901760
    %5847 = vmatpush.msra.mxu0 %v5846
    %v5848 = vand.u32 %v295, 4294901760
    %v5849 = vsub.f32 %v295, %v5848
    %v5850 = vand.u32 %v5849, 4294901760
    %v5851 = vsub.f32 %v5849, %v5850
    %v5852 = vand.u32 %v5851, 4294901760
    %5853 = vmatpush.msra.mxu0 %v5852
    %v5854 = vand.u32 %v294, 4294901760
    %v5855 = vsub.f32 %v294, %v5854
    %v5856 = vand.u32 %v5855, 4294901760
    %v5857 = vsub.f32 %v5855, %v5856
    %v5858 = vand.u32 %v5857, 4294901760
    %5859 = vmatpush.msra.mxu0 %v5858
    %v5860 = vand.u32 %v293, 4294901760
    %v5861 = vsub.f32 %v293, %v5860
    %v5862 = vand.u32 %v5861, 4294901760
    %v5863 = vsub.f32 %v5861, %v5862
    %v5864 = vand.u32 %v5863, 4294901760
    %5865 = vmatpush.msra.mxu0 %v5864
    %v5866 = vand.u32 %v292, 4294901760
    %v5867 = vsub.f32 %v292, %v5866
    %v5868 = vand.u32 %v5867, 4294901760
    %v5869 = vsub.f32 %v5867, %v5868
    %v5870 = vand.u32 %v5869, 4294901760
    %5871 = vmatpush.msra.mxu0 %v5870
    %v5872 = vand.u32 %v291, 4294901760
    %v5873 = vsub.f32 %v291, %v5872
    %v5874 = vand.u32 %v5873, 4294901760
    %v5875 = vsub.f32 %v5873, %v5874
    %v5876 = vand.u32 %v5875, 4294901760
    %5877 = vmatpush.msra.mxu0 %v5876
    %v5878 = vand.u32 %v290, 4294901760
    %v5879 = vsub.f32 %v290, %v5878
    %v5880 = vand.u32 %v5879, 4294901760
    %v5881 = vsub.f32 %v5879, %v5880
    %v5882 = vand.u32 %v5881, 4294901760
    %5883 = vmatpush.msra.mxu0 %v5882
    %v5884 = vand.u32 %v583, 4294901760
    %5885 = vmatmul.f32.gmra.mxu0 %v5884
    %v5886 = vpop.f32.mrf.mxu0
    %v5887 = vadd.f32 %v5786, %v5886
    %5888 = vdwg.mxu0
    %v5889 = vand.u32 %v305, 4294901760
    %v5890 = vsub.f32 %v305, %v5889
    %5891 = vmatpush.msra.mxu0 %v5890
    %v5892 = vand.u32 %v304, 4294901760
    %v5893 = vsub.f32 %v304, %v5892
    %5894 = vmatpush.msra.mxu0 %v5893
    %v5895 = vand.u32 %v303, 4294901760
    %v5896 = vsub.f32 %v303, %v5895
    %5897 = vmatpush.msra.mxu0 %v5896
    %v5898 = vand.u32 %v302, 4294901760
    %v5899 = vsub.f32 %v302, %v5898
    %5900 = vmatpush.msra.mxu0 %v5899
    %v5901 = vand.u32 %v301, 4294901760
    %v5902 = vsub.f32 %v301, %v5901
    %5903 = vmatpush.msra.mxu0 %v5902
    %v5904 = vand.u32 %v300, 4294901760
    %v5905 = vsub.f32 %v300, %v5904
    %5906 = vmatpush.msra.mxu0 %v5905
    %v5907 = vand.u32 %v299, 4294901760
    %v5908 = vsub.f32 %v299, %v5907
    %5909 = vmatpush.msra.mxu0 %v5908
    %v5910 = vand.u32 %v298, 4294901760
    %v5911 = vsub.f32 %v298, %v5910
    %5912 = vmatpush.msra.mxu0 %v5911
    %v5913 = vand.u32 %v297, 4294901760
    %v5914 = vsub.f32 %v297, %v5913
    %5915 = vmatpush.msra.mxu0 %v5914
    %v5916 = vand.u32 %v296, 4294901760
    %v5917 = vsub.f32 %v296, %v5916
    %5918 = vmatpush.msra.mxu0 %v5917
    %v5919 = vand.u32 %v295, 4294901760
    %v5920 = vsub.f32 %v295, %v5919
    %5921 = vmatpush.msra.mxu0 %v5920
    %v5922 = vand.u32 %v294, 4294901760
    %v5923 = vsub.f32 %v294, %v5922
    %5924 = vmatpush.msra.mxu0 %v5923
    %v5925 = vand.u32 %v293, 4294901760
    %v5926 = vsub.f32 %v293, %v5925
    %5927 = vmatpush.msra.mxu0 %v5926
    %v5928 = vand.u32 %v292, 4294901760
    %v5929 = vsub.f32 %v292, %v5928
    %5930 = vmatpush.msra.mxu0 %v5929
    %v5931 = vand.u32 %v291, 4294901760
    %v5932 = vsub.f32 %v291, %v5931
    %5933 = vmatpush.msra.mxu0 %v5932
    %v5934 = vand.u32 %v290, 4294901760
    %v5935 = vsub.f32 %v290, %v5934
    %5936 = vmatpush.msra.mxu0 %v5935
    %v5937 = vand.u32 %v583, 4294901760
    %v5938 = vsub.f32 %v583, %v5937
    %5939 = vmatmul.f32.gmra.mxu0 %v5938
    %v5940 = vpop.f32.mrf.mxu0
    %v5941 = vadd.f32 %v5887, %v5940
    %5942 = vdwg.mxu0
    %v5943 = vand.u32 %v305, 4294901760
    %5944 = vmatpush.msra.mxu0 %v5943
    %v5945 = vand.u32 %v304, 4294901760
    %5946 = vmatpush.msra.mxu0 %v5945
    %v5947 = vand.u32 %v303, 4294901760
    %5948 = vmatpush.msra.mxu0 %v5947
    %v5949 = vand.u32 %v302, 4294901760
    %5950 = vmatpush.msra.mxu0 %v5949
    %v5951 = vand.u32 %v301, 4294901760
    %5952 = vmatpush.msra.mxu0 %v5951
    %v5953 = vand.u32 %v300, 4294901760
    %5954 = vmatpush.msra.mxu0 %v5953
    %v5955 = vand.u32 %v299, 4294901760
    %5956 = vmatpush.msra.mxu0 %v5955
    %v5957 = vand.u32 %v298, 4294901760
    %5958 = vmatpush.msra.mxu0 %v5957
    %v5959 = vand.u32 %v297, 4294901760
    %5960 = vmatpush.msra.mxu0 %v5959
    %v5961 = vand.u32 %v296, 4294901760
    %5962 = vmatpush.msra.mxu0 %v5961
    %v5963 = vand.u32 %v295, 4294901760
    %5964 = vmatpush.msra.mxu0 %v5963
    %v5965 = vand.u32 %v294, 4294901760
    %5966 = vmatpush.msra.mxu0 %v5965
    %v5967 = vand.u32 %v293, 4294901760
    %5968 = vmatpush.msra.mxu0 %v5967
    %v5969 = vand.u32 %v292, 4294901760
    %5970 = vmatpush.msra.mxu0 %v5969
    %v5971 = vand.u32 %v291, 4294901760
    %5972 = vmatpush.msra.mxu0 %v5971
    %v5973 = vand.u32 %v290, 4294901760
    %5974 = vmatpush.msra.mxu0 %v5973
    %v5975 = vand.u32 %v583, 4294901760
    %v5976 = vsub.f32 %v583, %v5975
    %v5977 = vand.u32 %v5976, 4294901760
    %5978 = vmatmul.f32.gmra.mxu0 %v5977
    %v5979 = vpop.f32.mrf.mxu0
    %v5980 = vadd.f32 %v5941, %v5979
    %5981 = vdwg.mxu0
    %v5982 = vand.u32 %v305, 4294901760
    %v5983 = vsub.f32 %v305, %v5982
    %v5984 = vand.u32 %v5983, 4294901760
    %5985 = vmatpush.msra.mxu0 %v5984
    %v5986 = vand.u32 %v304, 4294901760
    %v5987 = vsub.f32 %v304, %v5986
    %v5988 = vand.u32 %v5987, 4294901760
    %5989 = vmatpush.msra.mxu0 %v5988
    %v5990 = vand.u32 %v303, 4294901760
    %v5991 = vsub.f32 %v303, %v5990
    %v5992 = vand.u32 %v5991, 4294901760
    %5993 = vmatpush.msra.mxu0 %v5992
    %v5994 = vand.u32 %v302, 4294901760
    %v5995 = vsub.f32 %v302, %v5994
    %v5996 = vand.u32 %v5995, 4294901760
    %5997 = vmatpush.msra.mxu0 %v5996
    %v5998 = vand.u32 %v301, 4294901760
    %v5999 = vsub.f32 %v301, %v5998
    %v6000 = vand.u32 %v5999, 4294901760
    %6001 = vmatpush.msra.mxu0 %v6000
    %v6002 = vand.u32 %v300, 4294901760
    %v6003 = vsub.f32 %v300, %v6002
    %v6004 = vand.u32 %v6003, 4294901760
    %6005 = vmatpush.msra.mxu0 %v6004
    %v6006 = vand.u32 %v299, 4294901760
    %v6007 = vsub.f32 %v299, %v6006
    %v6008 = vand.u32 %v6007, 4294901760
    %6009 = vmatpush.msra.mxu0 %v6008
    %v6010 = vand.u32 %v298, 4294901760
    %v6011 = vsub.f32 %v298, %v6010
    %v6012 = vand.u32 %v6011, 4294901760
    %6013 = vmatpush.msra.mxu0 %v6012
    %v6014 = vand.u32 %v297, 4294901760
    %v6015 = vsub.f32 %v297, %v6014
    %v6016 = vand.u32 %v6015, 4294901760
    %6017 = vmatpush.msra.mxu0 %v6016
    %v6018 = vand.u32 %v296, 4294901760
    %v6019 = vsub.f32 %v296, %v6018
    %v6020 = vand.u32 %v6019, 4294901760
    %6021 = vmatpush.msra.mxu0 %v6020
    %v6022 = vand.u32 %v295, 4294901760
    %v6023 = vsub.f32 %v295, %v6022
    %v6024 = vand.u32 %v6023, 4294901760
    %6025 = vmatpush.msra.mxu0 %v6024
    %v6026 = vand.u32 %v294, 4294901760
    %v6027 = vsub.f32 %v294, %v6026
    %v6028 = vand.u32 %v6027, 4294901760
    %6029 = vmatpush.msra.mxu0 %v6028
    %v6030 = vand.u32 %v293, 4294901760
    %v6031 = vsub.f32 %v293, %v6030
    %v6032 = vand.u32 %v6031, 4294901760
    %6033 = vmatpush.msra.mxu0 %v6032
    %v6034 = vand.u32 %v292, 4294901760
    %v6035 = vsub.f32 %v292, %v6034
    %v6036 = vand.u32 %v6035, 4294901760
    %6037 = vmatpush.msra.mxu0 %v6036
    %v6038 = vand.u32 %v291, 4294901760
    %v6039 = vsub.f32 %v291, %v6038
    %v6040 = vand.u32 %v6039, 4294901760
    %6041 = vmatpush.msra.mxu0 %v6040
    %v6042 = vand.u32 %v290, 4294901760
    %v6043 = vsub.f32 %v290, %v6042
    %v6044 = vand.u32 %v6043, 4294901760
    %6045 = vmatpush.msra.mxu0 %v6044
    %v6046 = vand.u32 %v583, 4294901760
    %6047 = vmatmul.f32.gmra.mxu0 %v6046
    %v6048 = vpop.f32.mrf.mxu0
    %v6049 = vadd.f32 %v5980, %v6048
    %6050 = vdwg.mxu0
    %v6051 = vand.u32 %v305, 4294901760
    %6052 = vmatpush.msra.mxu0 %v6051
    %v6053 = vand.u32 %v304, 4294901760
    %6054 = vmatpush.msra.mxu0 %v6053
    %v6055 = vand.u32 %v303, 4294901760
    %6056 = vmatpush.msra.mxu0 %v6055
    %v6057 = vand.u32 %v302, 4294901760
    %6058 = vmatpush.msra.mxu0 %v6057
    %v6059 = vand.u32 %v301, 4294901760
    %6060 = vmatpush.msra.mxu0 %v6059
    %v6061 = vand.u32 %v300, 4294901760
    %6062 = vmatpush.msra.mxu0 %v6061
    %v6063 = vand.u32 %v299, 4294901760
    %6064 = vmatpush.msra.mxu0 %v6063
    %v6065 = vand.u32 %v298, 4294901760
    %6066 = vmatpush.msra.mxu0 %v6065
    %v6067 = vand.u32 %v297, 4294901760
    %6068 = vmatpush.msra.mxu0 %v6067
    %v6069 = vand.u32 %v296, 4294901760
    %6070 = vmatpush.msra.mxu0 %v6069
    %v6071 = vand.u32 %v295, 4294901760
    %6072 = vmatpush.msra.mxu0 %v6071
    %v6073 = vand.u32 %v294, 4294901760
    %6074 = vmatpush.msra.mxu0 %v6073
    %v6075 = vand.u32 %v293, 4294901760
    %6076 = vmatpush.msra.mxu0 %v6075
    %v6077 = vand.u32 %v292, 4294901760
    %6078 = vmatpush.msra.mxu0 %v6077
    %v6079 = vand.u32 %v291, 4294901760
    %6080 = vmatpush.msra.mxu0 %v6079
    %v6081 = vand.u32 %v290, 4294901760
    %6082 = vmatpush.msra.mxu0 %v6081
    %v6083 = vand.u32 %v583, 4294901760
    %6084 = vmatmul.f32.gmra.mxu0 %v6083
    %v6085 = vpop.f32.mrf.mxu0
    %v6086 = vadd.f32 %v6049, %v6085
    %6087 = vdwg.mxu0
    %v6088 = vand.u32 %v321, 4294901760
    %6089 = vmatpush.msra.mxu0 %v6088
    %v6090 = vand.u32 %v320, 4294901760
    %6091 = vmatpush.msra.mxu0 %v6090
    %v6092 = vand.u32 %v319, 4294901760
    %6093 = vmatpush.msra.mxu0 %v6092
    %v6094 = vand.u32 %v318, 4294901760
    %6095 = vmatpush.msra.mxu0 %v6094
    %v6096 = vand.u32 %v317, 4294901760
    %6097 = vmatpush.msra.mxu0 %v6096
    %v6098 = vand.u32 %v316, 4294901760
    %6099 = vmatpush.msra.mxu0 %v6098
    %v6100 = vand.u32 %v315, 4294901760
    %6101 = vmatpush.msra.mxu0 %v6100
    %v6102 = vand.u32 %v314, 4294901760
    %6103 = vmatpush.msra.mxu0 %v6102
    %v6104 = vand.u32 %v313, 4294901760
    %6105 = vmatpush.msra.mxu0 %v6104
    %v6106 = vand.u32 %v312, 4294901760
    %6107 = vmatpush.msra.mxu0 %v6106
    %v6108 = vand.u32 %v311, 4294901760
    %6109 = vmatpush.msra.mxu0 %v6108
    %v6110 = vand.u32 %v310, 4294901760
    %6111 = vmatpush.msra.mxu0 %v6110
    %v6112 = vand.u32 %v309, 4294901760
    %6113 = vmatpush.msra.mxu0 %v6112
    %v6114 = vand.u32 %v308, 4294901760
    %6115 = vmatpush.msra.mxu0 %v6114
    %v6116 = vand.u32 %v307, 4294901760
    %6117 = vmatpush.msra.mxu0 %v6116
    %v6118 = vand.u32 %v306, 4294901760
    %6119 = vmatpush.msra.mxu0 %v6118
    %v6120 = vand.u32 %v584, 4294901760
    %v6121 = vsub.f32 %v584, %v6120
    %v6122 = vand.u32 %v6121, 4294901760
    %v6123 = vsub.f32 %v6121, %v6122
    %v6124 = vand.u32 %v6123, 4294901760
    %6125 = vmatmul.f32.gmra.mxu0 %v6124
    %v6126 = vpop.f32.mrf.mxu0
    %v6127 = vadd.f32 %v6086, %v6126
    %6128 = vdwg.mxu0
    %v6129 = vand.u32 %v321, 4294901760
    %v6130 = vsub.f32 %v321, %v6129
    %v6131 = vand.u32 %v6130, 4294901760
    %v6132 = vsub.f32 %v6130, %v6131
    %v6133 = vand.u32 %v6132, 4294901760
    %6134 = vmatpush.msra.mxu0 %v6133
    %v6135 = vand.u32 %v320, 4294901760
    %v6136 = vsub.f32 %v320, %v6135
    %v6137 = vand.u32 %v6136, 4294901760
    %v6138 = vsub.f32 %v6136, %v6137
    %v6139 = vand.u32 %v6138, 4294901760
    %6140 = vmatpush.msra.mxu0 %v6139
    %v6141 = vand.u32 %v319, 4294901760
    %v6142 = vsub.f32 %v319, %v6141
    %v6143 = vand.u32 %v6142, 4294901760
    %v6144 = vsub.f32 %v6142, %v6143
    %v6145 = vand.u32 %v6144, 4294901760
    %6146 = vmatpush.msra.mxu0 %v6145
    %v6147 = vand.u32 %v318, 4294901760
    %v6148 = vsub.f32 %v318, %v6147
    %v6149 = vand.u32 %v6148, 4294901760
    %v6150 = vsub.f32 %v6148, %v6149
    %v6151 = vand.u32 %v6150, 4294901760
    %6152 = vmatpush.msra.mxu0 %v6151
    %v6153 = vand.u32 %v317, 4294901760
    %v6154 = vsub.f32 %v317, %v6153
    %v6155 = vand.u32 %v6154, 4294901760
    %v6156 = vsub.f32 %v6154, %v6155
    %v6157 = vand.u32 %v6156, 4294901760
    %6158 = vmatpush.msra.mxu0 %v6157
    %v6159 = vand.u32 %v316, 4294901760
    %v6160 = vsub.f32 %v316, %v6159
    %v6161 = vand.u32 %v6160, 4294901760
    %v6162 = vsub.f32 %v6160, %v6161
    %v6163 = vand.u32 %v6162, 4294901760
    %6164 = vmatpush.msra.mxu0 %v6163
    %v6165 = vand.u32 %v315, 4294901760
    %v6166 = vsub.f32 %v315, %v6165
    %v6167 = vand.u32 %v6166, 4294901760
    %v6168 = vsub.f32 %v6166, %v6167
    %v6169 = vand.u32 %v6168, 4294901760
    %6170 = vmatpush.msra.mxu0 %v6169
    %v6171 = vand.u32 %v314, 4294901760
    %v6172 = vsub.f32 %v314, %v6171
    %v6173 = vand.u32 %v6172, 4294901760
    %v6174 = vsub.f32 %v6172, %v6173
    %v6175 = vand.u32 %v6174, 4294901760
    %6176 = vmatpush.msra.mxu0 %v6175
    %v6177 = vand.u32 %v313, 4294901760
    %v6178 = vsub.f32 %v313, %v6177
    %v6179 = vand.u32 %v6178, 4294901760
    %v6180 = vsub.f32 %v6178, %v6179
    %v6181 = vand.u32 %v6180, 4294901760
    %6182 = vmatpush.msra.mxu0 %v6181
    %v6183 = vand.u32 %v312, 4294901760
    %v6184 = vsub.f32 %v312, %v6183
    %v6185 = vand.u32 %v6184, 4294901760
    %v6186 = vsub.f32 %v6184, %v6185
    %v6187 = vand.u32 %v6186, 4294901760
    %6188 = vmatpush.msra.mxu0 %v6187
    %v6189 = vand.u32 %v311, 4294901760
    %v6190 = vsub.f32 %v311, %v6189
    %v6191 = vand.u32 %v6190, 4294901760
    %v6192 = vsub.f32 %v6190, %v6191
    %v6193 = vand.u32 %v6192, 4294901760
    %6194 = vmatpush.msra.mxu0 %v6193
    %v6195 = vand.u32 %v310, 4294901760
    %v6196 = vsub.f32 %v310, %v6195
    %v6197 = vand.u32 %v6196, 4294901760
    %v6198 = vsub.f32 %v6196, %v6197
    %v6199 = vand.u32 %v6198, 4294901760
    %6200 = vmatpush.msra.mxu0 %v6199
    %v6201 = vand.u32 %v309, 4294901760
    %v6202 = vsub.f32 %v309, %v6201
    %v6203 = vand.u32 %v6202, 4294901760
    %v6204 = vsub.f32 %v6202, %v6203
    %v6205 = vand.u32 %v6204, 4294901760
    %6206 = vmatpush.msra.mxu0 %v6205
    %v6207 = vand.u32 %v308, 4294901760
    %v6208 = vsub.f32 %v308, %v6207
    %v6209 = vand.u32 %v6208, 4294901760
    %v6210 = vsub.f32 %v6208, %v6209
    %v6211 = vand.u32 %v6210, 4294901760
    %6212 = vmatpush.msra.mxu0 %v6211
    %v6213 = vand.u32 %v307, 4294901760
    %v6214 = vsub.f32 %v307, %v6213
    %v6215 = vand.u32 %v6214, 4294901760
    %v6216 = vsub.f32 %v6214, %v6215
    %v6217 = vand.u32 %v6216, 4294901760
    %6218 = vmatpush.msra.mxu0 %v6217
    %v6219 = vand.u32 %v306, 4294901760
    %v6220 = vsub.f32 %v306, %v6219
    %v6221 = vand.u32 %v6220, 4294901760
    %v6222 = vsub.f32 %v6220, %v6221
    %v6223 = vand.u32 %v6222, 4294901760
    %6224 = vmatpush.msra.mxu0 %v6223
    %v6225 = vand.u32 %v584, 4294901760
    %6226 = vmatmul.f32.gmra.mxu0 %v6225
    %v6227 = vpop.f32.mrf.mxu0
    %v6228 = vadd.f32 %v6127, %v6227
    %6229 = vdwg.mxu0
    %v6230 = vand.u32 %v321, 4294901760
    %v6231 = vsub.f32 %v321, %v6230
    %6232 = vmatpush.msra.mxu0 %v6231
    %v6233 = vand.u32 %v320, 4294901760
    %v6234 = vsub.f32 %v320, %v6233
    %6235 = vmatpush.msra.mxu0 %v6234
    %v6236 = vand.u32 %v319, 4294901760
    %v6237 = vsub.f32 %v319, %v6236
    %6238 = vmatpush.msra.mxu0 %v6237
    %v6239 = vand.u32 %v318, 4294901760
    %v6240 = vsub.f32 %v318, %v6239
    %6241 = vmatpush.msra.mxu0 %v6240
    %v6242 = vand.u32 %v317, 4294901760
    %v6243 = vsub.f32 %v317, %v6242
    %6244 = vmatpush.msra.mxu0 %v6243
    %v6245 = vand.u32 %v316, 4294901760
    %v6246 = vsub.f32 %v316, %v6245
    %6247 = vmatpush.msra.mxu0 %v6246
    %v6248 = vand.u32 %v315, 4294901760
    %v6249 = vsub.f32 %v315, %v6248
    %6250 = vmatpush.msra.mxu0 %v6249
    %v6251 = vand.u32 %v314, 4294901760
    %v6252 = vsub.f32 %v314, %v6251
    %6253 = vmatpush.msra.mxu0 %v6252
    %v6254 = vand.u32 %v313, 4294901760
    %v6255 = vsub.f32 %v313, %v6254
    %6256 = vmatpush.msra.mxu0 %v6255
    %v6257 = vand.u32 %v312, 4294901760
    %v6258 = vsub.f32 %v312, %v6257
    %6259 = vmatpush.msra.mxu0 %v6258
    %v6260 = vand.u32 %v311, 4294901760
    %v6261 = vsub.f32 %v311, %v6260
    %6262 = vmatpush.msra.mxu0 %v6261
    %v6263 = vand.u32 %v310, 4294901760
    %v6264 = vsub.f32 %v310, %v6263
    %6265 = vmatpush.msra.mxu0 %v6264
    %v6266 = vand.u32 %v309, 4294901760
    %v6267 = vsub.f32 %v309, %v6266
    %6268 = vmatpush.msra.mxu0 %v6267
    %v6269 = vand.u32 %v308, 4294901760
    %v6270 = vsub.f32 %v308, %v6269
    %6271 = vmatpush.msra.mxu0 %v6270
    %v6272 = vand.u32 %v307, 4294901760
    %v6273 = vsub.f32 %v307, %v6272
    %6274 = vmatpush.msra.mxu0 %v6273
    %v6275 = vand.u32 %v306, 4294901760
    %v6276 = vsub.f32 %v306, %v6275
    %6277 = vmatpush.msra.mxu0 %v6276
    %v6278 = vand.u32 %v584, 4294901760
    %v6279 = vsub.f32 %v584, %v6278
    %6280 = vmatmul.f32.gmra.mxu0 %v6279
    %v6281 = vpop.f32.mrf.mxu0
    %v6282 = vadd.f32 %v6228, %v6281
    %6283 = vdwg.mxu0
    %v6284 = vand.u32 %v321, 4294901760
    %6285 = vmatpush.msra.mxu0 %v6284
    %v6286 = vand.u32 %v320, 4294901760
    %6287 = vmatpush.msra.mxu0 %v6286
    %v6288 = vand.u32 %v319, 4294901760
    %6289 = vmatpush.msra.mxu0 %v6288
    %v6290 = vand.u32 %v318, 4294901760
    %6291 = vmatpush.msra.mxu0 %v6290
    %v6292 = vand.u32 %v317, 4294901760
    %6293 = vmatpush.msra.mxu0 %v6292
    %v6294 = vand.u32 %v316, 4294901760
    %6295 = vmatpush.msra.mxu0 %v6294
    %v6296 = vand.u32 %v315, 4294901760
    %6297 = vmatpush.msra.mxu0 %v6296
    %v6298 = vand.u32 %v314, 4294901760
    %6299 = vmatpush.msra.mxu0 %v6298
    %v6300 = vand.u32 %v313, 4294901760
    %6301 = vmatpush.msra.mxu0 %v6300
    %v6302 = vand.u32 %v312, 4294901760
    %6303 = vmatpush.msra.mxu0 %v6302
    %v6304 = vand.u32 %v311, 4294901760
    %6305 = vmatpush.msra.mxu0 %v6304
    %v6306 = vand.u32 %v310, 4294901760
    %6307 = vmatpush.msra.mxu0 %v6306
    %v6308 = vand.u32 %v309, 4294901760
    %6309 = vmatpush.msra.mxu0 %v6308
    %v6310 = vand.u32 %v308, 4294901760
    %6311 = vmatpush.msra.mxu0 %v6310
    %v6312 = vand.u32 %v307, 4294901760
    %6313 = vmatpush.msra.mxu0 %v6312
    %v6314 = vand.u32 %v306, 4294901760
    %6315 = vmatpush.msra.mxu0 %v6314
    %v6316 = vand.u32 %v584, 4294901760
    %v6317 = vsub.f32 %v584, %v6316
    %v6318 = vand.u32 %v6317, 4294901760
    %6319 = vmatmul.f32.gmra.mxu0 %v6318
    %v6320 = vpop.f32.mrf.mxu0
    %v6321 = vadd.f32 %v6282, %v6320
    %6322 = vdwg.mxu0
    %v6323 = vand.u32 %v321, 4294901760
    %v6324 = vsub.f32 %v321, %v6323
    %v6325 = vand.u32 %v6324, 4294901760
    %6326 = vmatpush.msra.mxu0 %v6325
    %v6327 = vand.u32 %v320, 4294901760
    %v6328 = vsub.f32 %v320, %v6327
    %v6329 = vand.u32 %v6328, 4294901760
    %6330 = vmatpush.msra.mxu0 %v6329
    %v6331 = vand.u32 %v319, 4294901760
    %v6332 = vsub.f32 %v319, %v6331
    %v6333 = vand.u32 %v6332, 4294901760
    %6334 = vmatpush.msra.mxu0 %v6333
    %v6335 = vand.u32 %v318, 4294901760
    %v6336 = vsub.f32 %v318, %v6335
    %v6337 = vand.u32 %v6336, 4294901760
    %6338 = vmatpush.msra.mxu0 %v6337
    %v6339 = vand.u32 %v317, 4294901760
    %v6340 = vsub.f32 %v317, %v6339
    %v6341 = vand.u32 %v6340, 4294901760
    %6342 = vmatpush.msra.mxu0 %v6341
    %v6343 = vand.u32 %v316, 4294901760
    %v6344 = vsub.f32 %v316, %v6343
    %v6345 = vand.u32 %v6344, 4294901760
    %6346 = vmatpush.msra.mxu0 %v6345
    %v6347 = vand.u32 %v315, 4294901760
    %v6348 = vsub.f32 %v315, %v6347
    %v6349 = vand.u32 %v6348, 4294901760
    %6350 = vmatpush.msra.mxu0 %v6349
    %v6351 = vand.u32 %v314, 4294901760
    %v6352 = vsub.f32 %v314, %v6351
    %v6353 = vand.u32 %v6352, 4294901760
    %6354 = vmatpush.msra.mxu0 %v6353
    %v6355 = vand.u32 %v313, 4294901760
    %v6356 = vsub.f32 %v313, %v6355
    %v6357 = vand.u32 %v6356, 4294901760
    %6358 = vmatpush.msra.mxu0 %v6357
    %v6359 = vand.u32 %v312, 4294901760
    %v6360 = vsub.f32 %v312, %v6359
    %v6361 = vand.u32 %v6360, 4294901760
    %6362 = vmatpush.msra.mxu0 %v6361
    %v6363 = vand.u32 %v311, 4294901760
    %v6364 = vsub.f32 %v311, %v6363
    %v6365 = vand.u32 %v6364, 4294901760
    %6366 = vmatpush.msra.mxu0 %v6365
    %v6367 = vand.u32 %v310, 4294901760
    %v6368 = vsub.f32 %v310, %v6367
    %v6369 = vand.u32 %v6368, 4294901760
    %6370 = vmatpush.msra.mxu0 %v6369
    %v6371 = vand.u32 %v309, 4294901760
    %v6372 = vsub.f32 %v309, %v6371
    %v6373 = vand.u32 %v6372, 4294901760
    %6374 = vmatpush.msra.mxu0 %v6373
    %v6375 = vand.u32 %v308, 4294901760
    %v6376 = vsub.f32 %v308, %v6375
    %v6377 = vand.u32 %v6376, 4294901760
    %6378 = vmatpush.msra.mxu0 %v6377
    %v6379 = vand.u32 %v307, 4294901760
    %v6380 = vsub.f32 %v307, %v6379
    %v6381 = vand.u32 %v6380, 4294901760
    %6382 = vmatpush.msra.mxu0 %v6381
    %v6383 = vand.u32 %v306, 4294901760
    %v6384 = vsub.f32 %v306, %v6383
    %v6385 = vand.u32 %v6384, 4294901760
    %6386 = vmatpush.msra.mxu0 %v6385
    %v6387 = vand.u32 %v584, 4294901760
    %6388 = vmatmul.f32.gmra.mxu0 %v6387
    %v6389 = vpop.f32.mrf.mxu0
    %v6390 = vadd.f32 %v6321, %v6389
    %6391 = vdwg.mxu0
    %v6392 = vand.u32 %v321, 4294901760
    %6393 = vmatpush.msra.mxu0 %v6392
    %v6394 = vand.u32 %v320, 4294901760
    %6395 = vmatpush.msra.mxu0 %v6394
    %v6396 = vand.u32 %v319, 4294901760
    %6397 = vmatpush.msra.mxu0 %v6396
    %v6398 = vand.u32 %v318, 4294901760
    %6399 = vmatpush.msra.mxu0 %v6398
    %v6400 = vand.u32 %v317, 4294901760
    %6401 = vmatpush.msra.mxu0 %v6400
    %v6402 = vand.u32 %v316, 4294901760
    %6403 = vmatpush.msra.mxu0 %v6402
    %v6404 = vand.u32 %v315, 4294901760
    %6405 = vmatpush.msra.mxu0 %v6404
    %v6406 = vand.u32 %v314, 4294901760
    %6407 = vmatpush.msra.mxu0 %v6406
    %v6408 = vand.u32 %v313, 4294901760
    %6409 = vmatpush.msra.mxu0 %v6408
    %v6410 = vand.u32 %v312, 4294901760
    %6411 = vmatpush.msra.mxu0 %v6410
    %v6412 = vand.u32 %v311, 4294901760
    %6413 = vmatpush.msra.mxu0 %v6412
    %v6414 = vand.u32 %v310, 4294901760
    %6415 = vmatpush.msra.mxu0 %v6414
    %v6416 = vand.u32 %v309, 4294901760
    %6417 = vmatpush.msra.mxu0 %v6416
    %v6418 = vand.u32 %v308, 4294901760
    %6419 = vmatpush.msra.mxu0 %v6418
    %v6420 = vand.u32 %v307, 4294901760
    %6421 = vmatpush.msra.mxu0 %v6420
    %v6422 = vand.u32 %v306, 4294901760
    %6423 = vmatpush.msra.mxu0 %v6422
    %v6424 = vand.u32 %v584, 4294901760
    %6425 = vmatmul.f32.gmra.mxu0 %v6424
    %v6426 = vpop.f32.mrf.mxu0
    %v6427 = vadd.f32 %v6390, %v6426
    %6428 = vdwg.mxu0
    %v6429 = vand.u32 %v337, 4294901760
    %6430 = vmatpush.msra.mxu0 %v6429
    %v6431 = vand.u32 %v336, 4294901760
    %6432 = vmatpush.msra.mxu0 %v6431
    %v6433 = vand.u32 %v335, 4294901760
    %6434 = vmatpush.msra.mxu0 %v6433
    %v6435 = vand.u32 %v334, 4294901760
    %6436 = vmatpush.msra.mxu0 %v6435
    %v6437 = vand.u32 %v333, 4294901760
    %6438 = vmatpush.msra.mxu0 %v6437
    %v6439 = vand.u32 %v332, 4294901760
    %6440 = vmatpush.msra.mxu0 %v6439
    %v6441 = vand.u32 %v331, 4294901760
    %6442 = vmatpush.msra.mxu0 %v6441
    %v6443 = vand.u32 %v330, 4294901760
    %6444 = vmatpush.msra.mxu0 %v6443
    %v6445 = vand.u32 %v329, 4294901760
    %6446 = vmatpush.msra.mxu0 %v6445
    %v6447 = vand.u32 %v328, 4294901760
    %6448 = vmatpush.msra.mxu0 %v6447
    %v6449 = vand.u32 %v327, 4294901760
    %6450 = vmatpush.msra.mxu0 %v6449
    %v6451 = vand.u32 %v326, 4294901760
    %6452 = vmatpush.msra.mxu0 %v6451
    %v6453 = vand.u32 %v325, 4294901760
    %6454 = vmatpush.msra.mxu0 %v6453
    %v6455 = vand.u32 %v324, 4294901760
    %6456 = vmatpush.msra.mxu0 %v6455
    %v6457 = vand.u32 %v323, 4294901760
    %6458 = vmatpush.msra.mxu0 %v6457
    %v6459 = vand.u32 %v322, 4294901760
    %6460 = vmatpush.msra.mxu0 %v6459
    %v6461 = vand.u32 %v585, 4294901760
    %v6462 = vsub.f32 %v585, %v6461
    %v6463 = vand.u32 %v6462, 4294901760
    %v6464 = vsub.f32 %v6462, %v6463
    %v6465 = vand.u32 %v6464, 4294901760
    %6466 = vmatmul.f32.gmra.mxu0 %v6465
    %v6467 = vpop.f32.mrf.mxu0
    %v6468 = vadd.f32 %v6427, %v6467
    %6469 = vdwg.mxu0
    %v6470 = vand.u32 %v337, 4294901760
    %v6471 = vsub.f32 %v337, %v6470
    %v6472 = vand.u32 %v6471, 4294901760
    %v6473 = vsub.f32 %v6471, %v6472
    %v6474 = vand.u32 %v6473, 4294901760
    %6475 = vmatpush.msra.mxu0 %v6474
    %v6476 = vand.u32 %v336, 4294901760
    %v6477 = vsub.f32 %v336, %v6476
    %v6478 = vand.u32 %v6477, 4294901760
    %v6479 = vsub.f32 %v6477, %v6478
    %v6480 = vand.u32 %v6479, 4294901760
    %6481 = vmatpush.msra.mxu0 %v6480
    %v6482 = vand.u32 %v335, 4294901760
    %v6483 = vsub.f32 %v335, %v6482
    %v6484 = vand.u32 %v6483, 4294901760
    %v6485 = vsub.f32 %v6483, %v6484
    %v6486 = vand.u32 %v6485, 4294901760
    %6487 = vmatpush.msra.mxu0 %v6486
    %v6488 = vand.u32 %v334, 4294901760
    %v6489 = vsub.f32 %v334, %v6488
    %v6490 = vand.u32 %v6489, 4294901760
    %v6491 = vsub.f32 %v6489, %v6490
    %v6492 = vand.u32 %v6491, 4294901760
    %6493 = vmatpush.msra.mxu0 %v6492
    %v6494 = vand.u32 %v333, 4294901760
    %v6495 = vsub.f32 %v333, %v6494
    %v6496 = vand.u32 %v6495, 4294901760
    %v6497 = vsub.f32 %v6495, %v6496
    %v6498 = vand.u32 %v6497, 4294901760
    %6499 = vmatpush.msra.mxu0 %v6498
    %v6500 = vand.u32 %v332, 4294901760
    %v6501 = vsub.f32 %v332, %v6500
    %v6502 = vand.u32 %v6501, 4294901760
    %v6503 = vsub.f32 %v6501, %v6502
    %v6504 = vand.u32 %v6503, 4294901760
    %6505 = vmatpush.msra.mxu0 %v6504
    %v6506 = vand.u32 %v331, 4294901760
    %v6507 = vsub.f32 %v331, %v6506
    %v6508 = vand.u32 %v6507, 4294901760
    %v6509 = vsub.f32 %v6507, %v6508
    %v6510 = vand.u32 %v6509, 4294901760
    %6511 = vmatpush.msra.mxu0 %v6510
    %v6512 = vand.u32 %v330, 4294901760
    %v6513 = vsub.f32 %v330, %v6512
    %v6514 = vand.u32 %v6513, 4294901760
    %v6515 = vsub.f32 %v6513, %v6514
    %v6516 = vand.u32 %v6515, 4294901760
    %6517 = vmatpush.msra.mxu0 %v6516
    %v6518 = vand.u32 %v329, 4294901760
    %v6519 = vsub.f32 %v329, %v6518
    %v6520 = vand.u32 %v6519, 4294901760
    %v6521 = vsub.f32 %v6519, %v6520
    %v6522 = vand.u32 %v6521, 4294901760
    %6523 = vmatpush.msra.mxu0 %v6522
    %v6524 = vand.u32 %v328, 4294901760
    %v6525 = vsub.f32 %v328, %v6524
    %v6526 = vand.u32 %v6525, 4294901760
    %v6527 = vsub.f32 %v6525, %v6526
    %v6528 = vand.u32 %v6527, 4294901760
    %6529 = vmatpush.msra.mxu0 %v6528
    %v6530 = vand.u32 %v327, 4294901760
    %v6531 = vsub.f32 %v327, %v6530
    %v6532 = vand.u32 %v6531, 4294901760
    %v6533 = vsub.f32 %v6531, %v6532
    %v6534 = vand.u32 %v6533, 4294901760
    %6535 = vmatpush.msra.mxu0 %v6534
    %v6536 = vand.u32 %v326, 4294901760
    %v6537 = vsub.f32 %v326, %v6536
    %v6538 = vand.u32 %v6537, 4294901760
    %v6539 = vsub.f32 %v6537, %v6538
    %v6540 = vand.u32 %v6539, 4294901760
    %6541 = vmatpush.msra.mxu0 %v6540
    %v6542 = vand.u32 %v325, 4294901760
    %v6543 = vsub.f32 %v325, %v6542
    %v6544 = vand.u32 %v6543, 4294901760
    %v6545 = vsub.f32 %v6543, %v6544
    %v6546 = vand.u32 %v6545, 4294901760
    %6547 = vmatpush.msra.mxu0 %v6546
    %v6548 = vand.u32 %v324, 4294901760
    %v6549 = vsub.f32 %v324, %v6548
    %v6550 = vand.u32 %v6549, 4294901760
    %v6551 = vsub.f32 %v6549, %v6550
    %v6552 = vand.u32 %v6551, 4294901760
    %6553 = vmatpush.msra.mxu0 %v6552
    %v6554 = vand.u32 %v323, 4294901760
    %v6555 = vsub.f32 %v323, %v6554
    %v6556 = vand.u32 %v6555, 4294901760
    %v6557 = vsub.f32 %v6555, %v6556
    %v6558 = vand.u32 %v6557, 4294901760
    %6559 = vmatpush.msra.mxu0 %v6558
    %v6560 = vand.u32 %v322, 4294901760
    %v6561 = vsub.f32 %v322, %v6560
    %v6562 = vand.u32 %v6561, 4294901760
    %v6563 = vsub.f32 %v6561, %v6562
    %v6564 = vand.u32 %v6563, 4294901760
    %6565 = vmatpush.msra.mxu0 %v6564
    %v6566 = vand.u32 %v585, 4294901760
    %6567 = vmatmul.f32.gmra.mxu0 %v6566
    %v6568 = vpop.f32.mrf.mxu0
    %v6569 = vadd.f32 %v6468, %v6568
    %6570 = vdwg.mxu0
    %v6571 = vand.u32 %v337, 4294901760
    %v6572 = vsub.f32 %v337, %v6571
    %6573 = vmatpush.msra.mxu0 %v6572
    %v6574 = vand.u32 %v336, 4294901760
    %v6575 = vsub.f32 %v336, %v6574
    %6576 = vmatpush.msra.mxu0 %v6575
    %v6577 = vand.u32 %v335, 4294901760
    %v6578 = vsub.f32 %v335, %v6577
    %6579 = vmatpush.msra.mxu0 %v6578
    %v6580 = vand.u32 %v334, 4294901760
    %v6581 = vsub.f32 %v334, %v6580
    %6582 = vmatpush.msra.mxu0 %v6581
    %v6583 = vand.u32 %v333, 4294901760
    %v6584 = vsub.f32 %v333, %v6583
    %6585 = vmatpush.msra.mxu0 %v6584
    %v6586 = vand.u32 %v332, 4294901760
    %v6587 = vsub.f32 %v332, %v6586
    %6588 = vmatpush.msra.mxu0 %v6587
    %v6589 = vand.u32 %v331, 4294901760
    %v6590 = vsub.f32 %v331, %v6589
    %6591 = vmatpush.msra.mxu0 %v6590
    %v6592 = vand.u32 %v330, 4294901760
    %v6593 = vsub.f32 %v330, %v6592
    %6594 = vmatpush.msra.mxu0 %v6593
    %v6595 = vand.u32 %v329, 4294901760
    %v6596 = vsub.f32 %v329, %v6595
    %6597 = vmatpush.msra.mxu0 %v6596
    %v6598 = vand.u32 %v328, 4294901760
    %v6599 = vsub.f32 %v328, %v6598
    %6600 = vmatpush.msra.mxu0 %v6599
    %v6601 = vand.u32 %v327, 4294901760
    %v6602 = vsub.f32 %v327, %v6601
    %6603 = vmatpush.msra.mxu0 %v6602
    %v6604 = vand.u32 %v326, 4294901760
    %v6605 = vsub.f32 %v326, %v6604
    %6606 = vmatpush.msra.mxu0 %v6605
    %v6607 = vand.u32 %v325, 4294901760
    %v6608 = vsub.f32 %v325, %v6607
    %6609 = vmatpush.msra.mxu0 %v6608
    %v6610 = vand.u32 %v324, 4294901760
    %v6611 = vsub.f32 %v324, %v6610
    %6612 = vmatpush.msra.mxu0 %v6611
    %v6613 = vand.u32 %v323, 4294901760
    %v6614 = vsub.f32 %v323, %v6613
    %6615 = vmatpush.msra.mxu0 %v6614
    %v6616 = vand.u32 %v322, 4294901760
    %v6617 = vsub.f32 %v322, %v6616
    %6618 = vmatpush.msra.mxu0 %v6617
    %v6619 = vand.u32 %v585, 4294901760
    %v6620 = vsub.f32 %v585, %v6619
    %6621 = vmatmul.f32.gmra.mxu0 %v6620
    %v6622 = vpop.f32.mrf.mxu0
    %v6623 = vadd.f32 %v6569, %v6622
    %6624 = vdwg.mxu0
    %v6625 = vand.u32 %v337, 4294901760
    %6626 = vmatpush.msra.mxu0 %v6625
    %v6627 = vand.u32 %v336, 4294901760
    %6628 = vmatpush.msra.mxu0 %v6627
    %v6629 = vand.u32 %v335, 4294901760
    %6630 = vmatpush.msra.mxu0 %v6629
    %v6631 = vand.u32 %v334, 4294901760
    %6632 = vmatpush.msra.mxu0 %v6631
    %v6633 = vand.u32 %v333, 4294901760
    %6634 = vmatpush.msra.mxu0 %v6633
    %v6635 = vand.u32 %v332, 4294901760
    %6636 = vmatpush.msra.mxu0 %v6635
    %v6637 = vand.u32 %v331, 4294901760
    %6638 = vmatpush.msra.mxu0 %v6637
    %v6639 = vand.u32 %v330, 4294901760
    %6640 = vmatpush.msra.mxu0 %v6639
    %v6641 = vand.u32 %v329, 4294901760
    %6642 = vmatpush.msra.mxu0 %v6641
    %v6643 = vand.u32 %v328, 4294901760
    %6644 = vmatpush.msra.mxu0 %v6643
    %v6645 = vand.u32 %v327, 4294901760
    %6646 = vmatpush.msra.mxu0 %v6645
    %v6647 = vand.u32 %v326, 4294901760
    %6648 = vmatpush.msra.mxu0 %v6647
    %v6649 = vand.u32 %v325, 4294901760
    %6650 = vmatpush.msra.mxu0 %v6649
    %v6651 = vand.u32 %v324, 4294901760
    %6652 = vmatpush.msra.mxu0 %v6651
    %v6653 = vand.u32 %v323, 4294901760
    %6654 = vmatpush.msra.mxu0 %v6653
    %v6655 = vand.u32 %v322, 4294901760
    %6656 = vmatpush.msra.mxu0 %v6655
    %v6657 = vand.u32 %v585, 4294901760
    %v6658 = vsub.f32 %v585, %v6657
    %v6659 = vand.u32 %v6658, 4294901760
    %6660 = vmatmul.f32.gmra.mxu0 %v6659
    %v6661 = vpop.f32.mrf.mxu0
    %v6662 = vadd.f32 %v6623, %v6661
    %6663 = vdwg.mxu0
    %v6664 = vand.u32 %v337, 4294901760
    %v6665 = vsub.f32 %v337, %v6664
    %v6666 = vand.u32 %v6665, 4294901760
    %6667 = vmatpush.msra.mxu0 %v6666
    %v6668 = vand.u32 %v336, 4294901760
    %v6669 = vsub.f32 %v336, %v6668
    %v6670 = vand.u32 %v6669, 4294901760
    %6671 = vmatpush.msra.mxu0 %v6670
    %v6672 = vand.u32 %v335, 4294901760
    %v6673 = vsub.f32 %v335, %v6672
    %v6674 = vand.u32 %v6673, 4294901760
    %6675 = vmatpush.msra.mxu0 %v6674
    %v6676 = vand.u32 %v334, 4294901760
    %v6677 = vsub.f32 %v334, %v6676
    %v6678 = vand.u32 %v6677, 4294901760
    %6679 = vmatpush.msra.mxu0 %v6678
    %v6680 = vand.u32 %v333, 4294901760
    %v6681 = vsub.f32 %v333, %v6680
    %v6682 = vand.u32 %v6681, 4294901760
    %6683 = vmatpush.msra.mxu0 %v6682
    %v6684 = vand.u32 %v332, 4294901760
    %v6685 = vsub.f32 %v332, %v6684
    %v6686 = vand.u32 %v6685, 4294901760
    %6687 = vmatpush.msra.mxu0 %v6686
    %v6688 = vand.u32 %v331, 4294901760
    %v6689 = vsub.f32 %v331, %v6688
    %v6690 = vand.u32 %v6689, 4294901760
    %6691 = vmatpush.msra.mxu0 %v6690
    %v6692 = vand.u32 %v330, 4294901760
    %v6693 = vsub.f32 %v330, %v6692
    %v6694 = vand.u32 %v6693, 4294901760
    %6695 = vmatpush.msra.mxu0 %v6694
    %v6696 = vand.u32 %v329, 4294901760
    %v6697 = vsub.f32 %v329, %v6696
    %v6698 = vand.u32 %v6697, 4294901760
    %6699 = vmatpush.msra.mxu0 %v6698
    %v6700 = vand.u32 %v328, 4294901760
    %v6701 = vsub.f32 %v328, %v6700
    %v6702 = vand.u32 %v6701, 4294901760
    %6703 = vmatpush.msra.mxu0 %v6702
    %v6704 = vand.u32 %v327, 4294901760
    %v6705 = vsub.f32 %v327, %v6704
    %v6706 = vand.u32 %v6705, 4294901760
    %6707 = vmatpush.msra.mxu0 %v6706
    %v6708 = vand.u32 %v326, 4294901760
    %v6709 = vsub.f32 %v326, %v6708
    %v6710 = vand.u32 %v6709, 4294901760
    %6711 = vmatpush.msra.mxu0 %v6710
    %v6712 = vand.u32 %v325, 4294901760
    %v6713 = vsub.f32 %v325, %v6712
    %v6714 = vand.u32 %v6713, 4294901760
    %6715 = vmatpush.msra.mxu0 %v6714
    %v6716 = vand.u32 %v324, 4294901760
    %v6717 = vsub.f32 %v324, %v6716
    %v6718 = vand.u32 %v6717, 4294901760
    %6719 = vmatpush.msra.mxu0 %v6718
    %v6720 = vand.u32 %v323, 4294901760
    %v6721 = vsub.f32 %v323, %v6720
    %v6722 = vand.u32 %v6721, 4294901760
    %6723 = vmatpush.msra.mxu0 %v6722
    %v6724 = vand.u32 %v322, 4294901760
    %v6725 = vsub.f32 %v322, %v6724
    %v6726 = vand.u32 %v6725, 4294901760
    %6727 = vmatpush.msra.mxu0 %v6726
    %v6728 = vand.u32 %v585, 4294901760
    %6729 = vmatmul.f32.gmra.mxu0 %v6728
    %v6730 = vpop.f32.mrf.mxu0
    %v6731 = vadd.f32 %v6662, %v6730
    %6732 = vdwg.mxu0
    %v6733 = vand.u32 %v337, 4294901760
    %6734 = vmatpush.msra.mxu0 %v6733
    %v6735 = vand.u32 %v336, 4294901760
    %6736 = vmatpush.msra.mxu0 %v6735
    %v6737 = vand.u32 %v335, 4294901760
    %6738 = vmatpush.msra.mxu0 %v6737
    %v6739 = vand.u32 %v334, 4294901760
    %6740 = vmatpush.msra.mxu0 %v6739
    %v6741 = vand.u32 %v333, 4294901760
    %6742 = vmatpush.msra.mxu0 %v6741
    %v6743 = vand.u32 %v332, 4294901760
    %6744 = vmatpush.msra.mxu0 %v6743
    %v6745 = vand.u32 %v331, 4294901760
    %6746 = vmatpush.msra.mxu0 %v6745
    %v6747 = vand.u32 %v330, 4294901760
    %6748 = vmatpush.msra.mxu0 %v6747
    %v6749 = vand.u32 %v329, 4294901760
    %6750 = vmatpush.msra.mxu0 %v6749
    %v6751 = vand.u32 %v328, 4294901760
    %6752 = vmatpush.msra.mxu0 %v6751
    %v6753 = vand.u32 %v327, 4294901760
    %6754 = vmatpush.msra.mxu0 %v6753
    %v6755 = vand.u32 %v326, 4294901760
    %6756 = vmatpush.msra.mxu0 %v6755
    %v6757 = vand.u32 %v325, 4294901760
    %6758 = vmatpush.msra.mxu0 %v6757
    %v6759 = vand.u32 %v324, 4294901760
    %6760 = vmatpush.msra.mxu0 %v6759
    %v6761 = vand.u32 %v323, 4294901760
    %6762 = vmatpush.msra.mxu0 %v6761
    %v6763 = vand.u32 %v322, 4294901760
    %6764 = vmatpush.msra.mxu0 %v6763
    %v6765 = vand.u32 %v585, 4294901760
    %6766 = vmatmul.f32.gmra.mxu0 %v6765
    %v6767 = vpop.f32.mrf.mxu0
    %v6768 = vadd.f32 %v6731, %v6767
    %6769 = vdwg.mxu0
    %v6770 = vand.u32 %v353, 4294901760
    %6771 = vmatpush.msra.mxu0 %v6770
    %v6772 = vand.u32 %v352, 4294901760
    %6773 = vmatpush.msra.mxu0 %v6772
    %v6774 = vand.u32 %v351, 4294901760
    %6775 = vmatpush.msra.mxu0 %v6774
    %v6776 = vand.u32 %v350, 4294901760
    %6777 = vmatpush.msra.mxu0 %v6776
    %v6778 = vand.u32 %v349, 4294901760
    %6779 = vmatpush.msra.mxu0 %v6778
    %v6780 = vand.u32 %v348, 4294901760
    %6781 = vmatpush.msra.mxu0 %v6780
    %v6782 = vand.u32 %v347, 4294901760
    %6783 = vmatpush.msra.mxu0 %v6782
    %v6784 = vand.u32 %v346, 4294901760
    %6785 = vmatpush.msra.mxu0 %v6784
    %v6786 = vand.u32 %v345, 4294901760
    %6787 = vmatpush.msra.mxu0 %v6786
    %v6788 = vand.u32 %v344, 4294901760
    %6789 = vmatpush.msra.mxu0 %v6788
    %v6790 = vand.u32 %v343, 4294901760
    %6791 = vmatpush.msra.mxu0 %v6790
    %v6792 = vand.u32 %v342, 4294901760
    %6793 = vmatpush.msra.mxu0 %v6792
    %v6794 = vand.u32 %v341, 4294901760
    %6795 = vmatpush.msra.mxu0 %v6794
    %v6796 = vand.u32 %v340, 4294901760
    %6797 = vmatpush.msra.mxu0 %v6796
    %v6798 = vand.u32 %v339, 4294901760
    %6799 = vmatpush.msra.mxu0 %v6798
    %v6800 = vand.u32 %v338, 4294901760
    %6801 = vmatpush.msra.mxu0 %v6800
    %v6802 = vand.u32 %v586, 4294901760
    %v6803 = vsub.f32 %v586, %v6802
    %v6804 = vand.u32 %v6803, 4294901760
    %v6805 = vsub.f32 %v6803, %v6804
    %v6806 = vand.u32 %v6805, 4294901760
    %6807 = vmatmul.f32.gmra.mxu0 %v6806
    %v6808 = vpop.f32.mrf.mxu0
    %v6809 = vadd.f32 %v6768, %v6808
    %6810 = vdwg.mxu0
    %v6811 = vand.u32 %v353, 4294901760
    %v6812 = vsub.f32 %v353, %v6811
    %v6813 = vand.u32 %v6812, 4294901760
    %v6814 = vsub.f32 %v6812, %v6813
    %v6815 = vand.u32 %v6814, 4294901760
    %6816 = vmatpush.msra.mxu0 %v6815
    %v6817 = vand.u32 %v352, 4294901760
    %v6818 = vsub.f32 %v352, %v6817
    %v6819 = vand.u32 %v6818, 4294901760
    %v6820 = vsub.f32 %v6818, %v6819
    %v6821 = vand.u32 %v6820, 4294901760
    %6822 = vmatpush.msra.mxu0 %v6821
    %v6823 = vand.u32 %v351, 4294901760
    %v6824 = vsub.f32 %v351, %v6823
    %v6825 = vand.u32 %v6824, 4294901760
    %v6826 = vsub.f32 %v6824, %v6825
    %v6827 = vand.u32 %v6826, 4294901760
    %6828 = vmatpush.msra.mxu0 %v6827
    %v6829 = vand.u32 %v350, 4294901760
    %v6830 = vsub.f32 %v350, %v6829
    %v6831 = vand.u32 %v6830, 4294901760
    %v6832 = vsub.f32 %v6830, %v6831
    %v6833 = vand.u32 %v6832, 4294901760
    %6834 = vmatpush.msra.mxu0 %v6833
    %v6835 = vand.u32 %v349, 4294901760
    %v6836 = vsub.f32 %v349, %v6835
    %v6837 = vand.u32 %v6836, 4294901760
    %v6838 = vsub.f32 %v6836, %v6837
    %v6839 = vand.u32 %v6838, 4294901760
    %6840 = vmatpush.msra.mxu0 %v6839
    %v6841 = vand.u32 %v348, 4294901760
    %v6842 = vsub.f32 %v348, %v6841
    %v6843 = vand.u32 %v6842, 4294901760
    %v6844 = vsub.f32 %v6842, %v6843
    %v6845 = vand.u32 %v6844, 4294901760
    %6846 = vmatpush.msra.mxu0 %v6845
    %v6847 = vand.u32 %v347, 4294901760
    %v6848 = vsub.f32 %v347, %v6847
    %v6849 = vand.u32 %v6848, 4294901760
    %v6850 = vsub.f32 %v6848, %v6849
    %v6851 = vand.u32 %v6850, 4294901760
    %6852 = vmatpush.msra.mxu0 %v6851
    %v6853 = vand.u32 %v346, 4294901760
    %v6854 = vsub.f32 %v346, %v6853
    %v6855 = vand.u32 %v6854, 4294901760
    %v6856 = vsub.f32 %v6854, %v6855
    %v6857 = vand.u32 %v6856, 4294901760
    %6858 = vmatpush.msra.mxu0 %v6857
    %v6859 = vand.u32 %v345, 4294901760
    %v6860 = vsub.f32 %v345, %v6859
    %v6861 = vand.u32 %v6860, 4294901760
    %v6862 = vsub.f32 %v6860, %v6861
    %v6863 = vand.u32 %v6862, 4294901760
    %6864 = vmatpush.msra.mxu0 %v6863
    %v6865 = vand.u32 %v344, 4294901760
    %v6866 = vsub.f32 %v344, %v6865
    %v6867 = vand.u32 %v6866, 4294901760
    %v6868 = vsub.f32 %v6866, %v6867
    %v6869 = vand.u32 %v6868, 4294901760
    %6870 = vmatpush.msra.mxu0 %v6869
    %v6871 = vand.u32 %v343, 4294901760
    %v6872 = vsub.f32 %v343, %v6871
    %v6873 = vand.u32 %v6872, 4294901760
    %v6874 = vsub.f32 %v6872, %v6873
    %v6875 = vand.u32 %v6874, 4294901760
    %6876 = vmatpush.msra.mxu0 %v6875
    %v6877 = vand.u32 %v342, 4294901760
    %v6878 = vsub.f32 %v342, %v6877
    %v6879 = vand.u32 %v6878, 4294901760
    %v6880 = vsub.f32 %v6878, %v6879
    %v6881 = vand.u32 %v6880, 4294901760
    %6882 = vmatpush.msra.mxu0 %v6881
    %v6883 = vand.u32 %v341, 4294901760
    %v6884 = vsub.f32 %v341, %v6883
    %v6885 = vand.u32 %v6884, 4294901760
    %v6886 = vsub.f32 %v6884, %v6885
    %v6887 = vand.u32 %v6886, 4294901760
    %6888 = vmatpush.msra.mxu0 %v6887
    %v6889 = vand.u32 %v340, 4294901760
    %v6890 = vsub.f32 %v340, %v6889
    %v6891 = vand.u32 %v6890, 4294901760
    %v6892 = vsub.f32 %v6890, %v6891
    %v6893 = vand.u32 %v6892, 4294901760
    %6894 = vmatpush.msra.mxu0 %v6893
    %v6895 = vand.u32 %v339, 4294901760
    %v6896 = vsub.f32 %v339, %v6895
    %v6897 = vand.u32 %v6896, 4294901760
    %v6898 = vsub.f32 %v6896, %v6897
    %v6899 = vand.u32 %v6898, 4294901760
    %6900 = vmatpush.msra.mxu0 %v6899
    %v6901 = vand.u32 %v338, 4294901760
    %v6902 = vsub.f32 %v338, %v6901
    %v6903 = vand.u32 %v6902, 4294901760
    %v6904 = vsub.f32 %v6902, %v6903
    %v6905 = vand.u32 %v6904, 4294901760
    %6906 = vmatpush.msra.mxu0 %v6905
    %v6907 = vand.u32 %v586, 4294901760
    %6908 = vmatmul.f32.gmra.mxu0 %v6907
    %v6909 = vpop.f32.mrf.mxu0
    %v6910 = vadd.f32 %v6809, %v6909
    %6911 = vdwg.mxu0
    %v6912 = vand.u32 %v353, 4294901760
    %v6913 = vsub.f32 %v353, %v6912
    %6914 = vmatpush.msra.mxu0 %v6913
    %v6915 = vand.u32 %v352, 4294901760
    %v6916 = vsub.f32 %v352, %v6915
    %6917 = vmatpush.msra.mxu0 %v6916
    %v6918 = vand.u32 %v351, 4294901760
    %v6919 = vsub.f32 %v351, %v6918
    %6920 = vmatpush.msra.mxu0 %v6919
    %v6921 = vand.u32 %v350, 4294901760
    %v6922 = vsub.f32 %v350, %v6921
    %6923 = vmatpush.msra.mxu0 %v6922
    %v6924 = vand.u32 %v349, 4294901760
    %v6925 = vsub.f32 %v349, %v6924
    %6926 = vmatpush.msra.mxu0 %v6925
    %v6927 = vand.u32 %v348, 4294901760
    %v6928 = vsub.f32 %v348, %v6927
    %6929 = vmatpush.msra.mxu0 %v6928
    %v6930 = vand.u32 %v347, 4294901760
    %v6931 = vsub.f32 %v347, %v6930
    %6932 = vmatpush.msra.mxu0 %v6931
    %v6933 = vand.u32 %v346, 4294901760
    %v6934 = vsub.f32 %v346, %v6933
    %6935 = vmatpush.msra.mxu0 %v6934
    %v6936 = vand.u32 %v345, 4294901760
    %v6937 = vsub.f32 %v345, %v6936
    %6938 = vmatpush.msra.mxu0 %v6937
    %v6939 = vand.u32 %v344, 4294901760
    %v6940 = vsub.f32 %v344, %v6939
    %6941 = vmatpush.msra.mxu0 %v6940
    %v6942 = vand.u32 %v343, 4294901760
    %v6943 = vsub.f32 %v343, %v6942
    %6944 = vmatpush.msra.mxu0 %v6943
    %v6945 = vand.u32 %v342, 4294901760
    %v6946 = vsub.f32 %v342, %v6945
    %6947 = vmatpush.msra.mxu0 %v6946
    %v6948 = vand.u32 %v341, 4294901760
    %v6949 = vsub.f32 %v341, %v6948
    %6950 = vmatpush.msra.mxu0 %v6949
    %v6951 = vand.u32 %v340, 4294901760
    %v6952 = vsub.f32 %v340, %v6951
    %6953 = vmatpush.msra.mxu0 %v6952
    %v6954 = vand.u32 %v339, 4294901760
    %v6955 = vsub.f32 %v339, %v6954
    %6956 = vmatpush.msra.mxu0 %v6955
    %v6957 = vand.u32 %v338, 4294901760
    %v6958 = vsub.f32 %v338, %v6957
    %6959 = vmatpush.msra.mxu0 %v6958
    %v6960 = vand.u32 %v586, 4294901760
    %v6961 = vsub.f32 %v586, %v6960
    %6962 = vmatmul.f32.gmra.mxu0 %v6961
    %v6963 = vpop.f32.mrf.mxu0
    %v6964 = vadd.f32 %v6910, %v6963
    %6965 = vdwg.mxu0
    %v6966 = vand.u32 %v353, 4294901760
    %6967 = vmatpush.msra.mxu0 %v6966
    %v6968 = vand.u32 %v352, 4294901760
    %6969 = vmatpush.msra.mxu0 %v6968
    %v6970 = vand.u32 %v351, 4294901760
    %6971 = vmatpush.msra.mxu0 %v6970
    %v6972 = vand.u32 %v350, 4294901760
    %6973 = vmatpush.msra.mxu0 %v6972
    %v6974 = vand.u32 %v349, 4294901760
    %6975 = vmatpush.msra.mxu0 %v6974
    %v6976 = vand.u32 %v348, 4294901760
    %6977 = vmatpush.msra.mxu0 %v6976
    %v6978 = vand.u32 %v347, 4294901760
    %6979 = vmatpush.msra.mxu0 %v6978
    %v6980 = vand.u32 %v346, 4294901760
    %6981 = vmatpush.msra.mxu0 %v6980
    %v6982 = vand.u32 %v345, 4294901760
    %6983 = vmatpush.msra.mxu0 %v6982
    %v6984 = vand.u32 %v344, 4294901760
    %6985 = vmatpush.msra.mxu0 %v6984
    %v6986 = vand.u32 %v343, 4294901760
    %6987 = vmatpush.msra.mxu0 %v6986
    %v6988 = vand.u32 %v342, 4294901760
    %6989 = vmatpush.msra.mxu0 %v6988
    %v6990 = vand.u32 %v341, 4294901760
    %6991 = vmatpush.msra.mxu0 %v6990
    %v6992 = vand.u32 %v340, 4294901760
    %6993 = vmatpush.msra.mxu0 %v6992
    %v6994 = vand.u32 %v339, 4294901760
    %6995 = vmatpush.msra.mxu0 %v6994
    %v6996 = vand.u32 %v338, 4294901760
    %6997 = vmatpush.msra.mxu0 %v6996
    %v6998 = vand.u32 %v586, 4294901760
    %v6999 = vsub.f32 %v586, %v6998
    %v7000 = vand.u32 %v6999, 4294901760
    %7001 = vmatmul.f32.gmra.mxu0 %v7000
    %v7002 = vpop.f32.mrf.mxu0
    %v7003 = vadd.f32 %v6964, %v7002
    %7004 = vdwg.mxu0
    %v7005 = vand.u32 %v353, 4294901760
    %v7006 = vsub.f32 %v353, %v7005
    %v7007 = vand.u32 %v7006, 4294901760
    %7008 = vmatpush.msra.mxu0 %v7007
    %v7009 = vand.u32 %v352, 4294901760
    %v7010 = vsub.f32 %v352, %v7009
    %v7011 = vand.u32 %v7010, 4294901760
    %7012 = vmatpush.msra.mxu0 %v7011
    %v7013 = vand.u32 %v351, 4294901760
    %v7014 = vsub.f32 %v351, %v7013
    %v7015 = vand.u32 %v7014, 4294901760
    %7016 = vmatpush.msra.mxu0 %v7015
    %v7017 = vand.u32 %v350, 4294901760
    %v7018 = vsub.f32 %v350, %v7017
    %v7019 = vand.u32 %v7018, 4294901760
    %7020 = vmatpush.msra.mxu0 %v7019
    %v7021 = vand.u32 %v349, 4294901760
    %v7022 = vsub.f32 %v349, %v7021
    %v7023 = vand.u32 %v7022, 4294901760
    %7024 = vmatpush.msra.mxu0 %v7023
    %v7025 = vand.u32 %v348, 4294901760
    %v7026 = vsub.f32 %v348, %v7025
    %v7027 = vand.u32 %v7026, 4294901760
    %7028 = vmatpush.msra.mxu0 %v7027
    %v7029 = vand.u32 %v347, 4294901760
    %v7030 = vsub.f32 %v347, %v7029
    %v7031 = vand.u32 %v7030, 4294901760
    %7032 = vmatpush.msra.mxu0 %v7031
    %v7033 = vand.u32 %v346, 4294901760
    %v7034 = vsub.f32 %v346, %v7033
    %v7035 = vand.u32 %v7034, 4294901760
    %7036 = vmatpush.msra.mxu0 %v7035
    %v7037 = vand.u32 %v345, 4294901760
    %v7038 = vsub.f32 %v345, %v7037
    %v7039 = vand.u32 %v7038, 4294901760
    %7040 = vmatpush.msra.mxu0 %v7039
    %v7041 = vand.u32 %v344, 4294901760
    %v7042 = vsub.f32 %v344, %v7041
    %v7043 = vand.u32 %v7042, 4294901760
    %7044 = vmatpush.msra.mxu0 %v7043
    %v7045 = vand.u32 %v343, 4294901760
    %v7046 = vsub.f32 %v343, %v7045
    %v7047 = vand.u32 %v7046, 4294901760
    %7048 = vmatpush.msra.mxu0 %v7047
    %v7049 = vand.u32 %v342, 4294901760
    %v7050 = vsub.f32 %v342, %v7049
    %v7051 = vand.u32 %v7050, 4294901760
    %7052 = vmatpush.msra.mxu0 %v7051
    %v7053 = vand.u32 %v341, 4294901760
    %v7054 = vsub.f32 %v341, %v7053
    %v7055 = vand.u32 %v7054, 4294901760
    %7056 = vmatpush.msra.mxu0 %v7055
    %v7057 = vand.u32 %v340, 4294901760
    %v7058 = vsub.f32 %v340, %v7057
    %v7059 = vand.u32 %v7058, 4294901760
    %7060 = vmatpush.msra.mxu0 %v7059
    %v7061 = vand.u32 %v339, 4294901760
    %v7062 = vsub.f32 %v339, %v7061
    %v7063 = vand.u32 %v7062, 4294901760
    %7064 = vmatpush.msra.mxu0 %v7063
    %v7065 = vand.u32 %v338, 4294901760
    %v7066 = vsub.f32 %v338, %v7065
    %v7067 = vand.u32 %v7066, 4294901760
    %7068 = vmatpush.msra.mxu0 %v7067
    %v7069 = vand.u32 %v586, 4294901760
    %7070 = vmatmul.f32.gmra.mxu0 %v7069
    %v7071 = vpop.f32.mrf.mxu0
    %v7072 = vadd.f32 %v7003, %v7071
    %7073 = vdwg.mxu0
    %v7074 = vand.u32 %v353, 4294901760
    %7075 = vmatpush.msra.mxu0 %v7074
    %v7076 = vand.u32 %v352, 4294901760
    %7077 = vmatpush.msra.mxu0 %v7076
    %v7078 = vand.u32 %v351, 4294901760
    %7079 = vmatpush.msra.mxu0 %v7078
    %v7080 = vand.u32 %v350, 4294901760
    %7081 = vmatpush.msra.mxu0 %v7080
    %v7082 = vand.u32 %v349, 4294901760
    %7083 = vmatpush.msra.mxu0 %v7082
    %v7084 = vand.u32 %v348, 4294901760
    %7085 = vmatpush.msra.mxu0 %v7084
    %v7086 = vand.u32 %v347, 4294901760
    %7087 = vmatpush.msra.mxu0 %v7086
    %v7088 = vand.u32 %v346, 4294901760
    %7089 = vmatpush.msra.mxu0 %v7088
    %v7090 = vand.u32 %v345, 4294901760
    %7091 = vmatpush.msra.mxu0 %v7090
    %v7092 = vand.u32 %v344, 4294901760
    %7093 = vmatpush.msra.mxu0 %v7092
    %v7094 = vand.u32 %v343, 4294901760
    %7095 = vmatpush.msra.mxu0 %v7094
    %v7096 = vand.u32 %v342, 4294901760
    %7097 = vmatpush.msra.mxu0 %v7096
    %v7098 = vand.u32 %v341, 4294901760
    %7099 = vmatpush.msra.mxu0 %v7098
    %v7100 = vand.u32 %v340, 4294901760
    %7101 = vmatpush.msra.mxu0 %v7100
    %v7102 = vand.u32 %v339, 4294901760
    %7103 = vmatpush.msra.mxu0 %v7102
    %v7104 = vand.u32 %v338, 4294901760
    %7105 = vmatpush.msra.mxu0 %v7104
    %v7106 = vand.u32 %v586, 4294901760
    %7107 = vmatmul.f32.gmra.mxu0 %v7106
    %v7108 = vpop.f32.mrf.mxu0
    %v7109 = vadd.f32 %v7072, %v7108
    %7110 = vdwg.mxu0
    %v7111 = vand.u32 %v369, 4294901760
    %7112 = vmatpush.msra.mxu0 %v7111
    %v7113 = vand.u32 %v368, 4294901760
    %7114 = vmatpush.msra.mxu0 %v7113
    %v7115 = vand.u32 %v367, 4294901760
    %7116 = vmatpush.msra.mxu0 %v7115
    %v7117 = vand.u32 %v366, 4294901760
    %7118 = vmatpush.msra.mxu0 %v7117
    %v7119 = vand.u32 %v365, 4294901760
    %7120 = vmatpush.msra.mxu0 %v7119
    %v7121 = vand.u32 %v364, 4294901760
    %7122 = vmatpush.msra.mxu0 %v7121
    %v7123 = vand.u32 %v363, 4294901760
    %7124 = vmatpush.msra.mxu0 %v7123
    %v7125 = vand.u32 %v362, 4294901760
    %7126 = vmatpush.msra.mxu0 %v7125
    %v7127 = vand.u32 %v361, 4294901760
    %7128 = vmatpush.msra.mxu0 %v7127
    %v7129 = vand.u32 %v360, 4294901760
    %7130 = vmatpush.msra.mxu0 %v7129
    %v7131 = vand.u32 %v359, 4294901760
    %7132 = vmatpush.msra.mxu0 %v7131
    %v7133 = vand.u32 %v358, 4294901760
    %7134 = vmatpush.msra.mxu0 %v7133
    %v7135 = vand.u32 %v357, 4294901760
    %7136 = vmatpush.msra.mxu0 %v7135
    %v7137 = vand.u32 %v356, 4294901760
    %7138 = vmatpush.msra.mxu0 %v7137
    %v7139 = vand.u32 %v355, 4294901760
    %7140 = vmatpush.msra.mxu0 %v7139
    %v7141 = vand.u32 %v354, 4294901760
    %7142 = vmatpush.msra.mxu0 %v7141
    %v7143 = vand.u32 %v587, 4294901760
    %v7144 = vsub.f32 %v587, %v7143
    %v7145 = vand.u32 %v7144, 4294901760
    %v7146 = vsub.f32 %v7144, %v7145
    %v7147 = vand.u32 %v7146, 4294901760
    %7148 = vmatmul.f32.gmra.mxu0 %v7147
    %v7149 = vpop.f32.mrf.mxu0
    %v7150 = vadd.f32 %v7109, %v7149
    %7151 = vdwg.mxu0
    %v7152 = vand.u32 %v369, 4294901760
    %v7153 = vsub.f32 %v369, %v7152
    %v7154 = vand.u32 %v7153, 4294901760
    %v7155 = vsub.f32 %v7153, %v7154
    %v7156 = vand.u32 %v7155, 4294901760
    %7157 = vmatpush.msra.mxu0 %v7156
    %v7158 = vand.u32 %v368, 4294901760
    %v7159 = vsub.f32 %v368, %v7158
    %v7160 = vand.u32 %v7159, 4294901760
    %v7161 = vsub.f32 %v7159, %v7160
    %v7162 = vand.u32 %v7161, 4294901760
    %7163 = vmatpush.msra.mxu0 %v7162
    %v7164 = vand.u32 %v367, 4294901760
    %v7165 = vsub.f32 %v367, %v7164
    %v7166 = vand.u32 %v7165, 4294901760
    %v7167 = vsub.f32 %v7165, %v7166
    %v7168 = vand.u32 %v7167, 4294901760
    %7169 = vmatpush.msra.mxu0 %v7168
    %v7170 = vand.u32 %v366, 4294901760
    %v7171 = vsub.f32 %v366, %v7170
    %v7172 = vand.u32 %v7171, 4294901760
    %v7173 = vsub.f32 %v7171, %v7172
    %v7174 = vand.u32 %v7173, 4294901760
    %7175 = vmatpush.msra.mxu0 %v7174
    %v7176 = vand.u32 %v365, 4294901760
    %v7177 = vsub.f32 %v365, %v7176
    %v7178 = vand.u32 %v7177, 4294901760
    %v7179 = vsub.f32 %v7177, %v7178
    %v7180 = vand.u32 %v7179, 4294901760
    %7181 = vmatpush.msra.mxu0 %v7180
    %v7182 = vand.u32 %v364, 4294901760
    %v7183 = vsub.f32 %v364, %v7182
    %v7184 = vand.u32 %v7183, 4294901760
    %v7185 = vsub.f32 %v7183, %v7184
    %v7186 = vand.u32 %v7185, 4294901760
    %7187 = vmatpush.msra.mxu0 %v7186
    %v7188 = vand.u32 %v363, 4294901760
    %v7189 = vsub.f32 %v363, %v7188
    %v7190 = vand.u32 %v7189, 4294901760
    %v7191 = vsub.f32 %v7189, %v7190
    %v7192 = vand.u32 %v7191, 4294901760
    %7193 = vmatpush.msra.mxu0 %v7192
    %v7194 = vand.u32 %v362, 4294901760
    %v7195 = vsub.f32 %v362, %v7194
    %v7196 = vand.u32 %v7195, 4294901760
    %v7197 = vsub.f32 %v7195, %v7196
    %v7198 = vand.u32 %v7197, 4294901760
    %7199 = vmatpush.msra.mxu0 %v7198
    %v7200 = vand.u32 %v361, 4294901760
    %v7201 = vsub.f32 %v361, %v7200
    %v7202 = vand.u32 %v7201, 4294901760
    %v7203 = vsub.f32 %v7201, %v7202
    %v7204 = vand.u32 %v7203, 4294901760
    %7205 = vmatpush.msra.mxu0 %v7204
    %v7206 = vand.u32 %v360, 4294901760
    %v7207 = vsub.f32 %v360, %v7206
    %v7208 = vand.u32 %v7207, 4294901760
    %v7209 = vsub.f32 %v7207, %v7208
    %v7210 = vand.u32 %v7209, 4294901760
    %7211 = vmatpush.msra.mxu0 %v7210
    %v7212 = vand.u32 %v359, 4294901760
    %v7213 = vsub.f32 %v359, %v7212
    %v7214 = vand.u32 %v7213, 4294901760
    %v7215 = vsub.f32 %v7213, %v7214
    %v7216 = vand.u32 %v7215, 4294901760
    %7217 = vmatpush.msra.mxu0 %v7216
    %v7218 = vand.u32 %v358, 4294901760
    %v7219 = vsub.f32 %v358, %v7218
    %v7220 = vand.u32 %v7219, 4294901760
    %v7221 = vsub.f32 %v7219, %v7220
    %v7222 = vand.u32 %v7221, 4294901760
    %7223 = vmatpush.msra.mxu0 %v7222
    %v7224 = vand.u32 %v357, 4294901760
    %v7225 = vsub.f32 %v357, %v7224
    %v7226 = vand.u32 %v7225, 4294901760
    %v7227 = vsub.f32 %v7225, %v7226
    %v7228 = vand.u32 %v7227, 4294901760
    %7229 = vmatpush.msra.mxu0 %v7228
    %v7230 = vand.u32 %v356, 4294901760
    %v7231 = vsub.f32 %v356, %v7230
    %v7232 = vand.u32 %v7231, 4294901760
    %v7233 = vsub.f32 %v7231, %v7232
    %v7234 = vand.u32 %v7233, 4294901760
    %7235 = vmatpush.msra.mxu0 %v7234
    %v7236 = vand.u32 %v355, 4294901760
    %v7237 = vsub.f32 %v355, %v7236
    %v7238 = vand.u32 %v7237, 4294901760
    %v7239 = vsub.f32 %v7237, %v7238
    %v7240 = vand.u32 %v7239, 4294901760
    %7241 = vmatpush.msra.mxu0 %v7240
    %v7242 = vand.u32 %v354, 4294901760
    %v7243 = vsub.f32 %v354, %v7242
    %v7244 = vand.u32 %v7243, 4294901760
    %v7245 = vsub.f32 %v7243, %v7244
    %v7246 = vand.u32 %v7245, 4294901760
    %7247 = vmatpush.msra.mxu0 %v7246
    %v7248 = vand.u32 %v587, 4294901760
    %7249 = vmatmul.f32.gmra.mxu0 %v7248
    %v7250 = vpop.f32.mrf.mxu0
    %v7251 = vadd.f32 %v7150, %v7250
    %7252 = vdwg.mxu0
    %v7253 = vand.u32 %v369, 4294901760
    %v7254 = vsub.f32 %v369, %v7253
    %7255 = vmatpush.msra.mxu0 %v7254
    %v7256 = vand.u32 %v368, 4294901760
    %v7257 = vsub.f32 %v368, %v7256
    %7258 = vmatpush.msra.mxu0 %v7257
    %v7259 = vand.u32 %v367, 4294901760
    %v7260 = vsub.f32 %v367, %v7259
    %7261 = vmatpush.msra.mxu0 %v7260
    %v7262 = vand.u32 %v366, 4294901760
    %v7263 = vsub.f32 %v366, %v7262
    %7264 = vmatpush.msra.mxu0 %v7263
    %v7265 = vand.u32 %v365, 4294901760
    %v7266 = vsub.f32 %v365, %v7265
    %7267 = vmatpush.msra.mxu0 %v7266
    %v7268 = vand.u32 %v364, 4294901760
    %v7269 = vsub.f32 %v364, %v7268
    %7270 = vmatpush.msra.mxu0 %v7269
    %v7271 = vand.u32 %v363, 4294901760
    %v7272 = vsub.f32 %v363, %v7271
    %7273 = vmatpush.msra.mxu0 %v7272
    %v7274 = vand.u32 %v362, 4294901760
    %v7275 = vsub.f32 %v362, %v7274
    %7276 = vmatpush.msra.mxu0 %v7275
    %v7277 = vand.u32 %v361, 4294901760
    %v7278 = vsub.f32 %v361, %v7277
    %7279 = vmatpush.msra.mxu0 %v7278
    %v7280 = vand.u32 %v360, 4294901760
    %v7281 = vsub.f32 %v360, %v7280
    %7282 = vmatpush.msra.mxu0 %v7281
    %v7283 = vand.u32 %v359, 4294901760
    %v7284 = vsub.f32 %v359, %v7283
    %7285 = vmatpush.msra.mxu0 %v7284
    %v7286 = vand.u32 %v358, 4294901760
    %v7287 = vsub.f32 %v358, %v7286
    %7288 = vmatpush.msra.mxu0 %v7287
    %v7289 = vand.u32 %v357, 4294901760
    %v7290 = vsub.f32 %v357, %v7289
    %7291 = vmatpush.msra.mxu0 %v7290
    %v7292 = vand.u32 %v356, 4294901760
    %v7293 = vsub.f32 %v356, %v7292
    %7294 = vmatpush.msra.mxu0 %v7293
    %v7295 = vand.u32 %v355, 4294901760
    %v7296 = vsub.f32 %v355, %v7295
    %7297 = vmatpush.msra.mxu0 %v7296
    %v7298 = vand.u32 %v354, 4294901760
    %v7299 = vsub.f32 %v354, %v7298
    %7300 = vmatpush.msra.mxu0 %v7299
    %v7301 = vand.u32 %v587, 4294901760
    %v7302 = vsub.f32 %v587, %v7301
    %7303 = vmatmul.f32.gmra.mxu0 %v7302
    %v7304 = vpop.f32.mrf.mxu0
    %v7305 = vadd.f32 %v7251, %v7304
    %7306 = vdwg.mxu0
    %v7307 = vand.u32 %v369, 4294901760
    %7308 = vmatpush.msra.mxu0 %v7307
    %v7309 = vand.u32 %v368, 4294901760
    %7310 = vmatpush.msra.mxu0 %v7309
    %v7311 = vand.u32 %v367, 4294901760
    %7312 = vmatpush.msra.mxu0 %v7311
    %v7313 = vand.u32 %v366, 4294901760
    %7314 = vmatpush.msra.mxu0 %v7313
    %v7315 = vand.u32 %v365, 4294901760
    %7316 = vmatpush.msra.mxu0 %v7315
    %v7317 = vand.u32 %v364, 4294901760
    %7318 = vmatpush.msra.mxu0 %v7317
    %v7319 = vand.u32 %v363, 4294901760
    %7320 = vmatpush.msra.mxu0 %v7319
    %v7321 = vand.u32 %v362, 4294901760
    %7322 = vmatpush.msra.mxu0 %v7321
    %v7323 = vand.u32 %v361, 4294901760
    %7324 = vmatpush.msra.mxu0 %v7323
    %v7325 = vand.u32 %v360, 4294901760
    %7326 = vmatpush.msra.mxu0 %v7325
    %v7327 = vand.u32 %v359, 4294901760
    %7328 = vmatpush.msra.mxu0 %v7327
    %v7329 = vand.u32 %v358, 4294901760
    %7330 = vmatpush.msra.mxu0 %v7329
    %v7331 = vand.u32 %v357, 4294901760
    %7332 = vmatpush.msra.mxu0 %v7331
    %v7333 = vand.u32 %v356, 4294901760
    %7334 = vmatpush.msra.mxu0 %v7333
    %v7335 = vand.u32 %v355, 4294901760
    %7336 = vmatpush.msra.mxu0 %v7335
    %v7337 = vand.u32 %v354, 4294901760
    %7338 = vmatpush.msra.mxu0 %v7337
    %v7339 = vand.u32 %v587, 4294901760
    %v7340 = vsub.f32 %v587, %v7339
    %v7341 = vand.u32 %v7340, 4294901760
    %7342 = vmatmul.f32.gmra.mxu0 %v7341
    %v7343 = vpop.f32.mrf.mxu0
    %v7344 = vadd.f32 %v7305, %v7343
    %7345 = vdwg.mxu0
    %v7346 = vand.u32 %v369, 4294901760
    %v7347 = vsub.f32 %v369, %v7346
    %v7348 = vand.u32 %v7347, 4294901760
    %7349 = vmatpush.msra.mxu0 %v7348
    %v7350 = vand.u32 %v368, 4294901760
    %v7351 = vsub.f32 %v368, %v7350
    %v7352 = vand.u32 %v7351, 4294901760
    %7353 = vmatpush.msra.mxu0 %v7352
    %v7354 = vand.u32 %v367, 4294901760
    %v7355 = vsub.f32 %v367, %v7354
    %v7356 = vand.u32 %v7355, 4294901760
    %7357 = vmatpush.msra.mxu0 %v7356
    %v7358 = vand.u32 %v366, 4294901760
    %v7359 = vsub.f32 %v366, %v7358
    %v7360 = vand.u32 %v7359, 4294901760
    %7361 = vmatpush.msra.mxu0 %v7360
    %v7362 = vand.u32 %v365, 4294901760
    %v7363 = vsub.f32 %v365, %v7362
    %v7364 = vand.u32 %v7363, 4294901760
    %7365 = vmatpush.msra.mxu0 %v7364
    %v7366 = vand.u32 %v364, 4294901760
    %v7367 = vsub.f32 %v364, %v7366
    %v7368 = vand.u32 %v7367, 4294901760
    %7369 = vmatpush.msra.mxu0 %v7368
    %v7370 = vand.u32 %v363, 4294901760
    %v7371 = vsub.f32 %v363, %v7370
    %v7372 = vand.u32 %v7371, 4294901760
    %7373 = vmatpush.msra.mxu0 %v7372
    %v7374 = vand.u32 %v362, 4294901760
    %v7375 = vsub.f32 %v362, %v7374
    %v7376 = vand.u32 %v7375, 4294901760
    %7377 = vmatpush.msra.mxu0 %v7376
    %v7378 = vand.u32 %v361, 4294901760
    %v7379 = vsub.f32 %v361, %v7378
    %v7380 = vand.u32 %v7379, 4294901760
    %7381 = vmatpush.msra.mxu0 %v7380
    %v7382 = vand.u32 %v360, 4294901760
    %v7383 = vsub.f32 %v360, %v7382
    %v7384 = vand.u32 %v7383, 4294901760
    %7385 = vmatpush.msra.mxu0 %v7384
    %v7386 = vand.u32 %v359, 4294901760
    %v7387 = vsub.f32 %v359, %v7386
    %v7388 = vand.u32 %v7387, 4294901760
    %7389 = vmatpush.msra.mxu0 %v7388
    %v7390 = vand.u32 %v358, 4294901760
    %v7391 = vsub.f32 %v358, %v7390
    %v7392 = vand.u32 %v7391, 4294901760
    %7393 = vmatpush.msra.mxu0 %v7392
    %v7394 = vand.u32 %v357, 4294901760
    %v7395 = vsub.f32 %v357, %v7394
    %v7396 = vand.u32 %v7395, 4294901760
    %7397 = vmatpush.msra.mxu0 %v7396
    %v7398 = vand.u32 %v356, 4294901760
    %v7399 = vsub.f32 %v356, %v7398
    %v7400 = vand.u32 %v7399, 4294901760
    %7401 = vmatpush.msra.mxu0 %v7400
    %v7402 = vand.u32 %v355, 4294901760
    %v7403 = vsub.f32 %v355, %v7402
    %v7404 = vand.u32 %v7403, 4294901760
    %7405 = vmatpush.msra.mxu0 %v7404
    %v7406 = vand.u32 %v354, 4294901760
    %v7407 = vsub.f32 %v354, %v7406
    %v7408 = vand.u32 %v7407, 4294901760
    %7409 = vmatpush.msra.mxu0 %v7408
    %v7410 = vand.u32 %v587, 4294901760
    %7411 = vmatmul.f32.gmra.mxu0 %v7410
    %v7412 = vpop.f32.mrf.mxu0
    %v7413 = vadd.f32 %v7344, %v7412
    %7414 = vdwg.mxu0
    %v7415 = vand.u32 %v369, 4294901760
    %7416 = vmatpush.msra.mxu0 %v7415
    %v7417 = vand.u32 %v368, 4294901760
    %7418 = vmatpush.msra.mxu0 %v7417
    %v7419 = vand.u32 %v367, 4294901760
    %7420 = vmatpush.msra.mxu0 %v7419
    %v7421 = vand.u32 %v366, 4294901760
    %7422 = vmatpush.msra.mxu0 %v7421
    %v7423 = vand.u32 %v365, 4294901760
    %7424 = vmatpush.msra.mxu0 %v7423
    %v7425 = vand.u32 %v364, 4294901760
    %7426 = vmatpush.msra.mxu0 %v7425
    %v7427 = vand.u32 %v363, 4294901760
    %7428 = vmatpush.msra.mxu0 %v7427
    %v7429 = vand.u32 %v362, 4294901760
    %7430 = vmatpush.msra.mxu0 %v7429
    %v7431 = vand.u32 %v361, 4294901760
    %7432 = vmatpush.msra.mxu0 %v7431
    %v7433 = vand.u32 %v360, 4294901760
    %7434 = vmatpush.msra.mxu0 %v7433
    %v7435 = vand.u32 %v359, 4294901760
    %7436 = vmatpush.msra.mxu0 %v7435
    %v7437 = vand.u32 %v358, 4294901760
    %7438 = vmatpush.msra.mxu0 %v7437
    %v7439 = vand.u32 %v357, 4294901760
    %7440 = vmatpush.msra.mxu0 %v7439
    %v7441 = vand.u32 %v356, 4294901760
    %7442 = vmatpush.msra.mxu0 %v7441
    %v7443 = vand.u32 %v355, 4294901760
    %7444 = vmatpush.msra.mxu0 %v7443
    %v7445 = vand.u32 %v354, 4294901760
    %7446 = vmatpush.msra.mxu0 %v7445
    %v7447 = vand.u32 %v587, 4294901760
    %7448 = vmatmul.f32.gmra.mxu0 %v7447
    %v7449 = vpop.f32.mrf.mxu0
    %v7450 = vadd.f32 %v7413, %v7449
    %7451 = vdwg.mxu0
    %v7452 = vand.u32 %v385, 4294901760
    %7453 = vmatpush.msra.mxu0 %v7452
    %v7454 = vand.u32 %v384, 4294901760
    %7455 = vmatpush.msra.mxu0 %v7454
    %v7456 = vand.u32 %v383, 4294901760
    %7457 = vmatpush.msra.mxu0 %v7456
    %v7458 = vand.u32 %v382, 4294901760
    %7459 = vmatpush.msra.mxu0 %v7458
    %v7460 = vand.u32 %v381, 4294901760
    %7461 = vmatpush.msra.mxu0 %v7460
    %v7462 = vand.u32 %v380, 4294901760
    %7463 = vmatpush.msra.mxu0 %v7462
    %v7464 = vand.u32 %v379, 4294901760
    %7465 = vmatpush.msra.mxu0 %v7464
    %v7466 = vand.u32 %v378, 4294901760
    %7467 = vmatpush.msra.mxu0 %v7466
    %v7468 = vand.u32 %v377, 4294901760
    %7469 = vmatpush.msra.mxu0 %v7468
    %v7470 = vand.u32 %v376, 4294901760
    %7471 = vmatpush.msra.mxu0 %v7470
    %v7472 = vand.u32 %v375, 4294901760
    %7473 = vmatpush.msra.mxu0 %v7472
    %v7474 = vand.u32 %v374, 4294901760
    %7475 = vmatpush.msra.mxu0 %v7474
    %v7476 = vand.u32 %v373, 4294901760
    %7477 = vmatpush.msra.mxu0 %v7476
    %v7478 = vand.u32 %v372, 4294901760
    %7479 = vmatpush.msra.mxu0 %v7478
    %v7480 = vand.u32 %v371, 4294901760
    %7481 = vmatpush.msra.mxu0 %v7480
    %v7482 = vand.u32 %v370, 4294901760
    %7483 = vmatpush.msra.mxu0 %v7482
    %v7484 = vand.u32 %v588, 4294901760
    %v7485 = vsub.f32 %v588, %v7484
    %v7486 = vand.u32 %v7485, 4294901760
    %v7487 = vsub.f32 %v7485, %v7486
    %v7488 = vand.u32 %v7487, 4294901760
    %7489 = vmatmul.f32.gmra.mxu0 %v7488
    %v7490 = vpop.f32.mrf.mxu0
    %v7491 = vadd.f32 %v7450, %v7490
    %7492 = vdwg.mxu0
    %v7493 = vand.u32 %v385, 4294901760
    %v7494 = vsub.f32 %v385, %v7493
    %v7495 = vand.u32 %v7494, 4294901760
    %v7496 = vsub.f32 %v7494, %v7495
    %v7497 = vand.u32 %v7496, 4294901760
    %7498 = vmatpush.msra.mxu0 %v7497
    %v7499 = vand.u32 %v384, 4294901760
    %v7500 = vsub.f32 %v384, %v7499
    %v7501 = vand.u32 %v7500, 4294901760
    %v7502 = vsub.f32 %v7500, %v7501
    %v7503 = vand.u32 %v7502, 4294901760
    %7504 = vmatpush.msra.mxu0 %v7503
    %v7505 = vand.u32 %v383, 4294901760
    %v7506 = vsub.f32 %v383, %v7505
    %v7507 = vand.u32 %v7506, 4294901760
    %v7508 = vsub.f32 %v7506, %v7507
    %v7509 = vand.u32 %v7508, 4294901760
    %7510 = vmatpush.msra.mxu0 %v7509
    %v7511 = vand.u32 %v382, 4294901760
    %v7512 = vsub.f32 %v382, %v7511
    %v7513 = vand.u32 %v7512, 4294901760
    %v7514 = vsub.f32 %v7512, %v7513
    %v7515 = vand.u32 %v7514, 4294901760
    %7516 = vmatpush.msra.mxu0 %v7515
    %v7517 = vand.u32 %v381, 4294901760
    %v7518 = vsub.f32 %v381, %v7517
    %v7519 = vand.u32 %v7518, 4294901760
    %v7520 = vsub.f32 %v7518, %v7519
    %v7521 = vand.u32 %v7520, 4294901760
    %7522 = vmatpush.msra.mxu0 %v7521
    %v7523 = vand.u32 %v380, 4294901760
    %v7524 = vsub.f32 %v380, %v7523
    %v7525 = vand.u32 %v7524, 4294901760
    %v7526 = vsub.f32 %v7524, %v7525
    %v7527 = vand.u32 %v7526, 4294901760
    %7528 = vmatpush.msra.mxu0 %v7527
    %v7529 = vand.u32 %v379, 4294901760
    %v7530 = vsub.f32 %v379, %v7529
    %v7531 = vand.u32 %v7530, 4294901760
    %v7532 = vsub.f32 %v7530, %v7531
    %v7533 = vand.u32 %v7532, 4294901760
    %7534 = vmatpush.msra.mxu0 %v7533
    %v7535 = vand.u32 %v378, 4294901760
    %v7536 = vsub.f32 %v378, %v7535
    %v7537 = vand.u32 %v7536, 4294901760
    %v7538 = vsub.f32 %v7536, %v7537
    %v7539 = vand.u32 %v7538, 4294901760
    %7540 = vmatpush.msra.mxu0 %v7539
    %v7541 = vand.u32 %v377, 4294901760
    %v7542 = vsub.f32 %v377, %v7541
    %v7543 = vand.u32 %v7542, 4294901760
    %v7544 = vsub.f32 %v7542, %v7543
    %v7545 = vand.u32 %v7544, 4294901760
    %7546 = vmatpush.msra.mxu0 %v7545
    %v7547 = vand.u32 %v376, 4294901760
    %v7548 = vsub.f32 %v376, %v7547
    %v7549 = vand.u32 %v7548, 4294901760
    %v7550 = vsub.f32 %v7548, %v7549
    %v7551 = vand.u32 %v7550, 4294901760
    %7552 = vmatpush.msra.mxu0 %v7551
    %v7553 = vand.u32 %v375, 4294901760
    %v7554 = vsub.f32 %v375, %v7553
    %v7555 = vand.u32 %v7554, 4294901760
    %v7556 = vsub.f32 %v7554, %v7555
    %v7557 = vand.u32 %v7556, 4294901760
    %7558 = vmatpush.msra.mxu0 %v7557
    %v7559 = vand.u32 %v374, 4294901760
    %v7560 = vsub.f32 %v374, %v7559
    %v7561 = vand.u32 %v7560, 4294901760
    %v7562 = vsub.f32 %v7560, %v7561
    %v7563 = vand.u32 %v7562, 4294901760
    %7564 = vmatpush.msra.mxu0 %v7563
    %v7565 = vand.u32 %v373, 4294901760
    %v7566 = vsub.f32 %v373, %v7565
    %v7567 = vand.u32 %v7566, 4294901760
    %v7568 = vsub.f32 %v7566, %v7567
    %v7569 = vand.u32 %v7568, 4294901760
    %7570 = vmatpush.msra.mxu0 %v7569
    %v7571 = vand.u32 %v372, 4294901760
    %v7572 = vsub.f32 %v372, %v7571
    %v7573 = vand.u32 %v7572, 4294901760
    %v7574 = vsub.f32 %v7572, %v7573
    %v7575 = vand.u32 %v7574, 4294901760
    %7576 = vmatpush.msra.mxu0 %v7575
    %v7577 = vand.u32 %v371, 4294901760
    %v7578 = vsub.f32 %v371, %v7577
    %v7579 = vand.u32 %v7578, 4294901760
    %v7580 = vsub.f32 %v7578, %v7579
    %v7581 = vand.u32 %v7580, 4294901760
    %7582 = vmatpush.msra.mxu0 %v7581
    %v7583 = vand.u32 %v370, 4294901760
    %v7584 = vsub.f32 %v370, %v7583
    %v7585 = vand.u32 %v7584, 4294901760
    %v7586 = vsub.f32 %v7584, %v7585
    %v7587 = vand.u32 %v7586, 4294901760
    %7588 = vmatpush.msra.mxu0 %v7587
    %v7589 = vand.u32 %v588, 4294901760
    %7590 = vmatmul.f32.gmra.mxu0 %v7589
    %v7591 = vpop.f32.mrf.mxu0
    %v7592 = vadd.f32 %v7491, %v7591
    %7593 = vdwg.mxu0
    %v7594 = vand.u32 %v385, 4294901760
    %v7595 = vsub.f32 %v385, %v7594
    %7596 = vmatpush.msra.mxu0 %v7595
    %v7597 = vand.u32 %v384, 4294901760
    %v7598 = vsub.f32 %v384, %v7597
    %7599 = vmatpush.msra.mxu0 %v7598
    %v7600 = vand.u32 %v383, 4294901760
    %v7601 = vsub.f32 %v383, %v7600
    %7602 = vmatpush.msra.mxu0 %v7601
    %v7603 = vand.u32 %v382, 4294901760
    %v7604 = vsub.f32 %v382, %v7603
    %7605 = vmatpush.msra.mxu0 %v7604
    %v7606 = vand.u32 %v381, 4294901760
    %v7607 = vsub.f32 %v381, %v7606
    %7608 = vmatpush.msra.mxu0 %v7607
    %v7609 = vand.u32 %v380, 4294901760
    %v7610 = vsub.f32 %v380, %v7609
    %7611 = vmatpush.msra.mxu0 %v7610
    %v7612 = vand.u32 %v379, 4294901760
    %v7613 = vsub.f32 %v379, %v7612
    %7614 = vmatpush.msra.mxu0 %v7613
    %v7615 = vand.u32 %v378, 4294901760
    %v7616 = vsub.f32 %v378, %v7615
    %7617 = vmatpush.msra.mxu0 %v7616
    %v7618 = vand.u32 %v377, 4294901760
    %v7619 = vsub.f32 %v377, %v7618
    %7620 = vmatpush.msra.mxu0 %v7619
    %v7621 = vand.u32 %v376, 4294901760
    %v7622 = vsub.f32 %v376, %v7621
    %7623 = vmatpush.msra.mxu0 %v7622
    %v7624 = vand.u32 %v375, 4294901760
    %v7625 = vsub.f32 %v375, %v7624
    %7626 = vmatpush.msra.mxu0 %v7625
    %v7627 = vand.u32 %v374, 4294901760
    %v7628 = vsub.f32 %v374, %v7627
    %7629 = vmatpush.msra.mxu0 %v7628
    %v7630 = vand.u32 %v373, 4294901760
    %v7631 = vsub.f32 %v373, %v7630
    %7632 = vmatpush.msra.mxu0 %v7631
    %v7633 = vand.u32 %v372, 4294901760
    %v7634 = vsub.f32 %v372, %v7633
    %7635 = vmatpush.msra.mxu0 %v7634
    %v7636 = vand.u32 %v371, 4294901760
    %v7637 = vsub.f32 %v371, %v7636
    %7638 = vmatpush.msra.mxu0 %v7637
    %v7639 = vand.u32 %v370, 4294901760
    %v7640 = vsub.f32 %v370, %v7639
    %7641 = vmatpush.msra.mxu0 %v7640
    %v7642 = vand.u32 %v588, 4294901760
    %v7643 = vsub.f32 %v588, %v7642
    %7644 = vmatmul.f32.gmra.mxu0 %v7643
    %v7645 = vpop.f32.mrf.mxu0
    %v7646 = vadd.f32 %v7592, %v7645
    %7647 = vdwg.mxu0
    %v7648 = vand.u32 %v385, 4294901760
    %7649 = vmatpush.msra.mxu0 %v7648
    %v7650 = vand.u32 %v384, 4294901760
    %7651 = vmatpush.msra.mxu0 %v7650
    %v7652 = vand.u32 %v383, 4294901760
    %7653 = vmatpush.msra.mxu0 %v7652
    %v7654 = vand.u32 %v382, 4294901760
    %7655 = vmatpush.msra.mxu0 %v7654
    %v7656 = vand.u32 %v381, 4294901760
    %7657 = vmatpush.msra.mxu0 %v7656
    %v7658 = vand.u32 %v380, 4294901760
    %7659 = vmatpush.msra.mxu0 %v7658
    %v7660 = vand.u32 %v379, 4294901760
    %7661 = vmatpush.msra.mxu0 %v7660
    %v7662 = vand.u32 %v378, 4294901760
    %7663 = vmatpush.msra.mxu0 %v7662
    %v7664 = vand.u32 %v377, 4294901760
    %7665 = vmatpush.msra.mxu0 %v7664
    %v7666 = vand.u32 %v376, 4294901760
    %7667 = vmatpush.msra.mxu0 %v7666
    %v7668 = vand.u32 %v375, 4294901760
    %7669 = vmatpush.msra.mxu0 %v7668
    %v7670 = vand.u32 %v374, 4294901760
    %7671 = vmatpush.msra.mxu0 %v7670
    %v7672 = vand.u32 %v373, 4294901760
    %7673 = vmatpush.msra.mxu0 %v7672
    %v7674 = vand.u32 %v372, 4294901760
    %7675 = vmatpush.msra.mxu0 %v7674
    %v7676 = vand.u32 %v371, 4294901760
    %7677 = vmatpush.msra.mxu0 %v7676
    %v7678 = vand.u32 %v370, 4294901760
    %7679 = vmatpush.msra.mxu0 %v7678
    %v7680 = vand.u32 %v588, 4294901760
    %v7681 = vsub.f32 %v588, %v7680
    %v7682 = vand.u32 %v7681, 4294901760
    %7683 = vmatmul.f32.gmra.mxu0 %v7682
    %v7684 = vpop.f32.mrf.mxu0
    %v7685 = vadd.f32 %v7646, %v7684
    %7686 = vdwg.mxu0
    %v7687 = vand.u32 %v385, 4294901760
    %v7688 = vsub.f32 %v385, %v7687
    %v7689 = vand.u32 %v7688, 4294901760
    %7690 = vmatpush.msra.mxu0 %v7689
    %v7691 = vand.u32 %v384, 4294901760
    %v7692 = vsub.f32 %v384, %v7691
    %v7693 = vand.u32 %v7692, 4294901760
    %7694 = vmatpush.msra.mxu0 %v7693
    %v7695 = vand.u32 %v383, 4294901760
    %v7696 = vsub.f32 %v383, %v7695
    %v7697 = vand.u32 %v7696, 4294901760
    %7698 = vmatpush.msra.mxu0 %v7697
    %v7699 = vand.u32 %v382, 4294901760
    %v7700 = vsub.f32 %v382, %v7699
    %v7701 = vand.u32 %v7700, 4294901760
    %7702 = vmatpush.msra.mxu0 %v7701
    %v7703 = vand.u32 %v381, 4294901760
    %v7704 = vsub.f32 %v381, %v7703
    %v7705 = vand.u32 %v7704, 4294901760
    %7706 = vmatpush.msra.mxu0 %v7705
    %v7707 = vand.u32 %v380, 4294901760
    %v7708 = vsub.f32 %v380, %v7707
    %v7709 = vand.u32 %v7708, 4294901760
    %7710 = vmatpush.msra.mxu0 %v7709
    %v7711 = vand.u32 %v379, 4294901760
    %v7712 = vsub.f32 %v379, %v7711
    %v7713 = vand.u32 %v7712, 4294901760
    %7714 = vmatpush.msra.mxu0 %v7713
    %v7715 = vand.u32 %v378, 4294901760
    %v7716 = vsub.f32 %v378, %v7715
    %v7717 = vand.u32 %v7716, 4294901760
    %7718 = vmatpush.msra.mxu0 %v7717
    %v7719 = vand.u32 %v377, 4294901760
    %v7720 = vsub.f32 %v377, %v7719
    %v7721 = vand.u32 %v7720, 4294901760
    %7722 = vmatpush.msra.mxu0 %v7721
    %v7723 = vand.u32 %v376, 4294901760
    %v7724 = vsub.f32 %v376, %v7723
    %v7725 = vand.u32 %v7724, 4294901760
    %7726 = vmatpush.msra.mxu0 %v7725
    %v7727 = vand.u32 %v375, 4294901760
    %v7728 = vsub.f32 %v375, %v7727
    %v7729 = vand.u32 %v7728, 4294901760
    %7730 = vmatpush.msra.mxu0 %v7729
    %v7731 = vand.u32 %v374, 4294901760
    %v7732 = vsub.f32 %v374, %v7731
    %v7733 = vand.u32 %v7732, 4294901760
    %7734 = vmatpush.msra.mxu0 %v7733
    %v7735 = vand.u32 %v373, 4294901760
    %v7736 = vsub.f32 %v373, %v7735
    %v7737 = vand.u32 %v7736, 4294901760
    %7738 = vmatpush.msra.mxu0 %v7737
    %v7739 = vand.u32 %v372, 4294901760
    %v7740 = vsub.f32 %v372, %v7739
    %v7741 = vand.u32 %v7740, 4294901760
    %7742 = vmatpush.msra.mxu0 %v7741
    %v7743 = vand.u32 %v371, 4294901760
    %v7744 = vsub.f32 %v371, %v7743
    %v7745 = vand.u32 %v7744, 4294901760
    %7746 = vmatpush.msra.mxu0 %v7745
    %v7747 = vand.u32 %v370, 4294901760
    %v7748 = vsub.f32 %v370, %v7747
    %v7749 = vand.u32 %v7748, 4294901760
    %7750 = vmatpush.msra.mxu0 %v7749
    %v7751 = vand.u32 %v588, 4294901760
    %7752 = vmatmul.f32.gmra.mxu0 %v7751
    %v7753 = vpop.f32.mrf.mxu0
    %v7754 = vadd.f32 %v7685, %v7753
    %7755 = vdwg.mxu0
    %v7756 = vand.u32 %v385, 4294901760
    %7757 = vmatpush.msra.mxu0 %v7756
    %v7758 = vand.u32 %v384, 4294901760
    %7759 = vmatpush.msra.mxu0 %v7758
    %v7760 = vand.u32 %v383, 4294901760
    %7761 = vmatpush.msra.mxu0 %v7760
    %v7762 = vand.u32 %v382, 4294901760
    %7763 = vmatpush.msra.mxu0 %v7762
    %v7764 = vand.u32 %v381, 4294901760
    %7765 = vmatpush.msra.mxu0 %v7764
    %v7766 = vand.u32 %v380, 4294901760
    %7767 = vmatpush.msra.mxu0 %v7766
    %v7768 = vand.u32 %v379, 4294901760
    %7769 = vmatpush.msra.mxu0 %v7768
    %v7770 = vand.u32 %v378, 4294901760
    %7771 = vmatpush.msra.mxu0 %v7770
    %v7772 = vand.u32 %v377, 4294901760
    %7773 = vmatpush.msra.mxu0 %v7772
    %v7774 = vand.u32 %v376, 4294901760
    %7775 = vmatpush.msra.mxu0 %v7774
    %v7776 = vand.u32 %v375, 4294901760
    %7777 = vmatpush.msra.mxu0 %v7776
    %v7778 = vand.u32 %v374, 4294901760
    %7779 = vmatpush.msra.mxu0 %v7778
    %v7780 = vand.u32 %v373, 4294901760
    %7781 = vmatpush.msra.mxu0 %v7780
    %v7782 = vand.u32 %v372, 4294901760
    %7783 = vmatpush.msra.mxu0 %v7782
    %v7784 = vand.u32 %v371, 4294901760
    %7785 = vmatpush.msra.mxu0 %v7784
    %v7786 = vand.u32 %v370, 4294901760
    %7787 = vmatpush.msra.mxu0 %v7786
    %v7788 = vand.u32 %v588, 4294901760
    %7789 = vmatmul.f32.gmra.mxu0 %v7788
    %v7790 = vpop.f32.mrf.mxu0
    %v7791 = vadd.f32 %v7754, %v7790
    %7792 = vdwg.mxu0
    %v7793 = vand.u32 %v401, 4294901760
    %7794 = vmatpush.msra.mxu0 %v7793
    %v7795 = vand.u32 %v400, 4294901760
    %7796 = vmatpush.msra.mxu0 %v7795
    %v7797 = vand.u32 %v399, 4294901760
    %7798 = vmatpush.msra.mxu0 %v7797
    %v7799 = vand.u32 %v398, 4294901760
    %7800 = vmatpush.msra.mxu0 %v7799
    %v7801 = vand.u32 %v397, 4294901760
    %7802 = vmatpush.msra.mxu0 %v7801
    %v7803 = vand.u32 %v396, 4294901760
    %7804 = vmatpush.msra.mxu0 %v7803
    %v7805 = vand.u32 %v395, 4294901760
    %7806 = vmatpush.msra.mxu0 %v7805
    %v7807 = vand.u32 %v394, 4294901760
    %7808 = vmatpush.msra.mxu0 %v7807
    %v7809 = vand.u32 %v393, 4294901760
    %7810 = vmatpush.msra.mxu0 %v7809
    %v7811 = vand.u32 %v392, 4294901760
    %7812 = vmatpush.msra.mxu0 %v7811
    %v7813 = vand.u32 %v391, 4294901760
    %7814 = vmatpush.msra.mxu0 %v7813
    %v7815 = vand.u32 %v390, 4294901760
    %7816 = vmatpush.msra.mxu0 %v7815
    %v7817 = vand.u32 %v389, 4294901760
    %7818 = vmatpush.msra.mxu0 %v7817
    %v7819 = vand.u32 %v388, 4294901760
    %7820 = vmatpush.msra.mxu0 %v7819
    %v7821 = vand.u32 %v387, 4294901760
    %7822 = vmatpush.msra.mxu0 %v7821
    %v7823 = vand.u32 %v386, 4294901760
    %7824 = vmatpush.msra.mxu0 %v7823
    %v7825 = vand.u32 %v589, 4294901760
    %v7826 = vsub.f32 %v589, %v7825
    %v7827 = vand.u32 %v7826, 4294901760
    %v7828 = vsub.f32 %v7826, %v7827
    %v7829 = vand.u32 %v7828, 4294901760
    %7830 = vmatmul.f32.gmra.mxu0 %v7829
    %v7831 = vpop.f32.mrf.mxu0
    %v7832 = vadd.f32 %v7791, %v7831
    %7833 = vdwg.mxu0
    %v7834 = vand.u32 %v401, 4294901760
    %v7835 = vsub.f32 %v401, %v7834
    %v7836 = vand.u32 %v7835, 4294901760
    %v7837 = vsub.f32 %v7835, %v7836
    %v7838 = vand.u32 %v7837, 4294901760
    %7839 = vmatpush.msra.mxu0 %v7838
    %v7840 = vand.u32 %v400, 4294901760
    %v7841 = vsub.f32 %v400, %v7840
    %v7842 = vand.u32 %v7841, 4294901760
    %v7843 = vsub.f32 %v7841, %v7842
    %v7844 = vand.u32 %v7843, 4294901760
    %7845 = vmatpush.msra.mxu0 %v7844
    %v7846 = vand.u32 %v399, 4294901760
    %v7847 = vsub.f32 %v399, %v7846
    %v7848 = vand.u32 %v7847, 4294901760
    %v7849 = vsub.f32 %v7847, %v7848
    %v7850 = vand.u32 %v7849, 4294901760
    %7851 = vmatpush.msra.mxu0 %v7850
    %v7852 = vand.u32 %v398, 4294901760
    %v7853 = vsub.f32 %v398, %v7852
    %v7854 = vand.u32 %v7853, 4294901760
    %v7855 = vsub.f32 %v7853, %v7854
    %v7856 = vand.u32 %v7855, 4294901760
    %7857 = vmatpush.msra.mxu0 %v7856
    %v7858 = vand.u32 %v397, 4294901760
    %v7859 = vsub.f32 %v397, %v7858
    %v7860 = vand.u32 %v7859, 4294901760
    %v7861 = vsub.f32 %v7859, %v7860
    %v7862 = vand.u32 %v7861, 4294901760
    %7863 = vmatpush.msra.mxu0 %v7862
    %v7864 = vand.u32 %v396, 4294901760
    %v7865 = vsub.f32 %v396, %v7864
    %v7866 = vand.u32 %v7865, 4294901760
    %v7867 = vsub.f32 %v7865, %v7866
    %v7868 = vand.u32 %v7867, 4294901760
    %7869 = vmatpush.msra.mxu0 %v7868
    %v7870 = vand.u32 %v395, 4294901760
    %v7871 = vsub.f32 %v395, %v7870
    %v7872 = vand.u32 %v7871, 4294901760
    %v7873 = vsub.f32 %v7871, %v7872
    %v7874 = vand.u32 %v7873, 4294901760
    %7875 = vmatpush.msra.mxu0 %v7874
    %v7876 = vand.u32 %v394, 4294901760
    %v7877 = vsub.f32 %v394, %v7876
    %v7878 = vand.u32 %v7877, 4294901760
    %v7879 = vsub.f32 %v7877, %v7878
    %v7880 = vand.u32 %v7879, 4294901760
    %7881 = vmatpush.msra.mxu0 %v7880
    %v7882 = vand.u32 %v393, 4294901760
    %v7883 = vsub.f32 %v393, %v7882
    %v7884 = vand.u32 %v7883, 4294901760
    %v7885 = vsub.f32 %v7883, %v7884
    %v7886 = vand.u32 %v7885, 4294901760
    %7887 = vmatpush.msra.mxu0 %v7886
    %v7888 = vand.u32 %v392, 4294901760
    %v7889 = vsub.f32 %v392, %v7888
    %v7890 = vand.u32 %v7889, 4294901760
    %v7891 = vsub.f32 %v7889, %v7890
    %v7892 = vand.u32 %v7891, 4294901760
    %7893 = vmatpush.msra.mxu0 %v7892
    %v7894 = vand.u32 %v391, 4294901760
    %v7895 = vsub.f32 %v391, %v7894
    %v7896 = vand.u32 %v7895, 4294901760
    %v7897 = vsub.f32 %v7895, %v7896
    %v7898 = vand.u32 %v7897, 4294901760
    %7899 = vmatpush.msra.mxu0 %v7898
    %v7900 = vand.u32 %v390, 4294901760
    %v7901 = vsub.f32 %v390, %v7900
    %v7902 = vand.u32 %v7901, 4294901760
    %v7903 = vsub.f32 %v7901, %v7902
    %v7904 = vand.u32 %v7903, 4294901760
    %7905 = vmatpush.msra.mxu0 %v7904
    %v7906 = vand.u32 %v389, 4294901760
    %v7907 = vsub.f32 %v389, %v7906
    %v7908 = vand.u32 %v7907, 4294901760
    %v7909 = vsub.f32 %v7907, %v7908
    %v7910 = vand.u32 %v7909, 4294901760
    %7911 = vmatpush.msra.mxu0 %v7910
    %v7912 = vand.u32 %v388, 4294901760
    %v7913 = vsub.f32 %v388, %v7912
    %v7914 = vand.u32 %v7913, 4294901760
    %v7915 = vsub.f32 %v7913, %v7914
    %v7916 = vand.u32 %v7915, 4294901760
    %7917 = vmatpush.msra.mxu0 %v7916
    %v7918 = vand.u32 %v387, 4294901760
    %v7919 = vsub.f32 %v387, %v7918
    %v7920 = vand.u32 %v7919, 4294901760
    %v7921 = vsub.f32 %v7919, %v7920
    %v7922 = vand.u32 %v7921, 4294901760
    %7923 = vmatpush.msra.mxu0 %v7922
    %v7924 = vand.u32 %v386, 4294901760
    %v7925 = vsub.f32 %v386, %v7924
    %v7926 = vand.u32 %v7925, 4294901760
    %v7927 = vsub.f32 %v7925, %v7926
    %v7928 = vand.u32 %v7927, 4294901760
    %7929 = vmatpush.msra.mxu0 %v7928
    %v7930 = vand.u32 %v589, 4294901760
    %7931 = vmatmul.f32.gmra.mxu0 %v7930
    %v7932 = vpop.f32.mrf.mxu0
    %v7933 = vadd.f32 %v7832, %v7932
    %7934 = vdwg.mxu0
    %v7935 = vand.u32 %v401, 4294901760
    %v7936 = vsub.f32 %v401, %v7935
    %7937 = vmatpush.msra.mxu0 %v7936
    %v7938 = vand.u32 %v400, 4294901760
    %v7939 = vsub.f32 %v400, %v7938
    %7940 = vmatpush.msra.mxu0 %v7939
    %v7941 = vand.u32 %v399, 4294901760
    %v7942 = vsub.f32 %v399, %v7941
    %7943 = vmatpush.msra.mxu0 %v7942
    %v7944 = vand.u32 %v398, 4294901760
    %v7945 = vsub.f32 %v398, %v7944
    %7946 = vmatpush.msra.mxu0 %v7945
    %v7947 = vand.u32 %v397, 4294901760
    %v7948 = vsub.f32 %v397, %v7947
    %7949 = vmatpush.msra.mxu0 %v7948
    %v7950 = vand.u32 %v396, 4294901760
    %v7951 = vsub.f32 %v396, %v7950
    %7952 = vmatpush.msra.mxu0 %v7951
    %v7953 = vand.u32 %v395, 4294901760
    %v7954 = vsub.f32 %v395, %v7953
    %7955 = vmatpush.msra.mxu0 %v7954
    %v7956 = vand.u32 %v394, 4294901760
    %v7957 = vsub.f32 %v394, %v7956
    %7958 = vmatpush.msra.mxu0 %v7957
    %v7959 = vand.u32 %v393, 4294901760
    %v7960 = vsub.f32 %v393, %v7959
    %7961 = vmatpush.msra.mxu0 %v7960
    %v7962 = vand.u32 %v392, 4294901760
    %v7963 = vsub.f32 %v392, %v7962
    %7964 = vmatpush.msra.mxu0 %v7963
    %v7965 = vand.u32 %v391, 4294901760
    %v7966 = vsub.f32 %v391, %v7965
    %7967 = vmatpush.msra.mxu0 %v7966
    %v7968 = vand.u32 %v390, 4294901760
    %v7969 = vsub.f32 %v390, %v7968
    %7970 = vmatpush.msra.mxu0 %v7969
    %v7971 = vand.u32 %v389, 4294901760
    %v7972 = vsub.f32 %v389, %v7971
    %7973 = vmatpush.msra.mxu0 %v7972
    %v7974 = vand.u32 %v388, 4294901760
    %v7975 = vsub.f32 %v388, %v7974
    %7976 = vmatpush.msra.mxu0 %v7975
    %v7977 = vand.u32 %v387, 4294901760
    %v7978 = vsub.f32 %v387, %v7977
    %7979 = vmatpush.msra.mxu0 %v7978
    %v7980 = vand.u32 %v386, 4294901760
    %v7981 = vsub.f32 %v386, %v7980
    %7982 = vmatpush.msra.mxu0 %v7981
    %v7983 = vand.u32 %v589, 4294901760
    %v7984 = vsub.f32 %v589, %v7983
    %7985 = vmatmul.f32.gmra.mxu0 %v7984
    %v7986 = vpop.f32.mrf.mxu0
    %v7987 = vadd.f32 %v7933, %v7986
    %7988 = vdwg.mxu0
    %v7989 = vand.u32 %v401, 4294901760
    %7990 = vmatpush.msra.mxu0 %v7989
    %v7991 = vand.u32 %v400, 4294901760
    %7992 = vmatpush.msra.mxu0 %v7991
    %v7993 = vand.u32 %v399, 4294901760
    %7994 = vmatpush.msra.mxu0 %v7993
    %v7995 = vand.u32 %v398, 4294901760
    %7996 = vmatpush.msra.mxu0 %v7995
    %v7997 = vand.u32 %v397, 4294901760
    %7998 = vmatpush.msra.mxu0 %v7997
    %v7999 = vand.u32 %v396, 4294901760
    %8000 = vmatpush.msra.mxu0 %v7999
    %v8001 = vand.u32 %v395, 4294901760
    %8002 = vmatpush.msra.mxu0 %v8001
    %v8003 = vand.u32 %v394, 4294901760
    %8004 = vmatpush.msra.mxu0 %v8003
    %v8005 = vand.u32 %v393, 4294901760
    %8006 = vmatpush.msra.mxu0 %v8005
    %v8007 = vand.u32 %v392, 4294901760
    %8008 = vmatpush.msra.mxu0 %v8007
    %v8009 = vand.u32 %v391, 4294901760
    %8010 = vmatpush.msra.mxu0 %v8009
    %v8011 = vand.u32 %v390, 4294901760
    %8012 = vmatpush.msra.mxu0 %v8011
    %v8013 = vand.u32 %v389, 4294901760
    %8014 = vmatpush.msra.mxu0 %v8013
    %v8015 = vand.u32 %v388, 4294901760
    %8016 = vmatpush.msra.mxu0 %v8015
    %v8017 = vand.u32 %v387, 4294901760
    %8018 = vmatpush.msra.mxu0 %v8017
    %v8019 = vand.u32 %v386, 4294901760
    %8020 = vmatpush.msra.mxu0 %v8019
    %v8021 = vand.u32 %v589, 4294901760
    %v8022 = vsub.f32 %v589, %v8021
    %v8023 = vand.u32 %v8022, 4294901760
    %8024 = vmatmul.f32.gmra.mxu0 %v8023
    %v8025 = vpop.f32.mrf.mxu0
    %v8026 = vadd.f32 %v7987, %v8025
    %8027 = vdwg.mxu0
    %v8028 = vand.u32 %v401, 4294901760
    %v8029 = vsub.f32 %v401, %v8028
    %v8030 = vand.u32 %v8029, 4294901760
    %8031 = vmatpush.msra.mxu0 %v8030
    %v8032 = vand.u32 %v400, 4294901760
    %v8033 = vsub.f32 %v400, %v8032
    %v8034 = vand.u32 %v8033, 4294901760
    %8035 = vmatpush.msra.mxu0 %v8034
    %v8036 = vand.u32 %v399, 4294901760
    %v8037 = vsub.f32 %v399, %v8036
    %v8038 = vand.u32 %v8037, 4294901760
    %8039 = vmatpush.msra.mxu0 %v8038
    %v8040 = vand.u32 %v398, 4294901760
    %v8041 = vsub.f32 %v398, %v8040
    %v8042 = vand.u32 %v8041, 4294901760
    %8043 = vmatpush.msra.mxu0 %v8042
    %v8044 = vand.u32 %v397, 4294901760
    %v8045 = vsub.f32 %v397, %v8044
    %v8046 = vand.u32 %v8045, 4294901760
    %8047 = vmatpush.msra.mxu0 %v8046
    %v8048 = vand.u32 %v396, 4294901760
    %v8049 = vsub.f32 %v396, %v8048
    %v8050 = vand.u32 %v8049, 4294901760
    %8051 = vmatpush.msra.mxu0 %v8050
    %v8052 = vand.u32 %v395, 4294901760
    %v8053 = vsub.f32 %v395, %v8052
    %v8054 = vand.u32 %v8053, 4294901760
    %8055 = vmatpush.msra.mxu0 %v8054
    %v8056 = vand.u32 %v394, 4294901760
    %v8057 = vsub.f32 %v394, %v8056
    %v8058 = vand.u32 %v8057, 4294901760
    %8059 = vmatpush.msra.mxu0 %v8058
    %v8060 = vand.u32 %v393, 4294901760
    %v8061 = vsub.f32 %v393, %v8060
    %v8062 = vand.u32 %v8061, 4294901760
    %8063 = vmatpush.msra.mxu0 %v8062
    %v8064 = vand.u32 %v392, 4294901760
    %v8065 = vsub.f32 %v392, %v8064
    %v8066 = vand.u32 %v8065, 4294901760
    %8067 = vmatpush.msra.mxu0 %v8066
    %v8068 = vand.u32 %v391, 4294901760
    %v8069 = vsub.f32 %v391, %v8068
    %v8070 = vand.u32 %v8069, 4294901760
    %8071 = vmatpush.msra.mxu0 %v8070
    %v8072 = vand.u32 %v390, 4294901760
    %v8073 = vsub.f32 %v390, %v8072
    %v8074 = vand.u32 %v8073, 4294901760
    %8075 = vmatpush.msra.mxu0 %v8074
    %v8076 = vand.u32 %v389, 4294901760
    %v8077 = vsub.f32 %v389, %v8076
    %v8078 = vand.u32 %v8077, 4294901760
    %8079 = vmatpush.msra.mxu0 %v8078
    %v8080 = vand.u32 %v388, 4294901760
    %v8081 = vsub.f32 %v388, %v8080
    %v8082 = vand.u32 %v8081, 4294901760
    %8083 = vmatpush.msra.mxu0 %v8082
    %v8084 = vand.u32 %v387, 4294901760
    %v8085 = vsub.f32 %v387, %v8084
    %v8086 = vand.u32 %v8085, 4294901760
    %8087 = vmatpush.msra.mxu0 %v8086
    %v8088 = vand.u32 %v386, 4294901760
    %v8089 = vsub.f32 %v386, %v8088
    %v8090 = vand.u32 %v8089, 4294901760
    %8091 = vmatpush.msra.mxu0 %v8090
    %v8092 = vand.u32 %v589, 4294901760
    %8093 = vmatmul.f32.gmra.mxu0 %v8092
    %v8094 = vpop.f32.mrf.mxu0
    %v8095 = vadd.f32 %v8026, %v8094
    %8096 = vdwg.mxu0
    %v8097 = vand.u32 %v401, 4294901760
    %8098 = vmatpush.msra.mxu0 %v8097
    %v8099 = vand.u32 %v400, 4294901760
    %8100 = vmatpush.msra.mxu0 %v8099
    %v8101 = vand.u32 %v399, 4294901760
    %8102 = vmatpush.msra.mxu0 %v8101
    %v8103 = vand.u32 %v398, 4294901760
    %8104 = vmatpush.msra.mxu0 %v8103
    %v8105 = vand.u32 %v397, 4294901760
    %8106 = vmatpush.msra.mxu0 %v8105
    %v8107 = vand.u32 %v396, 4294901760
    %8108 = vmatpush.msra.mxu0 %v8107
    %v8109 = vand.u32 %v395, 4294901760
    %8110 = vmatpush.msra.mxu0 %v8109
    %v8111 = vand.u32 %v394, 4294901760
    %8112 = vmatpush.msra.mxu0 %v8111
    %v8113 = vand.u32 %v393, 4294901760
    %8114 = vmatpush.msra.mxu0 %v8113
    %v8115 = vand.u32 %v392, 4294901760
    %8116 = vmatpush.msra.mxu0 %v8115
    %v8117 = vand.u32 %v391, 4294901760
    %8118 = vmatpush.msra.mxu0 %v8117
    %v8119 = vand.u32 %v390, 4294901760
    %8120 = vmatpush.msra.mxu0 %v8119
    %v8121 = vand.u32 %v389, 4294901760
    %8122 = vmatpush.msra.mxu0 %v8121
    %v8123 = vand.u32 %v388, 4294901760
    %8124 = vmatpush.msra.mxu0 %v8123
    %v8125 = vand.u32 %v387, 4294901760
    %8126 = vmatpush.msra.mxu0 %v8125
    %v8127 = vand.u32 %v386, 4294901760
    %8128 = vmatpush.msra.mxu0 %v8127
    %v8129 = vand.u32 %v589, 4294901760
    %8130 = vmatmul.f32.gmra.mxu0 %v8129
    %v8131 = vpop.f32.mrf.mxu0
    %v8132 = vadd.f32 %v8095, %v8131
    %8133 = vdwg.mxu0
    %v8134 = vand.u32 %v417, 4294901760
    %8135 = vmatpush.msra.mxu0 %v8134
    %v8136 = vand.u32 %v416, 4294901760
    %8137 = vmatpush.msra.mxu0 %v8136
    %v8138 = vand.u32 %v415, 4294901760
    %8139 = vmatpush.msra.mxu0 %v8138
    %v8140 = vand.u32 %v414, 4294901760
    %8141 = vmatpush.msra.mxu0 %v8140
    %v8142 = vand.u32 %v413, 4294901760
    %8143 = vmatpush.msra.mxu0 %v8142
    %v8144 = vand.u32 %v412, 4294901760
    %8145 = vmatpush.msra.mxu0 %v8144
    %v8146 = vand.u32 %v411, 4294901760
    %8147 = vmatpush.msra.mxu0 %v8146
    %v8148 = vand.u32 %v410, 4294901760
    %8149 = vmatpush.msra.mxu0 %v8148
    %v8150 = vand.u32 %v409, 4294901760
    %8151 = vmatpush.msra.mxu0 %v8150
    %v8152 = vand.u32 %v408, 4294901760
    %8153 = vmatpush.msra.mxu0 %v8152
    %v8154 = vand.u32 %v407, 4294901760
    %8155 = vmatpush.msra.mxu0 %v8154
    %v8156 = vand.u32 %v406, 4294901760
    %8157 = vmatpush.msra.mxu0 %v8156
    %v8158 = vand.u32 %v405, 4294901760
    %8159 = vmatpush.msra.mxu0 %v8158
    %v8160 = vand.u32 %v404, 4294901760
    %8161 = vmatpush.msra.mxu0 %v8160
    %v8162 = vand.u32 %v403, 4294901760
    %8163 = vmatpush.msra.mxu0 %v8162
    %v8164 = vand.u32 %v402, 4294901760
    %8165 = vmatpush.msra.mxu0 %v8164
    %v8166 = vand.u32 %v590, 4294901760
    %v8167 = vsub.f32 %v590, %v8166
    %v8168 = vand.u32 %v8167, 4294901760
    %v8169 = vsub.f32 %v8167, %v8168
    %v8170 = vand.u32 %v8169, 4294901760
    %8171 = vmatmul.f32.gmra.mxu0 %v8170
    %v8172 = vpop.f32.mrf.mxu0
    %v8173 = vadd.f32 %v8132, %v8172
    %8174 = vdwg.mxu0
    %v8175 = vand.u32 %v417, 4294901760
    %v8176 = vsub.f32 %v417, %v8175
    %v8177 = vand.u32 %v8176, 4294901760
    %v8178 = vsub.f32 %v8176, %v8177
    %v8179 = vand.u32 %v8178, 4294901760
    %8180 = vmatpush.msra.mxu0 %v8179
    %v8181 = vand.u32 %v416, 4294901760
    %v8182 = vsub.f32 %v416, %v8181
    %v8183 = vand.u32 %v8182, 4294901760
    %v8184 = vsub.f32 %v8182, %v8183
    %v8185 = vand.u32 %v8184, 4294901760
    %8186 = vmatpush.msra.mxu0 %v8185
    %v8187 = vand.u32 %v415, 4294901760
    %v8188 = vsub.f32 %v415, %v8187
    %v8189 = vand.u32 %v8188, 4294901760
    %v8190 = vsub.f32 %v8188, %v8189
    %v8191 = vand.u32 %v8190, 4294901760
    %8192 = vmatpush.msra.mxu0 %v8191
    %v8193 = vand.u32 %v414, 4294901760
    %v8194 = vsub.f32 %v414, %v8193
    %v8195 = vand.u32 %v8194, 4294901760
    %v8196 = vsub.f32 %v8194, %v8195
    %v8197 = vand.u32 %v8196, 4294901760
    %8198 = vmatpush.msra.mxu0 %v8197
    %v8199 = vand.u32 %v413, 4294901760
    %v8200 = vsub.f32 %v413, %v8199
    %v8201 = vand.u32 %v8200, 4294901760
    %v8202 = vsub.f32 %v8200, %v8201
    %v8203 = vand.u32 %v8202, 4294901760
    %8204 = vmatpush.msra.mxu0 %v8203
    %v8205 = vand.u32 %v412, 4294901760
    %v8206 = vsub.f32 %v412, %v8205
    %v8207 = vand.u32 %v8206, 4294901760
    %v8208 = vsub.f32 %v8206, %v8207
    %v8209 = vand.u32 %v8208, 4294901760
    %8210 = vmatpush.msra.mxu0 %v8209
    %v8211 = vand.u32 %v411, 4294901760
    %v8212 = vsub.f32 %v411, %v8211
    %v8213 = vand.u32 %v8212, 4294901760
    %v8214 = vsub.f32 %v8212, %v8213
    %v8215 = vand.u32 %v8214, 4294901760
    %8216 = vmatpush.msra.mxu0 %v8215
    %v8217 = vand.u32 %v410, 4294901760
    %v8218 = vsub.f32 %v410, %v8217
    %v8219 = vand.u32 %v8218, 4294901760
    %v8220 = vsub.f32 %v8218, %v8219
    %v8221 = vand.u32 %v8220, 4294901760
    %8222 = vmatpush.msra.mxu0 %v8221
    %v8223 = vand.u32 %v409, 4294901760
    %v8224 = vsub.f32 %v409, %v8223
    %v8225 = vand.u32 %v8224, 4294901760
    %v8226 = vsub.f32 %v8224, %v8225
    %v8227 = vand.u32 %v8226, 4294901760
    %8228 = vmatpush.msra.mxu0 %v8227
    %v8229 = vand.u32 %v408, 4294901760
    %v8230 = vsub.f32 %v408, %v8229
    %v8231 = vand.u32 %v8230, 4294901760
    %v8232 = vsub.f32 %v8230, %v8231
    %v8233 = vand.u32 %v8232, 4294901760
    %8234 = vmatpush.msra.mxu0 %v8233
    %v8235 = vand.u32 %v407, 4294901760
    %v8236 = vsub.f32 %v407, %v8235
    %v8237 = vand.u32 %v8236, 4294901760
    %v8238 = vsub.f32 %v8236, %v8237
    %v8239 = vand.u32 %v8238, 4294901760
    %8240 = vmatpush.msra.mxu0 %v8239
    %v8241 = vand.u32 %v406, 4294901760
    %v8242 = vsub.f32 %v406, %v8241
    %v8243 = vand.u32 %v8242, 4294901760
    %v8244 = vsub.f32 %v8242, %v8243
    %v8245 = vand.u32 %v8244, 4294901760
    %8246 = vmatpush.msra.mxu0 %v8245
    %v8247 = vand.u32 %v405, 4294901760
    %v8248 = vsub.f32 %v405, %v8247
    %v8249 = vand.u32 %v8248, 4294901760
    %v8250 = vsub.f32 %v8248, %v8249
    %v8251 = vand.u32 %v8250, 4294901760
    %8252 = vmatpush.msra.mxu0 %v8251
    %v8253 = vand.u32 %v404, 4294901760
    %v8254 = vsub.f32 %v404, %v8253
    %v8255 = vand.u32 %v8254, 4294901760
    %v8256 = vsub.f32 %v8254, %v8255
    %v8257 = vand.u32 %v8256, 4294901760
    %8258 = vmatpush.msra.mxu0 %v8257
    %v8259 = vand.u32 %v403, 4294901760
    %v8260 = vsub.f32 %v403, %v8259
    %v8261 = vand.u32 %v8260, 4294901760
    %v8262 = vsub.f32 %v8260, %v8261
    %v8263 = vand.u32 %v8262, 4294901760
    %8264 = vmatpush.msra.mxu0 %v8263
    %v8265 = vand.u32 %v402, 4294901760
    %v8266 = vsub.f32 %v402, %v8265
    %v8267 = vand.u32 %v8266, 4294901760
    %v8268 = vsub.f32 %v8266, %v8267
    %v8269 = vand.u32 %v8268, 4294901760
    %8270 = vmatpush.msra.mxu0 %v8269
    %v8271 = vand.u32 %v590, 4294901760
    %8272 = vmatmul.f32.gmra.mxu0 %v8271
    %v8273 = vpop.f32.mrf.mxu0
    %v8274 = vadd.f32 %v8173, %v8273
    %8275 = vdwg.mxu0
    %v8276 = vand.u32 %v417, 4294901760
    %v8277 = vsub.f32 %v417, %v8276
    %8278 = vmatpush.msra.mxu0 %v8277
    %v8279 = vand.u32 %v416, 4294901760
    %v8280 = vsub.f32 %v416, %v8279
    %8281 = vmatpush.msra.mxu0 %v8280
    %v8282 = vand.u32 %v415, 4294901760
    %v8283 = vsub.f32 %v415, %v8282
    %8284 = vmatpush.msra.mxu0 %v8283
    %v8285 = vand.u32 %v414, 4294901760
    %v8286 = vsub.f32 %v414, %v8285
    %8287 = vmatpush.msra.mxu0 %v8286
    %v8288 = vand.u32 %v413, 4294901760
    %v8289 = vsub.f32 %v413, %v8288
    %8290 = vmatpush.msra.mxu0 %v8289
    %v8291 = vand.u32 %v412, 4294901760
    %v8292 = vsub.f32 %v412, %v8291
    %8293 = vmatpush.msra.mxu0 %v8292
    %v8294 = vand.u32 %v411, 4294901760
    %v8295 = vsub.f32 %v411, %v8294
    %8296 = vmatpush.msra.mxu0 %v8295
    %v8297 = vand.u32 %v410, 4294901760
    %v8298 = vsub.f32 %v410, %v8297
    %8299 = vmatpush.msra.mxu0 %v8298
    %v8300 = vand.u32 %v409, 4294901760
    %v8301 = vsub.f32 %v409, %v8300
    %8302 = vmatpush.msra.mxu0 %v8301
    %v8303 = vand.u32 %v408, 4294901760
    %v8304 = vsub.f32 %v408, %v8303
    %8305 = vmatpush.msra.mxu0 %v8304
    %v8306 = vand.u32 %v407, 4294901760
    %v8307 = vsub.f32 %v407, %v8306
    %8308 = vmatpush.msra.mxu0 %v8307
    %v8309 = vand.u32 %v406, 4294901760
    %v8310 = vsub.f32 %v406, %v8309
    %8311 = vmatpush.msra.mxu0 %v8310
    %v8312 = vand.u32 %v405, 4294901760
    %v8313 = vsub.f32 %v405, %v8312
    %8314 = vmatpush.msra.mxu0 %v8313
    %v8315 = vand.u32 %v404, 4294901760
    %v8316 = vsub.f32 %v404, %v8315
    %8317 = vmatpush.msra.mxu0 %v8316
    %v8318 = vand.u32 %v403, 4294901760
    %v8319 = vsub.f32 %v403, %v8318
    %8320 = vmatpush.msra.mxu0 %v8319
    %v8321 = vand.u32 %v402, 4294901760
    %v8322 = vsub.f32 %v402, %v8321
    %8323 = vmatpush.msra.mxu0 %v8322
    %v8324 = vand.u32 %v590, 4294901760
    %v8325 = vsub.f32 %v590, %v8324
    %8326 = vmatmul.f32.gmra.mxu0 %v8325
    %v8327 = vpop.f32.mrf.mxu0
    %v8328 = vadd.f32 %v8274, %v8327
    %8329 = vdwg.mxu0
    %v8330 = vand.u32 %v417, 4294901760
    %8331 = vmatpush.msra.mxu0 %v8330
    %v8332 = vand.u32 %v416, 4294901760
    %8333 = vmatpush.msra.mxu0 %v8332
    %v8334 = vand.u32 %v415, 4294901760
    %8335 = vmatpush.msra.mxu0 %v8334
    %v8336 = vand.u32 %v414, 4294901760
    %8337 = vmatpush.msra.mxu0 %v8336
    %v8338 = vand.u32 %v413, 4294901760
    %8339 = vmatpush.msra.mxu0 %v8338
    %v8340 = vand.u32 %v412, 4294901760
    %8341 = vmatpush.msra.mxu0 %v8340
    %v8342 = vand.u32 %v411, 4294901760
    %8343 = vmatpush.msra.mxu0 %v8342
    %v8344 = vand.u32 %v410, 4294901760
    %8345 = vmatpush.msra.mxu0 %v8344
    %v8346 = vand.u32 %v409, 4294901760
    %8347 = vmatpush.msra.mxu0 %v8346
    %v8348 = vand.u32 %v408, 4294901760
    %8349 = vmatpush.msra.mxu0 %v8348
    %v8350 = vand.u32 %v407, 4294901760
    %8351 = vmatpush.msra.mxu0 %v8350
    %v8352 = vand.u32 %v406, 4294901760
    %8353 = vmatpush.msra.mxu0 %v8352
    %v8354 = vand.u32 %v405, 4294901760
    %8355 = vmatpush.msra.mxu0 %v8354
    %v8356 = vand.u32 %v404, 4294901760
    %8357 = vmatpush.msra.mxu0 %v8356
    %v8358 = vand.u32 %v403, 4294901760
    %8359 = vmatpush.msra.mxu0 %v8358
    %v8360 = vand.u32 %v402, 4294901760
    %8361 = vmatpush.msra.mxu0 %v8360
    %v8362 = vand.u32 %v590, 4294901760
    %v8363 = vsub.f32 %v590, %v8362
    %v8364 = vand.u32 %v8363, 4294901760
    %8365 = vmatmul.f32.gmra.mxu0 %v8364
    %v8366 = vpop.f32.mrf.mxu0
    %v8367 = vadd.f32 %v8328, %v8366
    %8368 = vdwg.mxu0
    %v8369 = vand.u32 %v417, 4294901760
    %v8370 = vsub.f32 %v417, %v8369
    %v8371 = vand.u32 %v8370, 4294901760
    %8372 = vmatpush.msra.mxu0 %v8371
    %v8373 = vand.u32 %v416, 4294901760
    %v8374 = vsub.f32 %v416, %v8373
    %v8375 = vand.u32 %v8374, 4294901760
    %8376 = vmatpush.msra.mxu0 %v8375
    %v8377 = vand.u32 %v415, 4294901760
    %v8378 = vsub.f32 %v415, %v8377
    %v8379 = vand.u32 %v8378, 4294901760
    %8380 = vmatpush.msra.mxu0 %v8379
    %v8381 = vand.u32 %v414, 4294901760
    %v8382 = vsub.f32 %v414, %v8381
    %v8383 = vand.u32 %v8382, 4294901760
    %8384 = vmatpush.msra.mxu0 %v8383
    %v8385 = vand.u32 %v413, 4294901760
    %v8386 = vsub.f32 %v413, %v8385
    %v8387 = vand.u32 %v8386, 4294901760
    %8388 = vmatpush.msra.mxu0 %v8387
    %v8389 = vand.u32 %v412, 4294901760
    %v8390 = vsub.f32 %v412, %v8389
    %v8391 = vand.u32 %v8390, 4294901760
    %8392 = vmatpush.msra.mxu0 %v8391
    %v8393 = vand.u32 %v411, 4294901760
    %v8394 = vsub.f32 %v411, %v8393
    %v8395 = vand.u32 %v8394, 4294901760
    %8396 = vmatpush.msra.mxu0 %v8395
    %v8397 = vand.u32 %v410, 4294901760
    %v8398 = vsub.f32 %v410, %v8397
    %v8399 = vand.u32 %v8398, 4294901760
    %8400 = vmatpush.msra.mxu0 %v8399
    %v8401 = vand.u32 %v409, 4294901760
    %v8402 = vsub.f32 %v409, %v8401
    %v8403 = vand.u32 %v8402, 4294901760
    %8404 = vmatpush.msra.mxu0 %v8403
    %v8405 = vand.u32 %v408, 4294901760
    %v8406 = vsub.f32 %v408, %v8405
    %v8407 = vand.u32 %v8406, 4294901760
    %8408 = vmatpush.msra.mxu0 %v8407
    %v8409 = vand.u32 %v407, 4294901760
    %v8410 = vsub.f32 %v407, %v8409
    %v8411 = vand.u32 %v8410, 4294901760
    %8412 = vmatpush.msra.mxu0 %v8411
    %v8413 = vand.u32 %v406, 4294901760
    %v8414 = vsub.f32 %v406, %v8413
    %v8415 = vand.u32 %v8414, 4294901760
    %8416 = vmatpush.msra.mxu0 %v8415
    %v8417 = vand.u32 %v405, 4294901760
    %v8418 = vsub.f32 %v405, %v8417
    %v8419 = vand.u32 %v8418, 4294901760
    %8420 = vmatpush.msra.mxu0 %v8419
    %v8421 = vand.u32 %v404, 4294901760
    %v8422 = vsub.f32 %v404, %v8421
    %v8423 = vand.u32 %v8422, 4294901760
    %8424 = vmatpush.msra.mxu0 %v8423
    %v8425 = vand.u32 %v403, 4294901760
    %v8426 = vsub.f32 %v403, %v8425
    %v8427 = vand.u32 %v8426, 4294901760
    %8428 = vmatpush.msra.mxu0 %v8427
    %v8429 = vand.u32 %v402, 4294901760
    %v8430 = vsub.f32 %v402, %v8429
    %v8431 = vand.u32 %v8430, 4294901760
    %8432 = vmatpush.msra.mxu0 %v8431
    %v8433 = vand.u32 %v590, 4294901760
    %8434 = vmatmul.f32.gmra.mxu0 %v8433
    %v8435 = vpop.f32.mrf.mxu0
    %v8436 = vadd.f32 %v8367, %v8435
    %8437 = vdwg.mxu0
    %v8438 = vand.u32 %v417, 4294901760
    %8439 = vmatpush.msra.mxu0 %v8438
    %v8440 = vand.u32 %v416, 4294901760
    %8441 = vmatpush.msra.mxu0 %v8440
    %v8442 = vand.u32 %v415, 4294901760
    %8443 = vmatpush.msra.mxu0 %v8442
    %v8444 = vand.u32 %v414, 4294901760
    %8445 = vmatpush.msra.mxu0 %v8444
    %v8446 = vand.u32 %v413, 4294901760
    %8447 = vmatpush.msra.mxu0 %v8446
    %v8448 = vand.u32 %v412, 4294901760
    %8449 = vmatpush.msra.mxu0 %v8448
    %v8450 = vand.u32 %v411, 4294901760
    %8451 = vmatpush.msra.mxu0 %v8450
    %v8452 = vand.u32 %v410, 4294901760
    %8453 = vmatpush.msra.mxu0 %v8452
    %v8454 = vand.u32 %v409, 4294901760
    %8455 = vmatpush.msra.mxu0 %v8454
    %v8456 = vand.u32 %v408, 4294901760
    %8457 = vmatpush.msra.mxu0 %v8456
    %v8458 = vand.u32 %v407, 4294901760
    %8459 = vmatpush.msra.mxu0 %v8458
    %v8460 = vand.u32 %v406, 4294901760
    %8461 = vmatpush.msra.mxu0 %v8460
    %v8462 = vand.u32 %v405, 4294901760
    %8463 = vmatpush.msra.mxu0 %v8462
    %v8464 = vand.u32 %v404, 4294901760
    %8465 = vmatpush.msra.mxu0 %v8464
    %v8466 = vand.u32 %v403, 4294901760
    %8467 = vmatpush.msra.mxu0 %v8466
    %v8468 = vand.u32 %v402, 4294901760
    %8469 = vmatpush.msra.mxu0 %v8468
    %v8470 = vand.u32 %v590, 4294901760
    %8471 = vmatmul.f32.gmra.mxu0 %v8470
    %v8472 = vpop.f32.mrf.mxu0
    %v8473 = vadd.f32 %v8436, %v8472
    %8474 = vdwg.mxu0
    %v8475 = vand.u32 %v433, 4294901760
    %8476 = vmatpush.msra.mxu0 %v8475
    %v8477 = vand.u32 %v432, 4294901760
    %8478 = vmatpush.msra.mxu0 %v8477
    %v8479 = vand.u32 %v431, 4294901760
    %8480 = vmatpush.msra.mxu0 %v8479
    %v8481 = vand.u32 %v430, 4294901760
    %8482 = vmatpush.msra.mxu0 %v8481
    %v8483 = vand.u32 %v429, 4294901760
    %8484 = vmatpush.msra.mxu0 %v8483
    %v8485 = vand.u32 %v428, 4294901760
    %8486 = vmatpush.msra.mxu0 %v8485
    %v8487 = vand.u32 %v427, 4294901760
    %8488 = vmatpush.msra.mxu0 %v8487
    %v8489 = vand.u32 %v426, 4294901760
    %8490 = vmatpush.msra.mxu0 %v8489
    %v8491 = vand.u32 %v425, 4294901760
    %8492 = vmatpush.msra.mxu0 %v8491
    %v8493 = vand.u32 %v424, 4294901760
    %8494 = vmatpush.msra.mxu0 %v8493
    %v8495 = vand.u32 %v423, 4294901760
    %8496 = vmatpush.msra.mxu0 %v8495
    %v8497 = vand.u32 %v422, 4294901760
    %8498 = vmatpush.msra.mxu0 %v8497
    %v8499 = vand.u32 %v421, 4294901760
    %8500 = vmatpush.msra.mxu0 %v8499
    %v8501 = vand.u32 %v420, 4294901760
    %8502 = vmatpush.msra.mxu0 %v8501
    %v8503 = vand.u32 %v419, 4294901760
    %8504 = vmatpush.msra.mxu0 %v8503
    %v8505 = vand.u32 %v418, 4294901760
    %8506 = vmatpush.msra.mxu0 %v8505
    %v8507 = vand.u32 %v591, 4294901760
    %v8508 = vsub.f32 %v591, %v8507
    %v8509 = vand.u32 %v8508, 4294901760
    %v8510 = vsub.f32 %v8508, %v8509
    %v8511 = vand.u32 %v8510, 4294901760
    %8512 = vmatmul.f32.gmra.mxu0 %v8511
    %v8513 = vpop.f32.mrf.mxu0
    %v8514 = vadd.f32 %v8473, %v8513
    %8515 = vdwg.mxu0
    %v8516 = vand.u32 %v433, 4294901760
    %v8517 = vsub.f32 %v433, %v8516
    %v8518 = vand.u32 %v8517, 4294901760
    %v8519 = vsub.f32 %v8517, %v8518
    %v8520 = vand.u32 %v8519, 4294901760
    %8521 = vmatpush.msra.mxu0 %v8520
    %v8522 = vand.u32 %v432, 4294901760
    %v8523 = vsub.f32 %v432, %v8522
    %v8524 = vand.u32 %v8523, 4294901760
    %v8525 = vsub.f32 %v8523, %v8524
    %v8526 = vand.u32 %v8525, 4294901760
    %8527 = vmatpush.msra.mxu0 %v8526
    %v8528 = vand.u32 %v431, 4294901760
    %v8529 = vsub.f32 %v431, %v8528
    %v8530 = vand.u32 %v8529, 4294901760
    %v8531 = vsub.f32 %v8529, %v8530
    %v8532 = vand.u32 %v8531, 4294901760
    %8533 = vmatpush.msra.mxu0 %v8532
    %v8534 = vand.u32 %v430, 4294901760
    %v8535 = vsub.f32 %v430, %v8534
    %v8536 = vand.u32 %v8535, 4294901760
    %v8537 = vsub.f32 %v8535, %v8536
    %v8538 = vand.u32 %v8537, 4294901760
    %8539 = vmatpush.msra.mxu0 %v8538
    %v8540 = vand.u32 %v429, 4294901760
    %v8541 = vsub.f32 %v429, %v8540
    %v8542 = vand.u32 %v8541, 4294901760
    %v8543 = vsub.f32 %v8541, %v8542
    %v8544 = vand.u32 %v8543, 4294901760
    %8545 = vmatpush.msra.mxu0 %v8544
    %v8546 = vand.u32 %v428, 4294901760
    %v8547 = vsub.f32 %v428, %v8546
    %v8548 = vand.u32 %v8547, 4294901760
    %v8549 = vsub.f32 %v8547, %v8548
    %v8550 = vand.u32 %v8549, 4294901760
    %8551 = vmatpush.msra.mxu0 %v8550
    %v8552 = vand.u32 %v427, 4294901760
    %v8553 = vsub.f32 %v427, %v8552
    %v8554 = vand.u32 %v8553, 4294901760
    %v8555 = vsub.f32 %v8553, %v8554
    %v8556 = vand.u32 %v8555, 4294901760
    %8557 = vmatpush.msra.mxu0 %v8556
    %v8558 = vand.u32 %v426, 4294901760
    %v8559 = vsub.f32 %v426, %v8558
    %v8560 = vand.u32 %v8559, 4294901760
    %v8561 = vsub.f32 %v8559, %v8560
    %v8562 = vand.u32 %v8561, 4294901760
    %8563 = vmatpush.msra.mxu0 %v8562
    %v8564 = vand.u32 %v425, 4294901760
    %v8565 = vsub.f32 %v425, %v8564
    %v8566 = vand.u32 %v8565, 4294901760
    %v8567 = vsub.f32 %v8565, %v8566
    %v8568 = vand.u32 %v8567, 4294901760
    %8569 = vmatpush.msra.mxu0 %v8568
    %v8570 = vand.u32 %v424, 4294901760
    %v8571 = vsub.f32 %v424, %v8570
    %v8572 = vand.u32 %v8571, 4294901760
    %v8573 = vsub.f32 %v8571, %v8572
    %v8574 = vand.u32 %v8573, 4294901760
    %8575 = vmatpush.msra.mxu0 %v8574
    %v8576 = vand.u32 %v423, 4294901760
    %v8577 = vsub.f32 %v423, %v8576
    %v8578 = vand.u32 %v8577, 4294901760
    %v8579 = vsub.f32 %v8577, %v8578
    %v8580 = vand.u32 %v8579, 4294901760
    %8581 = vmatpush.msra.mxu0 %v8580
    %v8582 = vand.u32 %v422, 4294901760
    %v8583 = vsub.f32 %v422, %v8582
    %v8584 = vand.u32 %v8583, 4294901760
    %v8585 = vsub.f32 %v8583, %v8584
    %v8586 = vand.u32 %v8585, 4294901760
    %8587 = vmatpush.msra.mxu0 %v8586
    %v8588 = vand.u32 %v421, 4294901760
    %v8589 = vsub.f32 %v421, %v8588
    %v8590 = vand.u32 %v8589, 4294901760
    %v8591 = vsub.f32 %v8589, %v8590
    %v8592 = vand.u32 %v8591, 4294901760
    %8593 = vmatpush.msra.mxu0 %v8592
    %v8594 = vand.u32 %v420, 4294901760
    %v8595 = vsub.f32 %v420, %v8594
    %v8596 = vand.u32 %v8595, 4294901760
    %v8597 = vsub.f32 %v8595, %v8596
    %v8598 = vand.u32 %v8597, 4294901760
    %8599 = vmatpush.msra.mxu0 %v8598
    %v8600 = vand.u32 %v419, 4294901760
    %v8601 = vsub.f32 %v419, %v8600
    %v8602 = vand.u32 %v8601, 4294901760
    %v8603 = vsub.f32 %v8601, %v8602
    %v8604 = vand.u32 %v8603, 4294901760
    %8605 = vmatpush.msra.mxu0 %v8604
    %v8606 = vand.u32 %v418, 4294901760
    %v8607 = vsub.f32 %v418, %v8606
    %v8608 = vand.u32 %v8607, 4294901760
    %v8609 = vsub.f32 %v8607, %v8608
    %v8610 = vand.u32 %v8609, 4294901760
    %8611 = vmatpush.msra.mxu0 %v8610
    %v8612 = vand.u32 %v591, 4294901760
    %8613 = vmatmul.f32.gmra.mxu0 %v8612
    %v8614 = vpop.f32.mrf.mxu0
    %v8615 = vadd.f32 %v8514, %v8614
    %8616 = vdwg.mxu0
    %v8617 = vand.u32 %v433, 4294901760
    %v8618 = vsub.f32 %v433, %v8617
    %8619 = vmatpush.msra.mxu0 %v8618
    %v8620 = vand.u32 %v432, 4294901760
    %v8621 = vsub.f32 %v432, %v8620
    %8622 = vmatpush.msra.mxu0 %v8621
    %v8623 = vand.u32 %v431, 4294901760
    %v8624 = vsub.f32 %v431, %v8623
    %8625 = vmatpush.msra.mxu0 %v8624
    %v8626 = vand.u32 %v430, 4294901760
    %v8627 = vsub.f32 %v430, %v8626
    %8628 = vmatpush.msra.mxu0 %v8627
    %v8629 = vand.u32 %v429, 4294901760
    %v8630 = vsub.f32 %v429, %v8629
    %8631 = vmatpush.msra.mxu0 %v8630
    %v8632 = vand.u32 %v428, 4294901760
    %v8633 = vsub.f32 %v428, %v8632
    %8634 = vmatpush.msra.mxu0 %v8633
    %v8635 = vand.u32 %v427, 4294901760
    %v8636 = vsub.f32 %v427, %v8635
    %8637 = vmatpush.msra.mxu0 %v8636
    %v8638 = vand.u32 %v426, 4294901760
    %v8639 = vsub.f32 %v426, %v8638
    %8640 = vmatpush.msra.mxu0 %v8639
    %v8641 = vand.u32 %v425, 4294901760
    %v8642 = vsub.f32 %v425, %v8641
    %8643 = vmatpush.msra.mxu0 %v8642
    %v8644 = vand.u32 %v424, 4294901760
    %v8645 = vsub.f32 %v424, %v8644
    %8646 = vmatpush.msra.mxu0 %v8645
    %v8647 = vand.u32 %v423, 4294901760
    %v8648 = vsub.f32 %v423, %v8647
    %8649 = vmatpush.msra.mxu0 %v8648
    %v8650 = vand.u32 %v422, 4294901760
    %v8651 = vsub.f32 %v422, %v8650
    %8652 = vmatpush.msra.mxu0 %v8651
    %v8653 = vand.u32 %v421, 4294901760
    %v8654 = vsub.f32 %v421, %v8653
    %8655 = vmatpush.msra.mxu0 %v8654
    %v8656 = vand.u32 %v420, 4294901760
    %v8657 = vsub.f32 %v420, %v8656
    %8658 = vmatpush.msra.mxu0 %v8657
    %v8659 = vand.u32 %v419, 4294901760
    %v8660 = vsub.f32 %v419, %v8659
    %8661 = vmatpush.msra.mxu0 %v8660
    %v8662 = vand.u32 %v418, 4294901760
    %v8663 = vsub.f32 %v418, %v8662
    %8664 = vmatpush.msra.mxu0 %v8663
    %v8665 = vand.u32 %v591, 4294901760
    %v8666 = vsub.f32 %v591, %v8665
    %8667 = vmatmul.f32.gmra.mxu0 %v8666
    %v8668 = vpop.f32.mrf.mxu0
    %v8669 = vadd.f32 %v8615, %v8668
    %8670 = vdwg.mxu0
    %v8671 = vand.u32 %v433, 4294901760
    %8672 = vmatpush.msra.mxu0 %v8671
    %v8673 = vand.u32 %v432, 4294901760
    %8674 = vmatpush.msra.mxu0 %v8673
    %v8675 = vand.u32 %v431, 4294901760
    %8676 = vmatpush.msra.mxu0 %v8675
    %v8677 = vand.u32 %v430, 4294901760
    %8678 = vmatpush.msra.mxu0 %v8677
    %v8679 = vand.u32 %v429, 4294901760
    %8680 = vmatpush.msra.mxu0 %v8679
    %v8681 = vand.u32 %v428, 4294901760
    %8682 = vmatpush.msra.mxu0 %v8681
    %v8683 = vand.u32 %v427, 4294901760
    %8684 = vmatpush.msra.mxu0 %v8683
    %v8685 = vand.u32 %v426, 4294901760
    %8686 = vmatpush.msra.mxu0 %v8685
    %v8687 = vand.u32 %v425, 4294901760
    %8688 = vmatpush.msra.mxu0 %v8687
    %v8689 = vand.u32 %v424, 4294901760
    %8690 = vmatpush.msra.mxu0 %v8689
    %v8691 = vand.u32 %v423, 4294901760
    %8692 = vmatpush.msra.mxu0 %v8691
    %v8693 = vand.u32 %v422, 4294901760
    %8694 = vmatpush.msra.mxu0 %v8693
    %v8695 = vand.u32 %v421, 4294901760
    %8696 = vmatpush.msra.mxu0 %v8695
    %v8697 = vand.u32 %v420, 4294901760
    %8698 = vmatpush.msra.mxu0 %v8697
    %v8699 = vand.u32 %v419, 4294901760
    %8700 = vmatpush.msra.mxu0 %v8699
    %v8701 = vand.u32 %v418, 4294901760
    %8702 = vmatpush.msra.mxu0 %v8701
    %v8703 = vand.u32 %v591, 4294901760
    %v8704 = vsub.f32 %v591, %v8703
    %v8705 = vand.u32 %v8704, 4294901760
    %8706 = vmatmul.f32.gmra.mxu0 %v8705
    %v8707 = vpop.f32.mrf.mxu0
    %v8708 = vadd.f32 %v8669, %v8707
    %8709 = vdwg.mxu0
    %v8710 = vand.u32 %v433, 4294901760
    %v8711 = vsub.f32 %v433, %v8710
    %v8712 = vand.u32 %v8711, 4294901760
    %8713 = vmatpush.msra.mxu0 %v8712
    %v8714 = vand.u32 %v432, 4294901760
    %v8715 = vsub.f32 %v432, %v8714
    %v8716 = vand.u32 %v8715, 4294901760
    %8717 = vmatpush.msra.mxu0 %v8716
    %v8718 = vand.u32 %v431, 4294901760
    %v8719 = vsub.f32 %v431, %v8718
    %v8720 = vand.u32 %v8719, 4294901760
    %8721 = vmatpush.msra.mxu0 %v8720
    %v8722 = vand.u32 %v430, 4294901760
    %v8723 = vsub.f32 %v430, %v8722
    %v8724 = vand.u32 %v8723, 4294901760
    %8725 = vmatpush.msra.mxu0 %v8724
    %v8726 = vand.u32 %v429, 4294901760
    %v8727 = vsub.f32 %v429, %v8726
    %v8728 = vand.u32 %v8727, 4294901760
    %8729 = vmatpush.msra.mxu0 %v8728
    %v8730 = vand.u32 %v428, 4294901760
    %v8731 = vsub.f32 %v428, %v8730
    %v8732 = vand.u32 %v8731, 4294901760
    %8733 = vmatpush.msra.mxu0 %v8732
    %v8734 = vand.u32 %v427, 4294901760
    %v8735 = vsub.f32 %v427, %v8734
    %v8736 = vand.u32 %v8735, 4294901760
    %8737 = vmatpush.msra.mxu0 %v8736
    %v8738 = vand.u32 %v426, 4294901760
    %v8739 = vsub.f32 %v426, %v8738
    %v8740 = vand.u32 %v8739, 4294901760
    %8741 = vmatpush.msra.mxu0 %v8740
    %v8742 = vand.u32 %v425, 4294901760
    %v8743 = vsub.f32 %v425, %v8742
    %v8744 = vand.u32 %v8743, 4294901760
    %8745 = vmatpush.msra.mxu0 %v8744
    %v8746 = vand.u32 %v424, 4294901760
    %v8747 = vsub.f32 %v424, %v8746
    %v8748 = vand.u32 %v8747, 4294901760
    %8749 = vmatpush.msra.mxu0 %v8748
    %v8750 = vand.u32 %v423, 4294901760
    %v8751 = vsub.f32 %v423, %v8750
    %v8752 = vand.u32 %v8751, 4294901760
    %8753 = vmatpush.msra.mxu0 %v8752
    %v8754 = vand.u32 %v422, 4294901760
    %v8755 = vsub.f32 %v422, %v8754
    %v8756 = vand.u32 %v8755, 4294901760
    %8757 = vmatpush.msra.mxu0 %v8756
    %v8758 = vand.u32 %v421, 4294901760
    %v8759 = vsub.f32 %v421, %v8758
    %v8760 = vand.u32 %v8759, 4294901760
    %8761 = vmatpush.msra.mxu0 %v8760
    %v8762 = vand.u32 %v420, 4294901760
    %v8763 = vsub.f32 %v420, %v8762
    %v8764 = vand.u32 %v8763, 4294901760
    %8765 = vmatpush.msra.mxu0 %v8764
    %v8766 = vand.u32 %v419, 4294901760
    %v8767 = vsub.f32 %v419, %v8766
    %v8768 = vand.u32 %v8767, 4294901760
    %8769 = vmatpush.msra.mxu0 %v8768
    %v8770 = vand.u32 %v418, 4294901760
    %v8771 = vsub.f32 %v418, %v8770
    %v8772 = vand.u32 %v8771, 4294901760
    %8773 = vmatpush.msra.mxu0 %v8772
    %v8774 = vand.u32 %v591, 4294901760
    %8775 = vmatmul.f32.gmra.mxu0 %v8774
    %v8776 = vpop.f32.mrf.mxu0
    %v8777 = vadd.f32 %v8708, %v8776
    %8778 = vdwg.mxu0
    %v8779 = vand.u32 %v433, 4294901760
    %8780 = vmatpush.msra.mxu0 %v8779
    %v8781 = vand.u32 %v432, 4294901760
    %8782 = vmatpush.msra.mxu0 %v8781
    %v8783 = vand.u32 %v431, 4294901760
    %8784 = vmatpush.msra.mxu0 %v8783
    %v8785 = vand.u32 %v430, 4294901760
    %8786 = vmatpush.msra.mxu0 %v8785
    %v8787 = vand.u32 %v429, 4294901760
    %8788 = vmatpush.msra.mxu0 %v8787
    %v8789 = vand.u32 %v428, 4294901760
    %8790 = vmatpush.msra.mxu0 %v8789
    %v8791 = vand.u32 %v427, 4294901760
    %8792 = vmatpush.msra.mxu0 %v8791
    %v8793 = vand.u32 %v426, 4294901760
    %8794 = vmatpush.msra.mxu0 %v8793
    %v8795 = vand.u32 %v425, 4294901760
    %8796 = vmatpush.msra.mxu0 %v8795
    %v8797 = vand.u32 %v424, 4294901760
    %8798 = vmatpush.msra.mxu0 %v8797
    %v8799 = vand.u32 %v423, 4294901760
    %8800 = vmatpush.msra.mxu0 %v8799
    %v8801 = vand.u32 %v422, 4294901760
    %8802 = vmatpush.msra.mxu0 %v8801
    %v8803 = vand.u32 %v421, 4294901760
    %8804 = vmatpush.msra.mxu0 %v8803
    %v8805 = vand.u32 %v420, 4294901760
    %8806 = vmatpush.msra.mxu0 %v8805
    %v8807 = vand.u32 %v419, 4294901760
    %8808 = vmatpush.msra.mxu0 %v8807
    %v8809 = vand.u32 %v418, 4294901760
    %8810 = vmatpush.msra.mxu0 %v8809
    %v8811 = vand.u32 %v591, 4294901760
    %8812 = vmatmul.f32.gmra.mxu0 %v8811
    %v8813 = vpop.f32.mrf.mxu0
    %v8814 = vadd.f32 %v8777, %v8813
    %8815 = vdwg.mxu0
    %v8816 = vand.u32 %v449, 4294901760
    %8817 = vmatpush.msra.mxu0 %v8816
    %v8818 = vand.u32 %v448, 4294901760
    %8819 = vmatpush.msra.mxu0 %v8818
    %v8820 = vand.u32 %v447, 4294901760
    %8821 = vmatpush.msra.mxu0 %v8820
    %v8822 = vand.u32 %v446, 4294901760
    %8823 = vmatpush.msra.mxu0 %v8822
    %v8824 = vand.u32 %v445, 4294901760
    %8825 = vmatpush.msra.mxu0 %v8824
    %v8826 = vand.u32 %v444, 4294901760
    %8827 = vmatpush.msra.mxu0 %v8826
    %v8828 = vand.u32 %v443, 4294901760
    %8829 = vmatpush.msra.mxu0 %v8828
    %v8830 = vand.u32 %v442, 4294901760
    %8831 = vmatpush.msra.mxu0 %v8830
    %v8832 = vand.u32 %v441, 4294901760
    %8833 = vmatpush.msra.mxu0 %v8832
    %v8834 = vand.u32 %v440, 4294901760
    %8835 = vmatpush.msra.mxu0 %v8834
    %v8836 = vand.u32 %v439, 4294901760
    %8837 = vmatpush.msra.mxu0 %v8836
    %v8838 = vand.u32 %v438, 4294901760
    %8839 = vmatpush.msra.mxu0 %v8838
    %v8840 = vand.u32 %v437, 4294901760
    %8841 = vmatpush.msra.mxu0 %v8840
    %v8842 = vand.u32 %v436, 4294901760
    %8843 = vmatpush.msra.mxu0 %v8842
    %v8844 = vand.u32 %v435, 4294901760
    %8845 = vmatpush.msra.mxu0 %v8844
    %v8846 = vand.u32 %v434, 4294901760
    %8847 = vmatpush.msra.mxu0 %v8846
    %v8848 = vand.u32 %v592, 4294901760
    %v8849 = vsub.f32 %v592, %v8848
    %v8850 = vand.u32 %v8849, 4294901760
    %v8851 = vsub.f32 %v8849, %v8850
    %v8852 = vand.u32 %v8851, 4294901760
    %8853 = vmatmul.f32.gmra.mxu0 %v8852
    %v8854 = vpop.f32.mrf.mxu0
    %v8855 = vadd.f32 %v8814, %v8854
    %8856 = vdwg.mxu0
    %v8857 = vand.u32 %v449, 4294901760
    %v8858 = vsub.f32 %v449, %v8857
    %v8859 = vand.u32 %v8858, 4294901760
    %v8860 = vsub.f32 %v8858, %v8859
    %v8861 = vand.u32 %v8860, 4294901760
    %8862 = vmatpush.msra.mxu0 %v8861
    %v8863 = vand.u32 %v448, 4294901760
    %v8864 = vsub.f32 %v448, %v8863
    %v8865 = vand.u32 %v8864, 4294901760
    %v8866 = vsub.f32 %v8864, %v8865
    %v8867 = vand.u32 %v8866, 4294901760
    %8868 = vmatpush.msra.mxu0 %v8867
    %v8869 = vand.u32 %v447, 4294901760
    %v8870 = vsub.f32 %v447, %v8869
    %v8871 = vand.u32 %v8870, 4294901760
    %v8872 = vsub.f32 %v8870, %v8871
    %v8873 = vand.u32 %v8872, 4294901760
    %8874 = vmatpush.msra.mxu0 %v8873
    %v8875 = vand.u32 %v446, 4294901760
    %v8876 = vsub.f32 %v446, %v8875
    %v8877 = vand.u32 %v8876, 4294901760
    %v8878 = vsub.f32 %v8876, %v8877
    %v8879 = vand.u32 %v8878, 4294901760
    %8880 = vmatpush.msra.mxu0 %v8879
    %v8881 = vand.u32 %v445, 4294901760
    %v8882 = vsub.f32 %v445, %v8881
    %v8883 = vand.u32 %v8882, 4294901760
    %v8884 = vsub.f32 %v8882, %v8883
    %v8885 = vand.u32 %v8884, 4294901760
    %8886 = vmatpush.msra.mxu0 %v8885
    %v8887 = vand.u32 %v444, 4294901760
    %v8888 = vsub.f32 %v444, %v8887
    %v8889 = vand.u32 %v8888, 4294901760
    %v8890 = vsub.f32 %v8888, %v8889
    %v8891 = vand.u32 %v8890, 4294901760
    %8892 = vmatpush.msra.mxu0 %v8891
    %v8893 = vand.u32 %v443, 4294901760
    %v8894 = vsub.f32 %v443, %v8893
    %v8895 = vand.u32 %v8894, 4294901760
    %v8896 = vsub.f32 %v8894, %v8895
    %v8897 = vand.u32 %v8896, 4294901760
    %8898 = vmatpush.msra.mxu0 %v8897
    %v8899 = vand.u32 %v442, 4294901760
    %v8900 = vsub.f32 %v442, %v8899
    %v8901 = vand.u32 %v8900, 4294901760
    %v8902 = vsub.f32 %v8900, %v8901
    %v8903 = vand.u32 %v8902, 4294901760
    %8904 = vmatpush.msra.mxu0 %v8903
    %v8905 = vand.u32 %v441, 4294901760
    %v8906 = vsub.f32 %v441, %v8905
    %v8907 = vand.u32 %v8906, 4294901760
    %v8908 = vsub.f32 %v8906, %v8907
    %v8909 = vand.u32 %v8908, 4294901760
    %8910 = vmatpush.msra.mxu0 %v8909
    %v8911 = vand.u32 %v440, 4294901760
    %v8912 = vsub.f32 %v440, %v8911
    %v8913 = vand.u32 %v8912, 4294901760
    %v8914 = vsub.f32 %v8912, %v8913
    %v8915 = vand.u32 %v8914, 4294901760
    %8916 = vmatpush.msra.mxu0 %v8915
    %v8917 = vand.u32 %v439, 4294901760
    %v8918 = vsub.f32 %v439, %v8917
    %v8919 = vand.u32 %v8918, 4294901760
    %v8920 = vsub.f32 %v8918, %v8919
    %v8921 = vand.u32 %v8920, 4294901760
    %8922 = vmatpush.msra.mxu0 %v8921
    %v8923 = vand.u32 %v438, 4294901760
    %v8924 = vsub.f32 %v438, %v8923
    %v8925 = vand.u32 %v8924, 4294901760
    %v8926 = vsub.f32 %v8924, %v8925
    %v8927 = vand.u32 %v8926, 4294901760
    %8928 = vmatpush.msra.mxu0 %v8927
    %v8929 = vand.u32 %v437, 4294901760
    %v8930 = vsub.f32 %v437, %v8929
    %v8931 = vand.u32 %v8930, 4294901760
    %v8932 = vsub.f32 %v8930, %v8931
    %v8933 = vand.u32 %v8932, 4294901760
    %8934 = vmatpush.msra.mxu0 %v8933
    %v8935 = vand.u32 %v436, 4294901760
    %v8936 = vsub.f32 %v436, %v8935
    %v8937 = vand.u32 %v8936, 4294901760
    %v8938 = vsub.f32 %v8936, %v8937
    %v8939 = vand.u32 %v8938, 4294901760
    %8940 = vmatpush.msra.mxu0 %v8939
    %v8941 = vand.u32 %v435, 4294901760
    %v8942 = vsub.f32 %v435, %v8941
    %v8943 = vand.u32 %v8942, 4294901760
    %v8944 = vsub.f32 %v8942, %v8943
    %v8945 = vand.u32 %v8944, 4294901760
    %8946 = vmatpush.msra.mxu0 %v8945
    %v8947 = vand.u32 %v434, 4294901760
    %v8948 = vsub.f32 %v434, %v8947
    %v8949 = vand.u32 %v8948, 4294901760
    %v8950 = vsub.f32 %v8948, %v8949
    %v8951 = vand.u32 %v8950, 4294901760
    %8952 = vmatpush.msra.mxu0 %v8951
    %v8953 = vand.u32 %v592, 4294901760
    %8954 = vmatmul.f32.gmra.mxu0 %v8953
    %v8955 = vpop.f32.mrf.mxu0
    %v8956 = vadd.f32 %v8855, %v8955
    %8957 = vdwg.mxu0
    %v8958 = vand.u32 %v449, 4294901760
    %v8959 = vsub.f32 %v449, %v8958
    %8960 = vmatpush.msra.mxu0 %v8959
    %v8961 = vand.u32 %v448, 4294901760
    %v8962 = vsub.f32 %v448, %v8961
    %8963 = vmatpush.msra.mxu0 %v8962
    %v8964 = vand.u32 %v447, 4294901760
    %v8965 = vsub.f32 %v447, %v8964
    %8966 = vmatpush.msra.mxu0 %v8965
    %v8967 = vand.u32 %v446, 4294901760
    %v8968 = vsub.f32 %v446, %v8967
    %8969 = vmatpush.msra.mxu0 %v8968
    %v8970 = vand.u32 %v445, 4294901760
    %v8971 = vsub.f32 %v445, %v8970
    %8972 = vmatpush.msra.mxu0 %v8971
    %v8973 = vand.u32 %v444, 4294901760
    %v8974 = vsub.f32 %v444, %v8973
    %8975 = vmatpush.msra.mxu0 %v8974
    %v8976 = vand.u32 %v443, 4294901760
    %v8977 = vsub.f32 %v443, %v8976
    %8978 = vmatpush.msra.mxu0 %v8977
    %v8979 = vand.u32 %v442, 4294901760
    %v8980 = vsub.f32 %v442, %v8979
    %8981 = vmatpush.msra.mxu0 %v8980
    %v8982 = vand.u32 %v441, 4294901760
    %v8983 = vsub.f32 %v441, %v8982
    %8984 = vmatpush.msra.mxu0 %v8983
    %v8985 = vand.u32 %v440, 4294901760
    %v8986 = vsub.f32 %v440, %v8985
    %8987 = vmatpush.msra.mxu0 %v8986
    %v8988 = vand.u32 %v439, 4294901760
    %v8989 = vsub.f32 %v439, %v8988
    %8990 = vmatpush.msra.mxu0 %v8989
    %v8991 = vand.u32 %v438, 4294901760
    %v8992 = vsub.f32 %v438, %v8991
    %8993 = vmatpush.msra.mxu0 %v8992
    %v8994 = vand.u32 %v437, 4294901760
    %v8995 = vsub.f32 %v437, %v8994
    %8996 = vmatpush.msra.mxu0 %v8995
    %v8997 = vand.u32 %v436, 4294901760
    %v8998 = vsub.f32 %v436, %v8997
    %8999 = vmatpush.msra.mxu0 %v8998
    %v9000 = vand.u32 %v435, 4294901760
    %v9001 = vsub.f32 %v435, %v9000
    %9002 = vmatpush.msra.mxu0 %v9001
    %v9003 = vand.u32 %v434, 4294901760
    %v9004 = vsub.f32 %v434, %v9003
    %9005 = vmatpush.msra.mxu0 %v9004
    %v9006 = vand.u32 %v592, 4294901760
    %v9007 = vsub.f32 %v592, %v9006
    %9008 = vmatmul.f32.gmra.mxu0 %v9007
    %v9009 = vpop.f32.mrf.mxu0
    %v9010 = vadd.f32 %v8956, %v9009
    %9011 = vdwg.mxu0
    %v9012 = vand.u32 %v449, 4294901760
    %9013 = vmatpush.msra.mxu0 %v9012
    %v9014 = vand.u32 %v448, 4294901760
    %9015 = vmatpush.msra.mxu0 %v9014
    %v9016 = vand.u32 %v447, 4294901760
    %9017 = vmatpush.msra.mxu0 %v9016
    %v9018 = vand.u32 %v446, 4294901760
    %9019 = vmatpush.msra.mxu0 %v9018
    %v9020 = vand.u32 %v445, 4294901760
    %9021 = vmatpush.msra.mxu0 %v9020
    %v9022 = vand.u32 %v444, 4294901760
    %9023 = vmatpush.msra.mxu0 %v9022
    %v9024 = vand.u32 %v443, 4294901760
    %9025 = vmatpush.msra.mxu0 %v9024
    %v9026 = vand.u32 %v442, 4294901760
    %9027 = vmatpush.msra.mxu0 %v9026
    %v9028 = vand.u32 %v441, 4294901760
    %9029 = vmatpush.msra.mxu0 %v9028
    %v9030 = vand.u32 %v440, 4294901760
    %9031 = vmatpush.msra.mxu0 %v9030
    %v9032 = vand.u32 %v439, 4294901760
    %9033 = vmatpush.msra.mxu0 %v9032
    %v9034 = vand.u32 %v438, 4294901760
    %9035 = vmatpush.msra.mxu0 %v9034
    %v9036 = vand.u32 %v437, 4294901760
    %9037 = vmatpush.msra.mxu0 %v9036
    %v9038 = vand.u32 %v436, 4294901760
    %9039 = vmatpush.msra.mxu0 %v9038
    %v9040 = vand.u32 %v435, 4294901760
    %9041 = vmatpush.msra.mxu0 %v9040
    %v9042 = vand.u32 %v434, 4294901760
    %9043 = vmatpush.msra.mxu0 %v9042
    %v9044 = vand.u32 %v592, 4294901760
    %v9045 = vsub.f32 %v592, %v9044
    %v9046 = vand.u32 %v9045, 4294901760
    %9047 = vmatmul.f32.gmra.mxu0 %v9046
    %v9048 = vpop.f32.mrf.mxu0
    %v9049 = vadd.f32 %v9010, %v9048
    %9050 = vdwg.mxu0
    %v9051 = vand.u32 %v449, 4294901760
    %v9052 = vsub.f32 %v449, %v9051
    %v9053 = vand.u32 %v9052, 4294901760
    %9054 = vmatpush.msra.mxu0 %v9053
    %v9055 = vand.u32 %v448, 4294901760
    %v9056 = vsub.f32 %v448, %v9055
    %v9057 = vand.u32 %v9056, 4294901760
    %9058 = vmatpush.msra.mxu0 %v9057
    %v9059 = vand.u32 %v447, 4294901760
    %v9060 = vsub.f32 %v447, %v9059
    %v9061 = vand.u32 %v9060, 4294901760
    %9062 = vmatpush.msra.mxu0 %v9061
    %v9063 = vand.u32 %v446, 4294901760
    %v9064 = vsub.f32 %v446, %v9063
    %v9065 = vand.u32 %v9064, 4294901760
    %9066 = vmatpush.msra.mxu0 %v9065
    %v9067 = vand.u32 %v445, 4294901760
    %v9068 = vsub.f32 %v445, %v9067
    %v9069 = vand.u32 %v9068, 4294901760
    %9070 = vmatpush.msra.mxu0 %v9069
    %v9071 = vand.u32 %v444, 4294901760
    %v9072 = vsub.f32 %v444, %v9071
    %v9073 = vand.u32 %v9072, 4294901760
    %9074 = vmatpush.msra.mxu0 %v9073
    %v9075 = vand.u32 %v443, 4294901760
    %v9076 = vsub.f32 %v443, %v9075
    %v9077 = vand.u32 %v9076, 4294901760
    %9078 = vmatpush.msra.mxu0 %v9077
    %v9079 = vand.u32 %v442, 4294901760
    %v9080 = vsub.f32 %v442, %v9079
    %v9081 = vand.u32 %v9080, 4294901760
    %9082 = vmatpush.msra.mxu0 %v9081
    %v9083 = vand.u32 %v441, 4294901760
    %v9084 = vsub.f32 %v441, %v9083
    %v9085 = vand.u32 %v9084, 4294901760
    %9086 = vmatpush.msra.mxu0 %v9085
    %v9087 = vand.u32 %v440, 4294901760
    %v9088 = vsub.f32 %v440, %v9087
    %v9089 = vand.u32 %v9088, 4294901760
    %9090 = vmatpush.msra.mxu0 %v9089
    %v9091 = vand.u32 %v439, 4294901760
    %v9092 = vsub.f32 %v439, %v9091
    %v9093 = vand.u32 %v9092, 4294901760
    %9094 = vmatpush.msra.mxu0 %v9093
    %v9095 = vand.u32 %v438, 4294901760
    %v9096 = vsub.f32 %v438, %v9095
    %v9097 = vand.u32 %v9096, 4294901760
    %9098 = vmatpush.msra.mxu0 %v9097
    %v9099 = vand.u32 %v437, 4294901760
    %v9100 = vsub.f32 %v437, %v9099
    %v9101 = vand.u32 %v9100, 4294901760
    %9102 = vmatpush.msra.mxu0 %v9101
    %v9103 = vand.u32 %v436, 4294901760
    %v9104 = vsub.f32 %v436, %v9103
    %v9105 = vand.u32 %v9104, 4294901760
    %9106 = vmatpush.msra.mxu0 %v9105
    %v9107 = vand.u32 %v435, 4294901760
    %v9108 = vsub.f32 %v435, %v9107
    %v9109 = vand.u32 %v9108, 4294901760
    %9110 = vmatpush.msra.mxu0 %v9109
    %v9111 = vand.u32 %v434, 4294901760
    %v9112 = vsub.f32 %v434, %v9111
    %v9113 = vand.u32 %v9112, 4294901760
    %9114 = vmatpush.msra.mxu0 %v9113
    %v9115 = vand.u32 %v592, 4294901760
    %9116 = vmatmul.f32.gmra.mxu0 %v9115
    %v9117 = vpop.f32.mrf.mxu0
    %v9118 = vadd.f32 %v9049, %v9117
    %9119 = vdwg.mxu0
    %v9120 = vand.u32 %v449, 4294901760
    %9121 = vmatpush.msra.mxu0 %v9120
    %v9122 = vand.u32 %v448, 4294901760
    %9123 = vmatpush.msra.mxu0 %v9122
    %v9124 = vand.u32 %v447, 4294901760
    %9125 = vmatpush.msra.mxu0 %v9124
    %v9126 = vand.u32 %v446, 4294901760
    %9127 = vmatpush.msra.mxu0 %v9126
    %v9128 = vand.u32 %v445, 4294901760
    %9129 = vmatpush.msra.mxu0 %v9128
    %v9130 = vand.u32 %v444, 4294901760
    %9131 = vmatpush.msra.mxu0 %v9130
    %v9132 = vand.u32 %v443, 4294901760
    %9133 = vmatpush.msra.mxu0 %v9132
    %v9134 = vand.u32 %v442, 4294901760
    %9135 = vmatpush.msra.mxu0 %v9134
    %v9136 = vand.u32 %v441, 4294901760
    %9137 = vmatpush.msra.mxu0 %v9136
    %v9138 = vand.u32 %v440, 4294901760
    %9139 = vmatpush.msra.mxu0 %v9138
    %v9140 = vand.u32 %v439, 4294901760
    %9141 = vmatpush.msra.mxu0 %v9140
    %v9142 = vand.u32 %v438, 4294901760
    %9143 = vmatpush.msra.mxu0 %v9142
    %v9144 = vand.u32 %v437, 4294901760
    %9145 = vmatpush.msra.mxu0 %v9144
    %v9146 = vand.u32 %v436, 4294901760
    %9147 = vmatpush.msra.mxu0 %v9146
    %v9148 = vand.u32 %v435, 4294901760
    %9149 = vmatpush.msra.mxu0 %v9148
    %v9150 = vand.u32 %v434, 4294901760
    %9151 = vmatpush.msra.mxu0 %v9150
    %v9152 = vand.u32 %v592, 4294901760
    %9153 = vmatmul.f32.gmra.mxu0 %v9152
    %v9154 = vpop.f32.mrf.mxu0
    %v9155 = vadd.f32 %v9118, %v9154
    %9156 = vdwg.mxu0
    %v9157 = vand.u32 %v465, 4294901760
    %9158 = vmatpush.msra.mxu0 %v9157
    %v9159 = vand.u32 %v464, 4294901760
    %9160 = vmatpush.msra.mxu0 %v9159
    %v9161 = vand.u32 %v463, 4294901760
    %9162 = vmatpush.msra.mxu0 %v9161
    %v9163 = vand.u32 %v462, 4294901760
    %9164 = vmatpush.msra.mxu0 %v9163
    %v9165 = vand.u32 %v461, 4294901760
    %9166 = vmatpush.msra.mxu0 %v9165
    %v9167 = vand.u32 %v460, 4294901760
    %9168 = vmatpush.msra.mxu0 %v9167
    %v9169 = vand.u32 %v459, 4294901760
    %9170 = vmatpush.msra.mxu0 %v9169
    %v9171 = vand.u32 %v458, 4294901760
    %9172 = vmatpush.msra.mxu0 %v9171
    %v9173 = vand.u32 %v457, 4294901760
    %9174 = vmatpush.msra.mxu0 %v9173
    %v9175 = vand.u32 %v456, 4294901760
    %9176 = vmatpush.msra.mxu0 %v9175
    %v9177 = vand.u32 %v455, 4294901760
    %9178 = vmatpush.msra.mxu0 %v9177
    %v9179 = vand.u32 %v454, 4294901760
    %9180 = vmatpush.msra.mxu0 %v9179
    %v9181 = vand.u32 %v453, 4294901760
    %9182 = vmatpush.msra.mxu0 %v9181
    %v9183 = vand.u32 %v452, 4294901760
    %9184 = vmatpush.msra.mxu0 %v9183
    %v9185 = vand.u32 %v451, 4294901760
    %9186 = vmatpush.msra.mxu0 %v9185
    %v9187 = vand.u32 %v450, 4294901760
    %9188 = vmatpush.msra.mxu0 %v9187
    %v9189 = vand.u32 %v593, 4294901760
    %v9190 = vsub.f32 %v593, %v9189
    %v9191 = vand.u32 %v9190, 4294901760
    %v9192 = vsub.f32 %v9190, %v9191
    %v9193 = vand.u32 %v9192, 4294901760
    %9194 = vmatmul.f32.gmra.mxu0 %v9193
    %v9195 = vpop.f32.mrf.mxu0
    %v9196 = vadd.f32 %v9155, %v9195
    %9197 = vdwg.mxu0
    %v9198 = vand.u32 %v465, 4294901760
    %v9199 = vsub.f32 %v465, %v9198
    %v9200 = vand.u32 %v9199, 4294901760
    %v9201 = vsub.f32 %v9199, %v9200
    %v9202 = vand.u32 %v9201, 4294901760
    %9203 = vmatpush.msra.mxu0 %v9202
    %v9204 = vand.u32 %v464, 4294901760
    %v9205 = vsub.f32 %v464, %v9204
    %v9206 = vand.u32 %v9205, 4294901760
    %v9207 = vsub.f32 %v9205, %v9206
    %v9208 = vand.u32 %v9207, 4294901760
    %9209 = vmatpush.msra.mxu0 %v9208
    %v9210 = vand.u32 %v463, 4294901760
    %v9211 = vsub.f32 %v463, %v9210
    %v9212 = vand.u32 %v9211, 4294901760
    %v9213 = vsub.f32 %v9211, %v9212
    %v9214 = vand.u32 %v9213, 4294901760
    %9215 = vmatpush.msra.mxu0 %v9214
    %v9216 = vand.u32 %v462, 4294901760
    %v9217 = vsub.f32 %v462, %v9216
    %v9218 = vand.u32 %v9217, 4294901760
    %v9219 = vsub.f32 %v9217, %v9218
    %v9220 = vand.u32 %v9219, 4294901760
    %9221 = vmatpush.msra.mxu0 %v9220
    %v9222 = vand.u32 %v461, 4294901760
    %v9223 = vsub.f32 %v461, %v9222
    %v9224 = vand.u32 %v9223, 4294901760
    %v9225 = vsub.f32 %v9223, %v9224
    %v9226 = vand.u32 %v9225, 4294901760
    %9227 = vmatpush.msra.mxu0 %v9226
    %v9228 = vand.u32 %v460, 4294901760
    %v9229 = vsub.f32 %v460, %v9228
    %v9230 = vand.u32 %v9229, 4294901760
    %v9231 = vsub.f32 %v9229, %v9230
    %v9232 = vand.u32 %v9231, 4294901760
    %9233 = vmatpush.msra.mxu0 %v9232
    %v9234 = vand.u32 %v459, 4294901760
    %v9235 = vsub.f32 %v459, %v9234
    %v9236 = vand.u32 %v9235, 4294901760
    %v9237 = vsub.f32 %v9235, %v9236
    %v9238 = vand.u32 %v9237, 4294901760
    %9239 = vmatpush.msra.mxu0 %v9238
    %v9240 = vand.u32 %v458, 4294901760
    %v9241 = vsub.f32 %v458, %v9240
    %v9242 = vand.u32 %v9241, 4294901760
    %v9243 = vsub.f32 %v9241, %v9242
    %v9244 = vand.u32 %v9243, 4294901760
    %9245 = vmatpush.msra.mxu0 %v9244
    %v9246 = vand.u32 %v457, 4294901760
    %v9247 = vsub.f32 %v457, %v9246
    %v9248 = vand.u32 %v9247, 4294901760
    %v9249 = vsub.f32 %v9247, %v9248
    %v9250 = vand.u32 %v9249, 4294901760
    %9251 = vmatpush.msra.mxu0 %v9250
    %v9252 = vand.u32 %v456, 4294901760
    %v9253 = vsub.f32 %v456, %v9252
    %v9254 = vand.u32 %v9253, 4294901760
    %v9255 = vsub.f32 %v9253, %v9254
    %v9256 = vand.u32 %v9255, 4294901760
    %9257 = vmatpush.msra.mxu0 %v9256
    %v9258 = vand.u32 %v455, 4294901760
    %v9259 = vsub.f32 %v455, %v9258
    %v9260 = vand.u32 %v9259, 4294901760
    %v9261 = vsub.f32 %v9259, %v9260
    %v9262 = vand.u32 %v9261, 4294901760
    %9263 = vmatpush.msra.mxu0 %v9262
    %v9264 = vand.u32 %v454, 4294901760
    %v9265 = vsub.f32 %v454, %v9264
    %v9266 = vand.u32 %v9265, 4294901760
    %v9267 = vsub.f32 %v9265, %v9266
    %v9268 = vand.u32 %v9267, 4294901760
    %9269 = vmatpush.msra.mxu0 %v9268
    %v9270 = vand.u32 %v453, 4294901760
    %v9271 = vsub.f32 %v453, %v9270
    %v9272 = vand.u32 %v9271, 4294901760
    %v9273 = vsub.f32 %v9271, %v9272
    %v9274 = vand.u32 %v9273, 4294901760
    %9275 = vmatpush.msra.mxu0 %v9274
    %v9276 = vand.u32 %v452, 4294901760
    %v9277 = vsub.f32 %v452, %v9276
    %v9278 = vand.u32 %v9277, 4294901760
    %v9279 = vsub.f32 %v9277, %v9278
    %v9280 = vand.u32 %v9279, 4294901760
    %9281 = vmatpush.msra.mxu0 %v9280
    %v9282 = vand.u32 %v451, 4294901760
    %v9283 = vsub.f32 %v451, %v9282
    %v9284 = vand.u32 %v9283, 4294901760
    %v9285 = vsub.f32 %v9283, %v9284
    %v9286 = vand.u32 %v9285, 4294901760
    %9287 = vmatpush.msra.mxu0 %v9286
    %v9288 = vand.u32 %v450, 4294901760
    %v9289 = vsub.f32 %v450, %v9288
    %v9290 = vand.u32 %v9289, 4294901760
    %v9291 = vsub.f32 %v9289, %v9290
    %v9292 = vand.u32 %v9291, 4294901760
    %9293 = vmatpush.msra.mxu0 %v9292
    %v9294 = vand.u32 %v593, 4294901760
    %9295 = vmatmul.f32.gmra.mxu0 %v9294
    %v9296 = vpop.f32.mrf.mxu0
    %v9297 = vadd.f32 %v9196, %v9296
    %9298 = vdwg.mxu0
    %v9299 = vand.u32 %v465, 4294901760
    %v9300 = vsub.f32 %v465, %v9299
    %9301 = vmatpush.msra.mxu0 %v9300
    %v9302 = vand.u32 %v464, 4294901760
    %v9303 = vsub.f32 %v464, %v9302
    %9304 = vmatpush.msra.mxu0 %v9303
    %v9305 = vand.u32 %v463, 4294901760
    %v9306 = vsub.f32 %v463, %v9305
    %9307 = vmatpush.msra.mxu0 %v9306
    %v9308 = vand.u32 %v462, 4294901760
    %v9309 = vsub.f32 %v462, %v9308
    %9310 = vmatpush.msra.mxu0 %v9309
    %v9311 = vand.u32 %v461, 4294901760
    %v9312 = vsub.f32 %v461, %v9311
    %9313 = vmatpush.msra.mxu0 %v9312
    %v9314 = vand.u32 %v460, 4294901760
    %v9315 = vsub.f32 %v460, %v9314
    %9316 = vmatpush.msra.mxu0 %v9315
    %v9317 = vand.u32 %v459, 4294901760
    %v9318 = vsub.f32 %v459, %v9317
    %9319 = vmatpush.msra.mxu0 %v9318
    %v9320 = vand.u32 %v458, 4294901760
    %v9321 = vsub.f32 %v458, %v9320
    %9322 = vmatpush.msra.mxu0 %v9321
    %v9323 = vand.u32 %v457, 4294901760
    %v9324 = vsub.f32 %v457, %v9323
    %9325 = vmatpush.msra.mxu0 %v9324
    %v9326 = vand.u32 %v456, 4294901760
    %v9327 = vsub.f32 %v456, %v9326
    %9328 = vmatpush.msra.mxu0 %v9327
    %v9329 = vand.u32 %v455, 4294901760
    %v9330 = vsub.f32 %v455, %v9329
    %9331 = vmatpush.msra.mxu0 %v9330
    %v9332 = vand.u32 %v454, 4294901760
    %v9333 = vsub.f32 %v454, %v9332
    %9334 = vmatpush.msra.mxu0 %v9333
    %v9335 = vand.u32 %v453, 4294901760
    %v9336 = vsub.f32 %v453, %v9335
    %9337 = vmatpush.msra.mxu0 %v9336
    %v9338 = vand.u32 %v452, 4294901760
    %v9339 = vsub.f32 %v452, %v9338
    %9340 = vmatpush.msra.mxu0 %v9339
    %v9341 = vand.u32 %v451, 4294901760
    %v9342 = vsub.f32 %v451, %v9341
    %9343 = vmatpush.msra.mxu0 %v9342
    %v9344 = vand.u32 %v450, 4294901760
    %v9345 = vsub.f32 %v450, %v9344
    %9346 = vmatpush.msra.mxu0 %v9345
    %v9347 = vand.u32 %v593, 4294901760
    %v9348 = vsub.f32 %v593, %v9347
    %9349 = vmatmul.f32.gmra.mxu0 %v9348
    %v9350 = vpop.f32.mrf.mxu0
    %v9351 = vadd.f32 %v9297, %v9350
    %9352 = vdwg.mxu0
    %v9353 = vand.u32 %v465, 4294901760
    %9354 = vmatpush.msra.mxu0 %v9353
    %v9355 = vand.u32 %v464, 4294901760
    %9356 = vmatpush.msra.mxu0 %v9355
    %v9357 = vand.u32 %v463, 4294901760
    %9358 = vmatpush.msra.mxu0 %v9357
    %v9359 = vand.u32 %v462, 4294901760
    %9360 = vmatpush.msra.mxu0 %v9359
    %v9361 = vand.u32 %v461, 4294901760
    %9362 = vmatpush.msra.mxu0 %v9361
    %v9363 = vand.u32 %v460, 4294901760
    %9364 = vmatpush.msra.mxu0 %v9363
    %v9365 = vand.u32 %v459, 4294901760
    %9366 = vmatpush.msra.mxu0 %v9365
    %v9367 = vand.u32 %v458, 4294901760
    %9368 = vmatpush.msra.mxu0 %v9367
    %v9369 = vand.u32 %v457, 4294901760
    %9370 = vmatpush.msra.mxu0 %v9369
    %v9371 = vand.u32 %v456, 4294901760
    %9372 = vmatpush.msra.mxu0 %v9371
    %v9373 = vand.u32 %v455, 4294901760
    %9374 = vmatpush.msra.mxu0 %v9373
    %v9375 = vand.u32 %v454, 4294901760
    %9376 = vmatpush.msra.mxu0 %v9375
    %v9377 = vand.u32 %v453, 4294901760
    %9378 = vmatpush.msra.mxu0 %v9377
    %v9379 = vand.u32 %v452, 4294901760
    %9380 = vmatpush.msra.mxu0 %v9379
    %v9381 = vand.u32 %v451, 4294901760
    %9382 = vmatpush.msra.mxu0 %v9381
    %v9383 = vand.u32 %v450, 4294901760
    %9384 = vmatpush.msra.mxu0 %v9383
    %v9385 = vand.u32 %v593, 4294901760
    %v9386 = vsub.f32 %v593, %v9385
    %v9387 = vand.u32 %v9386, 4294901760
    %9388 = vmatmul.f32.gmra.mxu0 %v9387
    %v9389 = vpop.f32.mrf.mxu0
    %v9390 = vadd.f32 %v9351, %v9389
    %9391 = vdwg.mxu0
    %v9392 = vand.u32 %v465, 4294901760
    %v9393 = vsub.f32 %v465, %v9392
    %v9394 = vand.u32 %v9393, 4294901760
    %9395 = vmatpush.msra.mxu0 %v9394
    %v9396 = vand.u32 %v464, 4294901760
    %v9397 = vsub.f32 %v464, %v9396
    %v9398 = vand.u32 %v9397, 4294901760
    %9399 = vmatpush.msra.mxu0 %v9398
    %v9400 = vand.u32 %v463, 4294901760
    %v9401 = vsub.f32 %v463, %v9400
    %v9402 = vand.u32 %v9401, 4294901760
    %9403 = vmatpush.msra.mxu0 %v9402
    %v9404 = vand.u32 %v462, 4294901760
    %v9405 = vsub.f32 %v462, %v9404
    %v9406 = vand.u32 %v9405, 4294901760
    %9407 = vmatpush.msra.mxu0 %v9406
    %v9408 = vand.u32 %v461, 4294901760
    %v9409 = vsub.f32 %v461, %v9408
    %v9410 = vand.u32 %v9409, 4294901760
    %9411 = vmatpush.msra.mxu0 %v9410
    %v9412 = vand.u32 %v460, 4294901760
    %v9413 = vsub.f32 %v460, %v9412
    %v9414 = vand.u32 %v9413, 4294901760
    %9415 = vmatpush.msra.mxu0 %v9414
    %v9416 = vand.u32 %v459, 4294901760
    %v9417 = vsub.f32 %v459, %v9416
    %v9418 = vand.u32 %v9417, 4294901760
    %9419 = vmatpush.msra.mxu0 %v9418
    %v9420 = vand.u32 %v458, 4294901760
    %v9421 = vsub.f32 %v458, %v9420
    %v9422 = vand.u32 %v9421, 4294901760
    %9423 = vmatpush.msra.mxu0 %v9422
    %v9424 = vand.u32 %v457, 4294901760
    %v9425 = vsub.f32 %v457, %v9424
    %v9426 = vand.u32 %v9425, 4294901760
    %9427 = vmatpush.msra.mxu0 %v9426
    %v9428 = vand.u32 %v456, 4294901760
    %v9429 = vsub.f32 %v456, %v9428
    %v9430 = vand.u32 %v9429, 4294901760
    %9431 = vmatpush.msra.mxu0 %v9430
    %v9432 = vand.u32 %v455, 4294901760
    %v9433 = vsub.f32 %v455, %v9432
    %v9434 = vand.u32 %v9433, 4294901760
    %9435 = vmatpush.msra.mxu0 %v9434
    %v9436 = vand.u32 %v454, 4294901760
    %v9437 = vsub.f32 %v454, %v9436
    %v9438 = vand.u32 %v9437, 4294901760
    %9439 = vmatpush.msra.mxu0 %v9438
    %v9440 = vand.u32 %v453, 4294901760
    %v9441 = vsub.f32 %v453, %v9440
    %v9442 = vand.u32 %v9441, 4294901760
    %9443 = vmatpush.msra.mxu0 %v9442
    %v9444 = vand.u32 %v452, 4294901760
    %v9445 = vsub.f32 %v452, %v9444
    %v9446 = vand.u32 %v9445, 4294901760
    %9447 = vmatpush.msra.mxu0 %v9446
    %v9448 = vand.u32 %v451, 4294901760
    %v9449 = vsub.f32 %v451, %v9448
    %v9450 = vand.u32 %v9449, 4294901760
    %9451 = vmatpush.msra.mxu0 %v9450
    %v9452 = vand.u32 %v450, 4294901760
    %v9453 = vsub.f32 %v450, %v9452
    %v9454 = vand.u32 %v9453, 4294901760
    %9455 = vmatpush.msra.mxu0 %v9454
    %v9456 = vand.u32 %v593, 4294901760
    %9457 = vmatmul.f32.gmra.mxu0 %v9456
    %v9458 = vpop.f32.mrf.mxu0
    %v9459 = vadd.f32 %v9390, %v9458
    %9460 = vdwg.mxu0
    %v9461 = vand.u32 %v465, 4294901760
    %9462 = vmatpush.msra.mxu0 %v9461
    %v9463 = vand.u32 %v464, 4294901760
    %9464 = vmatpush.msra.mxu0 %v9463
    %v9465 = vand.u32 %v463, 4294901760
    %9466 = vmatpush.msra.mxu0 %v9465
    %v9467 = vand.u32 %v462, 4294901760
    %9468 = vmatpush.msra.mxu0 %v9467
    %v9469 = vand.u32 %v461, 4294901760
    %9470 = vmatpush.msra.mxu0 %v9469
    %v9471 = vand.u32 %v460, 4294901760
    %9472 = vmatpush.msra.mxu0 %v9471
    %v9473 = vand.u32 %v459, 4294901760
    %9474 = vmatpush.msra.mxu0 %v9473
    %v9475 = vand.u32 %v458, 4294901760
    %9476 = vmatpush.msra.mxu0 %v9475
    %v9477 = vand.u32 %v457, 4294901760
    %9478 = vmatpush.msra.mxu0 %v9477
    %v9479 = vand.u32 %v456, 4294901760
    %9480 = vmatpush.msra.mxu0 %v9479
    %v9481 = vand.u32 %v455, 4294901760
    %9482 = vmatpush.msra.mxu0 %v9481
    %v9483 = vand.u32 %v454, 4294901760
    %9484 = vmatpush.msra.mxu0 %v9483
    %v9485 = vand.u32 %v453, 4294901760
    %9486 = vmatpush.msra.mxu0 %v9485
    %v9487 = vand.u32 %v452, 4294901760
    %9488 = vmatpush.msra.mxu0 %v9487
    %v9489 = vand.u32 %v451, 4294901760
    %9490 = vmatpush.msra.mxu0 %v9489
    %v9491 = vand.u32 %v450, 4294901760
    %9492 = vmatpush.msra.mxu0 %v9491
    %v9493 = vand.u32 %v593, 4294901760
    %9494 = vmatmul.f32.gmra.mxu0 %v9493
    %v9495 = vpop.f32.mrf.mxu0
    %v9496 = vadd.f32 %v9459, %v9495
    %9497 = vdwg.mxu0
    %v9498 = vand.u32 %v481, 4294901760
    %9499 = vmatpush.msra.mxu0 %v9498
    %v9500 = vand.u32 %v480, 4294901760
    %9501 = vmatpush.msra.mxu0 %v9500
    %v9502 = vand.u32 %v479, 4294901760
    %9503 = vmatpush.msra.mxu0 %v9502
    %v9504 = vand.u32 %v478, 4294901760
    %9505 = vmatpush.msra.mxu0 %v9504
    %v9506 = vand.u32 %v477, 4294901760
    %9507 = vmatpush.msra.mxu0 %v9506
    %v9508 = vand.u32 %v476, 4294901760
    %9509 = vmatpush.msra.mxu0 %v9508
    %v9510 = vand.u32 %v475, 4294901760
    %9511 = vmatpush.msra.mxu0 %v9510
    %v9512 = vand.u32 %v474, 4294901760
    %9513 = vmatpush.msra.mxu0 %v9512
    %v9514 = vand.u32 %v473, 4294901760
    %9515 = vmatpush.msra.mxu0 %v9514
    %v9516 = vand.u32 %v472, 4294901760
    %9517 = vmatpush.msra.mxu0 %v9516
    %v9518 = vand.u32 %v471, 4294901760
    %9519 = vmatpush.msra.mxu0 %v9518
    %v9520 = vand.u32 %v470, 4294901760
    %9521 = vmatpush.msra.mxu0 %v9520
    %v9522 = vand.u32 %v469, 4294901760
    %9523 = vmatpush.msra.mxu0 %v9522
    %v9524 = vand.u32 %v468, 4294901760
    %9525 = vmatpush.msra.mxu0 %v9524
    %v9526 = vand.u32 %v467, 4294901760
    %9527 = vmatpush.msra.mxu0 %v9526
    %v9528 = vand.u32 %v466, 4294901760
    %9529 = vmatpush.msra.mxu0 %v9528
    %v9530 = vand.u32 %v594, 4294901760
    %v9531 = vsub.f32 %v594, %v9530
    %v9532 = vand.u32 %v9531, 4294901760
    %v9533 = vsub.f32 %v9531, %v9532
    %v9534 = vand.u32 %v9533, 4294901760
    %9535 = vmatmul.f32.gmra.mxu0 %v9534
    %v9536 = vpop.f32.mrf.mxu0
    %v9537 = vadd.f32 %v9496, %v9536
    %9538 = vdwg.mxu0
    %v9539 = vand.u32 %v481, 4294901760
    %v9540 = vsub.f32 %v481, %v9539
    %v9541 = vand.u32 %v9540, 4294901760
    %v9542 = vsub.f32 %v9540, %v9541
    %v9543 = vand.u32 %v9542, 4294901760
    %9544 = vmatpush.msra.mxu0 %v9543
    %v9545 = vand.u32 %v480, 4294901760
    %v9546 = vsub.f32 %v480, %v9545
    %v9547 = vand.u32 %v9546, 4294901760
    %v9548 = vsub.f32 %v9546, %v9547
    %v9549 = vand.u32 %v9548, 4294901760
    %9550 = vmatpush.msra.mxu0 %v9549
    %v9551 = vand.u32 %v479, 4294901760
    %v9552 = vsub.f32 %v479, %v9551
    %v9553 = vand.u32 %v9552, 4294901760
    %v9554 = vsub.f32 %v9552, %v9553
    %v9555 = vand.u32 %v9554, 4294901760
    %9556 = vmatpush.msra.mxu0 %v9555
    %v9557 = vand.u32 %v478, 4294901760
    %v9558 = vsub.f32 %v478, %v9557
    %v9559 = vand.u32 %v9558, 4294901760
    %v9560 = vsub.f32 %v9558, %v9559
    %v9561 = vand.u32 %v9560, 4294901760
    %9562 = vmatpush.msra.mxu0 %v9561
    %v9563 = vand.u32 %v477, 4294901760
    %v9564 = vsub.f32 %v477, %v9563
    %v9565 = vand.u32 %v9564, 4294901760
    %v9566 = vsub.f32 %v9564, %v9565
    %v9567 = vand.u32 %v9566, 4294901760
    %9568 = vmatpush.msra.mxu0 %v9567
    %v9569 = vand.u32 %v476, 4294901760
    %v9570 = vsub.f32 %v476, %v9569
    %v9571 = vand.u32 %v9570, 4294901760
    %v9572 = vsub.f32 %v9570, %v9571
    %v9573 = vand.u32 %v9572, 4294901760
    %9574 = vmatpush.msra.mxu0 %v9573
    %v9575 = vand.u32 %v475, 4294901760
    %v9576 = vsub.f32 %v475, %v9575
    %v9577 = vand.u32 %v9576, 4294901760
    %v9578 = vsub.f32 %v9576, %v9577
    %v9579 = vand.u32 %v9578, 4294901760
    %9580 = vmatpush.msra.mxu0 %v9579
    %v9581 = vand.u32 %v474, 4294901760
    %v9582 = vsub.f32 %v474, %v9581
    %v9583 = vand.u32 %v9582, 4294901760
    %v9584 = vsub.f32 %v9582, %v9583
    %v9585 = vand.u32 %v9584, 4294901760
    %9586 = vmatpush.msra.mxu0 %v9585
    %v9587 = vand.u32 %v473, 4294901760
    %v9588 = vsub.f32 %v473, %v9587
    %v9589 = vand.u32 %v9588, 4294901760
    %v9590 = vsub.f32 %v9588, %v9589
    %v9591 = vand.u32 %v9590, 4294901760
    %9592 = vmatpush.msra.mxu0 %v9591
    %v9593 = vand.u32 %v472, 4294901760
    %v9594 = vsub.f32 %v472, %v9593
    %v9595 = vand.u32 %v9594, 4294901760
    %v9596 = vsub.f32 %v9594, %v9595
    %v9597 = vand.u32 %v9596, 4294901760
    %9598 = vmatpush.msra.mxu0 %v9597
    %v9599 = vand.u32 %v471, 4294901760
    %v9600 = vsub.f32 %v471, %v9599
    %v9601 = vand.u32 %v9600, 4294901760
    %v9602 = vsub.f32 %v9600, %v9601
    %v9603 = vand.u32 %v9602, 4294901760
    %9604 = vmatpush.msra.mxu0 %v9603
    %v9605 = vand.u32 %v470, 4294901760
    %v9606 = vsub.f32 %v470, %v9605
    %v9607 = vand.u32 %v9606, 4294901760
    %v9608 = vsub.f32 %v9606, %v9607
    %v9609 = vand.u32 %v9608, 4294901760
    %9610 = vmatpush.msra.mxu0 %v9609
    %v9611 = vand.u32 %v469, 4294901760
    %v9612 = vsub.f32 %v469, %v9611
    %v9613 = vand.u32 %v9612, 4294901760
    %v9614 = vsub.f32 %v9612, %v9613
    %v9615 = vand.u32 %v9614, 4294901760
    %9616 = vmatpush.msra.mxu0 %v9615
    %v9617 = vand.u32 %v468, 4294901760
    %v9618 = vsub.f32 %v468, %v9617
    %v9619 = vand.u32 %v9618, 4294901760
    %v9620 = vsub.f32 %v9618, %v9619
    %v9621 = vand.u32 %v9620, 4294901760
    %9622 = vmatpush.msra.mxu0 %v9621
    %v9623 = vand.u32 %v467, 4294901760
    %v9624 = vsub.f32 %v467, %v9623
    %v9625 = vand.u32 %v9624, 4294901760
    %v9626 = vsub.f32 %v9624, %v9625
    %v9627 = vand.u32 %v9626, 4294901760
    %9628 = vmatpush.msra.mxu0 %v9627
    %v9629 = vand.u32 %v466, 4294901760
    %v9630 = vsub.f32 %v466, %v9629
    %v9631 = vand.u32 %v9630, 4294901760
    %v9632 = vsub.f32 %v9630, %v9631
    %v9633 = vand.u32 %v9632, 4294901760
    %9634 = vmatpush.msra.mxu0 %v9633
    %v9635 = vand.u32 %v594, 4294901760
    %9636 = vmatmul.f32.gmra.mxu0 %v9635
    %v9637 = vpop.f32.mrf.mxu0
    %v9638 = vadd.f32 %v9537, %v9637
    %9639 = vdwg.mxu0
    %v9640 = vand.u32 %v481, 4294901760
    %v9641 = vsub.f32 %v481, %v9640
    %9642 = vmatpush.msra.mxu0 %v9641
    %v9643 = vand.u32 %v480, 4294901760
    %v9644 = vsub.f32 %v480, %v9643
    %9645 = vmatpush.msra.mxu0 %v9644
    %v9646 = vand.u32 %v479, 4294901760
    %v9647 = vsub.f32 %v479, %v9646
    %9648 = vmatpush.msra.mxu0 %v9647
    %v9649 = vand.u32 %v478, 4294901760
    %v9650 = vsub.f32 %v478, %v9649
    %9651 = vmatpush.msra.mxu0 %v9650
    %v9652 = vand.u32 %v477, 4294901760
    %v9653 = vsub.f32 %v477, %v9652
    %9654 = vmatpush.msra.mxu0 %v9653
    %v9655 = vand.u32 %v476, 4294901760
    %v9656 = vsub.f32 %v476, %v9655
    %9657 = vmatpush.msra.mxu0 %v9656
    %v9658 = vand.u32 %v475, 4294901760
    %v9659 = vsub.f32 %v475, %v9658
    %9660 = vmatpush.msra.mxu0 %v9659
    %v9661 = vand.u32 %v474, 4294901760
    %v9662 = vsub.f32 %v474, %v9661
    %9663 = vmatpush.msra.mxu0 %v9662
    %v9664 = vand.u32 %v473, 4294901760
    %v9665 = vsub.f32 %v473, %v9664
    %9666 = vmatpush.msra.mxu0 %v9665
    %v9667 = vand.u32 %v472, 4294901760
    %v9668 = vsub.f32 %v472, %v9667
    %9669 = vmatpush.msra.mxu0 %v9668
    %v9670 = vand.u32 %v471, 4294901760
    %v9671 = vsub.f32 %v471, %v9670
    %9672 = vmatpush.msra.mxu0 %v9671
    %v9673 = vand.u32 %v470, 4294901760
    %v9674 = vsub.f32 %v470, %v9673
    %9675 = vmatpush.msra.mxu0 %v9674
    %v9676 = vand.u32 %v469, 4294901760
    %v9677 = vsub.f32 %v469, %v9676
    %9678 = vmatpush.msra.mxu0 %v9677
    %v9679 = vand.u32 %v468, 4294901760
    %v9680 = vsub.f32 %v468, %v9679
    %9681 = vmatpush.msra.mxu0 %v9680
    %v9682 = vand.u32 %v467, 4294901760
    %v9683 = vsub.f32 %v467, %v9682
    %9684 = vmatpush.msra.mxu0 %v9683
    %v9685 = vand.u32 %v466, 4294901760
    %v9686 = vsub.f32 %v466, %v9685
    %9687 = vmatpush.msra.mxu0 %v9686
    %v9688 = vand.u32 %v594, 4294901760
    %v9689 = vsub.f32 %v594, %v9688
    %9690 = vmatmul.f32.gmra.mxu0 %v9689
    %v9691 = vpop.f32.mrf.mxu0
    %v9692 = vadd.f32 %v9638, %v9691
    %9693 = vdwg.mxu0
    %v9694 = vand.u32 %v481, 4294901760
    %9695 = vmatpush.msra.mxu0 %v9694
    %v9696 = vand.u32 %v480, 4294901760
    %9697 = vmatpush.msra.mxu0 %v9696
    %v9698 = vand.u32 %v479, 4294901760
    %9699 = vmatpush.msra.mxu0 %v9698
    %v9700 = vand.u32 %v478, 4294901760
    %9701 = vmatpush.msra.mxu0 %v9700
    %v9702 = vand.u32 %v477, 4294901760
    %9703 = vmatpush.msra.mxu0 %v9702
    %v9704 = vand.u32 %v476, 4294901760
    %9705 = vmatpush.msra.mxu0 %v9704
    %v9706 = vand.u32 %v475, 4294901760
    %9707 = vmatpush.msra.mxu0 %v9706
    %v9708 = vand.u32 %v474, 4294901760
    %9709 = vmatpush.msra.mxu0 %v9708
    %v9710 = vand.u32 %v473, 4294901760
    %9711 = vmatpush.msra.mxu0 %v9710
    %v9712 = vand.u32 %v472, 4294901760
    %9713 = vmatpush.msra.mxu0 %v9712
    %v9714 = vand.u32 %v471, 4294901760
    %9715 = vmatpush.msra.mxu0 %v9714
    %v9716 = vand.u32 %v470, 4294901760
    %9717 = vmatpush.msra.mxu0 %v9716
    %v9718 = vand.u32 %v469, 4294901760
    %9719 = vmatpush.msra.mxu0 %v9718
    %v9720 = vand.u32 %v468, 4294901760
    %9721 = vmatpush.msra.mxu0 %v9720
    %v9722 = vand.u32 %v467, 4294901760
    %9723 = vmatpush.msra.mxu0 %v9722
    %v9724 = vand.u32 %v466, 4294901760
    %9725 = vmatpush.msra.mxu0 %v9724
    %v9726 = vand.u32 %v594, 4294901760
    %v9727 = vsub.f32 %v594, %v9726
    %v9728 = vand.u32 %v9727, 4294901760
    %9729 = vmatmul.f32.gmra.mxu0 %v9728
    %v9730 = vpop.f32.mrf.mxu0
    %v9731 = vadd.f32 %v9692, %v9730
    %9732 = vdwg.mxu0
    %v9733 = vand.u32 %v481, 4294901760
    %v9734 = vsub.f32 %v481, %v9733
    %v9735 = vand.u32 %v9734, 4294901760
    %9736 = vmatpush.msra.mxu0 %v9735
    %v9737 = vand.u32 %v480, 4294901760
    %v9738 = vsub.f32 %v480, %v9737
    %v9739 = vand.u32 %v9738, 4294901760
    %9740 = vmatpush.msra.mxu0 %v9739
    %v9741 = vand.u32 %v479, 4294901760
    %v9742 = vsub.f32 %v479, %v9741
    %v9743 = vand.u32 %v9742, 4294901760
    %9744 = vmatpush.msra.mxu0 %v9743
    %v9745 = vand.u32 %v478, 4294901760
    %v9746 = vsub.f32 %v478, %v9745
    %v9747 = vand.u32 %v9746, 4294901760
    %9748 = vmatpush.msra.mxu0 %v9747
    %v9749 = vand.u32 %v477, 4294901760
    %v9750 = vsub.f32 %v477, %v9749
    %v9751 = vand.u32 %v9750, 4294901760
    %9752 = vmatpush.msra.mxu0 %v9751
    %v9753 = vand.u32 %v476, 4294901760
    %v9754 = vsub.f32 %v476, %v9753
    %v9755 = vand.u32 %v9754, 4294901760
    %9756 = vmatpush.msra.mxu0 %v9755
    %v9757 = vand.u32 %v475, 4294901760
    %v9758 = vsub.f32 %v475, %v9757
    %v9759 = vand.u32 %v9758, 4294901760
    %9760 = vmatpush.msra.mxu0 %v9759
    %v9761 = vand.u32 %v474, 4294901760
    %v9762 = vsub.f32 %v474, %v9761
    %v9763 = vand.u32 %v9762, 4294901760
    %9764 = vmatpush.msra.mxu0 %v9763
    %v9765 = vand.u32 %v473, 4294901760
    %v9766 = vsub.f32 %v473, %v9765
    %v9767 = vand.u32 %v9766, 4294901760
    %9768 = vmatpush.msra.mxu0 %v9767
    %v9769 = vand.u32 %v472, 4294901760
    %v9770 = vsub.f32 %v472, %v9769
    %v9771 = vand.u32 %v9770, 4294901760
    %9772 = vmatpush.msra.mxu0 %v9771
    %v9773 = vand.u32 %v471, 4294901760
    %v9774 = vsub.f32 %v471, %v9773
    %v9775 = vand.u32 %v9774, 4294901760
    %9776 = vmatpush.msra.mxu0 %v9775
    %v9777 = vand.u32 %v470, 4294901760
    %v9778 = vsub.f32 %v470, %v9777
    %v9779 = vand.u32 %v9778, 4294901760
    %9780 = vmatpush.msra.mxu0 %v9779
    %v9781 = vand.u32 %v469, 4294901760
    %v9782 = vsub.f32 %v469, %v9781
    %v9783 = vand.u32 %v9782, 4294901760
    %9784 = vmatpush.msra.mxu0 %v9783
    %v9785 = vand.u32 %v468, 4294901760
    %v9786 = vsub.f32 %v468, %v9785
    %v9787 = vand.u32 %v9786, 4294901760
    %9788 = vmatpush.msra.mxu0 %v9787
    %v9789 = vand.u32 %v467, 4294901760
    %v9790 = vsub.f32 %v467, %v9789
    %v9791 = vand.u32 %v9790, 4294901760
    %9792 = vmatpush.msra.mxu0 %v9791
    %v9793 = vand.u32 %v466, 4294901760
    %v9794 = vsub.f32 %v466, %v9793
    %v9795 = vand.u32 %v9794, 4294901760
    %9796 = vmatpush.msra.mxu0 %v9795
    %v9797 = vand.u32 %v594, 4294901760
    %9798 = vmatmul.f32.gmra.mxu0 %v9797
    %v9799 = vpop.f32.mrf.mxu0
    %v9800 = vadd.f32 %v9731, %v9799
    %9801 = vdwg.mxu0
    %v9802 = vand.u32 %v481, 4294901760
    %9803 = vmatpush.msra.mxu0 %v9802
    %v9804 = vand.u32 %v480, 4294901760
    %9805 = vmatpush.msra.mxu0 %v9804
    %v9806 = vand.u32 %v479, 4294901760
    %9807 = vmatpush.msra.mxu0 %v9806
    %v9808 = vand.u32 %v478, 4294901760
    %9809 = vmatpush.msra.mxu0 %v9808
    %v9810 = vand.u32 %v477, 4294901760
    %9811 = vmatpush.msra.mxu0 %v9810
    %v9812 = vand.u32 %v476, 4294901760
    %9813 = vmatpush.msra.mxu0 %v9812
    %v9814 = vand.u32 %v475, 4294901760
    %9815 = vmatpush.msra.mxu0 %v9814
    %v9816 = vand.u32 %v474, 4294901760
    %9817 = vmatpush.msra.mxu0 %v9816
    %v9818 = vand.u32 %v473, 4294901760
    %9819 = vmatpush.msra.mxu0 %v9818
    %v9820 = vand.u32 %v472, 4294901760
    %9821 = vmatpush.msra.mxu0 %v9820
    %v9822 = vand.u32 %v471, 4294901760
    %9823 = vmatpush.msra.mxu0 %v9822
    %v9824 = vand.u32 %v470, 4294901760
    %9825 = vmatpush.msra.mxu0 %v9824
    %v9826 = vand.u32 %v469, 4294901760
    %9827 = vmatpush.msra.mxu0 %v9826
    %v9828 = vand.u32 %v468, 4294901760
    %9829 = vmatpush.msra.mxu0 %v9828
    %v9830 = vand.u32 %v467, 4294901760
    %9831 = vmatpush.msra.mxu0 %v9830
    %v9832 = vand.u32 %v466, 4294901760
    %9833 = vmatpush.msra.mxu0 %v9832
    %v9834 = vand.u32 %v594, 4294901760
    %9835 = vmatmul.f32.gmra.mxu0 %v9834
    %v9836 = vpop.f32.mrf.mxu0
    %v9837 = vadd.f32 %v9800, %v9836
    %9838 = vdwg.mxu0
    %v9839 = vand.u32 %v497, 4294901760
    %9840 = vmatpush.msra.mxu0 %v9839
    %v9841 = vand.u32 %v496, 4294901760
    %9842 = vmatpush.msra.mxu0 %v9841
    %v9843 = vand.u32 %v495, 4294901760
    %9844 = vmatpush.msra.mxu0 %v9843
    %v9845 = vand.u32 %v494, 4294901760
    %9846 = vmatpush.msra.mxu0 %v9845
    %v9847 = vand.u32 %v493, 4294901760
    %9848 = vmatpush.msra.mxu0 %v9847
    %v9849 = vand.u32 %v492, 4294901760
    %9850 = vmatpush.msra.mxu0 %v9849
    %v9851 = vand.u32 %v491, 4294901760
    %9852 = vmatpush.msra.mxu0 %v9851
    %v9853 = vand.u32 %v490, 4294901760
    %9854 = vmatpush.msra.mxu0 %v9853
    %v9855 = vand.u32 %v489, 4294901760
    %9856 = vmatpush.msra.mxu0 %v9855
    %v9857 = vand.u32 %v488, 4294901760
    %9858 = vmatpush.msra.mxu0 %v9857
    %v9859 = vand.u32 %v487, 4294901760
    %9860 = vmatpush.msra.mxu0 %v9859
    %v9861 = vand.u32 %v486, 4294901760
    %9862 = vmatpush.msra.mxu0 %v9861
    %v9863 = vand.u32 %v485, 4294901760
    %9864 = vmatpush.msra.mxu0 %v9863
    %v9865 = vand.u32 %v484, 4294901760
    %9866 = vmatpush.msra.mxu0 %v9865
    %v9867 = vand.u32 %v483, 4294901760
    %9868 = vmatpush.msra.mxu0 %v9867
    %v9869 = vand.u32 %v482, 4294901760
    %9870 = vmatpush.msra.mxu0 %v9869
    %v9871 = vand.u32 %v595, 4294901760
    %v9872 = vsub.f32 %v595, %v9871
    %v9873 = vand.u32 %v9872, 4294901760
    %v9874 = vsub.f32 %v9872, %v9873
    %v9875 = vand.u32 %v9874, 4294901760
    %9876 = vmatmul.f32.gmra.mxu0 %v9875
    %v9877 = vpop.f32.mrf.mxu0
    %v9878 = vadd.f32 %v9837, %v9877
    %9879 = vdwg.mxu0
    %v9880 = vand.u32 %v497, 4294901760
    %v9881 = vsub.f32 %v497, %v9880
    %v9882 = vand.u32 %v9881, 4294901760
    %v9883 = vsub.f32 %v9881, %v9882
    %v9884 = vand.u32 %v9883, 4294901760
    %9885 = vmatpush.msra.mxu0 %v9884
    %v9886 = vand.u32 %v496, 4294901760
    %v9887 = vsub.f32 %v496, %v9886
    %v9888 = vand.u32 %v9887, 4294901760
    %v9889 = vsub.f32 %v9887, %v9888
    %v9890 = vand.u32 %v9889, 4294901760
    %9891 = vmatpush.msra.mxu0 %v9890
    %v9892 = vand.u32 %v495, 4294901760
    %v9893 = vsub.f32 %v495, %v9892
    %v9894 = vand.u32 %v9893, 4294901760
    %v9895 = vsub.f32 %v9893, %v9894
    %v9896 = vand.u32 %v9895, 4294901760
    %9897 = vmatpush.msra.mxu0 %v9896
    %v9898 = vand.u32 %v494, 4294901760
    %v9899 = vsub.f32 %v494, %v9898
    %v9900 = vand.u32 %v9899, 4294901760
    %v9901 = vsub.f32 %v9899, %v9900
    %v9902 = vand.u32 %v9901, 4294901760
    %9903 = vmatpush.msra.mxu0 %v9902
    %v9904 = vand.u32 %v493, 4294901760
    %v9905 = vsub.f32 %v493, %v9904
    %v9906 = vand.u32 %v9905, 4294901760
    %v9907 = vsub.f32 %v9905, %v9906
    %v9908 = vand.u32 %v9907, 4294901760
    %9909 = vmatpush.msra.mxu0 %v9908
    %v9910 = vand.u32 %v492, 4294901760
    %v9911 = vsub.f32 %v492, %v9910
    %v9912 = vand.u32 %v9911, 4294901760
    %v9913 = vsub.f32 %v9911, %v9912
    %v9914 = vand.u32 %v9913, 4294901760
    %9915 = vmatpush.msra.mxu0 %v9914
    %v9916 = vand.u32 %v491, 4294901760
    %v9917 = vsub.f32 %v491, %v9916
    %v9918 = vand.u32 %v9917, 4294901760
    %v9919 = vsub.f32 %v9917, %v9918
    %v9920 = vand.u32 %v9919, 4294901760
    %9921 = vmatpush.msra.mxu0 %v9920
    %v9922 = vand.u32 %v490, 4294901760
    %v9923 = vsub.f32 %v490, %v9922
    %v9924 = vand.u32 %v9923, 4294901760
    %v9925 = vsub.f32 %v9923, %v9924
    %v9926 = vand.u32 %v9925, 4294901760
    %9927 = vmatpush.msra.mxu0 %v9926
    %v9928 = vand.u32 %v489, 4294901760
    %v9929 = vsub.f32 %v489, %v9928
    %v9930 = vand.u32 %v9929, 4294901760
    %v9931 = vsub.f32 %v9929, %v9930
    %v9932 = vand.u32 %v9931, 4294901760
    %9933 = vmatpush.msra.mxu0 %v9932
    %v9934 = vand.u32 %v488, 4294901760
    %v9935 = vsub.f32 %v488, %v9934
    %v9936 = vand.u32 %v9935, 4294901760
    %v9937 = vsub.f32 %v9935, %v9936
    %v9938 = vand.u32 %v9937, 4294901760
    %9939 = vmatpush.msra.mxu0 %v9938
    %v9940 = vand.u32 %v487, 4294901760
    %v9941 = vsub.f32 %v487, %v9940
    %v9942 = vand.u32 %v9941, 4294901760
    %v9943 = vsub.f32 %v9941, %v9942
    %v9944 = vand.u32 %v9943, 4294901760
    %9945 = vmatpush.msra.mxu0 %v9944
    %v9946 = vand.u32 %v486, 4294901760
    %v9947 = vsub.f32 %v486, %v9946
    %v9948 = vand.u32 %v9947, 4294901760
    %v9949 = vsub.f32 %v9947, %v9948
    %v9950 = vand.u32 %v9949, 4294901760
    %9951 = vmatpush.msra.mxu0 %v9950
    %v9952 = vand.u32 %v485, 4294901760
    %v9953 = vsub.f32 %v485, %v9952
    %v9954 = vand.u32 %v9953, 4294901760
    %v9955 = vsub.f32 %v9953, %v9954
    %v9956 = vand.u32 %v9955, 4294901760
    %9957 = vmatpush.msra.mxu0 %v9956
    %v9958 = vand.u32 %v484, 4294901760
    %v9959 = vsub.f32 %v484, %v9958
    %v9960 = vand.u32 %v9959, 4294901760
    %v9961 = vsub.f32 %v9959, %v9960
    %v9962 = vand.u32 %v9961, 4294901760
    %9963 = vmatpush.msra.mxu0 %v9962
    %v9964 = vand.u32 %v483, 4294901760
    %v9965 = vsub.f32 %v483, %v9964
    %v9966 = vand.u32 %v9965, 4294901760
    %v9967 = vsub.f32 %v9965, %v9966
    %v9968 = vand.u32 %v9967, 4294901760
    %9969 = vmatpush.msra.mxu0 %v9968
    %v9970 = vand.u32 %v482, 4294901760
    %v9971 = vsub.f32 %v482, %v9970
    %v9972 = vand.u32 %v9971, 4294901760
    %v9973 = vsub.f32 %v9971, %v9972
    %v9974 = vand.u32 %v9973, 4294901760
    %9975 = vmatpush.msra.mxu0 %v9974
    %v9976 = vand.u32 %v595, 4294901760
    %9977 = vmatmul.f32.gmra.mxu0 %v9976
    %v9978 = vpop.f32.mrf.mxu0
    %v9979 = vadd.f32 %v9878, %v9978
    %9980 = vdwg.mxu0
    %v9981 = vand.u32 %v497, 4294901760
    %v9982 = vsub.f32 %v497, %v9981
    %9983 = vmatpush.msra.mxu0 %v9982
    %v9984 = vand.u32 %v496, 4294901760
    %v9985 = vsub.f32 %v496, %v9984
    %9986 = vmatpush.msra.mxu0 %v9985
    %v9987 = vand.u32 %v495, 4294901760
    %v9988 = vsub.f32 %v495, %v9987
    %9989 = vmatpush.msra.mxu0 %v9988
    %v9990 = vand.u32 %v494, 4294901760
    %v9991 = vsub.f32 %v494, %v9990
    %9992 = vmatpush.msra.mxu0 %v9991
    %v9993 = vand.u32 %v493, 4294901760
    %v9994 = vsub.f32 %v493, %v9993
    %9995 = vmatpush.msra.mxu0 %v9994
    %v9996 = vand.u32 %v492, 4294901760
    %v9997 = vsub.f32 %v492, %v9996
    %9998 = vmatpush.msra.mxu0 %v9997
    %v9999 = vand.u32 %v491, 4294901760
    %v10000 = vsub.f32 %v491, %v9999
    %10001 = vmatpush.msra.mxu0 %v10000
    %v10002 = vand.u32 %v490, 4294901760
    %v10003 = vsub.f32 %v490, %v10002
    %10004 = vmatpush.msra.mxu0 %v10003
    %v10005 = vand.u32 %v489, 4294901760
    %v10006 = vsub.f32 %v489, %v10005
    %10007 = vmatpush.msra.mxu0 %v10006
    %v10008 = vand.u32 %v488, 4294901760
    %v10009 = vsub.f32 %v488, %v10008
    %10010 = vmatpush.msra.mxu0 %v10009
    %v10011 = vand.u32 %v487, 4294901760
    %v10012 = vsub.f32 %v487, %v10011
    %10013 = vmatpush.msra.mxu0 %v10012
    %v10014 = vand.u32 %v486, 4294901760
    %v10015 = vsub.f32 %v486, %v10014
    %10016 = vmatpush.msra.mxu0 %v10015
    %v10017 = vand.u32 %v485, 4294901760
    %v10018 = vsub.f32 %v485, %v10017
    %10019 = vmatpush.msra.mxu0 %v10018
    %v10020 = vand.u32 %v484, 4294901760
    %v10021 = vsub.f32 %v484, %v10020
    %10022 = vmatpush.msra.mxu0 %v10021
    %v10023 = vand.u32 %v483, 4294901760
    %v10024 = vsub.f32 %v483, %v10023
    %10025 = vmatpush.msra.mxu0 %v10024
    %v10026 = vand.u32 %v482, 4294901760
    %v10027 = vsub.f32 %v482, %v10026
    %10028 = vmatpush.msra.mxu0 %v10027
    %v10029 = vand.u32 %v595, 4294901760
    %v10030 = vsub.f32 %v595, %v10029
    %10031 = vmatmul.f32.gmra.mxu0 %v10030
    %v10032 = vpop.f32.mrf.mxu0
    %v10033 = vadd.f32 %v9979, %v10032
    %10034 = vdwg.mxu0
    %v10035 = vand.u32 %v497, 4294901760
    %10036 = vmatpush.msra.mxu0 %v10035
    %v10037 = vand.u32 %v496, 4294901760
    %10038 = vmatpush.msra.mxu0 %v10037
    %v10039 = vand.u32 %v495, 4294901760
    %10040 = vmatpush.msra.mxu0 %v10039
    %v10041 = vand.u32 %v494, 4294901760
    %10042 = vmatpush.msra.mxu0 %v10041
    %v10043 = vand.u32 %v493, 4294901760
    %10044 = vmatpush.msra.mxu0 %v10043
    %v10045 = vand.u32 %v492, 4294901760
    %10046 = vmatpush.msra.mxu0 %v10045
    %v10047 = vand.u32 %v491, 4294901760
    %10048 = vmatpush.msra.mxu0 %v10047
    %v10049 = vand.u32 %v490, 4294901760
    %10050 = vmatpush.msra.mxu0 %v10049
    %v10051 = vand.u32 %v489, 4294901760
    %10052 = vmatpush.msra.mxu0 %v10051
    %v10053 = vand.u32 %v488, 4294901760
    %10054 = vmatpush.msra.mxu0 %v10053
    %v10055 = vand.u32 %v487, 4294901760
    %10056 = vmatpush.msra.mxu0 %v10055
    %v10057 = vand.u32 %v486, 4294901760
    %10058 = vmatpush.msra.mxu0 %v10057
    %v10059 = vand.u32 %v485, 4294901760
    %10060 = vmatpush.msra.mxu0 %v10059
    %v10061 = vand.u32 %v484, 4294901760
    %10062 = vmatpush.msra.mxu0 %v10061
    %v10063 = vand.u32 %v483, 4294901760
    %10064 = vmatpush.msra.mxu0 %v10063
    %v10065 = vand.u32 %v482, 4294901760
    %10066 = vmatpush.msra.mxu0 %v10065
    %v10067 = vand.u32 %v595, 4294901760
    %v10068 = vsub.f32 %v595, %v10067
    %v10069 = vand.u32 %v10068, 4294901760
    %10070 = vmatmul.f32.gmra.mxu0 %v10069
    %v10071 = vpop.f32.mrf.mxu0
    %v10072 = vadd.f32 %v10033, %v10071
    %10073 = vdwg.mxu0
    %v10074 = vand.u32 %v497, 4294901760
    %v10075 = vsub.f32 %v497, %v10074
    %v10076 = vand.u32 %v10075, 4294901760
    %10077 = vmatpush.msra.mxu0 %v10076
    %v10078 = vand.u32 %v496, 4294901760
    %v10079 = vsub.f32 %v496, %v10078
    %v10080 = vand.u32 %v10079, 4294901760
    %10081 = vmatpush.msra.mxu0 %v10080
    %v10082 = vand.u32 %v495, 4294901760
    %v10083 = vsub.f32 %v495, %v10082
    %v10084 = vand.u32 %v10083, 4294901760
    %10085 = vmatpush.msra.mxu0 %v10084
    %v10086 = vand.u32 %v494, 4294901760
    %v10087 = vsub.f32 %v494, %v10086
    %v10088 = vand.u32 %v10087, 4294901760
    %10089 = vmatpush.msra.mxu0 %v10088
    %v10090 = vand.u32 %v493, 4294901760
    %v10091 = vsub.f32 %v493, %v10090
    %v10092 = vand.u32 %v10091, 4294901760
    %10093 = vmatpush.msra.mxu0 %v10092
    %v10094 = vand.u32 %v492, 4294901760
    %v10095 = vsub.f32 %v492, %v10094
    %v10096 = vand.u32 %v10095, 4294901760
    %10097 = vmatpush.msra.mxu0 %v10096
    %v10098 = vand.u32 %v491, 4294901760
    %v10099 = vsub.f32 %v491, %v10098
    %v10100 = vand.u32 %v10099, 4294901760
    %10101 = vmatpush.msra.mxu0 %v10100
    %v10102 = vand.u32 %v490, 4294901760
    %v10103 = vsub.f32 %v490, %v10102
    %v10104 = vand.u32 %v10103, 4294901760
    %10105 = vmatpush.msra.mxu0 %v10104
    %v10106 = vand.u32 %v489, 4294901760
    %v10107 = vsub.f32 %v489, %v10106
    %v10108 = vand.u32 %v10107, 4294901760
    %10109 = vmatpush.msra.mxu0 %v10108
    %v10110 = vand.u32 %v488, 4294901760
    %v10111 = vsub.f32 %v488, %v10110
    %v10112 = vand.u32 %v10111, 4294901760
    %10113 = vmatpush.msra.mxu0 %v10112
    %v10114 = vand.u32 %v487, 4294901760
    %v10115 = vsub.f32 %v487, %v10114
    %v10116 = vand.u32 %v10115, 4294901760
    %10117 = vmatpush.msra.mxu0 %v10116
    %v10118 = vand.u32 %v486, 4294901760
    %v10119 = vsub.f32 %v486, %v10118
    %v10120 = vand.u32 %v10119, 4294901760
    %10121 = vmatpush.msra.mxu0 %v10120
    %v10122 = vand.u32 %v485, 4294901760
    %v10123 = vsub.f32 %v485, %v10122
    %v10124 = vand.u32 %v10123, 4294901760
    %10125 = vmatpush.msra.mxu0 %v10124
    %v10126 = vand.u32 %v484, 4294901760
    %v10127 = vsub.f32 %v484, %v10126
    %v10128 = vand.u32 %v10127, 4294901760
    %10129 = vmatpush.msra.mxu0 %v10128
    %v10130 = vand.u32 %v483, 4294901760
    %v10131 = vsub.f32 %v483, %v10130
    %v10132 = vand.u32 %v10131, 4294901760
    %10133 = vmatpush.msra.mxu0 %v10132
    %v10134 = vand.u32 %v482, 4294901760
    %v10135 = vsub.f32 %v482, %v10134
    %v10136 = vand.u32 %v10135, 4294901760
    %10137 = vmatpush.msra.mxu0 %v10136
    %v10138 = vand.u32 %v595, 4294901760
    %10139 = vmatmul.f32.gmra.mxu0 %v10138
    %v10140 = vpop.f32.mrf.mxu0
    %v10141 = vadd.f32 %v10072, %v10140
    %10142 = vdwg.mxu0
    %v10143 = vand.u32 %v497, 4294901760
    %10144 = vmatpush.msra.mxu0 %v10143
    %v10145 = vand.u32 %v496, 4294901760
    %10146 = vmatpush.msra.mxu0 %v10145
    %v10147 = vand.u32 %v495, 4294901760
    %10148 = vmatpush.msra.mxu0 %v10147
    %v10149 = vand.u32 %v494, 4294901760
    %10150 = vmatpush.msra.mxu0 %v10149
    %v10151 = vand.u32 %v493, 4294901760
    %10152 = vmatpush.msra.mxu0 %v10151
    %v10153 = vand.u32 %v492, 4294901760
    %10154 = vmatpush.msra.mxu0 %v10153
    %v10155 = vand.u32 %v491, 4294901760
    %10156 = vmatpush.msra.mxu0 %v10155
    %v10157 = vand.u32 %v490, 4294901760
    %10158 = vmatpush.msra.mxu0 %v10157
    %v10159 = vand.u32 %v489, 4294901760
    %10160 = vmatpush.msra.mxu0 %v10159
    %v10161 = vand.u32 %v488, 4294901760
    %10162 = vmatpush.msra.mxu0 %v10161
    %v10163 = vand.u32 %v487, 4294901760
    %10164 = vmatpush.msra.mxu0 %v10163
    %v10165 = vand.u32 %v486, 4294901760
    %10166 = vmatpush.msra.mxu0 %v10165
    %v10167 = vand.u32 %v485, 4294901760
    %10168 = vmatpush.msra.mxu0 %v10167
    %v10169 = vand.u32 %v484, 4294901760
    %10170 = vmatpush.msra.mxu0 %v10169
    %v10171 = vand.u32 %v483, 4294901760
    %10172 = vmatpush.msra.mxu0 %v10171
    %v10173 = vand.u32 %v482, 4294901760
    %10174 = vmatpush.msra.mxu0 %v10173
    %v10175 = vand.u32 %v595, 4294901760
    %10176 = vmatmul.f32.gmra.mxu0 %v10175
    %v10177 = vpop.f32.mrf.mxu0
    %v10178 = vadd.f32 %v10141, %v10177
    %10179 = vdwg.mxu0
    %v10180 = vand.u32 %v513, 4294901760
    %10181 = vmatpush.msra.mxu0 %v10180
    %v10182 = vand.u32 %v512, 4294901760
    %10183 = vmatpush.msra.mxu0 %v10182
    %v10184 = vand.u32 %v511, 4294901760
    %10185 = vmatpush.msra.mxu0 %v10184
    %v10186 = vand.u32 %v510, 4294901760
    %10187 = vmatpush.msra.mxu0 %v10186
    %v10188 = vand.u32 %v509, 4294901760
    %10189 = vmatpush.msra.mxu0 %v10188
    %v10190 = vand.u32 %v508, 4294901760
    %10191 = vmatpush.msra.mxu0 %v10190
    %v10192 = vand.u32 %v507, 4294901760
    %10193 = vmatpush.msra.mxu0 %v10192
    %v10194 = vand.u32 %v506, 4294901760
    %10195 = vmatpush.msra.mxu0 %v10194
    %v10196 = vand.u32 %v505, 4294901760
    %10197 = vmatpush.msra.mxu0 %v10196
    %v10198 = vand.u32 %v504, 4294901760
    %10199 = vmatpush.msra.mxu0 %v10198
    %v10200 = vand.u32 %v503, 4294901760
    %10201 = vmatpush.msra.mxu0 %v10200
    %v10202 = vand.u32 %v502, 4294901760
    %10203 = vmatpush.msra.mxu0 %v10202
    %v10204 = vand.u32 %v501, 4294901760
    %10205 = vmatpush.msra.mxu0 %v10204
    %v10206 = vand.u32 %v500, 4294901760
    %10207 = vmatpush.msra.mxu0 %v10206
    %v10208 = vand.u32 %v499, 4294901760
    %10209 = vmatpush.msra.mxu0 %v10208
    %v10210 = vand.u32 %v498, 4294901760
    %10211 = vmatpush.msra.mxu0 %v10210
    %v10212 = vand.u32 %v596, 4294901760
    %v10213 = vsub.f32 %v596, %v10212
    %v10214 = vand.u32 %v10213, 4294901760
    %v10215 = vsub.f32 %v10213, %v10214
    %v10216 = vand.u32 %v10215, 4294901760
    %10217 = vmatmul.f32.gmra.mxu0 %v10216
    %v10218 = vpop.f32.mrf.mxu0
    %v10219 = vadd.f32 %v10178, %v10218
    %10220 = vdwg.mxu0
    %v10221 = vand.u32 %v513, 4294901760
    %v10222 = vsub.f32 %v513, %v10221
    %v10223 = vand.u32 %v10222, 4294901760
    %v10224 = vsub.f32 %v10222, %v10223
    %v10225 = vand.u32 %v10224, 4294901760
    %10226 = vmatpush.msra.mxu0 %v10225
    %v10227 = vand.u32 %v512, 4294901760
    %v10228 = vsub.f32 %v512, %v10227
    %v10229 = vand.u32 %v10228, 4294901760
    %v10230 = vsub.f32 %v10228, %v10229
    %v10231 = vand.u32 %v10230, 4294901760
    %10232 = vmatpush.msra.mxu0 %v10231
    %v10233 = vand.u32 %v511, 4294901760
    %v10234 = vsub.f32 %v511, %v10233
    %v10235 = vand.u32 %v10234, 4294901760
    %v10236 = vsub.f32 %v10234, %v10235
    %v10237 = vand.u32 %v10236, 4294901760
    %10238 = vmatpush.msra.mxu0 %v10237
    %v10239 = vand.u32 %v510, 4294901760
    %v10240 = vsub.f32 %v510, %v10239
    %v10241 = vand.u32 %v10240, 4294901760
    %v10242 = vsub.f32 %v10240, %v10241
    %v10243 = vand.u32 %v10242, 4294901760
    %10244 = vmatpush.msra.mxu0 %v10243
    %v10245 = vand.u32 %v509, 4294901760
    %v10246 = vsub.f32 %v509, %v10245
    %v10247 = vand.u32 %v10246, 4294901760
    %v10248 = vsub.f32 %v10246, %v10247
    %v10249 = vand.u32 %v10248, 4294901760
    %10250 = vmatpush.msra.mxu0 %v10249
    %v10251 = vand.u32 %v508, 4294901760
    %v10252 = vsub.f32 %v508, %v10251
    %v10253 = vand.u32 %v10252, 4294901760
    %v10254 = vsub.f32 %v10252, %v10253
    %v10255 = vand.u32 %v10254, 4294901760
    %10256 = vmatpush.msra.mxu0 %v10255
    %v10257 = vand.u32 %v507, 4294901760
    %v10258 = vsub.f32 %v507, %v10257
    %v10259 = vand.u32 %v10258, 4294901760
    %v10260 = vsub.f32 %v10258, %v10259
    %v10261 = vand.u32 %v10260, 4294901760
    %10262 = vmatpush.msra.mxu0 %v10261
    %v10263 = vand.u32 %v506, 4294901760
    %v10264 = vsub.f32 %v506, %v10263
    %v10265 = vand.u32 %v10264, 4294901760
    %v10266 = vsub.f32 %v10264, %v10265
    %v10267 = vand.u32 %v10266, 4294901760
    %10268 = vmatpush.msra.mxu0 %v10267
    %v10269 = vand.u32 %v505, 4294901760
    %v10270 = vsub.f32 %v505, %v10269
    %v10271 = vand.u32 %v10270, 4294901760
    %v10272 = vsub.f32 %v10270, %v10271
    %v10273 = vand.u32 %v10272, 4294901760
    %10274 = vmatpush.msra.mxu0 %v10273
    %v10275 = vand.u32 %v504, 4294901760
    %v10276 = vsub.f32 %v504, %v10275
    %v10277 = vand.u32 %v10276, 4294901760
    %v10278 = vsub.f32 %v10276, %v10277
    %v10279 = vand.u32 %v10278, 4294901760
    %10280 = vmatpush.msra.mxu0 %v10279
    %v10281 = vand.u32 %v503, 4294901760
    %v10282 = vsub.f32 %v503, %v10281
    %v10283 = vand.u32 %v10282, 4294901760
    %v10284 = vsub.f32 %v10282, %v10283
    %v10285 = vand.u32 %v10284, 4294901760
    %10286 = vmatpush.msra.mxu0 %v10285
    %v10287 = vand.u32 %v502, 4294901760
    %v10288 = vsub.f32 %v502, %v10287
    %v10289 = vand.u32 %v10288, 4294901760
    %v10290 = vsub.f32 %v10288, %v10289
    %v10291 = vand.u32 %v10290, 4294901760
    %10292 = vmatpush.msra.mxu0 %v10291
    %v10293 = vand.u32 %v501, 4294901760
    %v10294 = vsub.f32 %v501, %v10293
    %v10295 = vand.u32 %v10294, 4294901760
    %v10296 = vsub.f32 %v10294, %v10295
    %v10297 = vand.u32 %v10296, 4294901760
    %10298 = vmatpush.msra.mxu0 %v10297
    %v10299 = vand.u32 %v500, 4294901760
    %v10300 = vsub.f32 %v500, %v10299
    %v10301 = vand.u32 %v10300, 4294901760
    %v10302 = vsub.f32 %v10300, %v10301
    %v10303 = vand.u32 %v10302, 4294901760
    %10304 = vmatpush.msra.mxu0 %v10303
    %v10305 = vand.u32 %v499, 4294901760
    %v10306 = vsub.f32 %v499, %v10305
    %v10307 = vand.u32 %v10306, 4294901760
    %v10308 = vsub.f32 %v10306, %v10307
    %v10309 = vand.u32 %v10308, 4294901760
    %10310 = vmatpush.msra.mxu0 %v10309
    %v10311 = vand.u32 %v498, 4294901760
    %v10312 = vsub.f32 %v498, %v10311
    %v10313 = vand.u32 %v10312, 4294901760
    %v10314 = vsub.f32 %v10312, %v10313
    %v10315 = vand.u32 %v10314, 4294901760
    %10316 = vmatpush.msra.mxu0 %v10315
    %v10317 = vand.u32 %v596, 4294901760
    %10318 = vmatmul.f32.gmra.mxu0 %v10317
    %v10319 = vpop.f32.mrf.mxu0
    %v10320 = vadd.f32 %v10219, %v10319
    %10321 = vdwg.mxu0
    %v10322 = vand.u32 %v513, 4294901760
    %v10323 = vsub.f32 %v513, %v10322
    %10324 = vmatpush.msra.mxu0 %v10323
    %v10325 = vand.u32 %v512, 4294901760
    %v10326 = vsub.f32 %v512, %v10325
    %10327 = vmatpush.msra.mxu0 %v10326
    %v10328 = vand.u32 %v511, 4294901760
    %v10329 = vsub.f32 %v511, %v10328
    %10330 = vmatpush.msra.mxu0 %v10329
    %v10331 = vand.u32 %v510, 4294901760
    %v10332 = vsub.f32 %v510, %v10331
    %10333 = vmatpush.msra.mxu0 %v10332
    %v10334 = vand.u32 %v509, 4294901760
    %v10335 = vsub.f32 %v509, %v10334
    %10336 = vmatpush.msra.mxu0 %v10335
    %v10337 = vand.u32 %v508, 4294901760
    %v10338 = vsub.f32 %v508, %v10337
    %10339 = vmatpush.msra.mxu0 %v10338
    %v10340 = vand.u32 %v507, 4294901760
    %v10341 = vsub.f32 %v507, %v10340
    %10342 = vmatpush.msra.mxu0 %v10341
    %v10343 = vand.u32 %v506, 4294901760
    %v10344 = vsub.f32 %v506, %v10343
    %10345 = vmatpush.msra.mxu0 %v10344
    %v10346 = vand.u32 %v505, 4294901760
    %v10347 = vsub.f32 %v505, %v10346
    %10348 = vmatpush.msra.mxu0 %v10347
    %v10349 = vand.u32 %v504, 4294901760
    %v10350 = vsub.f32 %v504, %v10349
    %10351 = vmatpush.msra.mxu0 %v10350
    %v10352 = vand.u32 %v503, 4294901760
    %v10353 = vsub.f32 %v503, %v10352
    %10354 = vmatpush.msra.mxu0 %v10353
    %v10355 = vand.u32 %v502, 4294901760
    %v10356 = vsub.f32 %v502, %v10355
    %10357 = vmatpush.msra.mxu0 %v10356
    %v10358 = vand.u32 %v501, 4294901760
    %v10359 = vsub.f32 %v501, %v10358
    %10360 = vmatpush.msra.mxu0 %v10359
    %v10361 = vand.u32 %v500, 4294901760
    %v10362 = vsub.f32 %v500, %v10361
    %10363 = vmatpush.msra.mxu0 %v10362
    %v10364 = vand.u32 %v499, 4294901760
    %v10365 = vsub.f32 %v499, %v10364
    %10366 = vmatpush.msra.mxu0 %v10365
    %v10367 = vand.u32 %v498, 4294901760
    %v10368 = vsub.f32 %v498, %v10367
    %10369 = vmatpush.msra.mxu0 %v10368
    %v10370 = vand.u32 %v596, 4294901760
    %v10371 = vsub.f32 %v596, %v10370
    %10372 = vmatmul.f32.gmra.mxu0 %v10371
    %v10373 = vpop.f32.mrf.mxu0
    %v10374 = vadd.f32 %v10320, %v10373
    %10375 = vdwg.mxu0
    %v10376 = vand.u32 %v513, 4294901760
    %10377 = vmatpush.msra.mxu0 %v10376
    %v10378 = vand.u32 %v512, 4294901760
    %10379 = vmatpush.msra.mxu0 %v10378
    %v10380 = vand.u32 %v511, 4294901760
    %10381 = vmatpush.msra.mxu0 %v10380
    %v10382 = vand.u32 %v510, 4294901760
    %10383 = vmatpush.msra.mxu0 %v10382
    %v10384 = vand.u32 %v509, 4294901760
    %10385 = vmatpush.msra.mxu0 %v10384
    %v10386 = vand.u32 %v508, 4294901760
    %10387 = vmatpush.msra.mxu0 %v10386
    %v10388 = vand.u32 %v507, 4294901760
    %10389 = vmatpush.msra.mxu0 %v10388
    %v10390 = vand.u32 %v506, 4294901760
    %10391 = vmatpush.msra.mxu0 %v10390
    %v10392 = vand.u32 %v505, 4294901760
    %10393 = vmatpush.msra.mxu0 %v10392
    %v10394 = vand.u32 %v504, 4294901760
    %10395 = vmatpush.msra.mxu0 %v10394
    %v10396 = vand.u32 %v503, 4294901760
    %10397 = vmatpush.msra.mxu0 %v10396
    %v10398 = vand.u32 %v502, 4294901760
    %10399 = vmatpush.msra.mxu0 %v10398
    %v10400 = vand.u32 %v501, 4294901760
    %10401 = vmatpush.msra.mxu0 %v10400
    %v10402 = vand.u32 %v500, 4294901760
    %10403 = vmatpush.msra.mxu0 %v10402
    %v10404 = vand.u32 %v499, 4294901760
    %10405 = vmatpush.msra.mxu0 %v10404
    %v10406 = vand.u32 %v498, 4294901760
    %10407 = vmatpush.msra.mxu0 %v10406
    %v10408 = vand.u32 %v596, 4294901760
    %v10409 = vsub.f32 %v596, %v10408
    %v10410 = vand.u32 %v10409, 4294901760
    %10411 = vmatmul.f32.gmra.mxu0 %v10410
    %v10412 = vpop.f32.mrf.mxu0
    %v10413 = vadd.f32 %v10374, %v10412
    %10414 = vdwg.mxu0
    %v10415 = vand.u32 %v513, 4294901760
    %v10416 = vsub.f32 %v513, %v10415
    %v10417 = vand.u32 %v10416, 4294901760
    %10418 = vmatpush.msra.mxu0 %v10417
    %v10419 = vand.u32 %v512, 4294901760
    %v10420 = vsub.f32 %v512, %v10419
    %v10421 = vand.u32 %v10420, 4294901760
    %10422 = vmatpush.msra.mxu0 %v10421
    %v10423 = vand.u32 %v511, 4294901760
    %v10424 = vsub.f32 %v511, %v10423
    %v10425 = vand.u32 %v10424, 4294901760
    %10426 = vmatpush.msra.mxu0 %v10425
    %v10427 = vand.u32 %v510, 4294901760
    %v10428 = vsub.f32 %v510, %v10427
    %v10429 = vand.u32 %v10428, 4294901760
    %10430 = vmatpush.msra.mxu0 %v10429
    %v10431 = vand.u32 %v509, 4294901760
    %v10432 = vsub.f32 %v509, %v10431
    %v10433 = vand.u32 %v10432, 4294901760
    %10434 = vmatpush.msra.mxu0 %v10433
    %v10435 = vand.u32 %v508, 4294901760
    %v10436 = vsub.f32 %v508, %v10435
    %v10437 = vand.u32 %v10436, 4294901760
    %10438 = vmatpush.msra.mxu0 %v10437
    %v10439 = vand.u32 %v507, 4294901760
    %v10440 = vsub.f32 %v507, %v10439
    %v10441 = vand.u32 %v10440, 4294901760
    %10442 = vmatpush.msra.mxu0 %v10441
    %v10443 = vand.u32 %v506, 4294901760
    %v10444 = vsub.f32 %v506, %v10443
    %v10445 = vand.u32 %v10444, 4294901760
    %10446 = vmatpush.msra.mxu0 %v10445
    %v10447 = vand.u32 %v505, 4294901760
    %v10448 = vsub.f32 %v505, %v10447
    %v10449 = vand.u32 %v10448, 4294901760
    %10450 = vmatpush.msra.mxu0 %v10449
    %v10451 = vand.u32 %v504, 4294901760
    %v10452 = vsub.f32 %v504, %v10451
    %v10453 = vand.u32 %v10452, 4294901760
    %10454 = vmatpush.msra.mxu0 %v10453
    %v10455 = vand.u32 %v503, 4294901760
    %v10456 = vsub.f32 %v503, %v10455
    %v10457 = vand.u32 %v10456, 4294901760
    %10458 = vmatpush.msra.mxu0 %v10457
    %v10459 = vand.u32 %v502, 4294901760
    %v10460 = vsub.f32 %v502, %v10459
    %v10461 = vand.u32 %v10460, 4294901760
    %10462 = vmatpush.msra.mxu0 %v10461
    %v10463 = vand.u32 %v501, 4294901760
    %v10464 = vsub.f32 %v501, %v10463
    %v10465 = vand.u32 %v10464, 4294901760
    %10466 = vmatpush.msra.mxu0 %v10465
    %v10467 = vand.u32 %v500, 4294901760
    %v10468 = vsub.f32 %v500, %v10467
    %v10469 = vand.u32 %v10468, 4294901760
    %10470 = vmatpush.msra.mxu0 %v10469
    %v10471 = vand.u32 %v499, 4294901760
    %v10472 = vsub.f32 %v499, %v10471
    %v10473 = vand.u32 %v10472, 4294901760
    %10474 = vmatpush.msra.mxu0 %v10473
    %v10475 = vand.u32 %v498, 4294901760
    %v10476 = vsub.f32 %v498, %v10475
    %v10477 = vand.u32 %v10476, 4294901760
    %10478 = vmatpush.msra.mxu0 %v10477
    %v10479 = vand.u32 %v596, 4294901760
    %10480 = vmatmul.f32.gmra.mxu0 %v10479
    %v10481 = vpop.f32.mrf.mxu0
    %v10482 = vadd.f32 %v10413, %v10481
    %10483 = vdwg.mxu0
    %v10484 = vand.u32 %v513, 4294901760
    %10485 = vmatpush.msra.mxu0 %v10484
    %v10486 = vand.u32 %v512, 4294901760
    %10487 = vmatpush.msra.mxu0 %v10486
    %v10488 = vand.u32 %v511, 4294901760
    %10489 = vmatpush.msra.mxu0 %v10488
    %v10490 = vand.u32 %v510, 4294901760
    %10491 = vmatpush.msra.mxu0 %v10490
    %v10492 = vand.u32 %v509, 4294901760
    %10493 = vmatpush.msra.mxu0 %v10492
    %v10494 = vand.u32 %v508, 4294901760
    %10495 = vmatpush.msra.mxu0 %v10494
    %v10496 = vand.u32 %v507, 4294901760
    %10497 = vmatpush.msra.mxu0 %v10496
    %v10498 = vand.u32 %v506, 4294901760
    %10499 = vmatpush.msra.mxu0 %v10498
    %v10500 = vand.u32 %v505, 4294901760
    %10501 = vmatpush.msra.mxu0 %v10500
    %v10502 = vand.u32 %v504, 4294901760
    %10503 = vmatpush.msra.mxu0 %v10502
    %v10504 = vand.u32 %v503, 4294901760
    %10505 = vmatpush.msra.mxu0 %v10504
    %v10506 = vand.u32 %v502, 4294901760
    %10507 = vmatpush.msra.mxu0 %v10506
    %v10508 = vand.u32 %v501, 4294901760
    %10509 = vmatpush.msra.mxu0 %v10508
    %v10510 = vand.u32 %v500, 4294901760
    %10511 = vmatpush.msra.mxu0 %v10510
    %v10512 = vand.u32 %v499, 4294901760
    %10513 = vmatpush.msra.mxu0 %v10512
    %v10514 = vand.u32 %v498, 4294901760
    %10515 = vmatpush.msra.mxu0 %v10514
    %v10516 = vand.u32 %v596, 4294901760
    %10517 = vmatmul.f32.gmra.mxu0 %v10516
    %v10518 = vpop.f32.mrf.mxu0
    %v10519 = vadd.f32 %v10482, %v10518
    %10520 = vdwg.mxu0
    %v10521 = vand.u32 %v529, 4294901760
    %10522 = vmatpush.msra.mxu0 %v10521
    %v10523 = vand.u32 %v528, 4294901760
    %10524 = vmatpush.msra.mxu0 %v10523
    %v10525 = vand.u32 %v527, 4294901760
    %10526 = vmatpush.msra.mxu0 %v10525
    %v10527 = vand.u32 %v526, 4294901760
    %10528 = vmatpush.msra.mxu0 %v10527
    %v10529 = vand.u32 %v525, 4294901760
    %10530 = vmatpush.msra.mxu0 %v10529
    %v10531 = vand.u32 %v524, 4294901760
    %10532 = vmatpush.msra.mxu0 %v10531
    %v10533 = vand.u32 %v523, 4294901760
    %10534 = vmatpush.msra.mxu0 %v10533
    %v10535 = vand.u32 %v522, 4294901760
    %10536 = vmatpush.msra.mxu0 %v10535
    %v10537 = vand.u32 %v521, 4294901760
    %10538 = vmatpush.msra.mxu0 %v10537
    %v10539 = vand.u32 %v520, 4294901760
    %10540 = vmatpush.msra.mxu0 %v10539
    %v10541 = vand.u32 %v519, 4294901760
    %10542 = vmatpush.msra.mxu0 %v10541
    %v10543 = vand.u32 %v518, 4294901760
    %10544 = vmatpush.msra.mxu0 %v10543
    %v10545 = vand.u32 %v517, 4294901760
    %10546 = vmatpush.msra.mxu0 %v10545
    %v10547 = vand.u32 %v516, 4294901760
    %10548 = vmatpush.msra.mxu0 %v10547
    %v10549 = vand.u32 %v515, 4294901760
    %10550 = vmatpush.msra.mxu0 %v10549
    %v10551 = vand.u32 %v514, 4294901760
    %10552 = vmatpush.msra.mxu0 %v10551
    %v10553 = vand.u32 %v597, 4294901760
    %v10554 = vsub.f32 %v597, %v10553
    %v10555 = vand.u32 %v10554, 4294901760
    %v10556 = vsub.f32 %v10554, %v10555
    %v10557 = vand.u32 %v10556, 4294901760
    %10558 = vmatmul.f32.gmra.mxu0 %v10557
    %v10559 = vpop.f32.mrf.mxu0
    %v10560 = vadd.f32 %v10519, %v10559
    %10561 = vdwg.mxu0
    %v10562 = vand.u32 %v529, 4294901760
    %v10563 = vsub.f32 %v529, %v10562
    %v10564 = vand.u32 %v10563, 4294901760
    %v10565 = vsub.f32 %v10563, %v10564
    %v10566 = vand.u32 %v10565, 4294901760
    %10567 = vmatpush.msra.mxu0 %v10566
    %v10568 = vand.u32 %v528, 4294901760
    %v10569 = vsub.f32 %v528, %v10568
    %v10570 = vand.u32 %v10569, 4294901760
    %v10571 = vsub.f32 %v10569, %v10570
    %v10572 = vand.u32 %v10571, 4294901760
    %10573 = vmatpush.msra.mxu0 %v10572
    %v10574 = vand.u32 %v527, 4294901760
    %v10575 = vsub.f32 %v527, %v10574
    %v10576 = vand.u32 %v10575, 4294901760
    %v10577 = vsub.f32 %v10575, %v10576
    %v10578 = vand.u32 %v10577, 4294901760
    %10579 = vmatpush.msra.mxu0 %v10578
    %v10580 = vand.u32 %v526, 4294901760
    %v10581 = vsub.f32 %v526, %v10580
    %v10582 = vand.u32 %v10581, 4294901760
    %v10583 = vsub.f32 %v10581, %v10582
    %v10584 = vand.u32 %v10583, 4294901760
    %10585 = vmatpush.msra.mxu0 %v10584
    %v10586 = vand.u32 %v525, 4294901760
    %v10587 = vsub.f32 %v525, %v10586
    %v10588 = vand.u32 %v10587, 4294901760
    %v10589 = vsub.f32 %v10587, %v10588
    %v10590 = vand.u32 %v10589, 4294901760
    %10591 = vmatpush.msra.mxu0 %v10590
    %v10592 = vand.u32 %v524, 4294901760
    %v10593 = vsub.f32 %v524, %v10592
    %v10594 = vand.u32 %v10593, 4294901760
    %v10595 = vsub.f32 %v10593, %v10594
    %v10596 = vand.u32 %v10595, 4294901760
    %10597 = vmatpush.msra.mxu0 %v10596
    %v10598 = vand.u32 %v523, 4294901760
    %v10599 = vsub.f32 %v523, %v10598
    %v10600 = vand.u32 %v10599, 4294901760
    %v10601 = vsub.f32 %v10599, %v10600
    %v10602 = vand.u32 %v10601, 4294901760
    %10603 = vmatpush.msra.mxu0 %v10602
    %v10604 = vand.u32 %v522, 4294901760
    %v10605 = vsub.f32 %v522, %v10604
    %v10606 = vand.u32 %v10605, 4294901760
    %v10607 = vsub.f32 %v10605, %v10606
    %v10608 = vand.u32 %v10607, 4294901760
    %10609 = vmatpush.msra.mxu0 %v10608
    %v10610 = vand.u32 %v521, 4294901760
    %v10611 = vsub.f32 %v521, %v10610
    %v10612 = vand.u32 %v10611, 4294901760
    %v10613 = vsub.f32 %v10611, %v10612
    %v10614 = vand.u32 %v10613, 4294901760
    %10615 = vmatpush.msra.mxu0 %v10614
    %v10616 = vand.u32 %v520, 4294901760
    %v10617 = vsub.f32 %v520, %v10616
    %v10618 = vand.u32 %v10617, 4294901760
    %v10619 = vsub.f32 %v10617, %v10618
    %v10620 = vand.u32 %v10619, 4294901760
    %10621 = vmatpush.msra.mxu0 %v10620
    %v10622 = vand.u32 %v519, 4294901760
    %v10623 = vsub.f32 %v519, %v10622
    %v10624 = vand.u32 %v10623, 4294901760
    %v10625 = vsub.f32 %v10623, %v10624
    %v10626 = vand.u32 %v10625, 4294901760
    %10627 = vmatpush.msra.mxu0 %v10626
    %v10628 = vand.u32 %v518, 4294901760
    %v10629 = vsub.f32 %v518, %v10628
    %v10630 = vand.u32 %v10629, 4294901760
    %v10631 = vsub.f32 %v10629, %v10630
    %v10632 = vand.u32 %v10631, 4294901760
    %10633 = vmatpush.msra.mxu0 %v10632
    %v10634 = vand.u32 %v517, 4294901760
    %v10635 = vsub.f32 %v517, %v10634
    %v10636 = vand.u32 %v10635, 4294901760
    %v10637 = vsub.f32 %v10635, %v10636
    %v10638 = vand.u32 %v10637, 4294901760
    %10639 = vmatpush.msra.mxu0 %v10638
    %v10640 = vand.u32 %v516, 4294901760
    %v10641 = vsub.f32 %v516, %v10640
    %v10642 = vand.u32 %v10641, 4294901760
    %v10643 = vsub.f32 %v10641, %v10642
    %v10644 = vand.u32 %v10643, 4294901760
    %10645 = vmatpush.msra.mxu0 %v10644
    %v10646 = vand.u32 %v515, 4294901760
    %v10647 = vsub.f32 %v515, %v10646
    %v10648 = vand.u32 %v10647, 4294901760
    %v10649 = vsub.f32 %v10647, %v10648
    %v10650 = vand.u32 %v10649, 4294901760
    %10651 = vmatpush.msra.mxu0 %v10650
    %v10652 = vand.u32 %v514, 4294901760
    %v10653 = vsub.f32 %v514, %v10652
    %v10654 = vand.u32 %v10653, 4294901760
    %v10655 = vsub.f32 %v10653, %v10654
    %v10656 = vand.u32 %v10655, 4294901760
    %10657 = vmatpush.msra.mxu0 %v10656
    %v10658 = vand.u32 %v597, 4294901760
    %10659 = vmatmul.f32.gmra.mxu0 %v10658
    %v10660 = vpop.f32.mrf.mxu0
    %v10661 = vadd.f32 %v10560, %v10660
    %10662 = vdwg.mxu0
    %v10663 = vand.u32 %v529, 4294901760
    %v10664 = vsub.f32 %v529, %v10663
    %10665 = vmatpush.msra.mxu0 %v10664
    %v10666 = vand.u32 %v528, 4294901760
    %v10667 = vsub.f32 %v528, %v10666
    %10668 = vmatpush.msra.mxu0 %v10667
    %v10669 = vand.u32 %v527, 4294901760
    %v10670 = vsub.f32 %v527, %v10669
    %10671 = vmatpush.msra.mxu0 %v10670
    %v10672 = vand.u32 %v526, 4294901760
    %v10673 = vsub.f32 %v526, %v10672
    %10674 = vmatpush.msra.mxu0 %v10673
    %v10675 = vand.u32 %v525, 4294901760
    %v10676 = vsub.f32 %v525, %v10675
    %10677 = vmatpush.msra.mxu0 %v10676
    %v10678 = vand.u32 %v524, 4294901760
    %v10679 = vsub.f32 %v524, %v10678
    %10680 = vmatpush.msra.mxu0 %v10679
    %v10681 = vand.u32 %v523, 4294901760
    %v10682 = vsub.f32 %v523, %v10681
    %10683 = vmatpush.msra.mxu0 %v10682
    %v10684 = vand.u32 %v522, 4294901760
    %v10685 = vsub.f32 %v522, %v10684
    %10686 = vmatpush.msra.mxu0 %v10685
    %v10687 = vand.u32 %v521, 4294901760
    %v10688 = vsub.f32 %v521, %v10687
    %10689 = vmatpush.msra.mxu0 %v10688
    %v10690 = vand.u32 %v520, 4294901760
    %v10691 = vsub.f32 %v520, %v10690
    %10692 = vmatpush.msra.mxu0 %v10691
    %v10693 = vand.u32 %v519, 4294901760
    %v10694 = vsub.f32 %v519, %v10693
    %10695 = vmatpush.msra.mxu0 %v10694
    %v10696 = vand.u32 %v518, 4294901760
    %v10697 = vsub.f32 %v518, %v10696
    %10698 = vmatpush.msra.mxu0 %v10697
    %v10699 = vand.u32 %v517, 4294901760
    %v10700 = vsub.f32 %v517, %v10699
    %10701 = vmatpush.msra.mxu0 %v10700
    %v10702 = vand.u32 %v516, 4294901760
    %v10703 = vsub.f32 %v516, %v10702
    %10704 = vmatpush.msra.mxu0 %v10703
    %v10705 = vand.u32 %v515, 4294901760
    %v10706 = vsub.f32 %v515, %v10705
    %10707 = vmatpush.msra.mxu0 %v10706
    %v10708 = vand.u32 %v514, 4294901760
    %v10709 = vsub.f32 %v514, %v10708
    %10710 = vmatpush.msra.mxu0 %v10709
    %v10711 = vand.u32 %v597, 4294901760
    %v10712 = vsub.f32 %v597, %v10711
    %10713 = vmatmul.f32.gmra.mxu0 %v10712
    %v10714 = vpop.f32.mrf.mxu0
    %v10715 = vadd.f32 %v10661, %v10714
    %10716 = vdwg.mxu0
    %v10717 = vand.u32 %v529, 4294901760
    %10718 = vmatpush.msra.mxu0 %v10717
    %v10719 = vand.u32 %v528, 4294901760
    %10720 = vmatpush.msra.mxu0 %v10719
    %v10721 = vand.u32 %v527, 4294901760
    %10722 = vmatpush.msra.mxu0 %v10721
    %v10723 = vand.u32 %v526, 4294901760
    %10724 = vmatpush.msra.mxu0 %v10723
    %v10725 = vand.u32 %v525, 4294901760
    %10726 = vmatpush.msra.mxu0 %v10725
    %v10727 = vand.u32 %v524, 4294901760
    %10728 = vmatpush.msra.mxu0 %v10727
    %v10729 = vand.u32 %v523, 4294901760
    %10730 = vmatpush.msra.mxu0 %v10729
    %v10731 = vand.u32 %v522, 4294901760
    %10732 = vmatpush.msra.mxu0 %v10731
    %v10733 = vand.u32 %v521, 4294901760
    %10734 = vmatpush.msra.mxu0 %v10733
    %v10735 = vand.u32 %v520, 4294901760
    %10736 = vmatpush.msra.mxu0 %v10735
    %v10737 = vand.u32 %v519, 4294901760
    %10738 = vmatpush.msra.mxu0 %v10737
    %v10739 = vand.u32 %v518, 4294901760
    %10740 = vmatpush.msra.mxu0 %v10739
    %v10741 = vand.u32 %v517, 4294901760
    %10742 = vmatpush.msra.mxu0 %v10741
    %v10743 = vand.u32 %v516, 4294901760
    %10744 = vmatpush.msra.mxu0 %v10743
    %v10745 = vand.u32 %v515, 4294901760
    %10746 = vmatpush.msra.mxu0 %v10745
    %v10747 = vand.u32 %v514, 4294901760
    %10748 = vmatpush.msra.mxu0 %v10747
    %v10749 = vand.u32 %v597, 4294901760
    %v10750 = vsub.f32 %v597, %v10749
    %v10751 = vand.u32 %v10750, 4294901760
    %10752 = vmatmul.f32.gmra.mxu0 %v10751
    %v10753 = vpop.f32.mrf.mxu0
    %v10754 = vadd.f32 %v10715, %v10753
    %10755 = vdwg.mxu0
    %v10756 = vand.u32 %v529, 4294901760
    %v10757 = vsub.f32 %v529, %v10756
    %v10758 = vand.u32 %v10757, 4294901760
    %10759 = vmatpush.msra.mxu0 %v10758
    %v10760 = vand.u32 %v528, 4294901760
    %v10761 = vsub.f32 %v528, %v10760
    %v10762 = vand.u32 %v10761, 4294901760
    %10763 = vmatpush.msra.mxu0 %v10762
    %v10764 = vand.u32 %v527, 4294901760
    %v10765 = vsub.f32 %v527, %v10764
    %v10766 = vand.u32 %v10765, 4294901760
    %10767 = vmatpush.msra.mxu0 %v10766
    %v10768 = vand.u32 %v526, 4294901760
    %v10769 = vsub.f32 %v526, %v10768
    %v10770 = vand.u32 %v10769, 4294901760
    %10771 = vmatpush.msra.mxu0 %v10770
    %v10772 = vand.u32 %v525, 4294901760
    %v10773 = vsub.f32 %v525, %v10772
    %v10774 = vand.u32 %v10773, 4294901760
    %10775 = vmatpush.msra.mxu0 %v10774
    %v10776 = vand.u32 %v524, 4294901760
    %v10777 = vsub.f32 %v524, %v10776
    %v10778 = vand.u32 %v10777, 4294901760
    %10779 = vmatpush.msra.mxu0 %v10778
    %v10780 = vand.u32 %v523, 4294901760
    %v10781 = vsub.f32 %v523, %v10780
    %v10782 = vand.u32 %v10781, 4294901760
    %10783 = vmatpush.msra.mxu0 %v10782
    %v10784 = vand.u32 %v522, 4294901760
    %v10785 = vsub.f32 %v522, %v10784
    %v10786 = vand.u32 %v10785, 4294901760
    %10787 = vmatpush.msra.mxu0 %v10786
    %v10788 = vand.u32 %v521, 4294901760
    %v10789 = vsub.f32 %v521, %v10788
    %v10790 = vand.u32 %v10789, 4294901760
    %10791 = vmatpush.msra.mxu0 %v10790
    %v10792 = vand.u32 %v520, 4294901760
    %v10793 = vsub.f32 %v520, %v10792
    %v10794 = vand.u32 %v10793, 4294901760
    %10795 = vmatpush.msra.mxu0 %v10794
    %v10796 = vand.u32 %v519, 4294901760
    %v10797 = vsub.f32 %v519, %v10796
    %v10798 = vand.u32 %v10797, 4294901760
    %10799 = vmatpush.msra.mxu0 %v10798
    %v10800 = vand.u32 %v518, 4294901760
    %v10801 = vsub.f32 %v518, %v10800
    %v10802 = vand.u32 %v10801, 4294901760
    %10803 = vmatpush.msra.mxu0 %v10802
    %v10804 = vand.u32 %v517, 4294901760
    %v10805 = vsub.f32 %v517, %v10804
    %v10806 = vand.u32 %v10805, 4294901760
    %10807 = vmatpush.msra.mxu0 %v10806
    %v10808 = vand.u32 %v516, 4294901760
    %v10809 = vsub.f32 %v516, %v10808
    %v10810 = vand.u32 %v10809, 4294901760
    %10811 = vmatpush.msra.mxu0 %v10810
    %v10812 = vand.u32 %v515, 4294901760
    %v10813 = vsub.f32 %v515, %v10812
    %v10814 = vand.u32 %v10813, 4294901760
    %10815 = vmatpush.msra.mxu0 %v10814
    %v10816 = vand.u32 %v514, 4294901760
    %v10817 = vsub.f32 %v514, %v10816
    %v10818 = vand.u32 %v10817, 4294901760
    %10819 = vmatpush.msra.mxu0 %v10818
    %v10820 = vand.u32 %v597, 4294901760
    %10821 = vmatmul.f32.gmra.mxu0 %v10820
    %v10822 = vpop.f32.mrf.mxu0
    %v10823 = vadd.f32 %v10754, %v10822
    %10824 = vdwg.mxu0
    %v10825 = vand.u32 %v529, 4294901760
    %10826 = vmatpush.msra.mxu0 %v10825
    %v10827 = vand.u32 %v528, 4294901760
    %10828 = vmatpush.msra.mxu0 %v10827
    %v10829 = vand.u32 %v527, 4294901760
    %10830 = vmatpush.msra.mxu0 %v10829
    %v10831 = vand.u32 %v526, 4294901760
    %10832 = vmatpush.msra.mxu0 %v10831
    %v10833 = vand.u32 %v525, 4294901760
    %10834 = vmatpush.msra.mxu0 %v10833
    %v10835 = vand.u32 %v524, 4294901760
    %10836 = vmatpush.msra.mxu0 %v10835
    %v10837 = vand.u32 %v523, 4294901760
    %10838 = vmatpush.msra.mxu0 %v10837
    %v10839 = vand.u32 %v522, 4294901760
    %10840 = vmatpush.msra.mxu0 %v10839
    %v10841 = vand.u32 %v521, 4294901760
    %10842 = vmatpush.msra.mxu0 %v10841
    %v10843 = vand.u32 %v520, 4294901760
    %10844 = vmatpush.msra.mxu0 %v10843
    %v10845 = vand.u32 %v519, 4294901760
    %10846 = vmatpush.msra.mxu0 %v10845
    %v10847 = vand.u32 %v518, 4294901760
    %10848 = vmatpush.msra.mxu0 %v10847
    %v10849 = vand.u32 %v517, 4294901760
    %10850 = vmatpush.msra.mxu0 %v10849
    %v10851 = vand.u32 %v516, 4294901760
    %10852 = vmatpush.msra.mxu0 %v10851
    %v10853 = vand.u32 %v515, 4294901760
    %10854 = vmatpush.msra.mxu0 %v10853
    %v10855 = vand.u32 %v514, 4294901760
    %10856 = vmatpush.msra.mxu0 %v10855
    %v10857 = vand.u32 %v597, 4294901760
    %10858 = vmatmul.f32.gmra.mxu0 %v10857
    %v10859 = vpop.f32.mrf.mxu0
    %v10860 = vadd.f32 %v10823, %v10859
    %10861 = vdwg.mxu0
    %v10862 = vand.u32 %v545, 4294901760
    %10863 = vmatpush.msra.mxu0 %v10862
    %v10864 = vand.u32 %v544, 4294901760
    %10865 = vmatpush.msra.mxu0 %v10864
    %v10866 = vand.u32 %v543, 4294901760
    %10867 = vmatpush.msra.mxu0 %v10866
    %v10868 = vand.u32 %v542, 4294901760
    %10869 = vmatpush.msra.mxu0 %v10868
    %v10870 = vand.u32 %v541, 4294901760
    %10871 = vmatpush.msra.mxu0 %v10870
    %v10872 = vand.u32 %v540, 4294901760
    %10873 = vmatpush.msra.mxu0 %v10872
    %v10874 = vand.u32 %v539, 4294901760
    %10875 = vmatpush.msra.mxu0 %v10874
    %v10876 = vand.u32 %v538, 4294901760
    %10877 = vmatpush.msra.mxu0 %v10876
    %v10878 = vand.u32 %v537, 4294901760
    %10879 = vmatpush.msra.mxu0 %v10878
    %v10880 = vand.u32 %v536, 4294901760
    %10881 = vmatpush.msra.mxu0 %v10880
    %v10882 = vand.u32 %v535, 4294901760
    %10883 = vmatpush.msra.mxu0 %v10882
    %v10884 = vand.u32 %v534, 4294901760
    %10885 = vmatpush.msra.mxu0 %v10884
    %v10886 = vand.u32 %v533, 4294901760
    %10887 = vmatpush.msra.mxu0 %v10886
    %v10888 = vand.u32 %v532, 4294901760
    %10889 = vmatpush.msra.mxu0 %v10888
    %v10890 = vand.u32 %v531, 4294901760
    %10891 = vmatpush.msra.mxu0 %v10890
    %v10892 = vand.u32 %v530, 4294901760
    %10893 = vmatpush.msra.mxu0 %v10892
    %v10894 = vand.u32 %v598, 4294901760
    %v10895 = vsub.f32 %v598, %v10894
    %v10896 = vand.u32 %v10895, 4294901760
    %v10897 = vsub.f32 %v10895, %v10896
    %v10898 = vand.u32 %v10897, 4294901760
    %10899 = vmatmul.f32.gmra.mxu0 %v10898
    %v10900 = vpop.f32.mrf.mxu0
    %v10901 = vadd.f32 %v10860, %v10900
    %10902 = vdwg.mxu0
    %v10903 = vand.u32 %v545, 4294901760
    %v10904 = vsub.f32 %v545, %v10903
    %v10905 = vand.u32 %v10904, 4294901760
    %v10906 = vsub.f32 %v10904, %v10905
    %v10907 = vand.u32 %v10906, 4294901760
    %10908 = vmatpush.msra.mxu0 %v10907
    %v10909 = vand.u32 %v544, 4294901760
    %v10910 = vsub.f32 %v544, %v10909
    %v10911 = vand.u32 %v10910, 4294901760
    %v10912 = vsub.f32 %v10910, %v10911
    %v10913 = vand.u32 %v10912, 4294901760
    %10914 = vmatpush.msra.mxu0 %v10913
    %v10915 = vand.u32 %v543, 4294901760
    %v10916 = vsub.f32 %v543, %v10915
    %v10917 = vand.u32 %v10916, 4294901760
    %v10918 = vsub.f32 %v10916, %v10917
    %v10919 = vand.u32 %v10918, 4294901760
    %10920 = vmatpush.msra.mxu0 %v10919
    %v10921 = vand.u32 %v542, 4294901760
    %v10922 = vsub.f32 %v542, %v10921
    %v10923 = vand.u32 %v10922, 4294901760
    %v10924 = vsub.f32 %v10922, %v10923
    %v10925 = vand.u32 %v10924, 4294901760
    %10926 = vmatpush.msra.mxu0 %v10925
    %v10927 = vand.u32 %v541, 4294901760
    %v10928 = vsub.f32 %v541, %v10927
    %v10929 = vand.u32 %v10928, 4294901760
    %v10930 = vsub.f32 %v10928, %v10929
    %v10931 = vand.u32 %v10930, 4294901760
    %10932 = vmatpush.msra.mxu0 %v10931
    %v10933 = vand.u32 %v540, 4294901760
    %v10934 = vsub.f32 %v540, %v10933
    %v10935 = vand.u32 %v10934, 4294901760
    %v10936 = vsub.f32 %v10934, %v10935
    %v10937 = vand.u32 %v10936, 4294901760
    %10938 = vmatpush.msra.mxu0 %v10937
    %v10939 = vand.u32 %v539, 4294901760
    %v10940 = vsub.f32 %v539, %v10939
    %v10941 = vand.u32 %v10940, 4294901760
    %v10942 = vsub.f32 %v10940, %v10941
    %v10943 = vand.u32 %v10942, 4294901760
    %10944 = vmatpush.msra.mxu0 %v10943
    %v10945 = vand.u32 %v538, 4294901760
    %v10946 = vsub.f32 %v538, %v10945
    %v10947 = vand.u32 %v10946, 4294901760
    %v10948 = vsub.f32 %v10946, %v10947
    %v10949 = vand.u32 %v10948, 4294901760
    %10950 = vmatpush.msra.mxu0 %v10949
    %v10951 = vand.u32 %v537, 4294901760
    %v10952 = vsub.f32 %v537, %v10951
    %v10953 = vand.u32 %v10952, 4294901760
    %v10954 = vsub.f32 %v10952, %v10953
    %v10955 = vand.u32 %v10954, 4294901760
    %10956 = vmatpush.msra.mxu0 %v10955
    %v10957 = vand.u32 %v536, 4294901760
    %v10958 = vsub.f32 %v536, %v10957
    %v10959 = vand.u32 %v10958, 4294901760
    %v10960 = vsub.f32 %v10958, %v10959
    %v10961 = vand.u32 %v10960, 4294901760
    %10962 = vmatpush.msra.mxu0 %v10961
    %v10963 = vand.u32 %v535, 4294901760
    %v10964 = vsub.f32 %v535, %v10963
    %v10965 = vand.u32 %v10964, 4294901760
    %v10966 = vsub.f32 %v10964, %v10965
    %v10967 = vand.u32 %v10966, 4294901760
    %10968 = vmatpush.msra.mxu0 %v10967
    %v10969 = vand.u32 %v534, 4294901760
    %v10970 = vsub.f32 %v534, %v10969
    %v10971 = vand.u32 %v10970, 4294901760
    %v10972 = vsub.f32 %v10970, %v10971
    %v10973 = vand.u32 %v10972, 4294901760
    %10974 = vmatpush.msra.mxu0 %v10973
    %v10975 = vand.u32 %v533, 4294901760
    %v10976 = vsub.f32 %v533, %v10975
    %v10977 = vand.u32 %v10976, 4294901760
    %v10978 = vsub.f32 %v10976, %v10977
    %v10979 = vand.u32 %v10978, 4294901760
    %10980 = vmatpush.msra.mxu0 %v10979
    %v10981 = vand.u32 %v532, 4294901760
    %v10982 = vsub.f32 %v532, %v10981
    %v10983 = vand.u32 %v10982, 4294901760
    %v10984 = vsub.f32 %v10982, %v10983
    %v10985 = vand.u32 %v10984, 4294901760
    %10986 = vmatpush.msra.mxu0 %v10985
    %v10987 = vand.u32 %v531, 4294901760
    %v10988 = vsub.f32 %v531, %v10987
    %v10989 = vand.u32 %v10988, 4294901760
    %v10990 = vsub.f32 %v10988, %v10989
    %v10991 = vand.u32 %v10990, 4294901760
    %10992 = vmatpush.msra.mxu0 %v10991
    %v10993 = vand.u32 %v530, 4294901760
    %v10994 = vsub.f32 %v530, %v10993
    %v10995 = vand.u32 %v10994, 4294901760
    %v10996 = vsub.f32 %v10994, %v10995
    %v10997 = vand.u32 %v10996, 4294901760
    %10998 = vmatpush.msra.mxu0 %v10997
    %v10999 = vand.u32 %v598, 4294901760
    %11000 = vmatmul.f32.gmra.mxu0 %v10999
    %v11001 = vpop.f32.mrf.mxu0
    %v11002 = vadd.f32 %v10901, %v11001
    %11003 = vdwg.mxu0
    %v11004 = vand.u32 %v545, 4294901760
    %v11005 = vsub.f32 %v545, %v11004
    %11006 = vmatpush.msra.mxu0 %v11005
    %v11007 = vand.u32 %v544, 4294901760
    %v11008 = vsub.f32 %v544, %v11007
    %11009 = vmatpush.msra.mxu0 %v11008
    %v11010 = vand.u32 %v543, 4294901760
    %v11011 = vsub.f32 %v543, %v11010
    %11012 = vmatpush.msra.mxu0 %v11011
    %v11013 = vand.u32 %v542, 4294901760
    %v11014 = vsub.f32 %v542, %v11013
    %11015 = vmatpush.msra.mxu0 %v11014
    %v11016 = vand.u32 %v541, 4294901760
    %v11017 = vsub.f32 %v541, %v11016
    %11018 = vmatpush.msra.mxu0 %v11017
    %v11019 = vand.u32 %v540, 4294901760
    %v11020 = vsub.f32 %v540, %v11019
    %11021 = vmatpush.msra.mxu0 %v11020
    %v11022 = vand.u32 %v539, 4294901760
    %v11023 = vsub.f32 %v539, %v11022
    %11024 = vmatpush.msra.mxu0 %v11023
    %v11025 = vand.u32 %v538, 4294901760
    %v11026 = vsub.f32 %v538, %v11025
    %11027 = vmatpush.msra.mxu0 %v11026
    %v11028 = vand.u32 %v537, 4294901760
    %v11029 = vsub.f32 %v537, %v11028
    %11030 = vmatpush.msra.mxu0 %v11029
    %v11031 = vand.u32 %v536, 4294901760
    %v11032 = vsub.f32 %v536, %v11031
    %11033 = vmatpush.msra.mxu0 %v11032
    %v11034 = vand.u32 %v535, 4294901760
    %v11035 = vsub.f32 %v535, %v11034
    %11036 = vmatpush.msra.mxu0 %v11035
    %v11037 = vand.u32 %v534, 4294901760
    %v11038 = vsub.f32 %v534, %v11037
    %11039 = vmatpush.msra.mxu0 %v11038
    %v11040 = vand.u32 %v533, 4294901760
    %v11041 = vsub.f32 %v533, %v11040
    %11042 = vmatpush.msra.mxu0 %v11041
    %v11043 = vand.u32 %v532, 4294901760
    %v11044 = vsub.f32 %v532, %v11043
    %11045 = vmatpush.msra.mxu0 %v11044
    %v11046 = vand.u32 %v531, 4294901760
    %v11047 = vsub.f32 %v531, %v11046
    %11048 = vmatpush.msra.mxu0 %v11047
    %v11049 = vand.u32 %v530, 4294901760
    %v11050 = vsub.f32 %v530, %v11049
    %11051 = vmatpush.msra.mxu0 %v11050
    %v11052 = vand.u32 %v598, 4294901760
    %v11053 = vsub.f32 %v598, %v11052
    %11054 = vmatmul.f32.gmra.mxu0 %v11053
    %v11055 = vpop.f32.mrf.mxu0
    %v11056 = vadd.f32 %v11002, %v11055
    %11057 = vdwg.mxu0
    %v11058 = vand.u32 %v545, 4294901760
    %11059 = vmatpush.msra.mxu0 %v11058
    %v11060 = vand.u32 %v544, 4294901760
    %11061 = vmatpush.msra.mxu0 %v11060
    %v11062 = vand.u32 %v543, 4294901760
    %11063 = vmatpush.msra.mxu0 %v11062
    %v11064 = vand.u32 %v542, 4294901760
    %11065 = vmatpush.msra.mxu0 %v11064
    %v11066 = vand.u32 %v541, 4294901760
    %11067 = vmatpush.msra.mxu0 %v11066
    %v11068 = vand.u32 %v540, 4294901760
    %11069 = vmatpush.msra.mxu0 %v11068
    %v11070 = vand.u32 %v539, 4294901760
    %11071 = vmatpush.msra.mxu0 %v11070
    %v11072 = vand.u32 %v538, 4294901760
    %11073 = vmatpush.msra.mxu0 %v11072
    %v11074 = vand.u32 %v537, 4294901760
    %11075 = vmatpush.msra.mxu0 %v11074
    %v11076 = vand.u32 %v536, 4294901760
    %11077 = vmatpush.msra.mxu0 %v11076
    %v11078 = vand.u32 %v535, 4294901760
    %11079 = vmatpush.msra.mxu0 %v11078
    %v11080 = vand.u32 %v534, 4294901760
    %11081 = vmatpush.msra.mxu0 %v11080
    %v11082 = vand.u32 %v533, 4294901760
    %11083 = vmatpush.msra.mxu0 %v11082
    %v11084 = vand.u32 %v532, 4294901760
    %11085 = vmatpush.msra.mxu0 %v11084
    %v11086 = vand.u32 %v531, 4294901760
    %11087 = vmatpush.msra.mxu0 %v11086
    %v11088 = vand.u32 %v530, 4294901760
    %11089 = vmatpush.msra.mxu0 %v11088
    %v11090 = vand.u32 %v598, 4294901760
    %v11091 = vsub.f32 %v598, %v11090
    %v11092 = vand.u32 %v11091, 4294901760
    %11093 = vmatmul.f32.gmra.mxu0 %v11092
    %v11094 = vpop.f32.mrf.mxu0
    %v11095 = vadd.f32 %v11056, %v11094
    %11096 = vdwg.mxu0
    %v11097 = vand.u32 %v545, 4294901760
    %v11098 = vsub.f32 %v545, %v11097
    %v11099 = vand.u32 %v11098, 4294901760
    %11100 = vmatpush.msra.mxu0 %v11099
    %v11101 = vand.u32 %v544, 4294901760
    %v11102 = vsub.f32 %v544, %v11101
    %v11103 = vand.u32 %v11102, 4294901760
    %11104 = vmatpush.msra.mxu0 %v11103
    %v11105 = vand.u32 %v543, 4294901760
    %v11106 = vsub.f32 %v543, %v11105
    %v11107 = vand.u32 %v11106, 4294901760
    %11108 = vmatpush.msra.mxu0 %v11107
    %v11109 = vand.u32 %v542, 4294901760
    %v11110 = vsub.f32 %v542, %v11109
    %v11111 = vand.u32 %v11110, 4294901760
    %11112 = vmatpush.msra.mxu0 %v11111
    %v11113 = vand.u32 %v541, 4294901760
    %v11114 = vsub.f32 %v541, %v11113
    %v11115 = vand.u32 %v11114, 4294901760
    %11116 = vmatpush.msra.mxu0 %v11115
    %v11117 = vand.u32 %v540, 4294901760
    %v11118 = vsub.f32 %v540, %v11117
    %v11119 = vand.u32 %v11118, 4294901760
    %11120 = vmatpush.msra.mxu0 %v11119
    %v11121 = vand.u32 %v539, 4294901760
    %v11122 = vsub.f32 %v539, %v11121
    %v11123 = vand.u32 %v11122, 4294901760
    %11124 = vmatpush.msra.mxu0 %v11123
    %v11125 = vand.u32 %v538, 4294901760
    %v11126 = vsub.f32 %v538, %v11125
    %v11127 = vand.u32 %v11126, 4294901760
    %11128 = vmatpush.msra.mxu0 %v11127
    %v11129 = vand.u32 %v537, 4294901760
    %v11130 = vsub.f32 %v537, %v11129
    %v11131 = vand.u32 %v11130, 4294901760
    %11132 = vmatpush.msra.mxu0 %v11131
    %v11133 = vand.u32 %v536, 4294901760
    %v11134 = vsub.f32 %v536, %v11133
    %v11135 = vand.u32 %v11134, 4294901760
    %11136 = vmatpush.msra.mxu0 %v11135
    %v11137 = vand.u32 %v535, 4294901760
    %v11138 = vsub.f32 %v535, %v11137
    %v11139 = vand.u32 %v11138, 4294901760
    %11140 = vmatpush.msra.mxu0 %v11139
    %v11141 = vand.u32 %v534, 4294901760
    %v11142 = vsub.f32 %v534, %v11141
    %v11143 = vand.u32 %v11142, 4294901760
    %11144 = vmatpush.msra.mxu0 %v11143
    %v11145 = vand.u32 %v533, 4294901760
    %v11146 = vsub.f32 %v533, %v11145
    %v11147 = vand.u32 %v11146, 4294901760
    %11148 = vmatpush.msra.mxu0 %v11147
    %v11149 = vand.u32 %v532, 4294901760
    %v11150 = vsub.f32 %v532, %v11149
    %v11151 = vand.u32 %v11150, 4294901760
    %11152 = vmatpush.msra.mxu0 %v11151
    %v11153 = vand.u32 %v531, 4294901760
    %v11154 = vsub.f32 %v531, %v11153
    %v11155 = vand.u32 %v11154, 4294901760
    %11156 = vmatpush.msra.mxu0 %v11155
    %v11157 = vand.u32 %v530, 4294901760
    %v11158 = vsub.f32 %v530, %v11157
    %v11159 = vand.u32 %v11158, 4294901760
    %11160 = vmatpush.msra.mxu0 %v11159
    %v11161 = vand.u32 %v598, 4294901760
    %11162 = vmatmul.f32.gmra.mxu0 %v11161
    %v11163 = vpop.f32.mrf.mxu0
    %v11164 = vadd.f32 %v11095, %v11163
    %11165 = vdwg.mxu0
    %v11166 = vand.u32 %v545, 4294901760
    %11167 = vmatpush.msra.mxu0 %v11166
    %v11168 = vand.u32 %v544, 4294901760
    %11169 = vmatpush.msra.mxu0 %v11168
    %v11170 = vand.u32 %v543, 4294901760
    %11171 = vmatpush.msra.mxu0 %v11170
    %v11172 = vand.u32 %v542, 4294901760
    %11173 = vmatpush.msra.mxu0 %v11172
    %v11174 = vand.u32 %v541, 4294901760
    %11175 = vmatpush.msra.mxu0 %v11174
    %v11176 = vand.u32 %v540, 4294901760
    %11177 = vmatpush.msra.mxu0 %v11176
    %v11178 = vand.u32 %v539, 4294901760
    %11179 = vmatpush.msra.mxu0 %v11178
    %v11180 = vand.u32 %v538, 4294901760
    %11181 = vmatpush.msra.mxu0 %v11180
    %v11182 = vand.u32 %v537, 4294901760
    %11183 = vmatpush.msra.mxu0 %v11182
    %v11184 = vand.u32 %v536, 4294901760
    %11185 = vmatpush.msra.mxu0 %v11184
    %v11186 = vand.u32 %v535, 4294901760
    %11187 = vmatpush.msra.mxu0 %v11186
    %v11188 = vand.u32 %v534, 4294901760
    %11189 = vmatpush.msra.mxu0 %v11188
    %v11190 = vand.u32 %v533, 4294901760
    %11191 = vmatpush.msra.mxu0 %v11190
    %v11192 = vand.u32 %v532, 4294901760
    %11193 = vmatpush.msra.mxu0 %v11192
    %v11194 = vand.u32 %v531, 4294901760
    %11195 = vmatpush.msra.mxu0 %v11194
    %v11196 = vand.u32 %v530, 4294901760
    %11197 = vmatpush.msra.mxu0 %v11196
    %v11198 = vand.u32 %v598, 4294901760
    %11199 = vmatmul.f32.gmra.mxu0 %v11198
    %v11200 = vpop.f32.mrf.mxu0
    %v11201 = vadd.f32 %v11164, %v11200
    %11202 = vdwg.mxu0
    %v11203 = vand.u32 %v561, 4294901760
    %11204 = vmatpush.msra.mxu0 %v11203
    %v11205 = vand.u32 %v560, 4294901760
    %11206 = vmatpush.msra.mxu0 %v11205
    %v11207 = vand.u32 %v559, 4294901760
    %11208 = vmatpush.msra.mxu0 %v11207
    %v11209 = vand.u32 %v558, 4294901760
    %11210 = vmatpush.msra.mxu0 %v11209
    %v11211 = vand.u32 %v557, 4294901760
    %11212 = vmatpush.msra.mxu0 %v11211
    %v11213 = vand.u32 %v556, 4294901760
    %11214 = vmatpush.msra.mxu0 %v11213
    %v11215 = vand.u32 %v555, 4294901760
    %11216 = vmatpush.msra.mxu0 %v11215
    %v11217 = vand.u32 %v554, 4294901760
    %11218 = vmatpush.msra.mxu0 %v11217
    %v11219 = vand.u32 %v553, 4294901760
    %11220 = vmatpush.msra.mxu0 %v11219
    %v11221 = vand.u32 %v552, 4294901760
    %11222 = vmatpush.msra.mxu0 %v11221
    %v11223 = vand.u32 %v551, 4294901760
    %11224 = vmatpush.msra.mxu0 %v11223
    %v11225 = vand.u32 %v550, 4294901760
    %11226 = vmatpush.msra.mxu0 %v11225
    %v11227 = vand.u32 %v549, 4294901760
    %11228 = vmatpush.msra.mxu0 %v11227
    %v11229 = vand.u32 %v548, 4294901760
    %11230 = vmatpush.msra.mxu0 %v11229
    %v11231 = vand.u32 %v547, 4294901760
    %11232 = vmatpush.msra.mxu0 %v11231
    %v11233 = vand.u32 %v546, 4294901760
    %11234 = vmatpush.msra.mxu0 %v11233
    %v11235 = vand.u32 %v599, 4294901760
    %v11236 = vsub.f32 %v599, %v11235
    %v11237 = vand.u32 %v11236, 4294901760
    %v11238 = vsub.f32 %v11236, %v11237
    %v11239 = vand.u32 %v11238, 4294901760
    %11240 = vmatmul.f32.gmra.mxu0 %v11239
    %v11241 = vpop.f32.mrf.mxu0
    %v11242 = vadd.f32 %v11201, %v11241
    %11243 = vdwg.mxu0
    %v11244 = vand.u32 %v561, 4294901760
    %v11245 = vsub.f32 %v561, %v11244
    %v11246 = vand.u32 %v11245, 4294901760
    %v11247 = vsub.f32 %v11245, %v11246
    %v11248 = vand.u32 %v11247, 4294901760
    %11249 = vmatpush.msra.mxu0 %v11248
    %v11250 = vand.u32 %v560, 4294901760
    %v11251 = vsub.f32 %v560, %v11250
    %v11252 = vand.u32 %v11251, 4294901760
    %v11253 = vsub.f32 %v11251, %v11252
    %v11254 = vand.u32 %v11253, 4294901760
    %11255 = vmatpush.msra.mxu0 %v11254
    %v11256 = vand.u32 %v559, 4294901760
    %v11257 = vsub.f32 %v559, %v11256
    %v11258 = vand.u32 %v11257, 4294901760
    %v11259 = vsub.f32 %v11257, %v11258
    %v11260 = vand.u32 %v11259, 4294901760
    %11261 = vmatpush.msra.mxu0 %v11260
    %v11262 = vand.u32 %v558, 4294901760
    %v11263 = vsub.f32 %v558, %v11262
    %v11264 = vand.u32 %v11263, 4294901760
    %v11265 = vsub.f32 %v11263, %v11264
    %v11266 = vand.u32 %v11265, 4294901760
    %11267 = vmatpush.msra.mxu0 %v11266
    %v11268 = vand.u32 %v557, 4294901760
    %v11269 = vsub.f32 %v557, %v11268
    %v11270 = vand.u32 %v11269, 4294901760
    %v11271 = vsub.f32 %v11269, %v11270
    %v11272 = vand.u32 %v11271, 4294901760
    %11273 = vmatpush.msra.mxu0 %v11272
    %v11274 = vand.u32 %v556, 4294901760
    %v11275 = vsub.f32 %v556, %v11274
    %v11276 = vand.u32 %v11275, 4294901760
    %v11277 = vsub.f32 %v11275, %v11276
    %v11278 = vand.u32 %v11277, 4294901760
    %11279 = vmatpush.msra.mxu0 %v11278
    %v11280 = vand.u32 %v555, 4294901760
    %v11281 = vsub.f32 %v555, %v11280
    %v11282 = vand.u32 %v11281, 4294901760
    %v11283 = vsub.f32 %v11281, %v11282
    %v11284 = vand.u32 %v11283, 4294901760
    %11285 = vmatpush.msra.mxu0 %v11284
    %v11286 = vand.u32 %v554, 4294901760
    %v11287 = vsub.f32 %v554, %v11286
    %v11288 = vand.u32 %v11287, 4294901760
    %v11289 = vsub.f32 %v11287, %v11288
    %v11290 = vand.u32 %v11289, 4294901760
    %11291 = vmatpush.msra.mxu0 %v11290
    %v11292 = vand.u32 %v553, 4294901760
    %v11293 = vsub.f32 %v553, %v11292
    %v11294 = vand.u32 %v11293, 4294901760
    %v11295 = vsub.f32 %v11293, %v11294
    %v11296 = vand.u32 %v11295, 4294901760
    %11297 = vmatpush.msra.mxu0 %v11296
    %v11298 = vand.u32 %v552, 4294901760
    %v11299 = vsub.f32 %v552, %v11298
    %v11300 = vand.u32 %v11299, 4294901760
    %v11301 = vsub.f32 %v11299, %v11300
    %v11302 = vand.u32 %v11301, 4294901760
    %11303 = vmatpush.msra.mxu0 %v11302
    %v11304 = vand.u32 %v551, 4294901760
    %v11305 = vsub.f32 %v551, %v11304
    %v11306 = vand.u32 %v11305, 4294901760
    %v11307 = vsub.f32 %v11305, %v11306
    %v11308 = vand.u32 %v11307, 4294901760
    %11309 = vmatpush.msra.mxu0 %v11308
    %v11310 = vand.u32 %v550, 4294901760
    %v11311 = vsub.f32 %v550, %v11310
    %v11312 = vand.u32 %v11311, 4294901760
    %v11313 = vsub.f32 %v11311, %v11312
    %v11314 = vand.u32 %v11313, 4294901760
    %11315 = vmatpush.msra.mxu0 %v11314
    %v11316 = vand.u32 %v549, 4294901760
    %v11317 = vsub.f32 %v549, %v11316
    %v11318 = vand.u32 %v11317, 4294901760
    %v11319 = vsub.f32 %v11317, %v11318
    %v11320 = vand.u32 %v11319, 4294901760
    %11321 = vmatpush.msra.mxu0 %v11320
    %v11322 = vand.u32 %v548, 4294901760
    %v11323 = vsub.f32 %v548, %v11322
    %v11324 = vand.u32 %v11323, 4294901760
    %v11325 = vsub.f32 %v11323, %v11324
    %v11326 = vand.u32 %v11325, 4294901760
    %11327 = vmatpush.msra.mxu0 %v11326
    %v11328 = vand.u32 %v547, 4294901760
    %v11329 = vsub.f32 %v547, %v11328
    %v11330 = vand.u32 %v11329, 4294901760
    %v11331 = vsub.f32 %v11329, %v11330
    %v11332 = vand.u32 %v11331, 4294901760
    %11333 = vmatpush.msra.mxu0 %v11332
    %v11334 = vand.u32 %v546, 4294901760
    %v11335 = vsub.f32 %v546, %v11334
    %v11336 = vand.u32 %v11335, 4294901760
    %v11337 = vsub.f32 %v11335, %v11336
    %v11338 = vand.u32 %v11337, 4294901760
    %11339 = vmatpush.msra.mxu0 %v11338
    %v11340 = vand.u32 %v599, 4294901760
    %11341 = vmatmul.f32.gmra.mxu0 %v11340
    %v11342 = vpop.f32.mrf.mxu0
    %v11343 = vadd.f32 %v11242, %v11342
    %11344 = vdwg.mxu0
    %v11345 = vand.u32 %v561, 4294901760
    %v11346 = vsub.f32 %v561, %v11345
    %11347 = vmatpush.msra.mxu0 %v11346
    %v11348 = vand.u32 %v560, 4294901760
    %v11349 = vsub.f32 %v560, %v11348
    %11350 = vmatpush.msra.mxu0 %v11349
    %v11351 = vand.u32 %v559, 4294901760
    %v11352 = vsub.f32 %v559, %v11351
    %11353 = vmatpush.msra.mxu0 %v11352
    %v11354 = vand.u32 %v558, 4294901760
    %v11355 = vsub.f32 %v558, %v11354
    %11356 = vmatpush.msra.mxu0 %v11355
    %v11357 = vand.u32 %v557, 4294901760
    %v11358 = vsub.f32 %v557, %v11357
    %11359 = vmatpush.msra.mxu0 %v11358
    %v11360 = vand.u32 %v556, 4294901760
    %v11361 = vsub.f32 %v556, %v11360
    %11362 = vmatpush.msra.mxu0 %v11361
    %v11363 = vand.u32 %v555, 4294901760
    %v11364 = vsub.f32 %v555, %v11363
    %11365 = vmatpush.msra.mxu0 %v11364
    %v11366 = vand.u32 %v554, 4294901760
    %v11367 = vsub.f32 %v554, %v11366
    %11368 = vmatpush.msra.mxu0 %v11367
    %v11369 = vand.u32 %v553, 4294901760
    %v11370 = vsub.f32 %v553, %v11369
    %11371 = vmatpush.msra.mxu0 %v11370
    %v11372 = vand.u32 %v552, 4294901760
    %v11373 = vsub.f32 %v552, %v11372
    %11374 = vmatpush.msra.mxu0 %v11373
    %v11375 = vand.u32 %v551, 4294901760
    %v11376 = vsub.f32 %v551, %v11375
    %11377 = vmatpush.msra.mxu0 %v11376
    %v11378 = vand.u32 %v550, 4294901760
    %v11379 = vsub.f32 %v550, %v11378
    %11380 = vmatpush.msra.mxu0 %v11379
    %v11381 = vand.u32 %v549, 4294901760
    %v11382 = vsub.f32 %v549, %v11381
    %11383 = vmatpush.msra.mxu0 %v11382
    %v11384 = vand.u32 %v548, 4294901760
    %v11385 = vsub.f32 %v548, %v11384
    %11386 = vmatpush.msra.mxu0 %v11385
    %v11387 = vand.u32 %v547, 4294901760
    %v11388 = vsub.f32 %v547, %v11387
    %11389 = vmatpush.msra.mxu0 %v11388
    %v11390 = vand.u32 %v546, 4294901760
    %v11391 = vsub.f32 %v546, %v11390
    %11392 = vmatpush.msra.mxu0 %v11391
    %v11393 = vand.u32 %v599, 4294901760
    %v11394 = vsub.f32 %v599, %v11393
    %11395 = vmatmul.f32.gmra.mxu0 %v11394
    %v11396 = vpop.f32.mrf.mxu0
    %v11397 = vadd.f32 %v11343, %v11396
    %11398 = vdwg.mxu0
    %v11399 = vand.u32 %v561, 4294901760
    %11400 = vmatpush.msra.mxu0 %v11399
    %v11401 = vand.u32 %v560, 4294901760
    %11402 = vmatpush.msra.mxu0 %v11401
    %v11403 = vand.u32 %v559, 4294901760
    %11404 = vmatpush.msra.mxu0 %v11403
    %v11405 = vand.u32 %v558, 4294901760
    %11406 = vmatpush.msra.mxu0 %v11405
    %v11407 = vand.u32 %v557, 4294901760
    %11408 = vmatpush.msra.mxu0 %v11407
    %v11409 = vand.u32 %v556, 4294901760
    %11410 = vmatpush.msra.mxu0 %v11409
    %v11411 = vand.u32 %v555, 4294901760
    %11412 = vmatpush.msra.mxu0 %v11411
    %v11413 = vand.u32 %v554, 4294901760
    %11414 = vmatpush.msra.mxu0 %v11413
    %v11415 = vand.u32 %v553, 4294901760
    %11416 = vmatpush.msra.mxu0 %v11415
    %v11417 = vand.u32 %v552, 4294901760
    %11418 = vmatpush.msra.mxu0 %v11417
    %v11419 = vand.u32 %v551, 4294901760
    %11420 = vmatpush.msra.mxu0 %v11419
    %v11421 = vand.u32 %v550, 4294901760
    %11422 = vmatpush.msra.mxu0 %v11421
    %v11423 = vand.u32 %v549, 4294901760
    %11424 = vmatpush.msra.mxu0 %v11423
    %v11425 = vand.u32 %v548, 4294901760
    %11426 = vmatpush.msra.mxu0 %v11425
    %v11427 = vand.u32 %v547, 4294901760
    %11428 = vmatpush.msra.mxu0 %v11427
    %v11429 = vand.u32 %v546, 4294901760
    %11430 = vmatpush.msra.mxu0 %v11429
    %v11431 = vand.u32 %v599, 4294901760
    %v11432 = vsub.f32 %v599, %v11431
    %v11433 = vand.u32 %v11432, 4294901760
    %11434 = vmatmul.f32.gmra.mxu0 %v11433
    %v11435 = vpop.f32.mrf.mxu0
    %v11436 = vadd.f32 %v11397, %v11435
    %11437 = vdwg.mxu0
    %v11438 = vand.u32 %v561, 4294901760
    %v11439 = vsub.f32 %v561, %v11438
    %v11440 = vand.u32 %v11439, 4294901760
    %11441 = vmatpush.msra.mxu0 %v11440
    %v11442 = vand.u32 %v560, 4294901760
    %v11443 = vsub.f32 %v560, %v11442
    %v11444 = vand.u32 %v11443, 4294901760
    %11445 = vmatpush.msra.mxu0 %v11444
    %v11446 = vand.u32 %v559, 4294901760
    %v11447 = vsub.f32 %v559, %v11446
    %v11448 = vand.u32 %v11447, 4294901760
    %11449 = vmatpush.msra.mxu0 %v11448
    %v11450 = vand.u32 %v558, 4294901760
    %v11451 = vsub.f32 %v558, %v11450
    %v11452 = vand.u32 %v11451, 4294901760
    %11453 = vmatpush.msra.mxu0 %v11452
    %v11454 = vand.u32 %v557, 4294901760
    %v11455 = vsub.f32 %v557, %v11454
    %v11456 = vand.u32 %v11455, 4294901760
    %11457 = vmatpush.msra.mxu0 %v11456
    %v11458 = vand.u32 %v556, 4294901760
    %v11459 = vsub.f32 %v556, %v11458
    %v11460 = vand.u32 %v11459, 4294901760
    %11461 = vmatpush.msra.mxu0 %v11460
    %v11462 = vand.u32 %v555, 4294901760
    %v11463 = vsub.f32 %v555, %v11462
    %v11464 = vand.u32 %v11463, 4294901760
    %11465 = vmatpush.msra.mxu0 %v11464
    %v11466 = vand.u32 %v554, 4294901760
    %v11467 = vsub.f32 %v554, %v11466
    %v11468 = vand.u32 %v11467, 4294901760
    %11469 = vmatpush.msra.mxu0 %v11468
    %v11470 = vand.u32 %v553, 4294901760
    %v11471 = vsub.f32 %v553, %v11470
    %v11472 = vand.u32 %v11471, 4294901760
    %11473 = vmatpush.msra.mxu0 %v11472
    %v11474 = vand.u32 %v552, 4294901760
    %v11475 = vsub.f32 %v552, %v11474
    %v11476 = vand.u32 %v11475, 4294901760
    %11477 = vmatpush.msra.mxu0 %v11476
    %v11478 = vand.u32 %v551, 4294901760
    %v11479 = vsub.f32 %v551, %v11478
    %v11480 = vand.u32 %v11479, 4294901760
    %11481 = vmatpush.msra.mxu0 %v11480
    %v11482 = vand.u32 %v550, 4294901760
    %v11483 = vsub.f32 %v550, %v11482
    %v11484 = vand.u32 %v11483, 4294901760
    %11485 = vmatpush.msra.mxu0 %v11484
    %v11486 = vand.u32 %v549, 4294901760
    %v11487 = vsub.f32 %v549, %v11486
    %v11488 = vand.u32 %v11487, 4294901760
    %11489 = vmatpush.msra.mxu0 %v11488
    %v11490 = vand.u32 %v548, 4294901760
    %v11491 = vsub.f32 %v548, %v11490
    %v11492 = vand.u32 %v11491, 4294901760
    %11493 = vmatpush.msra.mxu0 %v11492
    %v11494 = vand.u32 %v547, 4294901760
    %v11495 = vsub.f32 %v547, %v11494
    %v11496 = vand.u32 %v11495, 4294901760
    %11497 = vmatpush.msra.mxu0 %v11496
    %v11498 = vand.u32 %v546, 4294901760
    %v11499 = vsub.f32 %v546, %v11498
    %v11500 = vand.u32 %v11499, 4294901760
    %11501 = vmatpush.msra.mxu0 %v11500
    %v11502 = vand.u32 %v599, 4294901760
    %11503 = vmatmul.f32.gmra.mxu0 %v11502
    %v11504 = vpop.f32.mrf.mxu0
    %v11505 = vadd.f32 %v11436, %v11504
    %11506 = vdwg.mxu0
    %v11507 = vand.u32 %v561, 4294901760
    %11508 = vmatpush.msra.mxu0 %v11507
    %v11509 = vand.u32 %v560, 4294901760
    %11510 = vmatpush.msra.mxu0 %v11509
    %v11511 = vand.u32 %v559, 4294901760
    %11512 = vmatpush.msra.mxu0 %v11511
    %v11513 = vand.u32 %v558, 4294901760
    %11514 = vmatpush.msra.mxu0 %v11513
    %v11515 = vand.u32 %v557, 4294901760
    %11516 = vmatpush.msra.mxu0 %v11515
    %v11517 = vand.u32 %v556, 4294901760
    %11518 = vmatpush.msra.mxu0 %v11517
    %v11519 = vand.u32 %v555, 4294901760
    %11520 = vmatpush.msra.mxu0 %v11519
    %v11521 = vand.u32 %v554, 4294901760
    %11522 = vmatpush.msra.mxu0 %v11521
    %v11523 = vand.u32 %v553, 4294901760
    %11524 = vmatpush.msra.mxu0 %v11523
    %v11525 = vand.u32 %v552, 4294901760
    %11526 = vmatpush.msra.mxu0 %v11525
    %v11527 = vand.u32 %v551, 4294901760
    %11528 = vmatpush.msra.mxu0 %v11527
    %v11529 = vand.u32 %v550, 4294901760
    %11530 = vmatpush.msra.mxu0 %v11529
    %v11531 = vand.u32 %v549, 4294901760
    %11532 = vmatpush.msra.mxu0 %v11531
    %v11533 = vand.u32 %v548, 4294901760
    %11534 = vmatpush.msra.mxu0 %v11533
    %v11535 = vand.u32 %v547, 4294901760
    %11536 = vmatpush.msra.mxu0 %v11535
    %v11537 = vand.u32 %v546, 4294901760
    %11538 = vmatpush.msra.mxu0 %v11537
    %v11539 = vand.u32 %v599, 4294901760
    %11540 = vmatmul.f32.gmra.mxu0 %v11539
    %v11541 = vpop.f32.mrf.mxu0
    %v11542 = vadd.f32 %v11505, %v11541
    %11543 = vdwg.mxu0
    %11544 = vst [vmem:[#allocation8] sm:$0x1] %v11542
    // Predicated region
    $region22: #{tpu_custom_call.1} parent=1 // pred_check
      _
    $region23: #{tpu_custom_call.1} parent=1 // pred_check_branch
      %11546 = sbr.rel (0) target = $region25
    $region24: #{tpu_custom_call.1} parent=1 // pred_region
      %11548 = vsyncadd [#allocation5], 0
      %s11550 = sshll.u32 [#allocation8], 4
      %s11551 = int_to_ptr.vmem [resolvable:$true] %s11550
      %s11552 = sshll.u32 %s3, 4
      %s11553 = int_to_ptr.hbm [resolvable:$true] %s11552
      %11555 = dma.vmem_to_hbm [thread:$0]  %s11551, 16, %s11553, [#allocation5]
    $region25: #{tpu_custom_call.1} parent=1 // pred_fallthru
      _
    // Predicated region
    $region26: #{tpu_custom_call.1} parent=1 // pred_check
      _
    $region27: #{tpu_custom_call.1} parent=1 // pred_check_branch
      %11557 = sbr.rel (0) target = $region29
    $region28: #{tpu_custom_call.1} parent=1 // pred_region
      %11559 = dma.done [#allocation5], 16
    $region29: #{tpu_custom_call.1} parent=1 // pred_fallthru
      _
    %11560 = vsyncpa [#allocation4], 1
    %11561 = vsyncpa [#allocation7], 1
    %11562 = vsyncpa [#allocation5], 1

</llo_original>
